<compile_context>
chip_gen: v7x
topology: tpu7x:2x2x1
jax: 0.10.0
libtpu: 0.0.40
codegen_flags: <defaults>
</compile_context>

<pallas_src>
import jax
import jax.numpy as jnp
from jax import lax
from jax.experimental import pallas as pl
from jax.experimental.pallas import tpu as pltpu


# ---------------------------------------------------------------------------
# Weight packing helpers (host/XLA side; tiny one-time work)
# ---------------------------------------------------------------------------
def _band3(w_hwio, Wd):
    """3x3 HWIO conv weight -> 3 banded matmul weights, one per dy tap.

    Returns B of shape (3, Wd*cin, Wd*cout) with
        B[ky, w_in*cin + ci, w_out*cout + co] = w_hwio[ky, (w_in - w_out) + 1, ci, co]
    for |w_in - w_out| <= 1 and zero elsewhere, so one matmul per dy applies all
    three dx taps including the zero padding at the W boundary.
    NOTE: weights are HWIO; PyTorch OIHW checkpoints must be transposed (2,3,1,0) first.
    """
    cin, cout = w_hwio.shape[2], w_hwio.shape[3]
    wi = jnp.arange(Wd)[:, None]
    wo = jnp.arange(Wd)[None, :]
    S = jnp.stack([(wi == wo + dx).astype(w_hwio.dtype) for dx in (-1, 0, 1)])  # (3,Wd,Wd)
    B = jnp.einsum("xab,yxio->yaibo", S, w_hwio)           # (3, Wd, cin, Wd, cout)
    return B.reshape(3, Wd * cin, Wd * cout)


def _blockdiag(g, Wd):
    """1x1 conv weight slice (cin, cout) -> block-diagonal (Wd*cin, Wd*cout)."""
    eye = jnp.eye(Wd, dtype=g.dtype)
    return jnp.einsum("ab,io->aibo", eye, g).reshape(Wd * g.shape[0], Wd * g.shape[1])


def _tile_lane(v, Wd):
    """Per-channel vector (c,) -> lane-dense (Wd*c,) matching lane index = w*c + ci."""
    return jnp.tile(v, Wd)


def _pack_params(params, settings, Wd, mm_dtype):
    C = settings["init_channels"]
    CoutF = settings["out_channels"]
    R = settings["num_resblocks"]
    WC = Wd * C

    pk = {
        "fe_w": _band3(params["fenet"]["w"], Wd).astype(mm_dtype),     # (3, Wd*Cin0, WC)
        "fe_b": _tile_lane(params["fenet"]["b"], Wd).reshape(1, WC),
        "rc_w": _band3(params["reconnet"]["w"], Wd).astype(mm_dtype),  # (3, WC, Wd*CoutF)
        "rc_b": _tile_lane(params["reconnet"]["b"], Wd).reshape(1, Wd * CoutF),
    }

    res_w, res_b, res_sc, res_sh = [], [], [], []
    for mb in params["mem_blocks"]:
        for rb in mb["resblocks"]:
            for cname in ("c1", "c2"):
                cp = rb[cname]
                res_w.append(_band3(cp["w"], Wd))
                res_b.append(_tile_lane(cp["b"], Wd))
                res_sc.append(_tile_lane(cp["scale"], Wd))
                res_sh.append(_tile_lane(cp["shift"], Wd))
    pk["res_w"] = jnp.stack(res_w).astype(mm_dtype)    # (2RM, 3, WC, WC)
    pk["res_b"] = jnp.stack(res_b)                     # (2RM, WC)
    pk["res_sc"] = jnp.stack(res_sc)
    pk["res_sh"] = jnp.stack(res_sh)

    gate_parts, gate_b = [], []
    for m, mb in enumerate(params["mem_blocks"]):
        g = mb["gate"]
        gate_cin = g["w"].shape[2]
        gw = g["w"].reshape(gate_cin, C)               # (gate_cin, C) from (1,1,gate_cin,C)
        nk = R + m + 1
        gwd = jnp.stack([_blockdiag(gw[k * C:(k + 1) * C, :], Wd) for k in range(nk)])
        gsc = jnp.stack([_tile_lane(g["scale"][k * C:(k + 1) * C], Wd) for k in range(nk)])
        gsh = jnp.stack([_tile_lane(g["shift"][k * C:(k + 1) * C], Wd) for k in range(nk)])
        gate_parts += [gwd.astype(mm_dtype), gsc, gsh]
        gate_b.append(_tile_lane(g["b"], Wd))
    pk["gate_parts"] = gate_parts
    pk["gate_b"] = jnp.stack(gate_b)                   # (M, WC)
    return pk


# ---------------------------------------------------------------------------
# Fused MemNet kernel builder
# ---------------------------------------------------------------------------
def _build_memnet_kernel(Nb, H, W, C, Cin0, CoutF, R, M, multi, mm_dtype):
    WC = W * C

    def shift_h(a, dy):
        """(nb, H, width) -> rows shifted by dy along H, zero-padded per image."""
        if dy == 0:
            return a
        nb, _, width = a.shape
        z = jnp.zeros((nb, 1, width), a.dtype)
        if dy > 0:
            return jnp.concatenate([a[:, 1:, :], z], axis=1)
        return jnp.concatenate([z, a[:, :-1, :]], axis=1)

    def conv3(a, bfn, bias):
        """3x3 'same' conv via 3 banded matmuls (one per dy), f32 accumulation.

        a: (nb, H, W*cin) f32; bfn(t) -> (W*cin, W*cout) banded weight (mm_dtype);
        bias: (W*cout,).  Returns (nb, H, W*cout) f32.
        """
        nb = a.shape[0]
        wcin = a.shape[2]
        a = a.astype(mm_dtype)                  # cast BEFORE building the shifted taps
        acc = None
        for t, dy in enumerate((-1, 0, 1)):
            ad = shift_h(a, dy).reshape(nb * H, wcin)
            y = jnp.dot(ad, bfn(t), preferred_element_type=jnp.float32)
            acc = y if acc is None else acc + y
        acc = acc + bias
        return acc.reshape(nb, H, acc.shape[-1])

    def kernel(*refs):
        x_ref, fe_w, fe_b, res_w, res_b, res_sc, res_sh = refs[:7]
        base = 7 + 3 * M
        gate_refs = refs[7:base]
        gate_b = refs[base]
        rc_w = refs[base + 1]
        rc_b = refs[base + 2]
        fac_ref = refs[base + 3] if multi else None
        out_refs = refs[base + 3 + (1 if multi else 0):]

        x = x_ref[...]                                          # (Nb, H, W*Cin0) f32

        # fenet: plain 3x3 conv (no BN/ReLU)
        out = conv3(x, lambda t: fe_w[t], fe_b[0])              # (Nb, H, WC)

        long_mem = [out]
        ridx = 0
        for m in range(M):                                      # MemoryBlocks
            cur = out
            short_mem = []
            for _ in range(R):                                  # recursive_unit
                skip = cur
                h = jnp.maximum(cur * res_sc[ridx] + res_sh[ridx], 0.0)   # BN+ReLU
                h = conv3(h, lambda t, r=ridx: res_w[r, t], res_b[ridx])
                ridx += 1
                h = jnp.maximum(h * res_sc[ridx] + res_sh[ridx], 0.0)
                h = conv3(h, lambda t, r=ridx: res_w[r, t], res_b[ridx])
                ridx += 1
                cur = h + skip
                short_mem.append(cur)

            # gate_unit: BN->ReLU->1x1 conv over concat(long_mem + short_mem),
            # decomposed into a sum of per-tensor block-diagonal matmuls (no lane concat).
            gw, gsc, gsh = gate_refs[3 * m], gate_refs[3 * m + 1], gate_refs[3 * m + 2]
            acc = None
            for k, s in enumerate(long_mem + short_mem):
                a = jnp.maximum(s * gsc[k] + gsh[k], 0.0).astype(mm_dtype)
                y = jnp.dot(a.reshape(Nb * H, WC), gw[k],
                            preferred_element_type=jnp.float32)
                acc = y if acc is None else acc + y
            out = (acc + gate_b[m]).reshape(Nb, H, WC)
            long_mem.append(out)

        if not multi:
            rec = conv3(long_mem[M], lambda t: rc_w[t], rc_b[0])   # (Nb, H, W*CoutF)
            out_refs[0][...] = rec + x                             # residual add
        else:
            # One stacked reconnet matmul over all M long-memory outputs; the
            # factors-weighted `final` is accumulated inside the kernel.
            stacked = jnp.concatenate(long_mem[1:], axis=0)        # (M*Nb, H, WC)
            rec = conv3(stacked, lambda t: rc_w[t], rc_b[0])       # (M*Nb, H, W*CoutF)
            fac = fac_ref[...]                                     # (1, M)
            final = None
            for i in range(M):
                oi = rec[i * Nb:(i + 1) * Nb] + x
                out_refs[1 + i][...] = oi
                contrib = fac[0, i] * oi
                final = contrib if final is None else final + contrib
            out_refs[0][...] = final

    return kernel


# ---------------------------------------------------------------------------
# Public wrapper: NCHW in / NCHW out, single fused pallas_call
# ---------------------------------------------------------------------------
def memnet_forward_pallas(x_nchw, params, settings, *,
                          matmul_dtype=jnp.float32, batch_block=None):
    x_nchw = x_nchw.astype(jnp.float32)
    N, Cin0, H, W = x_nchw.shape
    C = settings["init_channels"]
    CoutF = settings["out_channels"]
    R = settings["num_resblocks"]
    M = settings["num_memblocks"]
    multi = settings["multi_supervised"]
    if Cin0 != CoutF:
        raise ValueError("MemNet residual add requires in_channels == out_channels "
                         f"(got {Cin0} vs {CoutF}).")

    # NCHW -> lane-dense rows (N, H, W*Cin).
    x = jnp.transpose(x_nchw, (0, 2, 3, 1)).reshape(N, H, W * Cin0)

    pk = _pack_params(params, settings, W, matmul_dtype)

    # Grid: default is one step with the whole batch folded into the matmul M dim
    # (best on single-TC v5e/v6e).  Split for v7x megacore only when the split keeps
    # the output block 8-row aligned.
    if batch_block is None:
        batch_block = N
        try:
            kind = jax.devices()[0].device_kind.lower()
        except Exception:
            kind = ""
        if "v7" in kind and N % 2 == 0 and (N // 2) % 8 == 0:
            batch_block = N // 2
    if N % batch_block != 0 or (batch_block != N and batch_block % 8 != 0):
        batch_block = N
    Nb = batch_block
    grid = (N // Nb,)

    inputs = [x, pk["fe_w"], pk["fe_b"],
              pk["res_w"], pk["res_b"], pk["res_sc"], pk["res_sh"],
              *pk["gate_parts"], pk["gate_b"], pk["rc_w"], pk["rc_b"]]
    if multi:
        inputs.append(jnp.asarray(params["factors"], jnp.float32).reshape(1, M))

    def full_spec(a):  # whole-array block, constant index map (fetched once)
        nd = a.ndim
        return pl.BlockSpec(a.shape, lambda i, _n=nd: (0,) * _n)

    in_specs = ([pl.BlockSpec((Nb, H, W * Cin0), lambda i: (i, 0, 0))]
                + [full_spec(a) for a in inputs[1:]])

    n_out = (1 + M) if multi else 1
    out_shapes = [jax.ShapeDtypeStruct((N, H, W * CoutF), jnp.float32)
                  for _ in range(n_out)]
    out_specs = [pl.BlockSpec((Nb, H, W * CoutF), lambda i: (i, 0, 0))
                 for _ in range(n_out)]

    kernel = _build_memnet_kernel(Nb, H, W, C, Cin0, CoutF, R, M, multi, matmul_dtype)

    outs = pl.pallas_call(
        kernel,
        out_shape=out_shapes if multi else out_shapes[0],
        grid_spec=pltpu.PrefetchScalarGridSpec(
            num_scalar_prefetch=0,
            grid=grid,
            in_specs=in_specs,
            out_specs=out_specs if multi else out_specs[0]),
        compiler_params=pltpu.CompilerParams(
            dimension_semantics=("parallel",),
            vmem_limit_bytes=32 * 1024 * 1024),
    )(*inputs)

    def to_nchw(o):  # (N, H, W*CoutF) -> NCHW
        return jnp.transpose(o.reshape(N, H, W, CoutF), (0, 3, 1, 2))

    if not multi:
        return to_nchw(outs)
    final = to_nchw(outs[0])
    outs_nchw = [to_nchw(o) for o in outs[1:]]
    return final, outs_nchw


# ---------------------------------------------------------------------------
# Pure-JAX reference (correctness check only)
# ---------------------------------------------------------------------------
def _conv2d_ref(x, p, ksize, fuse):
    y = x
    if fuse:
        y = jnp.maximum(y * p["scale"] + p["shift"], 0.0)
    pad = ksize // 2
    y = lax.conv_general_dilated(
        y, p["w"], (1, 1), [(pad, pad), (pad, pad)],
        dimension_numbers=("NHWC", "HWIO", "NHWC"))
    return y + p["b"]


def memnet_forward_ref(x_nchw, params, settings):
    x = jnp.transpose(x_nchw, (0, 2, 3, 1)).astype(jnp.float32)
    res = x
    out = _conv2d_ref(x, params["fenet"], 3, False)
    long_mem = [out]
    for mb in params["mem_blocks"]:
        cur = out
        short_mem = []
        for rb in mb["resblocks"]:
            skip = cur
            cur = _conv2d_ref(cur, rb["c1"], 3, True)
            cur = _conv2d_ref(cur, rb["c2"], 3, True)
            cur = cur + skip
            short_mem.append(cur)
        gate_in = jnp.concatenate(long_mem + short_mem, axis=-1)
        out = _conv2d_ref(gate_in, mb["gate"], 1, True)
        long_mem.append(out)
    if not settings["multi_supervised"]:
        out = _conv2d_ref(out, params["reconnet"], 3, False)
        return jnp.transpose(res + out, (0, 3, 1, 2))
    M = settings["num_memblocks"]
    outs = [jnp.transpose(res + _conv2d_ref(long_mem[i + 1], params["reconnet"], 3, False),
                          (0, 3, 1, 2)) for i in range(M)]
    final = 0
    for i in range(M):
        final = final + params["factors"][i] * outs[i]
    return final, outs


# ---------------------------------------------------------------------------
# Deterministic parameter construction (synthetic init, no checkpoints)
# ---------------------------------------------------------------------------
def _bn_params(key, c):
    k1, k2, k3, k4 = jax.random.split(key, 4)
    gamma = jax.random.uniform(k1, (c,), jnp.float32, 0.8, 1.2)
    beta = 0.05 * jax.random.normal(k2, (c,), jnp.float32)
    mean = 0.05 * jax.random.normal(k3, (c,), jnp.float32)
    var = jax.random.uniform(k4, (c,), jnp.float32, 0.8, 1.2)
    scale = gamma * lax.rsqrt(var + 1e-5)
    shift = beta - mean * scale
    return scale, shift


def _conv_params(key, cin, cout, ksize, bn=False):
    k1, k2, k3 = jax.random.split(key, 3)
    w = 0.1 * jax.random.normal(k1, (ksize, ksize, cin, cout), jnp.float32)
    b = 0.01 * jax.random.normal(k2, (cout,), jnp.float32)
    if bn:
        scale, shift = _bn_params(k3, cin)
    else:  # plain conv / BN disabled: identity scale/shift
        scale = jnp.ones((cin,), jnp.float32)
        shift = jnp.zeros((cin,), jnp.float32)
    return {"w": w, "b": b, "scale": scale, "shift": shift}


def init_memnet_params(key, s):
    C = s["init_channels"]
    R = s["num_resblocks"]
    M = s["num_memblocks"]
    keys = jax.random.split(key, 3 + M)
    params = {
        "fenet": _conv_params(keys[0], s["in_channels"], C, 3, bn=False),
        "reconnet": _conv_params(keys[1], C, s["out_channels"], 3, bn=False),
        "factors": jnp.ones((M,), jnp.float32),
        "mem_blocks": [],
    }
    for m in range(M):
        mk = jax.random.split(keys[3 + m], 2 * R + 1)
        resblocks = []
        for r in range(R):
            resblocks.append({
                "c1": _conv_params(mk[2 * r], C, C, 3, bn=s["BN"]),
                "c2": _conv_params(mk[2 * r + 1], C, C, 3, bn=s["BN"]),
            })
        gate_cin = (R + m + 1) * C
        gate = _conv_params(mk[2 * R], gate_cin, C, 1, bn=s["BN"])
        params["mem_blocks"].append({"resblocks": resblocks, "gate": gate})
    return params


# ---------------------------------------------------------------------------
if __name__ == "__main__":
    settings = dict(
        BN=True,
        bias=True,
        act_func="relu",
        in_channels=3,
        out_channels=3,
        init_channels=8,
        num_resblocks=2,
        num_memblocks=2,
        multi_supervised=False,
    )

    key = jax.random.PRNGKey(0)
    kp, kx = jax.random.split(key)
    params = init_memnet_params(kp, settings)
    x = jax.random.normal(kx, (2, settings["in_channels"], 16, 16), jnp.float32)

    # f32 fused kernel vs pure-JAX reference
    out = jax.block_until_ready(memnet_forward_pallas(x, params, settings))
    ref = jax.block_until_ready(memnet_forward_ref(x, params, settings))
    assert out.shape == (2, settings["out_channels"], 16, 16), out.shape
    err = float(jnp.max(jnp.abs(out - ref)))
    assert jnp.allclose(out, ref, rtol=1e-3, atol=1e-3), f"f32 max abs err {err}"

    # bf16 MXU-operand variant (f32 accumulation) for v6e/v7x — loose tolerance.
    out_bf16 = jax.block_until_ready(
        memnet_forward_pallas(x, params, settings, matmul_dtype=jnp.bfloat16))
    err_bf16 = float(jnp.max(jnp.abs(out_bf16 - ref)))
    assert err_bf16 < 0.1, f"bf16 max abs err {err_bf16}"

    # multi_supervised path: stacked reconnet + in-kernel factor-weighted final.
    settings_m = dict(settings, multi_supervised=True)
    fin_p, outs_p = memnet_forward_pallas(x, params, settings_m)
    fin_r, outs_r = memnet_forward_ref(x, params, settings_m)
    jax.block_until_ready((fin_p, outs_p))
    assert jnp.allclose(fin_p, fin_r, rtol=1e-3, atol=1e-3)
    for o_p, o_r in zip(outs_p, outs_r):
        assert jnp.allclose(o_p, o_r, rtol=1e-3, atol=1e-3)

    print("KERNEL_OK")
</pallas_src>

<mosaic_0001>
module attributes {stable_mosaic.version = 11 : i64} {
  func.func @kernel(%arg0: i32, %arg1: memref<2x16x48xf32, #tpu.memory_space<vmem>>, %arg2: memref<3x48x128xf32, #tpu.memory_space<vmem>>, %arg3: memref<1x128xf32, #tpu.memory_space<vmem>>, %arg4: memref<8x3x128x128xf32, #tpu.memory_space<vmem>>, %arg5: memref<8x128xf32, #tpu.memory_space<vmem>>, %arg6: memref<8x128xf32, #tpu.memory_space<vmem>>, %arg7: memref<8x128xf32, #tpu.memory_space<vmem>>, %arg8: memref<3x128x128xf32, #tpu.memory_space<vmem>>, %arg9: memref<3x128xf32, #tpu.memory_space<vmem>>, %arg10: memref<3x128xf32, #tpu.memory_space<vmem>>, %arg11: memref<4x128x128xf32, #tpu.memory_space<vmem>>, %arg12: memref<4x128xf32, #tpu.memory_space<vmem>>, %arg13: memref<4x128xf32, #tpu.memory_space<vmem>>, %arg14: memref<2x128xf32, #tpu.memory_space<vmem>>, %arg15: memref<3x128x48xf32, #tpu.memory_space<vmem>>, %arg16: memref<1x48xf32, #tpu.memory_space<vmem>>, %arg17: memref<2x16x48xf32, #tpu.memory_space<vmem>>) attributes {dimension_semantics = [#tpu.dimension_semantics<parallel>], iteration_bounds = array<i64: 1>, scalar_prefetch = 0 : i64, scratch_operands = 0 : i64, tpu.core_type = #tpu.core_type<tc>, window_params = [{transform_indices = @transform_0, window_bounds = array<i64: 2, 16, 48>}, {pipeline_mode = #tpu.pipeline_mode<synchronous>, transform_indices = @transform_1, window_bounds = array<i64: 3, 48, 128>}, {pipeline_mode = #tpu.pipeline_mode<synchronous>, transform_indices = @transform_2, window_bounds = array<i64: 1, 128>}, {pipeline_mode = #tpu.pipeline_mode<synchronous>, transform_indices = @transform_3, window_bounds = array<i64: 8, 3, 128, 128>}, {pipeline_mode = #tpu.pipeline_mode<synchronous>, transform_indices = @transform_4, window_bounds = array<i64: 8, 128>}, {pipeline_mode = #tpu.pipeline_mode<synchronous>, transform_indices = @transform_5, window_bounds = array<i64: 8, 128>}, {pipeline_mode = #tpu.pipeline_mode<synchronous>, transform_indices = @transform_6, window_bounds = array<i64: 8, 128>}, {pipeline_mode = #tpu.pipeline_mode<synchronous>, transform_indices = @transform_7, window_bounds = array<i64: 3, 128, 128>}, {pipeline_mode = #tpu.pipeline_mode<synchronous>, transform_indices = @transform_8, window_bounds = array<i64: 3, 128>}, {pipeline_mode = #tpu.pipeline_mode<synchronous>, transform_indices = @transform_9, window_bounds = array<i64: 3, 128>}, {pipeline_mode = #tpu.pipeline_mode<synchronous>, transform_indices = @transform_10, window_bounds = array<i64: 4, 128, 128>}, {pipeline_mode = #tpu.pipeline_mode<synchronous>, transform_indices = @transform_11, window_bounds = array<i64: 4, 128>}, {pipeline_mode = #tpu.pipeline_mode<synchronous>, transform_indices = @transform_12, window_bounds = array<i64: 4, 128>}, {pipeline_mode = #tpu.pipeline_mode<synchronous>, transform_indices = @transform_13, window_bounds = array<i64: 2, 128>}, {pipeline_mode = #tpu.pipeline_mode<synchronous>, transform_indices = @transform_14, window_bounds = array<i64: 3, 128, 48>}, {pipeline_mode = #tpu.pipeline_mode<synchronous>, transform_indices = @transform_15, window_bounds = array<i64: 1, 48>}, {transform_indices = @transform_16, window_bounds = array<i64: 2, 16, 48>}]} {
    %c0 = arith.constant 0 : index
    %c0_0 = arith.constant 0 : index
    %c0_1 = arith.constant 0 : index
    %0 = vector.load %arg1[%c0, %c0_0, %c0_1] : memref<2x16x48xf32, #tpu.memory_space<vmem>>, vector<2x16x48xf32>
    %c0_2 = arith.constant 0 : index
    %c0_3 = arith.constant 0 : index
    %1 = vector.load %arg3[%c0_2, %c0_3] : memref<1x128xf32, #tpu.memory_space<vmem>>, vector<1x128xf32>
    %2 = vector.shape_cast %1 : vector<1x128xf32> to vector<128xf32>
    %cst = arith.constant 0.000000e+00 : f32
    %3 = vector.broadcast %cst : f32 to vector<2x1x48xf32>
    %4 = vector.extract_strided_slice %0 {offsets = [0, 0, 0], sizes = [2, 15, 48], strides = [1, 1, 1]} : vector<2x16x48xf32> to vector<2x15x48xf32>
    %5 = tpu.concatenate %3, %4 in 1 : vector<2x1x48xf32>, vector<2x15x48xf32> -> vector<2x16x48xf32>
    %6 = vector.shape_cast %5 : vector<2x16x48xf32> to vector<32x48xf32>
    %c0_4 = arith.constant 0 : index
    %c0_5 = arith.constant 0 : index
    %c0_6 = arith.constant 0 : index
    %7 = vector.load %arg2[%c0_4, %c0_5, %c0_6] : memref<3x48x128xf32, #tpu.memory_space<vmem>>, vector<1x48x128xf32>
    %8 = vector.shape_cast %7 : vector<1x48x128xf32> to vector<48x128xf32>
    %cst_7 = arith.constant dense<0.000000e+00> : vector<32x128xf32>
    %9 = tpu.matmul %6, %8, %cst_7 {dimension_numbers = #tpu.dot_dimension_numbers<[1], [0], [0], [1], [0, 0, 1, 1], [], []>} : vector<32x48xf32>, vector<48x128xf32>, vector<32x128xf32> -> vector<32x128xf32>
    %10 = vector.shape_cast %0 : vector<2x16x48xf32> to vector<32x48xf32>
    %c1 = arith.constant 1 : index
    %c0_8 = arith.constant 0 : index
    %c0_9 = arith.constant 0 : index
    %11 = vector.load %arg2[%c1, %c0_8, %c0_9] : memref<3x48x128xf32, #tpu.memory_space<vmem>>, vector<1x48x128xf32>
    %12 = vector.shape_cast %11 : vector<1x48x128xf32> to vector<48x128xf32>
    %cst_10 = arith.constant dense<0.000000e+00> : vector<32x128xf32>
    %13 = tpu.matmul %10, %12, %cst_10 {dimension_numbers = #tpu.dot_dimension_numbers<[1], [0], [0], [1], [0, 0, 1, 1], [], []>} : vector<32x48xf32>, vector<48x128xf32>, vector<32x128xf32> -> vector<32x128xf32>
    %14 = arith.addf %9, %13 : vector<32x128xf32>
    %cst_11 = arith.constant 0.000000e+00 : f32
    %15 = vector.broadcast %cst_11 : f32 to vector<2x1x48xf32>
    %16 = vector.extract_strided_slice %0 {offsets = [0, 1, 0], sizes = [2, 15, 48], strides = [1, 1, 1]} : vector<2x16x48xf32> to vector<2x15x48xf32>
    %17 = tpu.concatenate %16, %15 in 1 : vector<2x15x48xf32>, vector<2x1x48xf32> -> vector<2x16x48xf32>
    %18 = vector.shape_cast %17 : vector<2x16x48xf32> to vector<32x48xf32>
    %c2 = arith.constant 2 : index
    %c0_12 = arith.constant 0 : index
    %c0_13 = arith.constant 0 : index
    %19 = vector.load %arg2[%c2, %c0_12, %c0_13] : memref<3x48x128xf32, #tpu.memory_space<vmem>>, vector<1x48x128xf32>
    %20 = vector.shape_cast %19 : vector<1x48x128xf32> to vector<48x128xf32>
    %cst_14 = arith.constant dense<0.000000e+00> : vector<32x128xf32>
    %21 = tpu.matmul %18, %20, %cst_14 {dimension_numbers = #tpu.dot_dimension_numbers<[1], [0], [0], [1], [0, 0, 1, 1], [], []>} : vector<32x48xf32>, vector<48x128xf32>, vector<32x128xf32> -> vector<32x128xf32>
    %22 = arith.addf %14, %21 : vector<32x128xf32>
    %23 = vector.shape_cast %2 : vector<128xf32> to vector<1x128xf32>
    %24 = vector.broadcast %23 : vector<1x128xf32> to vector<32x128xf32>
    %25 = arith.addf %22, %24 : vector<32x128xf32>
    %26 = vector.shape_cast %25 : vector<32x128xf32> to vector<2x16x128xf32>
    %c0_15 = arith.constant 0 : index
    %c0_16 = arith.constant 0 : index
    %27 = vector.load %arg6[%c0_15, %c0_16] : memref<8x128xf32, #tpu.memory_space<vmem>>, vector<1x128xf32>
    %28 = vector.shape_cast %27 : vector<1x128xf32> to vector<128xf32>
    %29 = vector.shape_cast %28 : vector<128xf32> to vector<1x1x128xf32>
    %30 = vector.broadcast %29 : vector<1x1x128xf32> to vector<2x16x128xf32>
    %31 = arith.mulf %26, %30 : vector<2x16x128xf32>
    %c0_17 = arith.constant 0 : index
    %c0_18 = arith.constant 0 : index
    %32 = vector.load %arg7[%c0_17, %c0_18] : memref<8x128xf32, #tpu.memory_space<vmem>>, vector<1x128xf32>
    %33 = vector.shape_cast %32 : vector<1x128xf32> to vector<128xf32>
    %34 = vector.shape_cast %33 : vector<128xf32> to vector<1x1x128xf32>
    %35 = vector.broadcast %34 : vector<1x1x128xf32> to vector<2x16x128xf32>
    %36 = arith.addf %31, %35 : vector<2x16x128xf32>
    %cst_19 = arith.constant 0.000000e+00 : f32
    %37 = vector.broadcast %cst_19 : f32 to vector<2x16x128xf32>
    %38 = arith.maximumf %36, %37 : vector<2x16x128xf32>
    %c0_20 = arith.constant 0 : index
    %c0_21 = arith.constant 0 : index
    %39 = vector.load %arg5[%c0_20, %c0_21] : memref<8x128xf32, #tpu.memory_space<vmem>>, vector<1x128xf32>
    %40 = vector.shape_cast %39 : vector<1x128xf32> to vector<128xf32>
    %cst_22 = arith.constant 0.000000e+00 : f32
    %41 = vector.broadcast %cst_22 : f32 to vector<2x1x128xf32>
    %42 = vector.extract_strided_slice %38 {offsets = [0, 0, 0], sizes = [2, 15, 128], strides = [1, 1, 1]} : vector<2x16x128xf32> to vector<2x15x128xf32>
    %43 = tpu.concatenate %41, %42 in 1 : vector<2x1x128xf32>, vector<2x15x128xf32> -> vector<2x16x128xf32>
    %44 = vector.shape_cast %43 : vector<2x16x128xf32> to vector<32x128xf32>
    %c0_23 = arith.constant 0 : index
    %c0_24 = arith.constant 0 : index
    %c0_25 = arith.constant 0 : index
    %c0_26 = arith.constant 0 : index
    %45 = vector.load %arg4[%c0_23, %c0_24, %c0_25, %c0_26] : memref<8x3x128x128xf32, #tpu.memory_space<vmem>>, vector<1x1x128x128xf32>
    %46 = vector.shape_cast %45 : vector<1x1x128x128xf32> to vector<128x128xf32>
    %cst_27 = arith.constant dense<0.000000e+00> : vector<32x128xf32>
    %47 = tpu.matmul %44, %46, %cst_27 {dimension_numbers = #tpu.dot_dimension_numbers<[1], [0], [0], [1], [0, 0, 1, 1], [], []>} : vector<32x128xf32>, vector<128x128xf32>, vector<32x128xf32> -> vector<32x128xf32>
    %48 = vector.shape_cast %38 : vector<2x16x128xf32> to vector<32x128xf32>
    %c0_28 = arith.constant 0 : index
    %c1_29 = arith.constant 1 : index
    %c0_30 = arith.constant 0 : index
    %c0_31 = arith.constant 0 : index
    %49 = vector.load %arg4[%c0_28, %c1_29, %c0_30, %c0_31] : memref<8x3x128x128xf32, #tpu.memory_space<vmem>>, vector<1x1x128x128xf32>
    %50 = vector.shape_cast %49 : vector<1x1x128x128xf32> to vector<128x128xf32>
    %cst_32 = arith.constant dense<0.000000e+00> : vector<32x128xf32>
    %51 = tpu.matmul %48, %50, %cst_32 {dimension_numbers = #tpu.dot_dimension_numbers<[1], [0], [0], [1], [0, 0, 1, 1], [], []>} : vector<32x128xf32>, vector<128x128xf32>, vector<32x128xf32> -> vector<32x128xf32>
    %52 = arith.addf %47, %51 : vector<32x128xf32>
    %cst_33 = arith.constant 0.000000e+00 : f32
    %53 = vector.broadcast %cst_33 : f32 to vector<2x1x128xf32>
    %54 = vector.extract_strided_slice %38 {offsets = [0, 1, 0], sizes = [2, 15, 128], strides = [1, 1, 1]} : vector<2x16x128xf32> to vector<2x15x128xf32>
    %55 = tpu.concatenate %54, %53 in 1 : vector<2x15x128xf32>, vector<2x1x128xf32> -> vector<2x16x128xf32>
    %56 = vector.shape_cast %55 : vector<2x16x128xf32> to vector<32x128xf32>
    %c0_34 = arith.constant 0 : index
    %c2_35 = arith.constant 2 : index
    %c0_36 = arith.constant 0 : index
    %c0_37 = arith.constant 0 : index
    %57 = vector.load %arg4[%c0_34, %c2_35, %c0_36, %c0_37] : memref<8x3x128x128xf32, #tpu.memory_space<vmem>>, vector<1x1x128x128xf32>
    %58 = vector.shape_cast %57 : vector<1x1x128x128xf32> to vector<128x128xf32>
    %cst_38 = arith.constant dense<0.000000e+00> : vector<32x128xf32>
    %59 = tpu.matmul %56, %58, %cst_38 {dimension_numbers = #tpu.dot_dimension_numbers<[1], [0], [0], [1], [0, 0, 1, 1], [], []>} : vector<32x128xf32>, vector<128x128xf32>, vector<32x128xf32> -> vector<32x128xf32>
    %60 = arith.addf %52, %59 : vector<32x128xf32>
    %61 = vector.shape_cast %40 : vector<128xf32> to vector<1x128xf32>
    %62 = vector.broadcast %61 : vector<1x128xf32> to vector<32x128xf32>
    %63 = arith.addf %60, %62 : vector<32x128xf32>
    %64 = vector.shape_cast %63 : vector<32x128xf32> to vector<2x16x128xf32>
    %c1_39 = arith.constant 1 : index
    %c0_40 = arith.constant 0 : index
    %65 = vector.load %arg6[%c1_39, %c0_40] : memref<8x128xf32, #tpu.memory_space<vmem>>, vector<1x128xf32>
    %66 = vector.shape_cast %65 : vector<1x128xf32> to vector<128xf32>
    %67 = vector.shape_cast %66 : vector<128xf32> to vector<1x1x128xf32>
    %68 = vector.broadcast %67 : vector<1x1x128xf32> to vector<2x16x128xf32>
    %69 = arith.mulf %64, %68 : vector<2x16x128xf32>
    %c1_41 = arith.constant 1 : index
    %c0_42 = arith.constant 0 : index
    %70 = vector.load %arg7[%c1_41, %c0_42] : memref<8x128xf32, #tpu.memory_space<vmem>>, vector<1x128xf32>
    %71 = vector.shape_cast %70 : vector<1x128xf32> to vector<128xf32>
    %72 = vector.shape_cast %71 : vector<128xf32> to vector<1x1x128xf32>
    %73 = vector.broadcast %72 : vector<1x1x128xf32> to vector<2x16x128xf32>
    %74 = arith.addf %69, %73 : vector<2x16x128xf32>
    %cst_43 = arith.constant 0.000000e+00 : f32
    %75 = vector.broadcast %cst_43 : f32 to vector<2x16x128xf32>
    %76 = arith.maximumf %74, %75 : vector<2x16x128xf32>
    %c1_44 = arith.constant 1 : index
    %c0_45 = arith.constant 0 : index
    %77 = vector.load %arg5[%c1_44, %c0_45] : memref<8x128xf32, #tpu.memory_space<vmem>>, vector<1x128xf32>
    %78 = vector.shape_cast %77 : vector<1x128xf32> to vector<128xf32>
    %cst_46 = arith.constant 0.000000e+00 : f32
    %79 = vector.broadcast %cst_46 : f32 to vector<2x1x128xf32>
    %80 = vector.extract_strided_slice %76 {offsets = [0, 0, 0], sizes = [2, 15, 128], strides = [1, 1, 1]} : vector<2x16x128xf32> to vector<2x15x128xf32>
    %81 = tpu.concatenate %79, %80 in 1 : vector<2x1x128xf32>, vector<2x15x128xf32> -> vector<2x16x128xf32>
    %82 = vector.shape_cast %81 : vector<2x16x128xf32> to vector<32x128xf32>
    %c1_47 = arith.constant 1 : index
    %c0_48 = arith.constant 0 : index
    %c0_49 = arith.constant 0 : index
    %c0_50 = arith.constant 0 : index
    %83 = vector.load %arg4[%c1_47, %c0_48, %c0_49, %c0_50] : memref<8x3x128x128xf32, #tpu.memory_space<vmem>>, vector<1x1x128x128xf32>
    %84 = vector.shape_cast %83 : vector<1x1x128x128xf32> to vector<128x128xf32>
    %cst_51 = arith.constant dense<0.000000e+00> : vector<32x128xf32>
    %85 = tpu.matmul %82, %84, %cst_51 {dimension_numbers = #tpu.dot_dimension_numbers<[1], [0], [0], [1], [0, 0, 1, 1], [], []>} : vector<32x128xf32>, vector<128x128xf32>, vector<32x128xf32> -> vector<32x128xf32>
    %86 = vector.shape_cast %76 : vector<2x16x128xf32> to vector<32x128xf32>
    %c1_52 = arith.constant 1 : index
    %c1_53 = arith.constant 1 : index
    %c0_54 = arith.constant 0 : index
    %c0_55 = arith.constant 0 : index
    %87 = vector.load %arg4[%c1_52, %c1_53, %c0_54, %c0_55] : memref<8x3x128x128xf32, #tpu.memory_space<vmem>>, vector<1x1x128x128xf32>
    %88 = vector.shape_cast %87 : vector<1x1x128x128xf32> to vector<128x128xf32>
    %cst_56 = arith.constant dense<0.000000e+00> : vector<32x128xf32>
    %89 = tpu.matmul %86, %88, %cst_56 {dimension_numbers = #tpu.dot_dimension_numbers<[1], [0], [0], [1], [0, 0, 1, 1], [], []>} : vector<32x128xf32>, vector<128x128xf32>, vector<32x128xf32> -> vector<32x128xf32>
    %90 = arith.addf %85, %89 : vector<32x128xf32>
    %cst_57 = arith.constant 0.000000e+00 : f32
    %91 = vector.broadcast %cst_57 : f32 to vector<2x1x128xf32>
    %92 = vector.extract_strided_slice %76 {offsets = [0, 1, 0], sizes = [2, 15, 128], strides = [1, 1, 1]} : vector<2x16x128xf32> to vector<2x15x128xf32>
    %93 = tpu.concatenate %92, %91 in 1 : vector<2x15x128xf32>, vector<2x1x128xf32> -> vector<2x16x128xf32>
    %94 = vector.shape_cast %93 : vector<2x16x128xf32> to vector<32x128xf32>
    %c1_58 = arith.constant 1 : index
    %c2_59 = arith.constant 2 : index
    %c0_60 = arith.constant 0 : index
    %c0_61 = arith.constant 0 : index
    %95 = vector.load %arg4[%c1_58, %c2_59, %c0_60, %c0_61] : memref<8x3x128x128xf32, #tpu.memory_space<vmem>>, vector<1x1x128x128xf32>
    %96 = vector.shape_cast %95 : vector<1x1x128x128xf32> to vector<128x128xf32>
    %cst_62 = arith.constant dense<0.000000e+00> : vector<32x128xf32>
    %97 = tpu.matmul %94, %96, %cst_62 {dimension_numbers = #tpu.dot_dimension_numbers<[1], [0], [0], [1], [0, 0, 1, 1], [], []>} : vector<32x128xf32>, vector<128x128xf32>, vector<32x128xf32> -> vector<32x128xf32>
    %98 = arith.addf %90, %97 : vector<32x128xf32>
    %99 = vector.shape_cast %78 : vector<128xf32> to vector<1x128xf32>
    %100 = vector.broadcast %99 : vector<1x128xf32> to vector<32x128xf32>
    %101 = arith.addf %98, %100 : vector<32x128xf32>
    %102 = vector.shape_cast %101 : vector<32x128xf32> to vector<2x16x128xf32>
    %103 = arith.addf %102, %26 : vector<2x16x128xf32>
    %c2_63 = arith.constant 2 : index
    %c0_64 = arith.constant 0 : index
    %104 = vector.load %arg6[%c2_63, %c0_64] : memref<8x128xf32, #tpu.memory_space<vmem>>, vector<1x128xf32>
    %105 = vector.shape_cast %104 : vector<1x128xf32> to vector<128xf32>
    %106 = vector.shape_cast %105 : vector<128xf32> to vector<1x1x128xf32>
    %107 = vector.broadcast %106 : vector<1x1x128xf32> to vector<2x16x128xf32>
    %108 = arith.mulf %103, %107 : vector<2x16x128xf32>
    %c2_65 = arith.constant 2 : index
    %c0_66 = arith.constant 0 : index
    %109 = vector.load %arg7[%c2_65, %c0_66] : memref<8x128xf32, #tpu.memory_space<vmem>>, vector<1x128xf32>
    %110 = vector.shape_cast %109 : vector<1x128xf32> to vector<128xf32>
    %111 = vector.shape_cast %110 : vector<128xf32> to vector<1x1x128xf32>
    %112 = vector.broadcast %111 : vector<1x1x128xf32> to vector<2x16x128xf32>
    %113 = arith.addf %108, %112 : vector<2x16x128xf32>
    %cst_67 = arith.constant 0.000000e+00 : f32
    %114 = vector.broadcast %cst_67 : f32 to vector<2x16x128xf32>
    %115 = arith.maximumf %113, %114 : vector<2x16x128xf32>
    %c2_68 = arith.constant 2 : index
    %c0_69 = arith.constant 0 : index
    %116 = vector.load %arg5[%c2_68, %c0_69] : memref<8x128xf32, #tpu.memory_space<vmem>>, vector<1x128xf32>
    %117 = vector.shape_cast %116 : vector<1x128xf32> to vector<128xf32>
    %cst_70 = arith.constant 0.000000e+00 : f32
    %118 = vector.broadcast %cst_70 : f32 to vector<2x1x128xf32>
    %119 = vector.extract_strided_slice %115 {offsets = [0, 0, 0], sizes = [2, 15, 128], strides = [1, 1, 1]} : vector<2x16x128xf32> to vector<2x15x128xf32>
    %120 = tpu.concatenate %118, %119 in 1 : vector<2x1x128xf32>, vector<2x15x128xf32> -> vector<2x16x128xf32>
    %121 = vector.shape_cast %120 : vector<2x16x128xf32> to vector<32x128xf32>
    %c2_71 = arith.constant 2 : index
    %c0_72 = arith.constant 0 : index
    %c0_73 = arith.constant 0 : index
    %c0_74 = arith.constant 0 : index
    %122 = vector.load %arg4[%c2_71, %c0_72, %c0_73, %c0_74] : memref<8x3x128x128xf32, #tpu.memory_space<vmem>>, vector<1x1x128x128xf32>
    %123 = vector.shape_cast %122 : vector<1x1x128x128xf32> to vector<128x128xf32>
    %cst_75 = arith.constant dense<0.000000e+00> : vector<32x128xf32>
    %124 = tpu.matmul %121, %123, %cst_75 {dimension_numbers = #tpu.dot_dimension_numbers<[1], [0], [0], [1], [0, 0, 1, 1], [], []>} : vector<32x128xf32>, vector<128x128xf32>, vector<32x128xf32> -> vector<32x128xf32>
    %125 = vector.shape_cast %115 : vector<2x16x128xf32> to vector<32x128xf32>
    %c2_76 = arith.constant 2 : index
    %c1_77 = arith.constant 1 : index
    %c0_78 = arith.constant 0 : index
    %c0_79 = arith.constant 0 : index
    %126 = vector.load %arg4[%c2_76, %c1_77, %c0_78, %c0_79] : memref<8x3x128x128xf32, #tpu.memory_space<vmem>>, vector<1x1x128x128xf32>
    %127 = vector.shape_cast %126 : vector<1x1x128x128xf32> to vector<128x128xf32>
    %cst_80 = arith.constant dense<0.000000e+00> : vector<32x128xf32>
    %128 = tpu.matmul %125, %127, %cst_80 {dimension_numbers = #tpu.dot_dimension_numbers<[1], [0], [0], [1], [0, 0, 1, 1], [], []>} : vector<32x128xf32>, vector<128x128xf32>, vector<32x128xf32> -> vector<32x128xf32>
    %129 = arith.addf %124, %128 : vector<32x128xf32>
    %cst_81 = arith.constant 0.000000e+00 : f32
    %130 = vector.broadcast %cst_81 : f32 to vector<2x1x128xf32>
    %131 = vector.extract_strided_slice %115 {offsets = [0, 1, 0], sizes = [2, 15, 128], strides = [1, 1, 1]} : vector<2x16x128xf32> to vector<2x15x128xf32>
    %132 = tpu.concatenate %131, %130 in 1 : vector<2x15x128xf32>, vector<2x1x128xf32> -> vector<2x16x128xf32>
    %133 = vector.shape_cast %132 : vector<2x16x128xf32> to vector<32x128xf32>
    %c2_82 = arith.constant 2 : index
    %c2_83 = arith.constant 2 : index
    %c0_84 = arith.constant 0 : index
    %c0_85 = arith.constant 0 : index
    %134 = vector.load %arg4[%c2_82, %c2_83, %c0_84, %c0_85] : memref<8x3x128x128xf32, #tpu.memory_space<vmem>>, vector<1x1x128x128xf32>
    %135 = vector.shape_cast %134 : vector<1x1x128x128xf32> to vector<128x128xf32>
    %cst_86 = arith.constant dense<0.000000e+00> : vector<32x128xf32>
    %136 = tpu.matmul %133, %135, %cst_86 {dimension_numbers = #tpu.dot_dimension_numbers<[1], [0], [0], [1], [0, 0, 1, 1], [], []>} : vector<32x128xf32>, vector<128x128xf32>, vector<32x128xf32> -> vector<32x128xf32>
    %137 = arith.addf %129, %136 : vector<32x128xf32>
    %138 = vector.shape_cast %117 : vector<128xf32> to vector<1x128xf32>
    %139 = vector.broadcast %138 : vector<1x128xf32> to vector<32x128xf32>
    %140 = arith.addf %137, %139 : vector<32x128xf32>
    %141 = vector.shape_cast %140 : vector<32x128xf32> to vector<2x16x128xf32>
    %c3 = arith.constant 3 : index
    %c0_87 = arith.constant 0 : index
    %142 = vector.load %arg6[%c3, %c0_87] : memref<8x128xf32, #tpu.memory_space<vmem>>, vector<1x128xf32>
    %143 = vector.shape_cast %142 : vector<1x128xf32> to vector<128xf32>
    %144 = vector.shape_cast %143 : vector<128xf32> to vector<1x1x128xf32>
    %145 = vector.broadcast %144 : vector<1x1x128xf32> to vector<2x16x128xf32>
    %146 = arith.mulf %141, %145 : vector<2x16x128xf32>
    %c3_88 = arith.constant 3 : index
    %c0_89 = arith.constant 0 : index
    %147 = vector.load %arg7[%c3_88, %c0_89] : memref<8x128xf32, #tpu.memory_space<vmem>>, vector<1x128xf32>
    %148 = vector.shape_cast %147 : vector<1x128xf32> to vector<128xf32>
    %149 = vector.shape_cast %148 : vector<128xf32> to vector<1x1x128xf32>
    %150 = vector.broadcast %149 : vector<1x1x128xf32> to vector<2x16x128xf32>
    %151 = arith.addf %146, %150 : vector<2x16x128xf32>
    %cst_90 = arith.constant 0.000000e+00 : f32
    %152 = vector.broadcast %cst_90 : f32 to vector<2x16x128xf32>
    %153 = arith.maximumf %151, %152 : vector<2x16x128xf32>
    %c3_91 = arith.constant 3 : index
    %c0_92 = arith.constant 0 : index
    %154 = vector.load %arg5[%c3_91, %c0_92] : memref<8x128xf32, #tpu.memory_space<vmem>>, vector<1x128xf32>
    %155 = vector.shape_cast %154 : vector<1x128xf32> to vector<128xf32>
    %cst_93 = arith.constant 0.000000e+00 : f32
    %156 = vector.broadcast %cst_93 : f32 to vector<2x1x128xf32>
    %157 = vector.extract_strided_slice %153 {offsets = [0, 0, 0], sizes = [2, 15, 128], strides = [1, 1, 1]} : vector<2x16x128xf32> to vector<2x15x128xf32>
    %158 = tpu.concatenate %156, %157 in 1 : vector<2x1x128xf32>, vector<2x15x128xf32> -> vector<2x16x128xf32>
    %159 = vector.shape_cast %158 : vector<2x16x128xf32> to vector<32x128xf32>
    %c3_94 = arith.constant 3 : index
    %c0_95 = arith.constant 0 : index
    %c0_96 = arith.constant 0 : index
    %c0_97 = arith.constant 0 : index
    %160 = vector.load %arg4[%c3_94, %c0_95, %c0_96, %c0_97] : memref<8x3x128x128xf32, #tpu.memory_space<vmem>>, vector<1x1x128x128xf32>
    %161 = vector.shape_cast %160 : vector<1x1x128x128xf32> to vector<128x128xf32>
    %cst_98 = arith.constant dense<0.000000e+00> : vector<32x128xf32>
    %162 = tpu.matmul %159, %161, %cst_98 {dimension_numbers = #tpu.dot_dimension_numbers<[1], [0], [0], [1], [0, 0, 1, 1], [], []>} : vector<32x128xf32>, vector<128x128xf32>, vector<32x128xf32> -> vector<32x128xf32>
    %163 = vector.shape_cast %153 : vector<2x16x128xf32> to vector<32x128xf32>
    %c3_99 = arith.constant 3 : index
    %c1_100 = arith.constant 1 : index
    %c0_101 = arith.constant 0 : index
    %c0_102 = arith.constant 0 : index
    %164 = vector.load %arg4[%c3_99, %c1_100, %c0_101, %c0_102] : memref<8x3x128x128xf32, #tpu.memory_space<vmem>>, vector<1x1x128x128xf32>
    %165 = vector.shape_cast %164 : vector<1x1x128x128xf32> to vector<128x128xf32>
    %cst_103 = arith.constant dense<0.000000e+00> : vector<32x128xf32>
    %166 = tpu.matmul %163, %165, %cst_103 {dimension_numbers = #tpu.dot_dimension_numbers<[1], [0], [0], [1], [0, 0, 1, 1], [], []>} : vector<32x128xf32>, vector<128x128xf32>, vector<32x128xf32> -> vector<32x128xf32>
    %167 = arith.addf %162, %166 : vector<32x128xf32>
    %cst_104 = arith.constant 0.000000e+00 : f32
    %168 = vector.broadcast %cst_104 : f32 to vector<2x1x128xf32>
    %169 = vector.extract_strided_slice %153 {offsets = [0, 1, 0], sizes = [2, 15, 128], strides = [1, 1, 1]} : vector<2x16x128xf32> to vector<2x15x128xf32>
    %170 = tpu.concatenate %169, %168 in 1 : vector<2x15x128xf32>, vector<2x1x128xf32> -> vector<2x16x128xf32>
    %171 = vector.shape_cast %170 : vector<2x16x128xf32> to vector<32x128xf32>
    %c3_105 = arith.constant 3 : index
    %c2_106 = arith.constant 2 : index
    %c0_107 = arith.constant 0 : index
    %c0_108 = arith.constant 0 : index
    %172 = vector.load %arg4[%c3_105, %c2_106, %c0_107, %c0_108] : memref<8x3x128x128xf32, #tpu.memory_space<vmem>>, vector<1x1x128x128xf32>
    %173 = vector.shape_cast %172 : vector<1x1x128x128xf32> to vector<128x128xf32>
    %cst_109 = arith.constant dense<0.000000e+00> : vector<32x128xf32>
    %174 = tpu.matmul %171, %173, %cst_109 {dimension_numbers = #tpu.dot_dimension_numbers<[1], [0], [0], [1], [0, 0, 1, 1], [], []>} : vector<32x128xf32>, vector<128x128xf32>, vector<32x128xf32> -> vector<32x128xf32>
    %175 = arith.addf %167, %174 : vector<32x128xf32>
    %176 = vector.shape_cast %155 : vector<128xf32> to vector<1x128xf32>
    %177 = vector.broadcast %176 : vector<1x128xf32> to vector<32x128xf32>
    %178 = arith.addf %175, %177 : vector<32x128xf32>
    %179 = vector.shape_cast %178 : vector<32x128xf32> to vector<2x16x128xf32>
    %180 = arith.addf %179, %103 : vector<2x16x128xf32>
    %c0_110 = arith.constant 0 : index
    %c0_111 = arith.constant 0 : index
    %181 = vector.load %arg9[%c0_110, %c0_111] : memref<3x128xf32, #tpu.memory_space<vmem>>, vector<1x128xf32>
    %182 = vector.shape_cast %181 : vector<1x128xf32> to vector<128xf32>
    %183 = vector.shape_cast %182 : vector<128xf32> to vector<1x1x128xf32>
    %184 = vector.broadcast %183 : vector<1x1x128xf32> to vector<2x16x128xf32>
    %185 = arith.mulf %26, %184 : vector<2x16x128xf32>
    %c0_112 = arith.constant 0 : index
    %c0_113 = arith.constant 0 : index
    %186 = vector.load %arg10[%c0_112, %c0_113] : memref<3x128xf32, #tpu.memory_space<vmem>>, vector<1x128xf32>
    %187 = vector.shape_cast %186 : vector<1x128xf32> to vector<128xf32>
    %188 = vector.shape_cast %187 : vector<128xf32> to vector<1x1x128xf32>
    %189 = vector.broadcast %188 : vector<1x1x128xf32> to vector<2x16x128xf32>
    %190 = arith.addf %185, %189 : vector<2x16x128xf32>
    %cst_114 = arith.constant 0.000000e+00 : f32
    %191 = vector.broadcast %cst_114 : f32 to vector<2x16x128xf32>
    %192 = arith.maximumf %190, %191 : vector<2x16x128xf32>
    %193 = vector.shape_cast %192 : vector<2x16x128xf32> to vector<32x128xf32>
    %c0_115 = arith.constant 0 : index
    %c0_116 = arith.constant 0 : index
    %c0_117 = arith.constant 0 : index
    %194 = vector.load %arg8[%c0_115, %c0_116, %c0_117] : memref<3x128x128xf32, #tpu.memory_space<vmem>>, vector<1x128x128xf32>
    %195 = vector.shape_cast %194 : vector<1x128x128xf32> to vector<128x128xf32>
    %cst_118 = arith.constant dense<0.000000e+00> : vector<32x128xf32>
    %196 = tpu.matmul %193, %195, %cst_118 {dimension_numbers = #tpu.dot_dimension_numbers<[1], [0], [0], [1], [0, 0, 1, 1], [], []>} : vector<32x128xf32>, vector<128x128xf32>, vector<32x128xf32> -> vector<32x128xf32>
    %c1_119 = arith.constant 1 : index
    %c0_120 = arith.constant 0 : index
    %197 = vector.load %arg9[%c1_119, %c0_120] : memref<3x128xf32, #tpu.memory_space<vmem>>, vector<1x128xf32>
    %198 = vector.shape_cast %197 : vector<1x128xf32> to vector<128xf32>
    %199 = vector.shape_cast %198 : vector<128xf32> to vector<1x1x128xf32>
    %200 = vector.broadcast %199 : vector<1x1x128xf32> to vector<2x16x128xf32>
    %201 = arith.mulf %103, %200 : vector<2x16x128xf32>
    %c1_121 = arith.constant 1 : index
    %c0_122 = arith.constant 0 : index
    %202 = vector.load %arg10[%c1_121, %c0_122] : memref<3x128xf32, #tpu.memory_space<vmem>>, vector<1x128xf32>
    %203 = vector.shape_cast %202 : vector<1x128xf32> to vector<128xf32>
    %204 = vector.shape_cast %203 : vector<128xf32> to vector<1x1x128xf32>
    %205 = vector.broadcast %204 : vector<1x1x128xf32> to vector<2x16x128xf32>
    %206 = arith.addf %201, %205 : vector<2x16x128xf32>
    %cst_123 = arith.constant 0.000000e+00 : f32
    %207 = vector.broadcast %cst_123 : f32 to vector<2x16x128xf32>
    %208 = arith.maximumf %206, %207 : vector<2x16x128xf32>
    %209 = vector.shape_cast %208 : vector<2x16x128xf32> to vector<32x128xf32>
    %c1_124 = arith.constant 1 : index
    %c0_125 = arith.constant 0 : index
    %c0_126 = arith.constant 0 : index
    %210 = vector.load %arg8[%c1_124, %c0_125, %c0_126] : memref<3x128x128xf32, #tpu.memory_space<vmem>>, vector<1x128x128xf32>
    %211 = vector.shape_cast %210 : vector<1x128x128xf32> to vector<128x128xf32>
    %cst_127 = arith.constant dense<0.000000e+00> : vector<32x128xf32>
    %212 = tpu.matmul %209, %211, %cst_127 {dimension_numbers = #tpu.dot_dimension_numbers<[1], [0], [0], [1], [0, 0, 1, 1], [], []>} : vector<32x128xf32>, vector<128x128xf32>, vector<32x128xf32> -> vector<32x128xf32>
    %213 = arith.addf %196, %212 : vector<32x128xf32>
    %c2_128 = arith.constant 2 : index
    %c0_129 = arith.constant 0 : index
    %214 = vector.load %arg9[%c2_128, %c0_129] : memref<3x128xf32, #tpu.memory_space<vmem>>, vector<1x128xf32>
    %215 = vector.shape_cast %214 : vector<1x128xf32> to vector<128xf32>
    %216 = vector.shape_cast %215 : vector<128xf32> to vector<1x1x128xf32>
    %217 = vector.broadcast %216 : vector<1x1x128xf32> to vector<2x16x128xf32>
    %218 = arith.mulf %180, %217 : vector<2x16x128xf32>
    %c2_130 = arith.constant 2 : index
    %c0_131 = arith.constant 0 : index
    %219 = vector.load %arg10[%c2_130, %c0_131] : memref<3x128xf32, #tpu.memory_space<vmem>>, vector<1x128xf32>
    %220 = vector.shape_cast %219 : vector<1x128xf32> to vector<128xf32>
    %221 = vector.shape_cast %220 : vector<128xf32> to vector<1x1x128xf32>
    %222 = vector.broadcast %221 : vector<1x1x128xf32> to vector<2x16x128xf32>
    %223 = arith.addf %218, %222 : vector<2x16x128xf32>
    %cst_132 = arith.constant 0.000000e+00 : f32
    %224 = vector.broadcast %cst_132 : f32 to vector<2x16x128xf32>
    %225 = arith.maximumf %223, %224 : vector<2x16x128xf32>
    %226 = vector.shape_cast %225 : vector<2x16x128xf32> to vector<32x128xf32>
    %c2_133 = arith.constant 2 : index
    %c0_134 = arith.constant 0 : index
    %c0_135 = arith.constant 0 : index
    %227 = vector.load %arg8[%c2_133, %c0_134, %c0_135] : memref<3x128x128xf32, #tpu.memory_space<vmem>>, vector<1x128x128xf32>
    %228 = vector.shape_cast %227 : vector<1x128x128xf32> to vector<128x128xf32>
    %cst_136 = arith.constant dense<0.000000e+00> : vector<32x128xf32>
    %229 = tpu.matmul %226, %228, %cst_136 {dimension_numbers = #tpu.dot_dimension_numbers<[1], [0], [0], [1], [0, 0, 1, 1], [], []>} : vector<32x128xf32>, vector<128x128xf32>, vector<32x128xf32> -> vector<32x128xf32>
    %230 = arith.addf %213, %229 : vector<32x128xf32>
    %c0_137 = arith.constant 0 : index
    %c0_138 = arith.constant 0 : index
    %231 = vector.load %arg14[%c0_137, %c0_138] : memref<2x128xf32, #tpu.memory_space<vmem>>, vector<1x128xf32>
    %232 = vector.shape_cast %231 : vector<1x128xf32> to vector<128xf32>
    %233 = vector.shape_cast %232 : vector<128xf32> to vector<1x128xf32>
    %234 = vector.broadcast %233 : vector<1x128xf32> to vector<32x128xf32>
    %235 = arith.addf %230, %234 : vector<32x128xf32>
    %236 = vector.shape_cast %235 : vector<32x128xf32> to vector<2x16x128xf32>
    %c4 = arith.constant 4 : index
    %c0_139 = arith.constant 0 : index
    %237 = vector.load %arg6[%c4, %c0_139] : memref<8x128xf32, #tpu.memory_space<vmem>>, vector<1x128xf32>
    %238 = vector.shape_cast %237 : vector<1x128xf32> to vector<128xf32>
    %239 = vector.shape_cast %238 : vector<128xf32> to vector<1x1x128xf32>
    %240 = vector.broadcast %239 : vector<1x1x128xf32> to vector<2x16x128xf32>
    %241 = arith.mulf %236, %240 : vector<2x16x128xf32>
    %c4_140 = arith.constant 4 : index
    %c0_141 = arith.constant 0 : index
    %242 = vector.load %arg7[%c4_140, %c0_141] : memref<8x128xf32, #tpu.memory_space<vmem>>, vector<1x128xf32>
    %243 = vector.shape_cast %242 : vector<1x128xf32> to vector<128xf32>
    %244 = vector.shape_cast %243 : vector<128xf32> to vector<1x1x128xf32>
    %245 = vector.broadcast %244 : vector<1x1x128xf32> to vector<2x16x128xf32>
    %246 = arith.addf %241, %245 : vector<2x16x128xf32>
    %cst_142 = arith.constant 0.000000e+00 : f32
    %247 = vector.broadcast %cst_142 : f32 to vector<2x16x128xf32>
    %248 = arith.maximumf %246, %247 : vector<2x16x128xf32>
    %c4_143 = arith.constant 4 : index
    %c0_144 = arith.constant 0 : index
    %249 = vector.load %arg5[%c4_143, %c0_144] : memref<8x128xf32, #tpu.memory_space<vmem>>, vector<1x128xf32>
    %250 = vector.shape_cast %249 : vector<1x128xf32> to vector<128xf32>
    %cst_145 = arith.constant 0.000000e+00 : f32
    %251 = vector.broadcast %cst_145 : f32 to vector<2x1x128xf32>
    %252 = vector.extract_strided_slice %248 {offsets = [0, 0, 0], sizes = [2, 15, 128], strides = [1, 1, 1]} : vector<2x16x128xf32> to vector<2x15x128xf32>
    %253 = tpu.concatenate %251, %252 in 1 : vector<2x1x128xf32>, vector<2x15x128xf32> -> vector<2x16x128xf32>
    %254 = vector.shape_cast %253 : vector<2x16x128xf32> to vector<32x128xf32>
    %c4_146 = arith.constant 4 : index
    %c0_147 = arith.constant 0 : index
    %c0_148 = arith.constant 0 : index
    %c0_149 = arith.constant 0 : index
    %255 = vector.load %arg4[%c4_146, %c0_147, %c0_148, %c0_149] : memref<8x3x128x128xf32, #tpu.memory_space<vmem>>, vector<1x1x128x128xf32>
    %256 = vector.shape_cast %255 : vector<1x1x128x128xf32> to vector<128x128xf32>
    %cst_150 = arith.constant dense<0.000000e+00> : vector<32x128xf32>
    %257 = tpu.matmul %254, %256, %cst_150 {dimension_numbers = #tpu.dot_dimension_numbers<[1], [0], [0], [1], [0, 0, 1, 1], [], []>} : vector<32x128xf32>, vector<128x128xf32>, vector<32x128xf32> -> vector<32x128xf32>
    %258 = vector.shape_cast %248 : vector<2x16x128xf32> to vector<32x128xf32>
    %c4_151 = arith.constant 4 : index
    %c1_152 = arith.constant 1 : index
    %c0_153 = arith.constant 0 : index
    %c0_154 = arith.constant 0 : index
    %259 = vector.load %arg4[%c4_151, %c1_152, %c0_153, %c0_154] : memref<8x3x128x128xf32, #tpu.memory_space<vmem>>, vector<1x1x128x128xf32>
    %260 = vector.shape_cast %259 : vector<1x1x128x128xf32> to vector<128x128xf32>
    %cst_155 = arith.constant dense<0.000000e+00> : vector<32x128xf32>
    %261 = tpu.matmul %258, %260, %cst_155 {dimension_numbers = #tpu.dot_dimension_numbers<[1], [0], [0], [1], [0, 0, 1, 1], [], []>} : vector<32x128xf32>, vector<128x128xf32>, vector<32x128xf32> -> vector<32x128xf32>
    %262 = arith.addf %257, %261 : vector<32x128xf32>
    %cst_156 = arith.constant 0.000000e+00 : f32
    %263 = vector.broadcast %cst_156 : f32 to vector<2x1x128xf32>
    %264 = vector.extract_strided_slice %248 {offsets = [0, 1, 0], sizes = [2, 15, 128], strides = [1, 1, 1]} : vector<2x16x128xf32> to vector<2x15x128xf32>
    %265 = tpu.concatenate %264, %263 in 1 : vector<2x15x128xf32>, vector<2x1x128xf32> -> vector<2x16x128xf32>
    %266 = vector.shape_cast %265 : vector<2x16x128xf32> to vector<32x128xf32>
    %c4_157 = arith.constant 4 : index
    %c2_158 = arith.constant 2 : index
    %c0_159 = arith.constant 0 : index
    %c0_160 = arith.constant 0 : index
    %267 = vector.load %arg4[%c4_157, %c2_158, %c0_159, %c0_160] : memref<8x3x128x128xf32, #tpu.memory_space<vmem>>, vector<1x1x128x128xf32>
    %268 = vector.shape_cast %267 : vector<1x1x128x128xf32> to vector<128x128xf32>
    %cst_161 = arith.constant dense<0.000000e+00> : vector<32x128xf32>
    %269 = tpu.matmul %266, %268, %cst_161 {dimension_numbers = #tpu.dot_dimension_numbers<[1], [0], [0], [1], [0, 0, 1, 1], [], []>} : vector<32x128xf32>, vector<128x128xf32>, vector<32x128xf32> -> vector<32x128xf32>
    %270 = arith.addf %262, %269 : vector<32x128xf32>
    %271 = vector.shape_cast %250 : vector<128xf32> to vector<1x128xf32>
    %272 = vector.broadcast %271 : vector<1x128xf32> to vector<32x128xf32>
    %273 = arith.addf %270, %272 : vector<32x128xf32>
    %274 = vector.shape_cast %273 : vector<32x128xf32> to vector<2x16x128xf32>
    %c5 = arith.constant 5 : index
    %c0_162 = arith.constant 0 : index
    %275 = vector.load %arg6[%c5, %c0_162] : memref<8x128xf32, #tpu.memory_space<vmem>>, vector<1x128xf32>
    %276 = vector.shape_cast %275 : vector<1x128xf32> to vector<128xf32>
    %277 = vector.shape_cast %276 : vector<128xf32> to vector<1x1x128xf32>
    %278 = vector.broadcast %277 : vector<1x1x128xf32> to vector<2x16x128xf32>
    %279 = arith.mulf %274, %278 : vector<2x16x128xf32>
    %c5_163 = arith.constant 5 : index
    %c0_164 = arith.constant 0 : index
    %280 = vector.load %arg7[%c5_163, %c0_164] : memref<8x128xf32, #tpu.memory_space<vmem>>, vector<1x128xf32>
    %281 = vector.shape_cast %280 : vector<1x128xf32> to vector<128xf32>
    %282 = vector.shape_cast %281 : vector<128xf32> to vector<1x1x128xf32>
    %283 = vector.broadcast %282 : vector<1x1x128xf32> to vector<2x16x128xf32>
    %284 = arith.addf %279, %283 : vector<2x16x128xf32>
    %cst_165 = arith.constant 0.000000e+00 : f32
    %285 = vector.broadcast %cst_165 : f32 to vector<2x16x128xf32>
    %286 = arith.maximumf %284, %285 : vector<2x16x128xf32>
    %c5_166 = arith.constant 5 : index
    %c0_167 = arith.constant 0 : index
    %287 = vector.load %arg5[%c5_166, %c0_167] : memref<8x128xf32, #tpu.memory_space<vmem>>, vector<1x128xf32>
    %288 = vector.shape_cast %287 : vector<1x128xf32> to vector<128xf32>
    %cst_168 = arith.constant 0.000000e+00 : f32
    %289 = vector.broadcast %cst_168 : f32 to vector<2x1x128xf32>
    %290 = vector.extract_strided_slice %286 {offsets = [0, 0, 0], sizes = [2, 15, 128], strides = [1, 1, 1]} : vector<2x16x128xf32> to vector<2x15x128xf32>
    %291 = tpu.concatenate %289, %290 in 1 : vector<2x1x128xf32>, vector<2x15x128xf32> -> vector<2x16x128xf32>
    %292 = vector.shape_cast %291 : vector<2x16x128xf32> to vector<32x128xf32>
    %c5_169 = arith.constant 5 : index
    %c0_170 = arith.constant 0 : index
    %c0_171 = arith.constant 0 : index
    %c0_172 = arith.constant 0 : index
    %293 = vector.load %arg4[%c5_169, %c0_170, %c0_171, %c0_172] : memref<8x3x128x128xf32, #tpu.memory_space<vmem>>, vector<1x1x128x128xf32>
    %294 = vector.shape_cast %293 : vector<1x1x128x128xf32> to vector<128x128xf32>
    %cst_173 = arith.constant dense<0.000000e+00> : vector<32x128xf32>
    %295 = tpu.matmul %292, %294, %cst_173 {dimension_numbers = #tpu.dot_dimension_numbers<[1], [0], [0], [1], [0, 0, 1, 1], [], []>} : vector<32x128xf32>, vector<128x128xf32>, vector<32x128xf32> -> vector<32x128xf32>
    %296 = vector.shape_cast %286 : vector<2x16x128xf32> to vector<32x128xf32>
    %c5_174 = arith.constant 5 : index
    %c1_175 = arith.constant 1 : index
    %c0_176 = arith.constant 0 : index
    %c0_177 = arith.constant 0 : index
    %297 = vector.load %arg4[%c5_174, %c1_175, %c0_176, %c0_177] : memref<8x3x128x128xf32, #tpu.memory_space<vmem>>, vector<1x1x128x128xf32>
    %298 = vector.shape_cast %297 : vector<1x1x128x128xf32> to vector<128x128xf32>
    %cst_178 = arith.constant dense<0.000000e+00> : vector<32x128xf32>
    %299 = tpu.matmul %296, %298, %cst_178 {dimension_numbers = #tpu.dot_dimension_numbers<[1], [0], [0], [1], [0, 0, 1, 1], [], []>} : vector<32x128xf32>, vector<128x128xf32>, vector<32x128xf32> -> vector<32x128xf32>
    %300 = arith.addf %295, %299 : vector<32x128xf32>
    %cst_179 = arith.constant 0.000000e+00 : f32
    %301 = vector.broadcast %cst_179 : f32 to vector<2x1x128xf32>
    %302 = vector.extract_strided_slice %286 {offsets = [0, 1, 0], sizes = [2, 15, 128], strides = [1, 1, 1]} : vector<2x16x128xf32> to vector<2x15x128xf32>
    %303 = tpu.concatenate %302, %301 in 1 : vector<2x15x128xf32>, vector<2x1x128xf32> -> vector<2x16x128xf32>
    %304 = vector.shape_cast %303 : vector<2x16x128xf32> to vector<32x128xf32>
    %c5_180 = arith.constant 5 : index
    %c2_181 = arith.constant 2 : index
    %c0_182 = arith.constant 0 : index
    %c0_183 = arith.constant 0 : index
    %305 = vector.load %arg4[%c5_180, %c2_181, %c0_182, %c0_183] : memref<8x3x128x128xf32, #tpu.memory_space<vmem>>, vector<1x1x128x128xf32>
    %306 = vector.shape_cast %305 : vector<1x1x128x128xf32> to vector<128x128xf32>
    %cst_184 = arith.constant dense<0.000000e+00> : vector<32x128xf32>
    %307 = tpu.matmul %304, %306, %cst_184 {dimension_numbers = #tpu.dot_dimension_numbers<[1], [0], [0], [1], [0, 0, 1, 1], [], []>} : vector<32x128xf32>, vector<128x128xf32>, vector<32x128xf32> -> vector<32x128xf32>
    %308 = arith.addf %300, %307 : vector<32x128xf32>
    %309 = vector.shape_cast %288 : vector<128xf32> to vector<1x128xf32>
    %310 = vector.broadcast %309 : vector<1x128xf32> to vector<32x128xf32>
    %311 = arith.addf %308, %310 : vector<32x128xf32>
    %312 = vector.shape_cast %311 : vector<32x128xf32> to vector<2x16x128xf32>
    %313 = arith.addf %312, %236 : vector<2x16x128xf32>
    %c6 = arith.constant 6 : index
    %c0_185 = arith.constant 0 : index
    %314 = vector.load %arg6[%c6, %c0_185] : memref<8x128xf32, #tpu.memory_space<vmem>>, vector<1x128xf32>
    %315 = vector.shape_cast %314 : vector<1x128xf32> to vector<128xf32>
    %316 = vector.shape_cast %315 : vector<128xf32> to vector<1x1x128xf32>
    %317 = vector.broadcast %316 : vector<1x1x128xf32> to vector<2x16x128xf32>
    %318 = arith.mulf %313, %317 : vector<2x16x128xf32>
    %c6_186 = arith.constant 6 : index
    %c0_187 = arith.constant 0 : index
    %319 = vector.load %arg7[%c6_186, %c0_187] : memref<8x128xf32, #tpu.memory_space<vmem>>, vector<1x128xf32>
    %320 = vector.shape_cast %319 : vector<1x128xf32> to vector<128xf32>
    %321 = vector.shape_cast %320 : vector<128xf32> to vector<1x1x128xf32>
    %322 = vector.broadcast %321 : vector<1x1x128xf32> to vector<2x16x128xf32>
    %323 = arith.addf %318, %322 : vector<2x16x128xf32>
    %cst_188 = arith.constant 0.000000e+00 : f32
    %324 = vector.broadcast %cst_188 : f32 to vector<2x16x128xf32>
    %325 = arith.maximumf %323, %324 : vector<2x16x128xf32>
    %c6_189 = arith.constant 6 : index
    %c0_190 = arith.constant 0 : index
    %326 = vector.load %arg5[%c6_189, %c0_190] : memref<8x128xf32, #tpu.memory_space<vmem>>, vector<1x128xf32>
    %327 = vector.shape_cast %326 : vector<1x128xf32> to vector<128xf32>
    %cst_191 = arith.constant 0.000000e+00 : f32
    %328 = vector.broadcast %cst_191 : f32 to vector<2x1x128xf32>
    %329 = vector.extract_strided_slice %325 {offsets = [0, 0, 0], sizes = [2, 15, 128], strides = [1, 1, 1]} : vector<2x16x128xf32> to vector<2x15x128xf32>
    %330 = tpu.concatenate %328, %329 in 1 : vector<2x1x128xf32>, vector<2x15x128xf32> -> vector<2x16x128xf32>
    %331 = vector.shape_cast %330 : vector<2x16x128xf32> to vector<32x128xf32>
    %c6_192 = arith.constant 6 : index
    %c0_193 = arith.constant 0 : index
    %c0_194 = arith.constant 0 : index
    %c0_195 = arith.constant 0 : index
    %332 = vector.load %arg4[%c6_192, %c0_193, %c0_194, %c0_195] : memref<8x3x128x128xf32, #tpu.memory_space<vmem>>, vector<1x1x128x128xf32>
    %333 = vector.shape_cast %332 : vector<1x1x128x128xf32> to vector<128x128xf32>
    %cst_196 = arith.constant dense<0.000000e+00> : vector<32x128xf32>
    %334 = tpu.matmul %331, %333, %cst_196 {dimension_numbers = #tpu.dot_dimension_numbers<[1], [0], [0], [1], [0, 0, 1, 1], [], []>} : vector<32x128xf32>, vector<128x128xf32>, vector<32x128xf32> -> vector<32x128xf32>
    %335 = vector.shape_cast %325 : vector<2x16x128xf32> to vector<32x128xf32>
    %c6_197 = arith.constant 6 : index
    %c1_198 = arith.constant 1 : index
    %c0_199 = arith.constant 0 : index
    %c0_200 = arith.constant 0 : index
    %336 = vector.load %arg4[%c6_197, %c1_198, %c0_199, %c0_200] : memref<8x3x128x128xf32, #tpu.memory_space<vmem>>, vector<1x1x128x128xf32>
    %337 = vector.shape_cast %336 : vector<1x1x128x128xf32> to vector<128x128xf32>
    %cst_201 = arith.constant dense<0.000000e+00> : vector<32x128xf32>
    %338 = tpu.matmul %335, %337, %cst_201 {dimension_numbers = #tpu.dot_dimension_numbers<[1], [0], [0], [1], [0, 0, 1, 1], [], []>} : vector<32x128xf32>, vector<128x128xf32>, vector<32x128xf32> -> vector<32x128xf32>
    %339 = arith.addf %334, %338 : vector<32x128xf32>
    %cst_202 = arith.constant 0.000000e+00 : f32
    %340 = vector.broadcast %cst_202 : f32 to vector<2x1x128xf32>
    %341 = vector.extract_strided_slice %325 {offsets = [0, 1, 0], sizes = [2, 15, 128], strides = [1, 1, 1]} : vector<2x16x128xf32> to vector<2x15x128xf32>
    %342 = tpu.concatenate %341, %340 in 1 : vector<2x15x128xf32>, vector<2x1x128xf32> -> vector<2x16x128xf32>
    %343 = vector.shape_cast %342 : vector<2x16x128xf32> to vector<32x128xf32>
    %c6_203 = arith.constant 6 : index
    %c2_204 = arith.constant 2 : index
    %c0_205 = arith.constant 0 : index
    %c0_206 = arith.constant 0 : index
    %344 = vector.load %arg4[%c6_203, %c2_204, %c0_205, %c0_206] : memref<8x3x128x128xf32, #tpu.memory_space<vmem>>, vector<1x1x128x128xf32>
    %345 = vector.shape_cast %344 : vector<1x1x128x128xf32> to vector<128x128xf32>
    %cst_207 = arith.constant dense<0.000000e+00> : vector<32x128xf32>
    %346 = tpu.matmul %343, %345, %cst_207 {dimension_numbers = #tpu.dot_dimension_numbers<[1], [0], [0], [1], [0, 0, 1, 1], [], []>} : vector<32x128xf32>, vector<128x128xf32>, vector<32x128xf32> -> vector<32x128xf32>
    %347 = arith.addf %339, %346 : vector<32x128xf32>
    %348 = vector.shape_cast %327 : vector<128xf32> to vector<1x128xf32>
    %349 = vector.broadcast %348 : vector<1x128xf32> to vector<32x128xf32>
    %350 = arith.addf %347, %349 : vector<32x128xf32>
    %351 = vector.shape_cast %350 : vector<32x128xf32> to vector<2x16x128xf32>
    %c7 = arith.constant 7 : index
    %c0_208 = arith.constant 0 : index
    %352 = vector.load %arg6[%c7, %c0_208] : memref<8x128xf32, #tpu.memory_space<vmem>>, vector<1x128xf32>
    %353 = vector.shape_cast %352 : vector<1x128xf32> to vector<128xf32>
    %354 = vector.shape_cast %353 : vector<128xf32> to vector<1x1x128xf32>
    %355 = vector.broadcast %354 : vector<1x1x128xf32> to vector<2x16x128xf32>
    %356 = arith.mulf %351, %355 : vector<2x16x128xf32>
    %c7_209 = arith.constant 7 : index
    %c0_210 = arith.constant 0 : index
    %357 = vector.load %arg7[%c7_209, %c0_210] : memref<8x128xf32, #tpu.memory_space<vmem>>, vector<1x128xf32>
    %358 = vector.shape_cast %357 : vector<1x128xf32> to vector<128xf32>
    %359 = vector.shape_cast %358 : vector<128xf32> to vector<1x1x128xf32>
    %360 = vector.broadcast %359 : vector<1x1x128xf32> to vector<2x16x128xf32>
    %361 = arith.addf %356, %360 : vector<2x16x128xf32>
    %cst_211 = arith.constant 0.000000e+00 : f32
    %362 = vector.broadcast %cst_211 : f32 to vector<2x16x128xf32>
    %363 = arith.maximumf %361, %362 : vector<2x16x128xf32>
    %c7_212 = arith.constant 7 : index
    %c0_213 = arith.constant 0 : index
    %364 = vector.load %arg5[%c7_212, %c0_213] : memref<8x128xf32, #tpu.memory_space<vmem>>, vector<1x128xf32>
    %365 = vector.shape_cast %364 : vector<1x128xf32> to vector<128xf32>
    %cst_214 = arith.constant 0.000000e+00 : f32
    %366 = vector.broadcast %cst_214 : f32 to vector<2x1x128xf32>
    %367 = vector.extract_strided_slice %363 {offsets = [0, 0, 0], sizes = [2, 15, 128], strides = [1, 1, 1]} : vector<2x16x128xf32> to vector<2x15x128xf32>
    %368 = tpu.concatenate %366, %367 in 1 : vector<2x1x128xf32>, vector<2x15x128xf32> -> vector<2x16x128xf32>
    %369 = vector.shape_cast %368 : vector<2x16x128xf32> to vector<32x128xf32>
    %c7_215 = arith.constant 7 : index
    %c0_216 = arith.constant 0 : index
    %c0_217 = arith.constant 0 : index
    %c0_218 = arith.constant 0 : index
    %370 = vector.load %arg4[%c7_215, %c0_216, %c0_217, %c0_218] : memref<8x3x128x128xf32, #tpu.memory_space<vmem>>, vector<1x1x128x128xf32>
    %371 = vector.shape_cast %370 : vector<1x1x128x128xf32> to vector<128x128xf32>
    %cst_219 = arith.constant dense<0.000000e+00> : vector<32x128xf32>
    %372 = tpu.matmul %369, %371, %cst_219 {dimension_numbers = #tpu.dot_dimension_numbers<[1], [0], [0], [1], [0, 0, 1, 1], [], []>} : vector<32x128xf32>, vector<128x128xf32>, vector<32x128xf32> -> vector<32x128xf32>
    %373 = vector.shape_cast %363 : vector<2x16x128xf32> to vector<32x128xf32>
    %c7_220 = arith.constant 7 : index
    %c1_221 = arith.constant 1 : index
    %c0_222 = arith.constant 0 : index
    %c0_223 = arith.constant 0 : index
    %374 = vector.load %arg4[%c7_220, %c1_221, %c0_222, %c0_223] : memref<8x3x128x128xf32, #tpu.memory_space<vmem>>, vector<1x1x128x128xf32>
    %375 = vector.shape_cast %374 : vector<1x1x128x128xf32> to vector<128x128xf32>
    %cst_224 = arith.constant dense<0.000000e+00> : vector<32x128xf32>
    %376 = tpu.matmul %373, %375, %cst_224 {dimension_numbers = #tpu.dot_dimension_numbers<[1], [0], [0], [1], [0, 0, 1, 1], [], []>} : vector<32x128xf32>, vector<128x128xf32>, vector<32x128xf32> -> vector<32x128xf32>
    %377 = arith.addf %372, %376 : vector<32x128xf32>
    %cst_225 = arith.constant 0.000000e+00 : f32
    %378 = vector.broadcast %cst_225 : f32 to vector<2x1x128xf32>
    %379 = vector.extract_strided_slice %363 {offsets = [0, 1, 0], sizes = [2, 15, 128], strides = [1, 1, 1]} : vector<2x16x128xf32> to vector<2x15x128xf32>
    %380 = tpu.concatenate %379, %378 in 1 : vector<2x15x128xf32>, vector<2x1x128xf32> -> vector<2x16x128xf32>
    %381 = vector.shape_cast %380 : vector<2x16x128xf32> to vector<32x128xf32>
    %c7_226 = arith.constant 7 : index
    %c2_227 = arith.constant 2 : index
    %c0_228 = arith.constant 0 : index
    %c0_229 = arith.constant 0 : index
    %382 = vector.load %arg4[%c7_226, %c2_227, %c0_228, %c0_229] : memref<8x3x128x128xf32, #tpu.memory_space<vmem>>, vector<1x1x128x128xf32>
    %383 = vector.shape_cast %382 : vector<1x1x128x128xf32> to vector<128x128xf32>
    %cst_230 = arith.constant dense<0.000000e+00> : vector<32x128xf32>
    %384 = tpu.matmul %381, %383, %cst_230 {dimension_numbers = #tpu.dot_dimension_numbers<[1], [0], [0], [1], [0, 0, 1, 1], [], []>} : vector<32x128xf32>, vector<128x128xf32>, vector<32x128xf32> -> vector<32x128xf32>
    %385 = arith.addf %377, %384 : vector<32x128xf32>
    %386 = vector.shape_cast %365 : vector<128xf32> to vector<1x128xf32>
    %387 = vector.broadcast %386 : vector<1x128xf32> to vector<32x128xf32>
    %388 = arith.addf %385, %387 : vector<32x128xf32>
    %389 = vector.shape_cast %388 : vector<32x128xf32> to vector<2x16x128xf32>
    %390 = arith.addf %389, %313 : vector<2x16x128xf32>
    %c0_231 = arith.constant 0 : index
    %c0_232 = arith.constant 0 : index
    %391 = vector.load %arg12[%c0_231, %c0_232] : memref<4x128xf32, #tpu.memory_space<vmem>>, vector<1x128xf32>
    %392 = vector.shape_cast %391 : vector<1x128xf32> to vector<128xf32>
    %393 = vector.shape_cast %392 : vector<128xf32> to vector<1x1x128xf32>
    %394 = vector.broadcast %393 : vector<1x1x128xf32> to vector<2x16x128xf32>
    %395 = arith.mulf %26, %394 : vector<2x16x128xf32>
    %c0_233 = arith.constant 0 : index
    %c0_234 = arith.constant 0 : index
    %396 = vector.load %arg13[%c0_233, %c0_234] : memref<4x128xf32, #tpu.memory_space<vmem>>, vector<1x128xf32>
    %397 = vector.shape_cast %396 : vector<1x128xf32> to vector<128xf32>
    %398 = vector.shape_cast %397 : vector<128xf32> to vector<1x1x128xf32>
    %399 = vector.broadcast %398 : vector<1x1x128xf32> to vector<2x16x128xf32>
    %400 = arith.addf %395, %399 : vector<2x16x128xf32>
    %cst_235 = arith.constant 0.000000e+00 : f32
    %401 = vector.broadcast %cst_235 : f32 to vector<2x16x128xf32>
    %402 = arith.maximumf %400, %401 : vector<2x16x128xf32>
    %403 = vector.shape_cast %402 : vector<2x16x128xf32> to vector<32x128xf32>
    %c0_236 = arith.constant 0 : index
    %c0_237 = arith.constant 0 : index
    %c0_238 = arith.constant 0 : index
    %404 = vector.load %arg11[%c0_236, %c0_237, %c0_238] : memref<4x128x128xf32, #tpu.memory_space<vmem>>, vector<1x128x128xf32>
    %405 = vector.shape_cast %404 : vector<1x128x128xf32> to vector<128x128xf32>
    %cst_239 = arith.constant dense<0.000000e+00> : vector<32x128xf32>
    %406 = tpu.matmul %403, %405, %cst_239 {dimension_numbers = #tpu.dot_dimension_numbers<[1], [0], [0], [1], [0, 0, 1, 1], [], []>} : vector<32x128xf32>, vector<128x128xf32>, vector<32x128xf32> -> vector<32x128xf32>
    %c1_240 = arith.constant 1 : index
    %c0_241 = arith.constant 0 : index
    %407 = vector.load %arg12[%c1_240, %c0_241] : memref<4x128xf32, #tpu.memory_space<vmem>>, vector<1x128xf32>
    %408 = vector.shape_cast %407 : vector<1x128xf32> to vector<128xf32>
    %409 = vector.shape_cast %408 : vector<128xf32> to vector<1x1x128xf32>
    %410 = vector.broadcast %409 : vector<1x1x128xf32> to vector<2x16x128xf32>
    %411 = arith.mulf %236, %410 : vector<2x16x128xf32>
    %c1_242 = arith.constant 1 : index
    %c0_243 = arith.constant 0 : index
    %412 = vector.load %arg13[%c1_242, %c0_243] : memref<4x128xf32, #tpu.memory_space<vmem>>, vector<1x128xf32>
    %413 = vector.shape_cast %412 : vector<1x128xf32> to vector<128xf32>
    %414 = vector.shape_cast %413 : vector<128xf32> to vector<1x1x128xf32>
    %415 = vector.broadcast %414 : vector<1x1x128xf32> to vector<2x16x128xf32>
    %416 = arith.addf %411, %415 : vector<2x16x128xf32>
    %cst_244 = arith.constant 0.000000e+00 : f32
    %417 = vector.broadcast %cst_244 : f32 to vector<2x16x128xf32>
    %418 = arith.maximumf %416, %417 : vector<2x16x128xf32>
    %419 = vector.shape_cast %418 : vector<2x16x128xf32> to vector<32x128xf32>
    %c1_245 = arith.constant 1 : index
    %c0_246 = arith.constant 0 : index
    %c0_247 = arith.constant 0 : index
    %420 = vector.load %arg11[%c1_245, %c0_246, %c0_247] : memref<4x128x128xf32, #tpu.memory_space<vmem>>, vector<1x128x128xf32>
    %421 = vector.shape_cast %420 : vector<1x128x128xf32> to vector<128x128xf32>
    %cst_248 = arith.constant dense<0.000000e+00> : vector<32x128xf32>
    %422 = tpu.matmul %419, %421, %cst_248 {dimension_numbers = #tpu.dot_dimension_numbers<[1], [0], [0], [1], [0, 0, 1, 1], [], []>} : vector<32x128xf32>, vector<128x128xf32>, vector<32x128xf32> -> vector<32x128xf32>
    %423 = arith.addf %406, %422 : vector<32x128xf32>
    %c2_249 = arith.constant 2 : index
    %c0_250 = arith.constant 0 : index
    %424 = vector.load %arg12[%c2_249, %c0_250] : memref<4x128xf32, #tpu.memory_space<vmem>>, vector<1x128xf32>
    %425 = vector.shape_cast %424 : vector<1x128xf32> to vector<128xf32>
    %426 = vector.shape_cast %425 : vector<128xf32> to vector<1x1x128xf32>
    %427 = vector.broadcast %426 : vector<1x1x128xf32> to vector<2x16x128xf32>
    %428 = arith.mulf %313, %427 : vector<2x16x128xf32>
    %c2_251 = arith.constant 2 : index
    %c0_252 = arith.constant 0 : index
    %429 = vector.load %arg13[%c2_251, %c0_252] : memref<4x128xf32, #tpu.memory_space<vmem>>, vector<1x128xf32>
    %430 = vector.shape_cast %429 : vector<1x128xf32> to vector<128xf32>
    %431 = vector.shape_cast %430 : vector<128xf32> to vector<1x1x128xf32>
    %432 = vector.broadcast %431 : vector<1x1x128xf32> to vector<2x16x128xf32>
    %433 = arith.addf %428, %432 : vector<2x16x128xf32>
    %cst_253 = arith.constant 0.000000e+00 : f32
    %434 = vector.broadcast %cst_253 : f32 to vector<2x16x128xf32>
    %435 = arith.maximumf %433, %434 : vector<2x16x128xf32>
    %436 = vector.shape_cast %435 : vector<2x16x128xf32> to vector<32x128xf32>
    %c2_254 = arith.constant 2 : index
    %c0_255 = arith.constant 0 : index
    %c0_256 = arith.constant 0 : index
    %437 = vector.load %arg11[%c2_254, %c0_255, %c0_256] : memref<4x128x128xf32, #tpu.memory_space<vmem>>, vector<1x128x128xf32>
    %438 = vector.shape_cast %437 : vector<1x128x128xf32> to vector<128x128xf32>
    %cst_257 = arith.constant dense<0.000000e+00> : vector<32x128xf32>
    %439 = tpu.matmul %436, %438, %cst_257 {dimension_numbers = #tpu.dot_dimension_numbers<[1], [0], [0], [1], [0, 0, 1, 1], [], []>} : vector<32x128xf32>, vector<128x128xf32>, vector<32x128xf32> -> vector<32x128xf32>
    %440 = arith.addf %423, %439 : vector<32x128xf32>
    %c3_258 = arith.constant 3 : index
    %c0_259 = arith.constant 0 : index
    %441 = vector.load %arg12[%c3_258, %c0_259] : memref<4x128xf32, #tpu.memory_space<vmem>>, vector<1x128xf32>
    %442 = vector.shape_cast %441 : vector<1x128xf32> to vector<128xf32>
    %443 = vector.shape_cast %442 : vector<128xf32> to vector<1x1x128xf32>
    %444 = vector.broadcast %443 : vector<1x1x128xf32> to vector<2x16x128xf32>
    %445 = arith.mulf %390, %444 : vector<2x16x128xf32>
    %c3_260 = arith.constant 3 : index
    %c0_261 = arith.constant 0 : index
    %446 = vector.load %arg13[%c3_260, %c0_261] : memref<4x128xf32, #tpu.memory_space<vmem>>, vector<1x128xf32>
    %447 = vector.shape_cast %446 : vector<1x128xf32> to vector<128xf32>
    %448 = vector.shape_cast %447 : vector<128xf32> to vector<1x1x128xf32>
    %449 = vector.broadcast %448 : vector<1x1x128xf32> to vector<2x16x128xf32>
    %450 = arith.addf %445, %449 : vector<2x16x128xf32>
    %cst_262 = arith.constant 0.000000e+00 : f32
    %451 = vector.broadcast %cst_262 : f32 to vector<2x16x128xf32>
    %452 = arith.maximumf %450, %451 : vector<2x16x128xf32>
    %453 = vector.shape_cast %452 : vector<2x16x128xf32> to vector<32x128xf32>
    %c3_263 = arith.constant 3 : index
    %c0_264 = arith.constant 0 : index
    %c0_265 = arith.constant 0 : index
    %454 = vector.load %arg11[%c3_263, %c0_264, %c0_265] : memref<4x128x128xf32, #tpu.memory_space<vmem>>, vector<1x128x128xf32>
    %455 = vector.shape_cast %454 : vector<1x128x128xf32> to vector<128x128xf32>
    %cst_266 = arith.constant dense<0.000000e+00> : vector<32x128xf32>
    %456 = tpu.matmul %453, %455, %cst_266 {dimension_numbers = #tpu.dot_dimension_numbers<[1], [0], [0], [1], [0, 0, 1, 1], [], []>} : vector<32x128xf32>, vector<128x128xf32>, vector<32x128xf32> -> vector<32x128xf32>
    %457 = arith.addf %440, %456 : vector<32x128xf32>
    %c1_267 = arith.constant 1 : index
    %c0_268 = arith.constant 0 : index
    %458 = vector.load %arg14[%c1_267, %c0_268] : memref<2x128xf32, #tpu.memory_space<vmem>>, vector<1x128xf32>
    %459 = vector.shape_cast %458 : vector<1x128xf32> to vector<128xf32>
    %460 = vector.shape_cast %459 : vector<128xf32> to vector<1x128xf32>
    %461 = vector.broadcast %460 : vector<1x128xf32> to vector<32x128xf32>
    %462 = arith.addf %457, %461 : vector<32x128xf32>
    %463 = vector.shape_cast %462 : vector<32x128xf32> to vector<2x16x128xf32>
    %c0_269 = arith.constant 0 : index
    %c0_270 = arith.constant 0 : index
    %464 = vector.load %arg16[%c0_269, %c0_270] : memref<1x48xf32, #tpu.memory_space<vmem>>, vector<1x48xf32>
    %465 = vector.shape_cast %464 : vector<1x48xf32> to vector<48xf32>
    %cst_271 = arith.constant 0.000000e+00 : f32
    %466 = vector.broadcast %cst_271 : f32 to vector<2x1x128xf32>
    %467 = vector.extract_strided_slice %463 {offsets = [0, 0, 0], sizes = [2, 15, 128], strides = [1, 1, 1]} : vector<2x16x128xf32> to vector<2x15x128xf32>
    %468 = tpu.concatenate %466, %467 in 1 : vector<2x1x128xf32>, vector<2x15x128xf32> -> vector<2x16x128xf32>
    %469 = vector.shape_cast %468 : vector<2x16x128xf32> to vector<32x128xf32>
    %c0_272 = arith.constant 0 : index
    %c0_273 = arith.constant 0 : index
    %c0_274 = arith.constant 0 : index
    %470 = vector.load %arg15[%c0_272, %c0_273, %c0_274] : memref<3x128x48xf32, #tpu.memory_space<vmem>>, vector<1x128x48xf32>
    %471 = vector.shape_cast %470 : vector<1x128x48xf32> to vector<128x48xf32>
    %cst_275 = arith.constant dense<0.000000e+00> : vector<32x48xf32>
    %472 = tpu.matmul %469, %471, %cst_275 {dimension_numbers = #tpu.dot_dimension_numbers<[1], [0], [0], [1], [0, 0, 1, 1], [], []>} : vector<32x128xf32>, vector<128x48xf32>, vector<32x48xf32> -> vector<32x48xf32>
    %473 = vector.shape_cast %463 : vector<2x16x128xf32> to vector<32x128xf32>
    %c1_276 = arith.constant 1 : index
    %c0_277 = arith.constant 0 : index
    %c0_278 = arith.constant 0 : index
    %474 = vector.load %arg15[%c1_276, %c0_277, %c0_278] : memref<3x128x48xf32, #tpu.memory_space<vmem>>, vector<1x128x48xf32>
    %475 = vector.shape_cast %474 : vector<1x128x48xf32> to vector<128x48xf32>
    %cst_279 = arith.constant dense<0.000000e+00> : vector<32x48xf32>
    %476 = tpu.matmul %473, %475, %cst_279 {dimension_numbers = #tpu.dot_dimension_numbers<[1], [0], [0], [1], [0, 0, 1, 1], [], []>} : vector<32x128xf32>, vector<128x48xf32>, vector<32x48xf32> -> vector<32x48xf32>
    %477 = arith.addf %472, %476 : vector<32x48xf32>
    %cst_280 = arith.constant 0.000000e+00 : f32
    %478 = vector.broadcast %cst_280 : f32 to vector<2x1x128xf32>
    %479 = vector.extract_strided_slice %463 {offsets = [0, 1, 0], sizes = [2, 15, 128], strides = [1, 1, 1]} : vector<2x16x128xf32> to vector<2x15x128xf32>
    %480 = tpu.concatenate %479, %478 in 1 : vector<2x15x128xf32>, vector<2x1x128xf32> -> vector<2x16x128xf32>
    %481 = vector.shape_cast %480 : vector<2x16x128xf32> to vector<32x128xf32>
    %c2_281 = arith.constant 2 : index
    %c0_282 = arith.constant 0 : index
    %c0_283 = arith.constant 0 : index
    %482 = vector.load %arg15[%c2_281, %c0_282, %c0_283] : memref<3x128x48xf32, #tpu.memory_space<vmem>>, vector<1x128x48xf32>
    %483 = vector.shape_cast %482 : vector<1x128x48xf32> to vector<128x48xf32>
    %cst_284 = arith.constant dense<0.000000e+00> : vector<32x48xf32>
    %484 = tpu.matmul %481, %483, %cst_284 {dimension_numbers = #tpu.dot_dimension_numbers<[1], [0], [0], [1], [0, 0, 1, 1], [], []>} : vector<32x128xf32>, vector<128x48xf32>, vector<32x48xf32> -> vector<32x48xf32>
    %485 = arith.addf %477, %484 : vector<32x48xf32>
    %486 = vector.shape_cast %465 : vector<48xf32> to vector<1x48xf32>
    %487 = vector.broadcast %486 : vector<1x48xf32> to vector<32x48xf32>
    %488 = arith.addf %485, %487 : vector<32x48xf32>
    %489 = vector.shape_cast %488 : vector<32x48xf32> to vector<2x16x48xf32>
    %490 = arith.addf %489, %0 : vector<2x16x48xf32>
    %c0_285 = arith.constant 0 : index
    %c0_286 = arith.constant 0 : index
    %c0_287 = arith.constant 0 : index
    %491 = vector.load %arg17[%c0_285, %c0_286, %c0_287] : memref<2x16x48xf32, #tpu.memory_space<vmem>>, vector<2x16x48xf32>
    tpu.vector_store %arg17[%c0_285, %c0_286, %c0_287], %490 {strides = array<i32>} : memref<2x16x48xf32, #tpu.memory_space<vmem>>, vector<2x16x48xf32>,
    return
  }
  func.func @transform_0(%arg0: i32) -> (i32, i32, i32) {
    %c0_i32 = arith.constant 0 : i32
    %c0_i32_0 = arith.constant 0 : i32
    %c0_i32_1 = arith.constant 0 : i32
    return %arg0, %c0_i32, %c0_i32_0 : i32, i32, i32
  }
  func.func @transform_1(%arg0: i32) -> (i32, i32, i32) {
    %c0_i32 = arith.constant 0 : i32
    %c0_i32_0 = arith.constant 0 : i32
    %c0_i32_1 = arith.constant 0 : i32
    %c0_i32_2 = arith.constant 0 : i32
    return %c0_i32, %c0_i32_0, %c0_i32_1 : i32, i32, i32
  }
  func.func @transform_2(%arg0: i32) -> (i32, i32) {
    %c0_i32 = arith.constant 0 : i32
    %c0_i32_0 = arith.constant 0 : i32
    %c0_i32_1 = arith.constant 0 : i32
    return %c0_i32, %c0_i32_0 : i32, i32
  }
  func.func @transform_3(%arg0: i32) -> (i32, i32, i32, i32) {
    %c0_i32 = arith.constant 0 : i32
    %c0_i32_0 = arith.constant 0 : i32
    %c0_i32_1 = arith.constant 0 : i32
    %c0_i32_2 = arith.constant 0 : i32
    %c0_i32_3 = arith.constant 0 : i32
    return %c0_i32, %c0_i32_0, %c0_i32_1, %c0_i32_2 : i32, i32, i32, i32
  }
  func.func @transform_4(%arg0: i32) -> (i32, i32) {
    %c0_i32 = arith.constant 0 : i32
    %c0_i32_0 = arith.constant 0 : i32
    %c0_i32_1 = arith.constant 0 : i32
    return %c0_i32, %c0_i32_0 : i32, i32
  }
  func.func @transform_5(%arg0: i32) -> (i32, i32) {
    %c0_i32 = arith.constant 0 : i32
    %c0_i32_0 = arith.constant 0 : i32
    %c0_i32_1 = arith.constant 0 : i32
    return %c0_i32, %c0_i32_0 : i32, i32
  }
  func.func @transform_6(%arg0: i32) -> (i32, i32) {
    %c0_i32 = arith.constant 0 : i32
    %c0_i32_0 = arith.constant 0 : i32
    %c0_i32_1 = arith.constant 0 : i32
    return %c0_i32, %c0_i32_0 : i32, i32
  }
  func.func @transform_7(%arg0: i32) -> (i32, i32, i32) {
    %c0_i32 = arith.constant 0 : i32
    %c0_i32_0 = arith.constant 0 : i32
    %c0_i32_1 = arith.constant 0 : i32
    %c0_i32_2 = arith.constant 0 : i32
    return %c0_i32, %c0_i32_0, %c0_i32_1 : i32, i32, i32
  }
  func.func @transform_8(%arg0: i32) -> (i32, i32) {
    %c0_i32 = arith.constant 0 : i32
    %c0_i32_0 = arith.constant 0 : i32
    %c0_i32_1 = arith.constant 0 : i32
    return %c0_i32, %c0_i32_0 : i32, i32
  }
  func.func @transform_9(%arg0: i32) -> (i32, i32) {
    %c0_i32 = arith.constant 0 : i32
    %c0_i32_0 = arith.constant 0 : i32
    %c0_i32_1 = arith.constant 0 : i32
    return %c0_i32, %c0_i32_0 : i32, i32
  }
  func.func @transform_10(%arg0: i32) -> (i32, i32, i32) {
    %c0_i32 = arith.constant 0 : i32
    %c0_i32_0 = arith.constant 0 : i32
    %c0_i32_1 = arith.constant 0 : i32
    %c0_i32_2 = arith.constant 0 : i32
    return %c0_i32, %c0_i32_0, %c0_i32_1 : i32, i32, i32
  }
  func.func @transform_11(%arg0: i32) -> (i32, i32) {
    %c0_i32 = arith.constant 0 : i32
    %c0_i32_0 = arith.constant 0 : i32
    %c0_i32_1 = arith.constant 0 : i32
    return %c0_i32, %c0_i32_0 : i32, i32
  }
  func.func @transform_12(%arg0: i32) -> (i32, i32) {
    %c0_i32 = arith.constant 0 : i32
    %c0_i32_0 = arith.constant 0 : i32
    %c0_i32_1 = arith.constant 0 : i32
    return %c0_i32, %c0_i32_0 : i32, i32
  }
  func.func @transform_13(%arg0: i32) -> (i32, i32) {
    %c0_i32 = arith.constant 0 : i32
    %c0_i32_0 = arith.constant 0 : i32
    %c0_i32_1 = arith.constant 0 : i32
    return %c0_i32, %c0_i32_0 : i32, i32
  }
  func.func @transform_14(%arg0: i32) -> (i32, i32, i32) {
    %c0_i32 = arith.constant 0 : i32
    %c0_i32_0 = arith.constant 0 : i32
    %c0_i32_1 = arith.constant 0 : i32
    %c0_i32_2 = arith.constant 0 : i32
    return %c0_i32, %c0_i32_0, %c0_i32_1 : i32, i32, i32
  }
  func.func @transform_15(%arg0: i32) -> (i32, i32) {
    %c0_i32 = arith.constant 0 : i32
    %c0_i32_0 = arith.constant 0 : i32
    %c0_i32_1 = arith.constant 0 : i32
    return %c0_i32, %c0_i32_0 : i32, i32
  }
  func.func @transform_16(%arg0: i32) -> (i32, i32, i32) {
    %c0_i32 = arith.constant 0 : i32
    %c0_i32_0 = arith.constant 0 : i32
    %c0_i32_1 = arith.constant 0 : i32
    return %arg0, %c0_i32, %c0_i32_0 : i32, i32, i32
  }
}

</mosaic_0001>

<llo_original>
// kernel: tpu_custom_call.1
$region0: #{tpu_custom_call.1}
  #allocation0 [shape = 'u32[]', space=smem, size = 0x4, offset = 0x4, fixed_abs, tag = 'smem constant byte address 0x4 - core index']
  #allocation1 [shape = 'u32[144,128]{1,0:T(1,128)}', space=vmem, size = 0x12000, scoped, tag = 'internal scratch']
  %s0 = inlined_call_operand.hbm [shape: f32[2,16,48], index: 0, kind: input, shape index: {}]
  %s1 = inlined_call_operand.hbm [shape: f32[3,48,128], index: 1, kind: input, shape index: {}]
  %s2 = inlined_call_operand.hbm [shape: f32[1,128], index: 2, kind: input, shape index: {}]
  %s3 = inlined_call_operand.hbm [shape: f32[8,3,128,128], index: 3, kind: input, shape index: {}]
  %s4 = inlined_call_operand.hbm [shape: f32[8,128], index: 4, kind: input, shape index: {}]
  %s5 = inlined_call_operand.hbm [shape: f32[8,128], index: 5, kind: input, shape index: {}]
  %s6 = inlined_call_operand.hbm [shape: f32[8,128], index: 6, kind: input, shape index: {}]
  %s7 = inlined_call_operand.hbm [shape: f32[3,128,128], index: 7, kind: input, shape index: {}]
  %s8 = inlined_call_operand.hbm [shape: f32[3,128], index: 8, kind: input, shape index: {}]
  %s9 = inlined_call_operand.hbm [shape: f32[3,128], index: 9, kind: input, shape index: {}]
  %s10 = inlined_call_operand.hbm [shape: f32[4,128,128], index: 10, kind: input, shape index: {}]
  %s11 = inlined_call_operand.hbm [shape: f32[4,128], index: 11, kind: input, shape index: {}]
  %s12 = inlined_call_operand.hbm [shape: f32[4,128], index: 12, kind: input, shape index: {}]
  %s13 = inlined_call_operand.hbm [shape: f32[2,128], index: 13, kind: input, shape index: {}]
  %s14 = inlined_call_operand.vmem [shape: f32[3,128,48], index: 14, kind: input, shape index: {}]
  %s15 = inlined_call_operand.hbm [shape: f32[1,48], index: 15, kind: input, shape index: {}]
  %s16 = inlined_call_operand.hbm [shape: f32[2,16,48], index: 16, kind: output, shape index: {}]
  %s17 = sld [smem:[#allocation0]]
  $region134: #{tpu_custom_call.1} parent=0
    _
  %s19 = ssub.s32 1, %s17
  %s20 = scalar_select 0, %s19, %s17
  $region1: #{tpu_custom_call.1} parent=0
    #allocation2 [shape = 'u8[16384]{0}', space=vmem, size = 0x4000, scoped, tag = 'input window, operand 0, single buffered']
    #allocation3 [shape = 's32[1]{0}', space=sflag, size = 0x4, scoped, tag = 'scoped memory for tpu_custom_call.1']
    #allocation4 [shape = 's32[1]{0}', space=sflag, size = 0x4, scoped, tag = 'scoped memory for tpu_custom_call.1']
    #allocation5 [shape = 'u8[73728]{0}', space=vmem, size = 0x12000, scoped, tag = 'input window, operand 1, single buffered']
    #allocation6 [shape = 's32[1]{0}', space=sflag, size = 0x4, scoped, tag = 'scoped memory for tpu_custom_call.1']
    #allocation7 [shape = 'u8[512]{0}', space=vmem, size = 0x400, scoped, tag = 'input window, operand 2, single buffered']
    #allocation8 [shape = 'u8[1572864]{0}', space=vmem, size = 0x180000, scoped, tag = 'input window, operand 3, single buffered']
    #allocation9 [shape = 's32[1]{0}', space=sflag, size = 0x4, scoped, tag = 'scoped memory for tpu_custom_call.1']
    #allocation10 [shape = 'u8[4096]{0}', space=vmem, size = 0x1000, scoped, tag = 'input window, operand 4, single buffered']
    #allocation11 [shape = 'u8[4096]{0}', space=vmem, size = 0x1000, scoped, tag = 'input window, operand 5, single buffered']
    #allocation12 [shape = 's32[1]{0}', space=sflag, size = 0x4, scoped, tag = 'scoped memory for tpu_custom_call.1']
    #allocation13 [shape = 'u8[4096]{0}', space=vmem, size = 0x1000, scoped, tag = 'input window, operand 6, single buffered']
    #allocation14 [shape = 'u8[196608]{0}', space=vmem, size = 0x30000, scoped, tag = 'input window, operand 7, single buffered']
    #allocation15 [shape = 's32[1]{0}', space=sflag, size = 0x4, scoped, tag = 'scoped memory for tpu_custom_call.1']
    #allocation16 [shape = 'u8[2048]{0}', space=vmem, size = 0x800, scoped, tag = 'input window, operand 8, single buffered']
    #allocation17 [shape = 'u8[2048]{0}', space=vmem, size = 0x800, scoped, tag = 'input window, operand 9, single buffered']
    #allocation18 [shape = 's32[1]{0}', space=sflag, size = 0x4, scoped, tag = 'scoped memory for tpu_custom_call.1']
    #allocation19 [shape = 'u8[262144]{0}', space=vmem, size = 0x40000, scoped, tag = 'input window, operand 10, single buffered']
    #allocation20 [shape = 'u8[2048]{0}', space=vmem, size = 0x800, scoped, tag = 'input window, operand 11, single buffered']
    #allocation21 [shape = 's32[1]{0}', space=sflag, size = 0x4, scoped, tag = 'scoped memory for tpu_custom_call.1']
    #allocation22 [shape = 'u8[2048]{0}', space=vmem, size = 0x800, scoped, tag = 'input window, operand 12, single buffered']
    #allocation23 [shape = 'u8[1024]{0}', space=vmem, size = 0x400, scoped, tag = 'input window, operand 13, single buffered']
    #allocation24 [shape = 's32[1]{0}', space=sflag, size = 0x4, scoped, tag = 'scoped memory for tpu_custom_call.1']
    #allocation25 [shape = 'u8[512]{0}', space=vmem, size = 0x400, scoped, tag = 'input window, operand 15, single buffered']
    #allocation26 [shape = 'u8[16384]{0}', space=vmem, size = 0x4000, scoped, tag = 'output window, operand 0, single buffered']
    %21 = vsyncpa [#allocation3], 0
    %22 = vsyncpa [#allocation6], 0
    %23 = vsyncpa [#allocation9], 0
    %24 = vsyncpa [#allocation12], 0
    %25 = vsyncpa [#allocation15], 0
    %26 = vsyncpa [#allocation18], 0
    %27 = vsyncpa [#allocation21], 0
    %28 = vsyncpa [#allocation24], 0
    %29 = vsyncpa [#allocation4], 0
    // Predicated region
    $region2: #{tpu_custom_call.1} parent=1 // pred_check
      _
    $region3: #{tpu_custom_call.1} parent=1 // pred_check_branch
      %31 = sbr.rel (0) target = $region5
    $region4: #{tpu_custom_call.1} parent=1 // pred_region
      %s33 = ssub.s32 512, 512
      %34 = vsyncadd [#allocation3], %s33
      %s35 = sshll.u32 [#allocation2], 4
      %s36 = int_to_ptr.vmem [resolvable:$true] %s35
      %41 = dma.hbm_to_vmem [thread:$0]  %s0, 512, %s36, [#allocation3], 128, 128, 8
    $region5: #{tpu_custom_call.1} parent=1 // pred_fallthru
      _
    // Predicated region
    $region6: #{tpu_custom_call.1} parent=1 // pred_check
      _
    $region7: #{tpu_custom_call.1} parent=1 // pred_check_branch
      %43 = sbr.rel (0) target = $region9
    $region8: #{tpu_custom_call.1} parent=1 // pred_region
      %s45 = ssub.s32 2304, 2304
      %46 = vsyncadd [#allocation6], %s45
      %s47 = sshll.u32 [#allocation5], 4
      %s48 = int_to_ptr.vmem [resolvable:$true] %s47
      %53 = dma.hbm_to_vmem [thread:$0]  %s1, 2304, %s48, [#allocation6], 128, 128, 8
    $region9: #{tpu_custom_call.1} parent=1 // pred_fallthru
      _
    // Predicated region
    $region10: #{tpu_custom_call.1} parent=1 // pred_check
      _
    $region11: #{tpu_custom_call.1} parent=1 // pred_check_branch
      %55 = sbr.rel (0) target = $region13
    $region12: #{tpu_custom_call.1} parent=1 // pred_region
      %s57 = ssub.s32 16, 16
      %58 = vsyncadd [#allocation6], %s57
      %s60 = sshll.u32 [#allocation7], 4
      %s61 = int_to_ptr.vmem [resolvable:$true] %s60
      %63 = dma.hbm_to_vmem [thread:$0]  %s2, 16, %s61, [#allocation6]
    $region13: #{tpu_custom_call.1} parent=1 // pred_fallthru
      _
    // Predicated region
    $region14: #{tpu_custom_call.1} parent=1 // pred_check
      _
    $region15: #{tpu_custom_call.1} parent=1 // pred_check_branch
      %65 = sbr.rel (0) target = $region17
    $region16: #{tpu_custom_call.1} parent=1 // pred_region
      %s67 = ssub.s32 49152, 49152
      %68 = vsyncadd [#allocation9], %s67
      %s69 = sshll.u32 [#allocation8], 4
      %s70 = int_to_ptr.vmem [resolvable:$true] %s69
      %75 = dma.hbm_to_vmem [thread:$0]  %s3, 49152, %s70, [#allocation9], 128, 128, 8
    $region17: #{tpu_custom_call.1} parent=1 // pred_fallthru
      _
    // Predicated region
    $region18: #{tpu_custom_call.1} parent=1 // pred_check
      _
    $region19: #{tpu_custom_call.1} parent=1 // pred_check_branch
      %77 = sbr.rel (0) target = $region21
    $region20: #{tpu_custom_call.1} parent=1 // pred_region
      %s79 = ssub.s32 128, 128
      %80 = vsyncadd [#allocation9], %s79
      %s82 = sshll.u32 [#allocation10], 4
      %s83 = int_to_ptr.vmem [resolvable:$true] %s82
      %85 = dma.hbm_to_vmem [thread:$0]  %s4, 128, %s83, [#allocation9]
    $region21: #{tpu_custom_call.1} parent=1 // pred_fallthru
      _
    // Predicated region
    $region22: #{tpu_custom_call.1} parent=1 // pred_check
      _
    $region23: #{tpu_custom_call.1} parent=1 // pred_check_branch
      %87 = sbr.rel (0) target = $region25
    $region24: #{tpu_custom_call.1} parent=1 // pred_region
      %s89 = ssub.s32 128, 128
      %90 = vsyncadd [#allocation12], %s89
      %s92 = sshll.u32 [#allocation11], 4
      %s93 = int_to_ptr.vmem [resolvable:$true] %s92
      %95 = dma.hbm_to_vmem [thread:$0]  %s5, 128, %s93, [#allocation12]
    $region25: #{tpu_custom_call.1} parent=1 // pred_fallthru
      _
    // Predicated region
    $region26: #{tpu_custom_call.1} parent=1 // pred_check
      _
    $region27: #{tpu_custom_call.1} parent=1 // pred_check_branch
      %97 = sbr.rel (0) target = $region29
    $region28: #{tpu_custom_call.1} parent=1 // pred_region
      %s99 = ssub.s32 128, 128
      %100 = vsyncadd [#allocation12], %s99
      %s102 = sshll.u32 [#allocation13], 4
      %s103 = int_to_ptr.vmem [resolvable:$true] %s102
      %105 = dma.hbm_to_vmem [thread:$0]  %s6, 128, %s103, [#allocation12]
    $region29: #{tpu_custom_call.1} parent=1 // pred_fallthru
      _
    // Predicated region
    $region30: #{tpu_custom_call.1} parent=1 // pred_check
      _
    $region31: #{tpu_custom_call.1} parent=1 // pred_check_branch
      %107 = sbr.rel (0) target = $region33
    $region32: #{tpu_custom_call.1} parent=1 // pred_region
      %s109 = ssub.s32 6144, 6144
      %110 = vsyncadd [#allocation15], %s109
      %s111 = sshll.u32 [#allocation14], 4
      %s112 = int_to_ptr.vmem [resolvable:$true] %s111
      %117 = dma.hbm_to_vmem [thread:$0]  %s7, 6144, %s112, [#allocation15], 128, 128, 8
    $region33: #{tpu_custom_call.1} parent=1 // pred_fallthru
      _
    // Predicated region
    $region34: #{tpu_custom_call.1} parent=1 // pred_check
      _
    $region35: #{tpu_custom_call.1} parent=1 // pred_check_branch
      %119 = sbr.rel (0) target = $region37
    $region36: #{tpu_custom_call.1} parent=1 // pred_region
      %s121 = ssub.s32 64, 64
      %122 = vsyncadd [#allocation15], %s121
      %s124 = sshll.u32 [#allocation16], 4
      %s125 = int_to_ptr.vmem [resolvable:$true] %s124
      %127 = dma.hbm_to_vmem [thread:$0]  %s8, 64, %s125, [#allocation15]
    $region37: #{tpu_custom_call.1} parent=1 // pred_fallthru
      _
    // Predicated region
    $region38: #{tpu_custom_call.1} parent=1 // pred_check
      _
    $region39: #{tpu_custom_call.1} parent=1 // pred_check_branch
      %129 = sbr.rel (0) target = $region41
    $region40: #{tpu_custom_call.1} parent=1 // pred_region
      %s131 = ssub.s32 64, 64
      %132 = vsyncadd [#allocation18], %s131
      %s134 = sshll.u32 [#allocation17], 4
      %s135 = int_to_ptr.vmem [resolvable:$true] %s134
      %137 = dma.hbm_to_vmem [thread:$0]  %s9, 64, %s135, [#allocation18]
    $region41: #{tpu_custom_call.1} parent=1 // pred_fallthru
      _
    // Predicated region
    $region42: #{tpu_custom_call.1} parent=1 // pred_check
      _
    $region43: #{tpu_custom_call.1} parent=1 // pred_check_branch
      %139 = sbr.rel (0) target = $region45
    $region44: #{tpu_custom_call.1} parent=1 // pred_region
      %s141 = ssub.s32 8192, 8192
      %142 = vsyncadd [#allocation18], %s141
      %s143 = sshll.u32 [#allocation19], 4
      %s144 = int_to_ptr.vmem [resolvable:$true] %s143
      %149 = dma.hbm_to_vmem [thread:$0]  %s10, 8192, %s144, [#allocation18], 128, 128, 8
    $region45: #{tpu_custom_call.1} parent=1 // pred_fallthru
      _
    // Predicated region
    $region46: #{tpu_custom_call.1} parent=1 // pred_check
      _
    $region47: #{tpu_custom_call.1} parent=1 // pred_check_branch
      %151 = sbr.rel (0) target = $region49
    $region48: #{tpu_custom_call.1} parent=1 // pred_region
      %s153 = ssub.s32 64, 64
      %154 = vsyncadd [#allocation21], %s153
      %s156 = sshll.u32 [#allocation20], 4
      %s157 = int_to_ptr.vmem [resolvable:$true] %s156
      %159 = dma.hbm_to_vmem [thread:$0]  %s11, 64, %s157, [#allocation21]
    $region49: #{tpu_custom_call.1} parent=1 // pred_fallthru
      _
    // Predicated region
    $region50: #{tpu_custom_call.1} parent=1 // pred_check
      _
    $region51: #{tpu_custom_call.1} parent=1 // pred_check_branch
      %161 = sbr.rel (0) target = $region53
    $region52: #{tpu_custom_call.1} parent=1 // pred_region
      %s163 = ssub.s32 64, 64
      %164 = vsyncadd [#allocation21], %s163
      %s166 = sshll.u32 [#allocation22], 4
      %s167 = int_to_ptr.vmem [resolvable:$true] %s166
      %169 = dma.hbm_to_vmem [thread:$0]  %s12, 64, %s167, [#allocation21]
    $region53: #{tpu_custom_call.1} parent=1 // pred_fallthru
      _
    // Predicated region
    $region54: #{tpu_custom_call.1} parent=1 // pred_check
      _
    $region55: #{tpu_custom_call.1} parent=1 // pred_check_branch
      %171 = sbr.rel (0) target = $region57
    $region56: #{tpu_custom_call.1} parent=1 // pred_region
      %s173 = ssub.s32 32, 32
      %174 = vsyncadd [#allocation24], %s173
      %s176 = sshll.u32 [#allocation23], 4
      %s177 = int_to_ptr.vmem [resolvable:$true] %s176
      %179 = dma.hbm_to_vmem [thread:$0]  %s13, 32, %s177, [#allocation24]
    $region57: #{tpu_custom_call.1} parent=1 // pred_fallthru
      _
    // Predicated region
    $region58: #{tpu_custom_call.1} parent=1 // pred_check
      _
    $region59: #{tpu_custom_call.1} parent=1 // pred_check_branch
      %181 = sbr.rel (0) target = $region61
    $region60: #{tpu_custom_call.1} parent=1 // pred_region
      _
    $region61: #{tpu_custom_call.1} parent=1 // pred_fallthru
      _
    // Predicated region
    $region62: #{tpu_custom_call.1} parent=1 // pred_check
      _
    $region63: #{tpu_custom_call.1} parent=1 // pred_check_branch
      %183 = sbr.rel (0) target = $region65
    $region64: #{tpu_custom_call.1} parent=1 // pred_region
      %s185 = ssub.s32 16, 16
      %186 = vsyncadd [#allocation24], %s185
      %s188 = sshll.u32 [#allocation25], 4
      %s189 = int_to_ptr.vmem [resolvable:$true] %s188
      %191 = dma.hbm_to_vmem [thread:$0]  %s15, 16, %s189, [#allocation24]
    $region65: #{tpu_custom_call.1} parent=1 // pred_fallthru
      _
    // Predicated region
    $region66: #{tpu_custom_call.1} parent=1 // pred_check
      _
    $region67: #{tpu_custom_call.1} parent=1 // pred_check_branch
      %193 = sbr.rel (0) target = $region69
    $region68: #{tpu_custom_call.1} parent=1 // pred_region
      %194 = dma.done [#allocation3], 512
    $region69: #{tpu_custom_call.1} parent=1 // pred_fallthru
      _
    // Predicated region
    $region70: #{tpu_custom_call.1} parent=1 // pred_check
      _
    $region71: #{tpu_custom_call.1} parent=1 // pred_check_branch
      %196 = sbr.rel (0) target = $region73
    $region72: #{tpu_custom_call.1} parent=1 // pred_region
      %197 = dma.done [#allocation6], 2304
    $region73: #{tpu_custom_call.1} parent=1 // pred_fallthru
      _
    // Predicated region
    $region74: #{tpu_custom_call.1} parent=1 // pred_check
      _
    $region75: #{tpu_custom_call.1} parent=1 // pred_check_branch
      %199 = sbr.rel (0) target = $region77
    $region76: #{tpu_custom_call.1} parent=1 // pred_region
      %200 = dma.done [#allocation6], 16
    $region77: #{tpu_custom_call.1} parent=1 // pred_fallthru
      _
    // Predicated region
    $region78: #{tpu_custom_call.1} parent=1 // pred_check
      _
    $region79: #{tpu_custom_call.1} parent=1 // pred_check_branch
      %202 = sbr.rel (0) target = $region81
    $region80: #{tpu_custom_call.1} parent=1 // pred_region
      %203 = dma.done [#allocation9], 49152
    $region81: #{tpu_custom_call.1} parent=1 // pred_fallthru
      _
    // Predicated region
    $region82: #{tpu_custom_call.1} parent=1 // pred_check
      _
    $region83: #{tpu_custom_call.1} parent=1 // pred_check_branch
      %205 = sbr.rel (0) target = $region85
    $region84: #{tpu_custom_call.1} parent=1 // pred_region
      %206 = dma.done [#allocation9], 128
    $region85: #{tpu_custom_call.1} parent=1 // pred_fallthru
      _
    // Predicated region
    $region86: #{tpu_custom_call.1} parent=1 // pred_check
      _
    $region87: #{tpu_custom_call.1} parent=1 // pred_check_branch
      %208 = sbr.rel (0) target = $region89
    $region88: #{tpu_custom_call.1} parent=1 // pred_region
      %209 = dma.done [#allocation12], 128
    $region89: #{tpu_custom_call.1} parent=1 // pred_fallthru
      _
    // Predicated region
    $region90: #{tpu_custom_call.1} parent=1 // pred_check
      _
    $region91: #{tpu_custom_call.1} parent=1 // pred_check_branch
      %211 = sbr.rel (0) target = $region93
    $region92: #{tpu_custom_call.1} parent=1 // pred_region
      %212 = dma.done [#allocation12], 128
    $region93: #{tpu_custom_call.1} parent=1 // pred_fallthru
      _
    // Predicated region
    $region94: #{tpu_custom_call.1} parent=1 // pred_check
      _
    $region95: #{tpu_custom_call.1} parent=1 // pred_check_branch
      %214 = sbr.rel (0) target = $region97
    $region96: #{tpu_custom_call.1} parent=1 // pred_region
      %215 = dma.done [#allocation15], 6144
    $region97: #{tpu_custom_call.1} parent=1 // pred_fallthru
      _
    // Predicated region
    $region98: #{tpu_custom_call.1} parent=1 // pred_check
      _
    $region99: #{tpu_custom_call.1} parent=1 // pred_check_branch
      %217 = sbr.rel (0) target = $region101
    $region100: #{tpu_custom_call.1} parent=1 // pred_region
      %218 = dma.done [#allocation15], 64
    $region101: #{tpu_custom_call.1} parent=1 // pred_fallthru
      _
    // Predicated region
    $region102: #{tpu_custom_call.1} parent=1 // pred_check
      _
    $region103: #{tpu_custom_call.1} parent=1 // pred_check_branch
      %220 = sbr.rel (0) target = $region105
    $region104: #{tpu_custom_call.1} parent=1 // pred_region
      %221 = dma.done [#allocation18], 64
    $region105: #{tpu_custom_call.1} parent=1 // pred_fallthru
      _
    // Predicated region
    $region106: #{tpu_custom_call.1} parent=1 // pred_check
      _
    $region107: #{tpu_custom_call.1} parent=1 // pred_check_branch
      %223 = sbr.rel (0) target = $region109
    $region108: #{tpu_custom_call.1} parent=1 // pred_region
      %224 = dma.done [#allocation18], 8192
    $region109: #{tpu_custom_call.1} parent=1 // pred_fallthru
      _
    // Predicated region
    $region110: #{tpu_custom_call.1} parent=1 // pred_check
      _
    $region111: #{tpu_custom_call.1} parent=1 // pred_check_branch
      %226 = sbr.rel (0) target = $region113
    $region112: #{tpu_custom_call.1} parent=1 // pred_region
      %227 = dma.done [#allocation21], 64
    $region113: #{tpu_custom_call.1} parent=1 // pred_fallthru
      _
    // Predicated region
    $region114: #{tpu_custom_call.1} parent=1 // pred_check
      _
    $region115: #{tpu_custom_call.1} parent=1 // pred_check_branch
      %229 = sbr.rel (0) target = $region117
    $region116: #{tpu_custom_call.1} parent=1 // pred_region
      %230 = dma.done [#allocation21], 64
    $region117: #{tpu_custom_call.1} parent=1 // pred_fallthru
      _
    // Predicated region
    $region118: #{tpu_custom_call.1} parent=1 // pred_check
      _
    $region119: #{tpu_custom_call.1} parent=1 // pred_check_branch
      %232 = sbr.rel (0) target = $region121
    $region120: #{tpu_custom_call.1} parent=1 // pred_region
      %233 = dma.done [#allocation24], 32
    $region121: #{tpu_custom_call.1} parent=1 // pred_fallthru
      _
    // Predicated region
    $region122: #{tpu_custom_call.1} parent=1 // pred_check
      _
    $region123: #{tpu_custom_call.1} parent=1 // pred_check_branch
      %235 = sbr.rel (0) target = $region125
    $region124: #{tpu_custom_call.1} parent=1 // pred_region
      %236 = dma.done [#allocation24], 16
    $region125: #{tpu_custom_call.1} parent=1 // pred_fallthru
      _
    %v237 = vld [vmem:[#allocation2] sm:$0xff]
    %v238 = vld [vmem:[#allocation2 + $0x8] sm:$0xff]
    %v239 = vld [vmem:[#allocation2 + $0x10] sm:$0xff]
    %v240 = vld [vmem:[#allocation2 + $0x18] sm:$0xff]
    %v241 = vld [vmem:[#allocation7] sm:$0x1]
    %vm246 = vcmask 1040384
    %v247 = vrot.slane %v237, 7
    %v248 = vrot.slane %v238, 7
    %v249 = vsel %vm246, %v247, %v248
    %v250 = vrot.slane %v239, 7
    %v251 = vrot.slane %v240, 7
    %v252 = vsel %vm246, %v250, %v251
    %v255 = vsel %vm246, 0.0, %v247
    %v256 = vsel %vm246, 0.0, %v250
    %v257 = vld [vmem:[#allocation5] sm:$0xff]
    %v258 = vld [vmem:[#allocation5 + $0x8] sm:$0xff]
    %v259 = vld [vmem:[#allocation5 + $0x10] sm:$0xff]
    %v260 = vld [vmem:[#allocation5 + $0x18] sm:$0xff]
    %v261 = vld [vmem:[#allocation5 + $0x20] sm:$0xff]
    %v262 = vld [vmem:[#allocation5 + $0x28] sm:$0xff]
    %s263 = scalar_lea.vmem [#allocation5], 48
    %v264 = vld [vmem:[%s263] sm:$0xff]
    %v265 = vld [vmem:[%s263 + $0x8] sm:$0xff]
    %v266 = vld [vmem:[%s263 + $0x10] sm:$0xff]
    %v267 = vld [vmem:[%s263 + $0x18] sm:$0xff]
    %v268 = vld [vmem:[%s263 + $0x20] sm:$0xff]
    %v269 = vld [vmem:[%s263 + $0x28] sm:$0xff]
    %vm270 = vcmask 392192
    %v271 = vsel %vm270, %v237, 0
    %v273 = vsel %vm270, %v238, 0
    %v275 = vsel %vm270, %v239, 0
    %v277 = vsel %vm270, %v240, 0
    %279 = vmatprep.subr.mxu0 0.0
    %280 = vmatpush1.msra.mxu0 %v264
    %281 = vmatprep.subr.mxu0 0.0
    %282 = vmatpush1.msra.mxu0 %v265
    %283 = vmatprep.subr.mxu0 0.0
    %284 = vmatpush1.msra.mxu0 %v266
    %285 = vmatprep.subr.mxu0 0.0
    %286 = vmatpush1.msra.mxu0 %v267
    %287 = vmatprep.subr.mxu0 0.0
    %288 = vmatpush1.msra.mxu0 %v268
    %289 = vmatprep.subr.mxu0 0.0
    %290 = vmatpush1.msra.mxu0 %v269
    %291 = vmatprep.subr.mxu0 0.0
    %292 = vmatpush1.msra.mxu0 0.0
    %293 = vmatprep.subr.mxu0 0.0
    %294 = vmatpush1.msra.mxu0 0.0
    %295 = vmatprep.subr.mxu0 0.0
    %296 = vmatpush1.msra.mxu0 0.0
    %297 = vmatprep.subr.mxu0 0.0
    %298 = vmatpush1.msra.mxu0 0.0
    %299 = vmatprep.subr.mxu0 0.0
    %300 = vmatpush1.msra.mxu0 0.0
    %301 = vmatprep.subr.mxu0 0.0
    %302 = vmatpush1.msra.mxu0 0.0
    %303 = vmatprep.subr.mxu0 0.0
    %304 = vmatpush1.msra.mxu0 0.0
    %305 = vmatprep.subr.mxu0 0.0
    %306 = vmatpush1.msra.mxu0 0.0
    %307 = vmatprep.subr.mxu0 0.0
    %308 = vmatpush1.msra.mxu0 0.0
    %309 = vmatprep.subr.mxu0 0.0
    %310 = vmatpush1.msra.mxu0 0.0
    %311 = vmatprep.subr.mxu0 0.0
    %312 = vmatpush1.msra.mxu0 0.0
    %313 = vmatprep.subr.mxu0 0.0
    %314 = vmatpush1.msra.mxu0 0.0
    %315 = vmatprep.subr.mxu0 0.0
    %316 = vmatpush1.msra.mxu0 0.0
    %317 = vmatprep.subr.mxu0 0.0
    %318 = vmatpush1.msra.mxu0 0.0
    %319 = vmatprep.subr.mxu0 0.0
    %320 = vmatpush1.msra.mxu0 0.0
    %321 = vmatprep.subr.mxu0 0.0
    %322 = vmatpush1.msra.mxu0 0.0
    %323 = vmatprep.subr.mxu0 0.0
    %324 = vmatpush1.msra.mxu0 0.0
    %325 = vmatprep.subr.mxu0 0.0
    %326 = vmatpush1.msra.mxu0 0.0
    %327 = vmatprep.subr.mxu0 0.0
    %328 = vmatpush1.msra.mxu0 0.0
    %329 = vmatprep.subr.mxu0 0.0
    %330 = vmatpush1.msra.mxu0 0.0
    %331 = vmatprep.subr.mxu0 0.0
    %332 = vmatpush1.msra.mxu0 0.0
    %333 = vmatprep.subr.mxu0 0.0
    %334 = vmatpush1.msra.mxu0 0.0
    %335 = vmatprep.subr.mxu0 0.0
    %336 = vmatpush1.msra.mxu0 0.0
    %337 = vmatprep.subr.mxu0 0.0
    %338 = vmatpush1.msra.mxu0 0.0
    %339 = vmatprep.subr.mxu0 0.0
    %340 = vmatpush1.msra.mxu0 0.0
    %341 = vmatprep.subr.mxu0 0.0
    %342 = vmatpush1.msra.mxu0 0.0
    %343 = vmatprep.mubr.f32.mxu0 0.0
    %344 = vmatmul.mubr.f32.gmra.mrb[0].mxu0 %v271
    %v345 = vpop.f32.mrb[0].mxu0
    %v346 = vadd.f32 0.0, %v345
    %v347 = vpop.f32.mrb[0].mxu0
    %348 = vmatprep.mubr.f32.mxu0 0.0
    %349 = vmatmul.mubr.f32.gmra.mrb[0].mxu0 %v273
    %v350 = vpop.f32.mrb[0].mxu0
    %v351 = vadd.f32 0.0, %v350
    %v352 = vpop.f32.mrb[0].mxu0
    %353 = vmatprep.mubr.f32.mxu0 0.0
    %354 = vmatmul.mubr.f32.gmra.mrb[0].mxu0 %v275
    %v355 = vpop.f32.mrb[0].mxu0
    %v356 = vadd.f32 0.0, %v355
    %v357 = vpop.f32.mrb[0].mxu0
    %358 = vmatprep.mubr.f32.mxu0 0.0
    %359 = vmatmul.mubr.f32.gmra.mrb[0].mxu0 %v277
    %v360 = vpop.f32.mrb[0].mxu0
    %v361 = vadd.f32 0.0, %v360
    %v362 = vpop.f32.mrb[0].mxu0
    %363 = vdwg.mxu0
    %v365 = vsel %vm270, %v255, 0
    %v367 = vsel %vm270, %v249, 0
    %v370 = vsel %vm270, %v256, 0
    %v372 = vsel %vm270, %v252, 0
    %374 = vmatprep.subr.mxu0 0.0
    %375 = vmatpush1.msra.mxu0 %v257
    %376 = vmatprep.subr.mxu0 0.0
    %377 = vmatpush1.msra.mxu0 %v258
    %378 = vmatprep.subr.mxu0 0.0
    %379 = vmatpush1.msra.mxu0 %v259
    %380 = vmatprep.subr.mxu0 0.0
    %381 = vmatpush1.msra.mxu0 %v260
    %382 = vmatprep.subr.mxu0 0.0
    %383 = vmatpush1.msra.mxu0 %v261
    %384 = vmatprep.subr.mxu0 0.0
    %385 = vmatpush1.msra.mxu0 %v262
    %386 = vmatprep.subr.mxu0 0.0
    %387 = vmatpush1.msra.mxu0 0.0
    %388 = vmatprep.subr.mxu0 0.0
    %389 = vmatpush1.msra.mxu0 0.0
    %390 = vmatprep.subr.mxu0 0.0
    %391 = vmatpush1.msra.mxu0 0.0
    %392 = vmatprep.subr.mxu0 0.0
    %393 = vmatpush1.msra.mxu0 0.0
    %394 = vmatprep.subr.mxu0 0.0
    %395 = vmatpush1.msra.mxu0 0.0
    %396 = vmatprep.subr.mxu0 0.0
    %397 = vmatpush1.msra.mxu0 0.0
    %398 = vmatprep.subr.mxu0 0.0
    %399 = vmatpush1.msra.mxu0 0.0
    %400 = vmatprep.subr.mxu0 0.0
    %401 = vmatpush1.msra.mxu0 0.0
    %402 = vmatprep.subr.mxu0 0.0
    %403 = vmatpush1.msra.mxu0 0.0
    %404 = vmatprep.subr.mxu0 0.0
    %405 = vmatpush1.msra.mxu0 0.0
    %406 = vmatprep.subr.mxu0 0.0
    %407 = vmatpush1.msra.mxu0 0.0
    %408 = vmatprep.subr.mxu0 0.0
    %409 = vmatpush1.msra.mxu0 0.0
    %410 = vmatprep.subr.mxu0 0.0
    %411 = vmatpush1.msra.mxu0 0.0
    %412 = vmatprep.subr.mxu0 0.0
    %413 = vmatpush1.msra.mxu0 0.0
    %414 = vmatprep.subr.mxu0 0.0
    %415 = vmatpush1.msra.mxu0 0.0
    %416 = vmatprep.subr.mxu0 0.0
    %417 = vmatpush1.msra.mxu0 0.0
    %418 = vmatprep.subr.mxu0 0.0
    %419 = vmatpush1.msra.mxu0 0.0
    %420 = vmatprep.subr.mxu0 0.0
    %421 = vmatpush1.msra.mxu0 0.0
    %422 = vmatprep.subr.mxu0 0.0
    %423 = vmatpush1.msra.mxu0 0.0
    %424 = vmatprep.subr.mxu0 0.0
    %425 = vmatpush1.msra.mxu0 0.0
    %426 = vmatprep.subr.mxu0 0.0
    %427 = vmatpush1.msra.mxu0 0.0
    %428 = vmatprep.subr.mxu0 0.0
    %429 = vmatpush1.msra.mxu0 0.0
    %430 = vmatprep.subr.mxu0 0.0
    %431 = vmatpush1.msra.mxu0 0.0
    %432 = vmatprep.subr.mxu0 0.0
    %433 = vmatpush1.msra.mxu0 0.0
    %434 = vmatprep.subr.mxu0 0.0
    %435 = vmatpush1.msra.mxu0 0.0
    %436 = vmatprep.subr.mxu0 0.0
    %437 = vmatpush1.msra.mxu0 0.0
    %438 = vmatprep.mubr.f32.mxu0 0.0
    %439 = vmatmul.mubr.f32.gmra.mrb[0].mxu0 %v365
    %v440 = vpop.f32.mrb[0].mxu0
    %v441 = vadd.f32 %v346, %v440
    %v442 = vpop.f32.mrb[0].mxu0
    %443 = vmatprep.mubr.f32.mxu0 0.0
    %444 = vmatmul.mubr.f32.gmra.mrb[0].mxu0 %v367
    %v445 = vpop.f32.mrb[0].mxu0
    %v446 = vadd.f32 %v351, %v445
    %v447 = vpop.f32.mrb[0].mxu0
    %448 = vmatprep.mubr.f32.mxu0 0.0
    %449 = vmatmul.mubr.f32.gmra.mrb[0].mxu0 %v370
    %v450 = vpop.f32.mrb[0].mxu0
    %v451 = vadd.f32 %v356, %v450
    %v452 = vpop.f32.mrb[0].mxu0
    %453 = vmatprep.mubr.f32.mxu0 0.0
    %454 = vmatmul.mubr.f32.gmra.mrb[0].mxu0 %v372
    %v455 = vpop.f32.mrb[0].mxu0
    %v456 = vadd.f32 %v361, %v455
    %v457 = vpop.f32.mrb[0].mxu0
    %458 = vdwg.mxu0
    %vm459 = vcmask 1046528
    %v460 = vrot.slane %v237, 1
    %v461 = vrot.slane %v238, 1
    %v462 = vsel %vm459, %v460, %v461
    %v463 = vrot.slane %v239, 1
    %v464 = vrot.slane %v240, 1
    %v465 = vsel %vm459, %v463, %v464
    %v468 = vsel %vm459, %v461, 0.0
    %v469 = vsel %vm459, %v464, 0.0
    %s470 = scalar_lea.vmem [#allocation5], 96
    %v471 = vld [vmem:[%s470] sm:$0xff]
    %v472 = vld [vmem:[%s470 + $0x8] sm:$0xff]
    %v473 = vld [vmem:[%s470 + $0x10] sm:$0xff]
    %v474 = vld [vmem:[%s470 + $0x18] sm:$0xff]
    %v475 = vld [vmem:[%s470 + $0x20] sm:$0xff]
    %v476 = vld [vmem:[%s470 + $0x28] sm:$0xff]
    %v477 = vsel %vm270, %v462, 0
    %v480 = vsel %vm270, %v468, 0
    %v482 = vsel %vm270, %v465, 0
    %v485 = vsel %vm270, %v469, 0
    %487 = vmatprep.subr.mxu0 0.0
    %488 = vmatpush1.msra.mxu0 %v471
    %489 = vmatprep.subr.mxu0 0.0
    %490 = vmatpush1.msra.mxu0 %v472
    %491 = vmatprep.subr.mxu0 0.0
    %492 = vmatpush1.msra.mxu0 %v473
    %493 = vmatprep.subr.mxu0 0.0
    %494 = vmatpush1.msra.mxu0 %v474
    %495 = vmatprep.subr.mxu0 0.0
    %496 = vmatpush1.msra.mxu0 %v475
    %497 = vmatprep.subr.mxu0 0.0
    %498 = vmatpush1.msra.mxu0 %v476
    %499 = vmatprep.subr.mxu0 0.0
    %500 = vmatpush1.msra.mxu0 0.0
    %501 = vmatprep.subr.mxu0 0.0
    %502 = vmatpush1.msra.mxu0 0.0
    %503 = vmatprep.subr.mxu0 0.0
    %504 = vmatpush1.msra.mxu0 0.0
    %505 = vmatprep.subr.mxu0 0.0
    %506 = vmatpush1.msra.mxu0 0.0
    %507 = vmatprep.subr.mxu0 0.0
    %508 = vmatpush1.msra.mxu0 0.0
    %509 = vmatprep.subr.mxu0 0.0
    %510 = vmatpush1.msra.mxu0 0.0
    %511 = vmatprep.subr.mxu0 0.0
    %512 = vmatpush1.msra.mxu0 0.0
    %513 = vmatprep.subr.mxu0 0.0
    %514 = vmatpush1.msra.mxu0 0.0
    %515 = vmatprep.subr.mxu0 0.0
    %516 = vmatpush1.msra.mxu0 0.0
    %517 = vmatprep.subr.mxu0 0.0
    %518 = vmatpush1.msra.mxu0 0.0
    %519 = vmatprep.subr.mxu0 0.0
    %520 = vmatpush1.msra.mxu0 0.0
    %521 = vmatprep.subr.mxu0 0.0
    %522 = vmatpush1.msra.mxu0 0.0
    %523 = vmatprep.subr.mxu0 0.0
    %524 = vmatpush1.msra.mxu0 0.0
    %525 = vmatprep.subr.mxu0 0.0
    %526 = vmatpush1.msra.mxu0 0.0
    %527 = vmatprep.subr.mxu0 0.0
    %528 = vmatpush1.msra.mxu0 0.0
    %529 = vmatprep.subr.mxu0 0.0
    %530 = vmatpush1.msra.mxu0 0.0
    %531 = vmatprep.subr.mxu0 0.0
    %532 = vmatpush1.msra.mxu0 0.0
    %533 = vmatprep.subr.mxu0 0.0
    %534 = vmatpush1.msra.mxu0 0.0
    %535 = vmatprep.subr.mxu0 0.0
    %536 = vmatpush1.msra.mxu0 0.0
    %537 = vmatprep.subr.mxu0 0.0
    %538 = vmatpush1.msra.mxu0 0.0
    %539 = vmatprep.subr.mxu0 0.0
    %540 = vmatpush1.msra.mxu0 0.0
    %541 = vmatprep.subr.mxu0 0.0
    %542 = vmatpush1.msra.mxu0 0.0
    %543 = vmatprep.subr.mxu0 0.0
    %544 = vmatpush1.msra.mxu0 0.0
    %545 = vmatprep.subr.mxu0 0.0
    %546 = vmatpush1.msra.mxu0 0.0
    %547 = vmatprep.subr.mxu0 0.0
    %548 = vmatpush1.msra.mxu0 0.0
    %549 = vmatprep.subr.mxu0 0.0
    %550 = vmatpush1.msra.mxu0 0.0
    %551 = vmatprep.mubr.f32.mxu0 0.0
    %552 = vmatmul.mubr.f32.gmra.mrb[0].mxu0 %v477
    %v553 = vpop.f32.mrb[0].mxu0
    %v554 = vadd.f32 0.0, %v553
    %v555 = vpop.f32.mrb[0].mxu0
    %556 = vmatprep.mubr.f32.mxu0 0.0
    %557 = vmatmul.mubr.f32.gmra.mrb[0].mxu0 %v480
    %v558 = vpop.f32.mrb[0].mxu0
    %v559 = vadd.f32 0.0, %v558
    %v560 = vpop.f32.mrb[0].mxu0
    %561 = vmatprep.mubr.f32.mxu0 0.0
    %562 = vmatmul.mubr.f32.gmra.mrb[0].mxu0 %v482
    %v563 = vpop.f32.mrb[0].mxu0
    %v564 = vadd.f32 0.0, %v563
    %v565 = vpop.f32.mrb[0].mxu0
    %566 = vmatprep.mubr.f32.mxu0 0.0
    %567 = vmatmul.mubr.f32.gmra.mrb[0].mxu0 %v485
    %v568 = vpop.f32.mrb[0].mxu0
    %v569 = vadd.f32 0.0, %v568
    %v570 = vpop.f32.mrb[0].mxu0
    %571 = vdwg.mxu0
    %v572 = vadd.f32 %v441, %v554
    %v573 = vadd.f32 %v446, %v559
    %v574 = vadd.f32 %v451, %v564
    %v575 = vadd.f32 %v456, %v569
    %v577 = vlaneseq
    %v578 = vshrl.u32 %v577, 7
    %v579 = vsub.s32 0, %v578
    %v580 = vrot.slane %v241, %v579
    %v582 = vadd.f32 %v572, %v580
    %v583 = vadd.f32 %v573, %v580
    %v584 = vadd.f32 %v574, %v580
    %v585 = vadd.f32 %v575, %v580
    %v586 = vld [vmem:[#allocation11] sm:$0x1]
    %v587 = vlaneseq
    %v588 = vshrl.u32 %v587, 7
    %v589 = vsub.s32 0, %v588
    %v590 = vrot.slane %v586, %v589
    %v591 = vmul.f32 %v582, %v590
    %v592 = vmul.f32 %v583, %v590
    %v593 = vmul.f32 %v584, %v590
    %v594 = vmul.f32 %v585, %v590
    %v595 = vld [vmem:[#allocation13] sm:$0x1]
    %v596 = vlaneseq
    %v597 = vshrl.u32 %v596, 7
    %v598 = vsub.s32 0, %v597
    %v599 = vrot.slane %v595, %v598
    %v600 = vadd.f32 %v591, %v599
    %v601 = vadd.f32 %v592, %v599
    %v602 = vadd.f32 %v593, %v599
    %v603 = vadd.f32 %v594, %v599
    %v604 = vmax.f32 %v600, 0.0
    %v605 = vmax.f32 %v601, 0.0
    %v606 = vmax.f32 %v602, 0.0
    %v607 = vmax.f32 %v603, 0.0
    %v608 = vld [vmem:[#allocation10] sm:$0x1]
    %v613 = vrot.slane %v604, 7
    %v614 = vrot.slane %v605, 7
    %v615 = vsel %vm246, %v613, %v614
    %v616 = vrot.slane %v606, 7
    %v617 = vrot.slane %v607, 7
    %v618 = vsel %vm246, %v616, %v617
    %v623 = vsel %vm246, 0.0, %v613
    %v624 = vsel %vm246, 0.0, %v616
    %v625 = vld [vmem:[#allocation8] sm:$0xff]
    %v626 = vld [vmem:[#allocation8 + $0x8] sm:$0xff]
    %v627 = vld [vmem:[#allocation8 + $0x10] sm:$0xff]
    %v628 = vld [vmem:[#allocation8 + $0x18] sm:$0xff]
    %v629 = vld [vmem:[#allocation8 + $0x20] sm:$0xff]
    %v630 = vld [vmem:[#allocation8 + $0x28] sm:$0xff]
    %v631 = vld [vmem:[#allocation8 + $0x30] sm:$0xff]
    %v632 = vld [vmem:[#allocation8 + $0x38] sm:$0xff]
    %v633 = vld [vmem:[#allocation8 + $0x40] sm:$0xff]
    %v634 = vld [vmem:[#allocation8 + $0x48] sm:$0xff]
    %v635 = vld [vmem:[#allocation8 + $0x50] sm:$0xff]
    %v636 = vld [vmem:[#allocation8 + $0x58] sm:$0xff]
    %v637 = vld [vmem:[#allocation8 + $0x60] sm:$0xff]
    %v638 = vld [vmem:[#allocation8 + $0x68] sm:$0xff]
    %v639 = vld [vmem:[#allocation8 + $0x70] sm:$0xff]
    %v640 = vld [vmem:[#allocation8 + $0x78] sm:$0xff]
    %s641 = scalar_lea.vmem [#allocation8], 128
    %v642 = vld [vmem:[%s641] sm:$0xff]
    %v643 = vld [vmem:[%s641 + $0x8] sm:$0xff]
    %v644 = vld [vmem:[%s641 + $0x10] sm:$0xff]
    %v645 = vld [vmem:[%s641 + $0x18] sm:$0xff]
    %v646 = vld [vmem:[%s641 + $0x20] sm:$0xff]
    %v647 = vld [vmem:[%s641 + $0x28] sm:$0xff]
    %v648 = vld [vmem:[%s641 + $0x30] sm:$0xff]
    %v649 = vld [vmem:[%s641 + $0x38] sm:$0xff]
    %v650 = vld [vmem:[%s641 + $0x40] sm:$0xff]
    %v651 = vld [vmem:[%s641 + $0x48] sm:$0xff]
    %v652 = vld [vmem:[%s641 + $0x50] sm:$0xff]
    %v653 = vld [vmem:[%s641 + $0x58] sm:$0xff]
    %v654 = vld [vmem:[%s641 + $0x60] sm:$0xff]
    %v655 = vld [vmem:[%s641 + $0x68] sm:$0xff]
    %v656 = vld [vmem:[%s641 + $0x70] sm:$0xff]
    %v657 = vld [vmem:[%s641 + $0x78] sm:$0xff]
    %658 = vmatprep.subr.mxu0 0.0
    %659 = vmatpush1.msra.mxu0 %v642
    %660 = vmatprep.subr.mxu0 0.0
    %661 = vmatpush1.msra.mxu0 %v643
    %662 = vmatprep.subr.mxu0 0.0
    %663 = vmatpush1.msra.mxu0 %v644
    %664 = vmatprep.subr.mxu0 0.0
    %665 = vmatpush1.msra.mxu0 %v645
    %666 = vmatprep.subr.mxu0 0.0
    %667 = vmatpush1.msra.mxu0 %v646
    %668 = vmatprep.subr.mxu0 0.0
    %669 = vmatpush1.msra.mxu0 %v647
    %670 = vmatprep.subr.mxu0 0.0
    %671 = vmatpush1.msra.mxu0 %v648
    %672 = vmatprep.subr.mxu0 0.0
    %673 = vmatpush1.msra.mxu0 %v649
    %674 = vmatprep.subr.mxu0 0.0
    %675 = vmatpush1.msra.mxu0 %v650
    %676 = vmatprep.subr.mxu0 0.0
    %677 = vmatpush1.msra.mxu0 %v651
    %678 = vmatprep.subr.mxu0 0.0
    %679 = vmatpush1.msra.mxu0 %v652
    %680 = vmatprep.subr.mxu0 0.0
    %681 = vmatpush1.msra.mxu0 %v653
    %682 = vmatprep.subr.mxu0 0.0
    %683 = vmatpush1.msra.mxu0 %v654
    %684 = vmatprep.subr.mxu0 0.0
    %685 = vmatpush1.msra.mxu0 %v655
    %686 = vmatprep.subr.mxu0 0.0
    %687 = vmatpush1.msra.mxu0 %v656
    %688 = vmatprep.subr.mxu0 0.0
    %689 = vmatpush1.msra.mxu0 %v657
    %690 = vmatprep.subr.mxu0 0.0
    %691 = vmatpush1.msra.mxu0 0.0
    %692 = vmatprep.subr.mxu0 0.0
    %693 = vmatpush1.msra.mxu0 0.0
    %694 = vmatprep.subr.mxu0 0.0
    %695 = vmatpush1.msra.mxu0 0.0
    %696 = vmatprep.subr.mxu0 0.0
    %697 = vmatpush1.msra.mxu0 0.0
    %698 = vmatprep.subr.mxu0 0.0
    %699 = vmatpush1.msra.mxu0 0.0
    %700 = vmatprep.subr.mxu0 0.0
    %701 = vmatpush1.msra.mxu0 0.0
    %702 = vmatprep.subr.mxu0 0.0
    %703 = vmatpush1.msra.mxu0 0.0
    %704 = vmatprep.subr.mxu0 0.0
    %705 = vmatpush1.msra.mxu0 0.0
    %706 = vmatprep.subr.mxu0 0.0
    %707 = vmatpush1.msra.mxu0 0.0
    %708 = vmatprep.subr.mxu0 0.0
    %709 = vmatpush1.msra.mxu0 0.0
    %710 = vmatprep.subr.mxu0 0.0
    %711 = vmatpush1.msra.mxu0 0.0
    %712 = vmatprep.subr.mxu0 0.0
    %713 = vmatpush1.msra.mxu0 0.0
    %714 = vmatprep.subr.mxu0 0.0
    %715 = vmatpush1.msra.mxu0 0.0
    %716 = vmatprep.subr.mxu0 0.0
    %717 = vmatpush1.msra.mxu0 0.0
    %718 = vmatprep.subr.mxu0 0.0
    %719 = vmatpush1.msra.mxu0 0.0
    %720 = vmatprep.subr.mxu0 0.0
    %721 = vmatpush1.msra.mxu0 0.0
    %722 = vmatprep.mubr.f32.mxu0 0.0
    %723 = vmatmul.mubr.f32.gmra.mrb[0].mxu0 %v604
    %v724 = vpop.f32.mrb[0].mxu0
    %v725 = vadd.f32 0.0, %v724
    %v726 = vpop.f32.mrb[0].mxu0
    %727 = vmatprep.mubr.f32.mxu0 0.0
    %728 = vmatmul.mubr.f32.gmra.mrb[0].mxu0 %v605
    %v729 = vpop.f32.mrb[0].mxu0
    %v730 = vadd.f32 0.0, %v729
    %v731 = vpop.f32.mrb[0].mxu0
    %732 = vmatprep.mubr.f32.mxu0 0.0
    %733 = vmatmul.mubr.f32.gmra.mrb[0].mxu0 %v606
    %v734 = vpop.f32.mrb[0].mxu0
    %v735 = vadd.f32 0.0, %v734
    %v736 = vpop.f32.mrb[0].mxu0
    %737 = vmatprep.mubr.f32.mxu0 0.0
    %738 = vmatmul.mubr.f32.gmra.mrb[0].mxu0 %v607
    %v739 = vpop.f32.mrb[0].mxu0
    %v740 = vadd.f32 0.0, %v739
    %v741 = vpop.f32.mrb[0].mxu0
    %742 = vdwg.mxu0
    %743 = vmatprep.subr.mxu0 0.0
    %744 = vmatpush1.msra.mxu0 %v625
    %745 = vmatprep.subr.mxu0 0.0
    %746 = vmatpush1.msra.mxu0 %v626
    %747 = vmatprep.subr.mxu0 0.0
    %748 = vmatpush1.msra.mxu0 %v627
    %749 = vmatprep.subr.mxu0 0.0
    %750 = vmatpush1.msra.mxu0 %v628
    %751 = vmatprep.subr.mxu0 0.0
    %752 = vmatpush1.msra.mxu0 %v629
    %753 = vmatprep.subr.mxu0 0.0
    %754 = vmatpush1.msra.mxu0 %v630
    %755 = vmatprep.subr.mxu0 0.0
    %756 = vmatpush1.msra.mxu0 %v631
    %757 = vmatprep.subr.mxu0 0.0
    %758 = vmatpush1.msra.mxu0 %v632
    %759 = vmatprep.subr.mxu0 0.0
    %760 = vmatpush1.msra.mxu0 %v633
    %761 = vmatprep.subr.mxu0 0.0
    %762 = vmatpush1.msra.mxu0 %v634
    %763 = vmatprep.subr.mxu0 0.0
    %764 = vmatpush1.msra.mxu0 %v635
    %765 = vmatprep.subr.mxu0 0.0
    %766 = vmatpush1.msra.mxu0 %v636
    %767 = vmatprep.subr.mxu0 0.0
    %768 = vmatpush1.msra.mxu0 %v637
    %769 = vmatprep.subr.mxu0 0.0
    %770 = vmatpush1.msra.mxu0 %v638
    %771 = vmatprep.subr.mxu0 0.0
    %772 = vmatpush1.msra.mxu0 %v639
    %773 = vmatprep.subr.mxu0 0.0
    %774 = vmatpush1.msra.mxu0 %v640
    %775 = vmatprep.subr.mxu0 0.0
    %776 = vmatpush1.msra.mxu0 0.0
    %777 = vmatprep.subr.mxu0 0.0
    %778 = vmatpush1.msra.mxu0 0.0
    %779 = vmatprep.subr.mxu0 0.0
    %780 = vmatpush1.msra.mxu0 0.0
    %781 = vmatprep.subr.mxu0 0.0
    %782 = vmatpush1.msra.mxu0 0.0
    %783 = vmatprep.subr.mxu0 0.0
    %784 = vmatpush1.msra.mxu0 0.0
    %785 = vmatprep.subr.mxu0 0.0
    %786 = vmatpush1.msra.mxu0 0.0
    %787 = vmatprep.subr.mxu0 0.0
    %788 = vmatpush1.msra.mxu0 0.0
    %789 = vmatprep.subr.mxu0 0.0
    %790 = vmatpush1.msra.mxu0 0.0
    %791 = vmatprep.subr.mxu0 0.0
    %792 = vmatpush1.msra.mxu0 0.0
    %793 = vmatprep.subr.mxu0 0.0
    %794 = vmatpush1.msra.mxu0 0.0
    %795 = vmatprep.subr.mxu0 0.0
    %796 = vmatpush1.msra.mxu0 0.0
    %797 = vmatprep.subr.mxu0 0.0
    %798 = vmatpush1.msra.mxu0 0.0
    %799 = vmatprep.subr.mxu0 0.0
    %800 = vmatpush1.msra.mxu0 0.0
    %801 = vmatprep.subr.mxu0 0.0
    %802 = vmatpush1.msra.mxu0 0.0
    %803 = vmatprep.subr.mxu0 0.0
    %804 = vmatpush1.msra.mxu0 0.0
    %805 = vmatprep.subr.mxu0 0.0
    %806 = vmatpush1.msra.mxu0 0.0
    %807 = vmatprep.mubr.f32.mxu0 0.0
    %808 = vmatmul.mubr.f32.gmra.mrb[0].mxu0 %v623
    %v809 = vpop.f32.mrb[0].mxu0
    %v810 = vadd.f32 %v725, %v809
    %v811 = vpop.f32.mrb[0].mxu0
    %812 = vmatprep.mubr.f32.mxu0 0.0
    %813 = vmatmul.mubr.f32.gmra.mrb[0].mxu0 %v615
    %v814 = vpop.f32.mrb[0].mxu0
    %v815 = vadd.f32 %v730, %v814
    %v816 = vpop.f32.mrb[0].mxu0
    %817 = vmatprep.mubr.f32.mxu0 0.0
    %818 = vmatmul.mubr.f32.gmra.mrb[0].mxu0 %v624
    %v819 = vpop.f32.mrb[0].mxu0
    %v820 = vadd.f32 %v735, %v819
    %v821 = vpop.f32.mrb[0].mxu0
    %822 = vmatprep.mubr.f32.mxu0 0.0
    %823 = vmatmul.mubr.f32.gmra.mrb[0].mxu0 %v618
    %v824 = vpop.f32.mrb[0].mxu0
    %v825 = vadd.f32 %v740, %v824
    %v826 = vpop.f32.mrb[0].mxu0
    %827 = vdwg.mxu0
    %v828 = vrot.slane %v604, 1
    %v829 = vrot.slane %v605, 1
    %v830 = vsel %vm459, %v828, %v829
    %v831 = vrot.slane %v606, 1
    %v832 = vrot.slane %v607, 1
    %v833 = vsel %vm459, %v831, %v832
    %v838 = vsel %vm459, %v829, 0.0
    %v839 = vsel %vm459, %v832, 0.0
    %s840 = scalar_lea.vmem [#allocation8], 256
    %v841 = vld [vmem:[%s840] sm:$0xff]
    %v842 = vld [vmem:[%s840 + $0x8] sm:$0xff]
    %v843 = vld [vmem:[%s840 + $0x10] sm:$0xff]
    %v844 = vld [vmem:[%s840 + $0x18] sm:$0xff]
    %v845 = vld [vmem:[%s840 + $0x20] sm:$0xff]
    %v846 = vld [vmem:[%s840 + $0x28] sm:$0xff]
    %v847 = vld [vmem:[%s840 + $0x30] sm:$0xff]
    %v848 = vld [vmem:[%s840 + $0x38] sm:$0xff]
    %v849 = vld [vmem:[%s840 + $0x40] sm:$0xff]
    %v850 = vld [vmem:[%s840 + $0x48] sm:$0xff]
    %v851 = vld [vmem:[%s840 + $0x50] sm:$0xff]
    %v852 = vld [vmem:[%s840 + $0x58] sm:$0xff]
    %v853 = vld [vmem:[%s840 + $0x60] sm:$0xff]
    %v854 = vld [vmem:[%s840 + $0x68] sm:$0xff]
    %v855 = vld [vmem:[%s840 + $0x70] sm:$0xff]
    %v856 = vld [vmem:[%s840 + $0x78] sm:$0xff]
    %857 = vmatprep.subr.mxu0 0.0
    %858 = vmatpush1.msra.mxu0 %v841
    %859 = vmatprep.subr.mxu0 0.0
    %860 = vmatpush1.msra.mxu0 %v842
    %861 = vmatprep.subr.mxu0 0.0
    %862 = vmatpush1.msra.mxu0 %v843
    %863 = vmatprep.subr.mxu0 0.0
    %864 = vmatpush1.msra.mxu0 %v844
    %865 = vmatprep.subr.mxu0 0.0
    %866 = vmatpush1.msra.mxu0 %v845
    %867 = vmatprep.subr.mxu0 0.0
    %868 = vmatpush1.msra.mxu0 %v846
    %869 = vmatprep.subr.mxu0 0.0
    %870 = vmatpush1.msra.mxu0 %v847
    %871 = vmatprep.subr.mxu0 0.0
    %872 = vmatpush1.msra.mxu0 %v848
    %873 = vmatprep.subr.mxu0 0.0
    %874 = vmatpush1.msra.mxu0 %v849
    %875 = vmatprep.subr.mxu0 0.0
    %876 = vmatpush1.msra.mxu0 %v850
    %877 = vmatprep.subr.mxu0 0.0
    %878 = vmatpush1.msra.mxu0 %v851
    %879 = vmatprep.subr.mxu0 0.0
    %880 = vmatpush1.msra.mxu0 %v852
    %881 = vmatprep.subr.mxu0 0.0
    %882 = vmatpush1.msra.mxu0 %v853
    %883 = vmatprep.subr.mxu0 0.0
    %884 = vmatpush1.msra.mxu0 %v854
    %885 = vmatprep.subr.mxu0 0.0
    %886 = vmatpush1.msra.mxu0 %v855
    %887 = vmatprep.subr.mxu0 0.0
    %888 = vmatpush1.msra.mxu0 %v856
    %889 = vmatprep.subr.mxu0 0.0
    %890 = vmatpush1.msra.mxu0 0.0
    %891 = vmatprep.subr.mxu0 0.0
    %892 = vmatpush1.msra.mxu0 0.0
    %893 = vmatprep.subr.mxu0 0.0
    %894 = vmatpush1.msra.mxu0 0.0
    %895 = vmatprep.subr.mxu0 0.0
    %896 = vmatpush1.msra.mxu0 0.0
    %897 = vmatprep.subr.mxu0 0.0
    %898 = vmatpush1.msra.mxu0 0.0
    %899 = vmatprep.subr.mxu0 0.0
    %900 = vmatpush1.msra.mxu0 0.0
    %901 = vmatprep.subr.mxu0 0.0
    %902 = vmatpush1.msra.mxu0 0.0
    %903 = vmatprep.subr.mxu0 0.0
    %904 = vmatpush1.msra.mxu0 0.0
    %905 = vmatprep.subr.mxu0 0.0
    %906 = vmatpush1.msra.mxu0 0.0
    %907 = vmatprep.subr.mxu0 0.0
    %908 = vmatpush1.msra.mxu0 0.0
    %909 = vmatprep.subr.mxu0 0.0
    %910 = vmatpush1.msra.mxu0 0.0
    %911 = vmatprep.subr.mxu0 0.0
    %912 = vmatpush1.msra.mxu0 0.0
    %913 = vmatprep.subr.mxu0 0.0
    %914 = vmatpush1.msra.mxu0 0.0
    %915 = vmatprep.subr.mxu0 0.0
    %916 = vmatpush1.msra.mxu0 0.0
    %917 = vmatprep.subr.mxu0 0.0
    %918 = vmatpush1.msra.mxu0 0.0
    %919 = vmatprep.subr.mxu0 0.0
    %920 = vmatpush1.msra.mxu0 0.0
    %921 = vmatprep.mubr.f32.mxu0 0.0
    %922 = vmatmul.mubr.f32.gmra.mrb[0].mxu0 %v830
    %v923 = vpop.f32.mrb[0].mxu0
    %v924 = vadd.f32 0.0, %v923
    %v925 = vpop.f32.mrb[0].mxu0
    %926 = vmatprep.mubr.f32.mxu0 0.0
    %927 = vmatmul.mubr.f32.gmra.mrb[0].mxu0 %v838
    %v928 = vpop.f32.mrb[0].mxu0
    %v929 = vadd.f32 0.0, %v928
    %v930 = vpop.f32.mrb[0].mxu0
    %931 = vmatprep.mubr.f32.mxu0 0.0
    %932 = vmatmul.mubr.f32.gmra.mrb[0].mxu0 %v833
    %v933 = vpop.f32.mrb[0].mxu0
    %v934 = vadd.f32 0.0, %v933
    %v935 = vpop.f32.mrb[0].mxu0
    %936 = vmatprep.mubr.f32.mxu0 0.0
    %937 = vmatmul.mubr.f32.gmra.mrb[0].mxu0 %v839
    %v938 = vpop.f32.mrb[0].mxu0
    %v939 = vadd.f32 0.0, %v938
    %v940 = vpop.f32.mrb[0].mxu0
    %941 = vdwg.mxu0
    %v942 = vadd.f32 %v810, %v924
    %v943 = vadd.f32 %v815, %v929
    %v944 = vadd.f32 %v820, %v934
    %v945 = vadd.f32 %v825, %v939
    %v946 = vlaneseq
    %v947 = vshrl.u32 %v946, 7
    %v948 = vsub.s32 0, %v947
    %v949 = vrot.slane %v608, %v948
    %v950 = vadd.f32 %v942, %v949
    %v951 = vadd.f32 %v943, %v949
    %v952 = vadd.f32 %v944, %v949
    %v953 = vadd.f32 %v945, %v949
    %v954 = vld [vmem:[#allocation11 + $0x1] sm:$0x1]
    %v955 = vlaneseq
    %v956 = vshrl.u32 %v955, 7
    %v957 = vsub.s32 0, %v956
    %v958 = vrot.slane %v954, %v957
    %v959 = vmul.f32 %v950, %v958
    %v960 = vmul.f32 %v951, %v958
    %v961 = vmul.f32 %v952, %v958
    %v962 = vmul.f32 %v953, %v958
    %v963 = vld [vmem:[#allocation13 + $0x1] sm:$0x1]
    %v964 = vlaneseq
    %v965 = vshrl.u32 %v964, 7
    %v966 = vsub.s32 0, %v965
    %v967 = vrot.slane %v963, %v966
    %v968 = vadd.f32 %v959, %v967
    %v969 = vadd.f32 %v960, %v967
    %v970 = vadd.f32 %v961, %v967
    %v971 = vadd.f32 %v962, %v967
    %v972 = vmax.f32 %v968, 0.0
    %v973 = vmax.f32 %v969, 0.0
    %v974 = vmax.f32 %v970, 0.0
    %v975 = vmax.f32 %v971, 0.0
    %v976 = vld [vmem:[#allocation10 + $0x1] sm:$0x1]
    %v981 = vrot.slane %v972, 7
    %v982 = vrot.slane %v973, 7
    %v983 = vsel %vm246, %v981, %v982
    %v984 = vrot.slane %v974, 7
    %v985 = vrot.slane %v975, 7
    %v986 = vsel %vm246, %v984, %v985
    %v991 = vsel %vm246, 0.0, %v981
    %v992 = vsel %vm246, 0.0, %v984
    %s993 = scalar_lea.vmem [#allocation8], 384
    %v994 = vld [vmem:[%s993] sm:$0xff]
    %v995 = vld [vmem:[%s993 + $0x8] sm:$0xff]
    %v996 = vld [vmem:[%s993 + $0x10] sm:$0xff]
    %v997 = vld [vmem:[%s993 + $0x18] sm:$0xff]
    %v998 = vld [vmem:[%s993 + $0x20] sm:$0xff]
    %v999 = vld [vmem:[%s993 + $0x28] sm:$0xff]
    %v1000 = vld [vmem:[%s993 + $0x30] sm:$0xff]
    %v1001 = vld [vmem:[%s993 + $0x38] sm:$0xff]
    %v1002 = vld [vmem:[%s993 + $0x40] sm:$0xff]
    %v1003 = vld [vmem:[%s993 + $0x48] sm:$0xff]
    %v1004 = vld [vmem:[%s993 + $0x50] sm:$0xff]
    %v1005 = vld [vmem:[%s993 + $0x58] sm:$0xff]
    %v1006 = vld [vmem:[%s993 + $0x60] sm:$0xff]
    %v1007 = vld [vmem:[%s993 + $0x68] sm:$0xff]
    %v1008 = vld [vmem:[%s993 + $0x70] sm:$0xff]
    %v1009 = vld [vmem:[%s993 + $0x78] sm:$0xff]
    %s1010 = scalar_lea.vmem [#allocation8], 512
    %v1011 = vld [vmem:[%s1010] sm:$0xff]
    %v1012 = vld [vmem:[%s1010 + $0x8] sm:$0xff]
    %v1013 = vld [vmem:[%s1010 + $0x10] sm:$0xff]
    %v1014 = vld [vmem:[%s1010 + $0x18] sm:$0xff]
    %v1015 = vld [vmem:[%s1010 + $0x20] sm:$0xff]
    %v1016 = vld [vmem:[%s1010 + $0x28] sm:$0xff]
    %v1017 = vld [vmem:[%s1010 + $0x30] sm:$0xff]
    %v1018 = vld [vmem:[%s1010 + $0x38] sm:$0xff]
    %v1019 = vld [vmem:[%s1010 + $0x40] sm:$0xff]
    %v1020 = vld [vmem:[%s1010 + $0x48] sm:$0xff]
    %v1021 = vld [vmem:[%s1010 + $0x50] sm:$0xff]
    %v1022 = vld [vmem:[%s1010 + $0x58] sm:$0xff]
    %v1023 = vld [vmem:[%s1010 + $0x60] sm:$0xff]
    %v1024 = vld [vmem:[%s1010 + $0x68] sm:$0xff]
    %v1025 = vld [vmem:[%s1010 + $0x70] sm:$0xff]
    %v1026 = vld [vmem:[%s1010 + $0x78] sm:$0xff]
    %1027 = vmatprep.subr.mxu0 0.0
    %1028 = vmatpush1.msra.mxu0 %v1011
    %1029 = vmatprep.subr.mxu0 0.0
    %1030 = vmatpush1.msra.mxu0 %v1012
    %1031 = vmatprep.subr.mxu0 0.0
    %1032 = vmatpush1.msra.mxu0 %v1013
    %1033 = vmatprep.subr.mxu0 0.0
    %1034 = vmatpush1.msra.mxu0 %v1014
    %1035 = vmatprep.subr.mxu0 0.0
    %1036 = vmatpush1.msra.mxu0 %v1015
    %1037 = vmatprep.subr.mxu0 0.0
    %1038 = vmatpush1.msra.mxu0 %v1016
    %1039 = vmatprep.subr.mxu0 0.0
    %1040 = vmatpush1.msra.mxu0 %v1017
    %1041 = vmatprep.subr.mxu0 0.0
    %1042 = vmatpush1.msra.mxu0 %v1018
    %1043 = vmatprep.subr.mxu0 0.0
    %1044 = vmatpush1.msra.mxu0 %v1019
    %1045 = vmatprep.subr.mxu0 0.0
    %1046 = vmatpush1.msra.mxu0 %v1020
    %1047 = vmatprep.subr.mxu0 0.0
    %1048 = vmatpush1.msra.mxu0 %v1021
    %1049 = vmatprep.subr.mxu0 0.0
    %1050 = vmatpush1.msra.mxu0 %v1022
    %1051 = vmatprep.subr.mxu0 0.0
    %1052 = vmatpush1.msra.mxu0 %v1023
    %1053 = vmatprep.subr.mxu0 0.0
    %1054 = vmatpush1.msra.mxu0 %v1024
    %1055 = vmatprep.subr.mxu0 0.0
    %1056 = vmatpush1.msra.mxu0 %v1025
    %1057 = vmatprep.subr.mxu0 0.0
    %1058 = vmatpush1.msra.mxu0 %v1026
    %1059 = vmatprep.subr.mxu0 0.0
    %1060 = vmatpush1.msra.mxu0 0.0
    %1061 = vmatprep.subr.mxu0 0.0
    %1062 = vmatpush1.msra.mxu0 0.0
    %1063 = vmatprep.subr.mxu0 0.0
    %1064 = vmatpush1.msra.mxu0 0.0
    %1065 = vmatprep.subr.mxu0 0.0
    %1066 = vmatpush1.msra.mxu0 0.0
    %1067 = vmatprep.subr.mxu0 0.0
    %1068 = vmatpush1.msra.mxu0 0.0
    %1069 = vmatprep.subr.mxu0 0.0
    %1070 = vmatpush1.msra.mxu0 0.0
    %1071 = vmatprep.subr.mxu0 0.0
    %1072 = vmatpush1.msra.mxu0 0.0
    %1073 = vmatprep.subr.mxu0 0.0
    %1074 = vmatpush1.msra.mxu0 0.0
    %1075 = vmatprep.subr.mxu0 0.0
    %1076 = vmatpush1.msra.mxu0 0.0
    %1077 = vmatprep.subr.mxu0 0.0
    %1078 = vmatpush1.msra.mxu0 0.0
    %1079 = vmatprep.subr.mxu0 0.0
    %1080 = vmatpush1.msra.mxu0 0.0
    %1081 = vmatprep.subr.mxu0 0.0
    %1082 = vmatpush1.msra.mxu0 0.0
    %1083 = vmatprep.subr.mxu0 0.0
    %1084 = vmatpush1.msra.mxu0 0.0
    %1085 = vmatprep.subr.mxu0 0.0
    %1086 = vmatpush1.msra.mxu0 0.0
    %1087 = vmatprep.subr.mxu0 0.0
    %1088 = vmatpush1.msra.mxu0 0.0
    %1089 = vmatprep.subr.mxu0 0.0
    %1090 = vmatpush1.msra.mxu0 0.0
    %1091 = vmatprep.mubr.f32.mxu0 0.0
    %1092 = vmatmul.mubr.f32.gmra.mrb[0].mxu0 %v972
    %v1093 = vpop.f32.mrb[0].mxu0
    %v1094 = vadd.f32 0.0, %v1093
    %v1095 = vpop.f32.mrb[0].mxu0
    %1096 = vmatprep.mubr.f32.mxu0 0.0
    %1097 = vmatmul.mubr.f32.gmra.mrb[0].mxu0 %v973
    %v1098 = vpop.f32.mrb[0].mxu0
    %v1099 = vadd.f32 0.0, %v1098
    %v1100 = vpop.f32.mrb[0].mxu0
    %1101 = vmatprep.mubr.f32.mxu0 0.0
    %1102 = vmatmul.mubr.f32.gmra.mrb[0].mxu0 %v974
    %v1103 = vpop.f32.mrb[0].mxu0
    %v1104 = vadd.f32 0.0, %v1103
    %v1105 = vpop.f32.mrb[0].mxu0
    %1106 = vmatprep.mubr.f32.mxu0 0.0
    %1107 = vmatmul.mubr.f32.gmra.mrb[0].mxu0 %v975
    %v1108 = vpop.f32.mrb[0].mxu0
    %v1109 = vadd.f32 0.0, %v1108
    %v1110 = vpop.f32.mrb[0].mxu0
    %1111 = vdwg.mxu0
    %1112 = vmatprep.subr.mxu0 0.0
    %1113 = vmatpush1.msra.mxu0 %v994
    %1114 = vmatprep.subr.mxu0 0.0
    %1115 = vmatpush1.msra.mxu0 %v995
    %1116 = vmatprep.subr.mxu0 0.0
    %1117 = vmatpush1.msra.mxu0 %v996
    %1118 = vmatprep.subr.mxu0 0.0
    %1119 = vmatpush1.msra.mxu0 %v997
    %1120 = vmatprep.subr.mxu0 0.0
    %1121 = vmatpush1.msra.mxu0 %v998
    %1122 = vmatprep.subr.mxu0 0.0
    %1123 = vmatpush1.msra.mxu0 %v999
    %1124 = vmatprep.subr.mxu0 0.0
    %1125 = vmatpush1.msra.mxu0 %v1000
    %1126 = vmatprep.subr.mxu0 0.0
    %1127 = vmatpush1.msra.mxu0 %v1001
    %1128 = vmatprep.subr.mxu0 0.0
    %1129 = vmatpush1.msra.mxu0 %v1002
    %1130 = vmatprep.subr.mxu0 0.0
    %1131 = vmatpush1.msra.mxu0 %v1003
    %1132 = vmatprep.subr.mxu0 0.0
    %1133 = vmatpush1.msra.mxu0 %v1004
    %1134 = vmatprep.subr.mxu0 0.0
    %1135 = vmatpush1.msra.mxu0 %v1005
    %1136 = vmatprep.subr.mxu0 0.0
    %1137 = vmatpush1.msra.mxu0 %v1006
    %1138 = vmatprep.subr.mxu0 0.0
    %1139 = vmatpush1.msra.mxu0 %v1007
    %1140 = vmatprep.subr.mxu0 0.0
    %1141 = vmatpush1.msra.mxu0 %v1008
    %1142 = vmatprep.subr.mxu0 0.0
    %1143 = vmatpush1.msra.mxu0 %v1009
    %1144 = vmatprep.subr.mxu0 0.0
    %1145 = vmatpush1.msra.mxu0 0.0
    %1146 = vmatprep.subr.mxu0 0.0
    %1147 = vmatpush1.msra.mxu0 0.0
    %1148 = vmatprep.subr.mxu0 0.0
    %1149 = vmatpush1.msra.mxu0 0.0
    %1150 = vmatprep.subr.mxu0 0.0
    %1151 = vmatpush1.msra.mxu0 0.0
    %1152 = vmatprep.subr.mxu0 0.0
    %1153 = vmatpush1.msra.mxu0 0.0
    %1154 = vmatprep.subr.mxu0 0.0
    %1155 = vmatpush1.msra.mxu0 0.0
    %1156 = vmatprep.subr.mxu0 0.0
    %1157 = vmatpush1.msra.mxu0 0.0
    %1158 = vmatprep.subr.mxu0 0.0
    %1159 = vmatpush1.msra.mxu0 0.0
    %1160 = vmatprep.subr.mxu0 0.0
    %1161 = vmatpush1.msra.mxu0 0.0
    %1162 = vmatprep.subr.mxu0 0.0
    %1163 = vmatpush1.msra.mxu0 0.0
    %1164 = vmatprep.subr.mxu0 0.0
    %1165 = vmatpush1.msra.mxu0 0.0
    %1166 = vmatprep.subr.mxu0 0.0
    %1167 = vmatpush1.msra.mxu0 0.0
    %1168 = vmatprep.subr.mxu0 0.0
    %1169 = vmatpush1.msra.mxu0 0.0
    %1170 = vmatprep.subr.mxu0 0.0
    %1171 = vmatpush1.msra.mxu0 0.0
    %1172 = vmatprep.subr.mxu0 0.0
    %1173 = vmatpush1.msra.mxu0 0.0
    %1174 = vmatprep.subr.mxu0 0.0
    %1175 = vmatpush1.msra.mxu0 0.0
    %1176 = vmatprep.mubr.f32.mxu0 0.0
    %1177 = vmatmul.mubr.f32.gmra.mrb[0].mxu0 %v991
    %v1178 = vpop.f32.mrb[0].mxu0
    %v1179 = vadd.f32 %v1094, %v1178
    %v1180 = vpop.f32.mrb[0].mxu0
    %1181 = vmatprep.mubr.f32.mxu0 0.0
    %1182 = vmatmul.mubr.f32.gmra.mrb[0].mxu0 %v983
    %v1183 = vpop.f32.mrb[0].mxu0
    %v1184 = vadd.f32 %v1099, %v1183
    %v1185 = vpop.f32.mrb[0].mxu0
    %1186 = vmatprep.mubr.f32.mxu0 0.0
    %1187 = vmatmul.mubr.f32.gmra.mrb[0].mxu0 %v992
    %v1188 = vpop.f32.mrb[0].mxu0
    %v1189 = vadd.f32 %v1104, %v1188
    %v1190 = vpop.f32.mrb[0].mxu0
    %1191 = vmatprep.mubr.f32.mxu0 0.0
    %1192 = vmatmul.mubr.f32.gmra.mrb[0].mxu0 %v986
    %v1193 = vpop.f32.mrb[0].mxu0
    %v1194 = vadd.f32 %v1109, %v1193
    %v1195 = vpop.f32.mrb[0].mxu0
    %1196 = vdwg.mxu0
    %v1197 = vrot.slane %v972, 1
    %v1198 = vrot.slane %v973, 1
    %v1199 = vsel %vm459, %v1197, %v1198
    %v1200 = vrot.slane %v974, 1
    %v1201 = vrot.slane %v975, 1
    %v1202 = vsel %vm459, %v1200, %v1201
    %v1207 = vsel %vm459, %v1198, 0.0
    %v1208 = vsel %vm459, %v1201, 0.0
    %s1209 = scalar_lea.vmem [#allocation8], 640
    %v1210 = vld [vmem:[%s1209] sm:$0xff]
    %v1211 = vld [vmem:[%s1209 + $0x8] sm:$0xff]
    %v1212 = vld [vmem:[%s1209 + $0x10] sm:$0xff]
    %v1213 = vld [vmem:[%s1209 + $0x18] sm:$0xff]
    %v1214 = vld [vmem:[%s1209 + $0x20] sm:$0xff]
    %v1215 = vld [vmem:[%s1209 + $0x28] sm:$0xff]
    %v1216 = vld [vmem:[%s1209 + $0x30] sm:$0xff]
    %v1217 = vld [vmem:[%s1209 + $0x38] sm:$0xff]
    %v1218 = vld [vmem:[%s1209 + $0x40] sm:$0xff]
    %v1219 = vld [vmem:[%s1209 + $0x48] sm:$0xff]
    %v1220 = vld [vmem:[%s1209 + $0x50] sm:$0xff]
    %v1221 = vld [vmem:[%s1209 + $0x58] sm:$0xff]
    %v1222 = vld [vmem:[%s1209 + $0x60] sm:$0xff]
    %v1223 = vld [vmem:[%s1209 + $0x68] sm:$0xff]
    %v1224 = vld [vmem:[%s1209 + $0x70] sm:$0xff]
    %v1225 = vld [vmem:[%s1209 + $0x78] sm:$0xff]
    %1226 = vmatprep.subr.mxu0 0.0
    %1227 = vmatpush1.msra.mxu0 %v1210
    %1228 = vmatprep.subr.mxu0 0.0
    %1229 = vmatpush1.msra.mxu0 %v1211
    %1230 = vmatprep.subr.mxu0 0.0
    %1231 = vmatpush1.msra.mxu0 %v1212
    %1232 = vmatprep.subr.mxu0 0.0
    %1233 = vmatpush1.msra.mxu0 %v1213
    %1234 = vmatprep.subr.mxu0 0.0
    %1235 = vmatpush1.msra.mxu0 %v1214
    %1236 = vmatprep.subr.mxu0 0.0
    %1237 = vmatpush1.msra.mxu0 %v1215
    %1238 = vmatprep.subr.mxu0 0.0
    %1239 = vmatpush1.msra.mxu0 %v1216
    %1240 = vmatprep.subr.mxu0 0.0
    %1241 = vmatpush1.msra.mxu0 %v1217
    %1242 = vmatprep.subr.mxu0 0.0
    %1243 = vmatpush1.msra.mxu0 %v1218
    %1244 = vmatprep.subr.mxu0 0.0
    %1245 = vmatpush1.msra.mxu0 %v1219
    %1246 = vmatprep.subr.mxu0 0.0
    %1247 = vmatpush1.msra.mxu0 %v1220
    %1248 = vmatprep.subr.mxu0 0.0
    %1249 = vmatpush1.msra.mxu0 %v1221
    %1250 = vmatprep.subr.mxu0 0.0
    %1251 = vmatpush1.msra.mxu0 %v1222
    %1252 = vmatprep.subr.mxu0 0.0
    %1253 = vmatpush1.msra.mxu0 %v1223
    %1254 = vmatprep.subr.mxu0 0.0
    %1255 = vmatpush1.msra.mxu0 %v1224
    %1256 = vmatprep.subr.mxu0 0.0
    %1257 = vmatpush1.msra.mxu0 %v1225
    %1258 = vmatprep.subr.mxu0 0.0
    %1259 = vmatpush1.msra.mxu0 0.0
    %1260 = vmatprep.subr.mxu0 0.0
    %1261 = vmatpush1.msra.mxu0 0.0
    %1262 = vmatprep.subr.mxu0 0.0
    %1263 = vmatpush1.msra.mxu0 0.0
    %1264 = vmatprep.subr.mxu0 0.0
    %1265 = vmatpush1.msra.mxu0 0.0
    %1266 = vmatprep.subr.mxu0 0.0
    %1267 = vmatpush1.msra.mxu0 0.0
    %1268 = vmatprep.subr.mxu0 0.0
    %1269 = vmatpush1.msra.mxu0 0.0
    %1270 = vmatprep.subr.mxu0 0.0
    %1271 = vmatpush1.msra.mxu0 0.0
    %1272 = vmatprep.subr.mxu0 0.0
    %1273 = vmatpush1.msra.mxu0 0.0
    %1274 = vmatprep.subr.mxu0 0.0
    %1275 = vmatpush1.msra.mxu0 0.0
    %1276 = vmatprep.subr.mxu0 0.0
    %1277 = vmatpush1.msra.mxu0 0.0
    %1278 = vmatprep.subr.mxu0 0.0
    %1279 = vmatpush1.msra.mxu0 0.0
    %1280 = vmatprep.subr.mxu0 0.0
    %1281 = vmatpush1.msra.mxu0 0.0
    %1282 = vmatprep.subr.mxu0 0.0
    %1283 = vmatpush1.msra.mxu0 0.0
    %1284 = vmatprep.subr.mxu0 0.0
    %1285 = vmatpush1.msra.mxu0 0.0
    %1286 = vmatprep.subr.mxu0 0.0
    %1287 = vmatpush1.msra.mxu0 0.0
    %1288 = vmatprep.subr.mxu0 0.0
    %1289 = vmatpush1.msra.mxu0 0.0
    %1290 = vmatprep.mubr.f32.mxu0 0.0
    %1291 = vmatmul.mubr.f32.gmra.mrb[0].mxu0 %v1199
    %v1292 = vpop.f32.mrb[0].mxu0
    %v1293 = vadd.f32 0.0, %v1292
    %v1294 = vpop.f32.mrb[0].mxu0
    %1295 = vmatprep.mubr.f32.mxu0 0.0
    %1296 = vmatmul.mubr.f32.gmra.mrb[0].mxu0 %v1207
    %v1297 = vpop.f32.mrb[0].mxu0
    %v1298 = vadd.f32 0.0, %v1297
    %v1299 = vpop.f32.mrb[0].mxu0
    %1300 = vmatprep.mubr.f32.mxu0 0.0
    %1301 = vmatmul.mubr.f32.gmra.mrb[0].mxu0 %v1202
    %v1302 = vpop.f32.mrb[0].mxu0
    %v1303 = vadd.f32 0.0, %v1302
    %v1304 = vpop.f32.mrb[0].mxu0
    %1305 = vmatprep.mubr.f32.mxu0 0.0
    %1306 = vmatmul.mubr.f32.gmra.mrb[0].mxu0 %v1208
    %v1307 = vpop.f32.mrb[0].mxu0
    %v1308 = vadd.f32 0.0, %v1307
    %v1309 = vpop.f32.mrb[0].mxu0
    %1310 = vdwg.mxu0
    %v1311 = vadd.f32 %v1179, %v1293
    %v1312 = vadd.f32 %v1184, %v1298
    %v1313 = vadd.f32 %v1189, %v1303
    %v1314 = vadd.f32 %v1194, %v1308
    %v1315 = vlaneseq
    %v1316 = vshrl.u32 %v1315, 7
    %v1317 = vsub.s32 0, %v1316
    %v1318 = vrot.slane %v976, %v1317
    %v1319 = vadd.f32 %v1311, %v1318
    %v1320 = vadd.f32 %v1312, %v1318
    %v1321 = vadd.f32 %v1313, %v1318
    %v1322 = vadd.f32 %v1314, %v1318
    %v1323 = vadd.f32 %v1319, %v582
    %v1324 = vadd.f32 %v1320, %v583
    %v1325 = vadd.f32 %v1321, %v584
    %v1326 = vadd.f32 %v1322, %v585
    %v1327 = vld [vmem:[#allocation11 + $0x2] sm:$0x1]
    %v1328 = vlaneseq
    %v1329 = vshrl.u32 %v1328, 7
    %v1330 = vsub.s32 0, %v1329
    %v1331 = vrot.slane %v1327, %v1330
    %v1332 = vmul.f32 %v1323, %v1331
    %v1333 = vmul.f32 %v1324, %v1331
    %v1334 = vmul.f32 %v1325, %v1331
    %v1335 = vmul.f32 %v1326, %v1331
    %v1336 = vld [vmem:[#allocation13 + $0x2] sm:$0x1]
    %v1337 = vlaneseq
    %v1338 = vshrl.u32 %v1337, 7
    %v1339 = vsub.s32 0, %v1338
    %v1340 = vrot.slane %v1336, %v1339
    %v1341 = vadd.f32 %v1332, %v1340
    %v1342 = vadd.f32 %v1333, %v1340
    %v1343 = vadd.f32 %v1334, %v1340
    %v1344 = vadd.f32 %v1335, %v1340
    %v1345 = vmax.f32 %v1341, 0.0
    %v1346 = vmax.f32 %v1342, 0.0
    %v1347 = vmax.f32 %v1343, 0.0
    %v1348 = vmax.f32 %v1344, 0.0
    %v1349 = vld [vmem:[#allocation10 + $0x2] sm:$0x1]
    %v1354 = vrot.slane %v1345, 7
    %v1355 = vrot.slane %v1346, 7
    %v1356 = vsel %vm246, %v1354, %v1355
    %v1357 = vrot.slane %v1347, 7
    %v1358 = vrot.slane %v1348, 7
    %v1359 = vsel %vm246, %v1357, %v1358
    %v1364 = vsel %vm246, 0.0, %v1354
    %v1365 = vsel %vm246, 0.0, %v1357
    %s1366 = scalar_lea.vmem [#allocation8], 768
    %v1367 = vld [vmem:[%s1366] sm:$0xff]
    %v1368 = vld [vmem:[%s1366 + $0x8] sm:$0xff]
    %v1369 = vld [vmem:[%s1366 + $0x10] sm:$0xff]
    %v1370 = vld [vmem:[%s1366 + $0x18] sm:$0xff]
    %v1371 = vld [vmem:[%s1366 + $0x20] sm:$0xff]
    %v1372 = vld [vmem:[%s1366 + $0x28] sm:$0xff]
    %v1373 = vld [vmem:[%s1366 + $0x30] sm:$0xff]
    %v1374 = vld [vmem:[%s1366 + $0x38] sm:$0xff]
    %v1375 = vld [vmem:[%s1366 + $0x40] sm:$0xff]
    %v1376 = vld [vmem:[%s1366 + $0x48] sm:$0xff]
    %v1377 = vld [vmem:[%s1366 + $0x50] sm:$0xff]
    %v1378 = vld [vmem:[%s1366 + $0x58] sm:$0xff]
    %v1379 = vld [vmem:[%s1366 + $0x60] sm:$0xff]
    %v1380 = vld [vmem:[%s1366 + $0x68] sm:$0xff]
    %v1381 = vld [vmem:[%s1366 + $0x70] sm:$0xff]
    %v1382 = vld [vmem:[%s1366 + $0x78] sm:$0xff]
    %s1383 = scalar_lea.vmem [#allocation8], 896
    %v1384 = vld [vmem:[%s1383] sm:$0xff]
    %v1385 = vld [vmem:[%s1383 + $0x8] sm:$0xff]
    %v1386 = vld [vmem:[%s1383 + $0x10] sm:$0xff]
    %v1387 = vld [vmem:[%s1383 + $0x18] sm:$0xff]
    %v1388 = vld [vmem:[%s1383 + $0x20] sm:$0xff]
    %v1389 = vld [vmem:[%s1383 + $0x28] sm:$0xff]
    %v1390 = vld [vmem:[%s1383 + $0x30] sm:$0xff]
    %v1391 = vld [vmem:[%s1383 + $0x38] sm:$0xff]
    %v1392 = vld [vmem:[%s1383 + $0x40] sm:$0xff]
    %v1393 = vld [vmem:[%s1383 + $0x48] sm:$0xff]
    %v1394 = vld [vmem:[%s1383 + $0x50] sm:$0xff]
    %v1395 = vld [vmem:[%s1383 + $0x58] sm:$0xff]
    %v1396 = vld [vmem:[%s1383 + $0x60] sm:$0xff]
    %v1397 = vld [vmem:[%s1383 + $0x68] sm:$0xff]
    %v1398 = vld [vmem:[%s1383 + $0x70] sm:$0xff]
    %v1399 = vld [vmem:[%s1383 + $0x78] sm:$0xff]
    %1400 = vmatprep.subr.mxu0 0.0
    %1401 = vmatpush1.msra.mxu0 %v1384
    %1402 = vmatprep.subr.mxu0 0.0
    %1403 = vmatpush1.msra.mxu0 %v1385
    %1404 = vmatprep.subr.mxu0 0.0
    %1405 = vmatpush1.msra.mxu0 %v1386
    %1406 = vmatprep.subr.mxu0 0.0
    %1407 = vmatpush1.msra.mxu0 %v1387
    %1408 = vmatprep.subr.mxu0 0.0
    %1409 = vmatpush1.msra.mxu0 %v1388
    %1410 = vmatprep.subr.mxu0 0.0
    %1411 = vmatpush1.msra.mxu0 %v1389
    %1412 = vmatprep.subr.mxu0 0.0
    %1413 = vmatpush1.msra.mxu0 %v1390
    %1414 = vmatprep.subr.mxu0 0.0
    %1415 = vmatpush1.msra.mxu0 %v1391
    %1416 = vmatprep.subr.mxu0 0.0
    %1417 = vmatpush1.msra.mxu0 %v1392
    %1418 = vmatprep.subr.mxu0 0.0
    %1419 = vmatpush1.msra.mxu0 %v1393
    %1420 = vmatprep.subr.mxu0 0.0
    %1421 = vmatpush1.msra.mxu0 %v1394
    %1422 = vmatprep.subr.mxu0 0.0
    %1423 = vmatpush1.msra.mxu0 %v1395
    %1424 = vmatprep.subr.mxu0 0.0
    %1425 = vmatpush1.msra.mxu0 %v1396
    %1426 = vmatprep.subr.mxu0 0.0
    %1427 = vmatpush1.msra.mxu0 %v1397
    %1428 = vmatprep.subr.mxu0 0.0
    %1429 = vmatpush1.msra.mxu0 %v1398
    %1430 = vmatprep.subr.mxu0 0.0
    %1431 = vmatpush1.msra.mxu0 %v1399
    %1432 = vmatprep.subr.mxu0 0.0
    %1433 = vmatpush1.msra.mxu0 0.0
    %1434 = vmatprep.subr.mxu0 0.0
    %1435 = vmatpush1.msra.mxu0 0.0
    %1436 = vmatprep.subr.mxu0 0.0
    %1437 = vmatpush1.msra.mxu0 0.0
    %1438 = vmatprep.subr.mxu0 0.0
    %1439 = vmatpush1.msra.mxu0 0.0
    %1440 = vmatprep.subr.mxu0 0.0
    %1441 = vmatpush1.msra.mxu0 0.0
    %1442 = vmatprep.subr.mxu0 0.0
    %1443 = vmatpush1.msra.mxu0 0.0
    %1444 = vmatprep.subr.mxu0 0.0
    %1445 = vmatpush1.msra.mxu0 0.0
    %1446 = vmatprep.subr.mxu0 0.0
    %1447 = vmatpush1.msra.mxu0 0.0
    %1448 = vmatprep.subr.mxu0 0.0
    %1449 = vmatpush1.msra.mxu0 0.0
    %1450 = vmatprep.subr.mxu0 0.0
    %1451 = vmatpush1.msra.mxu0 0.0
    %1452 = vmatprep.subr.mxu0 0.0
    %1453 = vmatpush1.msra.mxu0 0.0
    %1454 = vmatprep.subr.mxu0 0.0
    %1455 = vmatpush1.msra.mxu0 0.0
    %1456 = vmatprep.subr.mxu0 0.0
    %1457 = vmatpush1.msra.mxu0 0.0
    %1458 = vmatprep.subr.mxu0 0.0
    %1459 = vmatpush1.msra.mxu0 0.0
    %1460 = vmatprep.subr.mxu0 0.0
    %1461 = vmatpush1.msra.mxu0 0.0
    %1462 = vmatprep.subr.mxu0 0.0
    %1463 = vmatpush1.msra.mxu0 0.0
    %1464 = vmatprep.mubr.f32.mxu0 0.0
    %1465 = vmatmul.mubr.f32.gmra.mrb[0].mxu0 %v1345
    %v1466 = vpop.f32.mrb[0].mxu0
    %v1467 = vadd.f32 0.0, %v1466
    %v1468 = vpop.f32.mrb[0].mxu0
    %1469 = vmatprep.mubr.f32.mxu0 0.0
    %1470 = vmatmul.mubr.f32.gmra.mrb[0].mxu0 %v1346
    %v1471 = vpop.f32.mrb[0].mxu0
    %v1472 = vadd.f32 0.0, %v1471
    %v1473 = vpop.f32.mrb[0].mxu0
    %1474 = vmatprep.mubr.f32.mxu0 0.0
    %1475 = vmatmul.mubr.f32.gmra.mrb[0].mxu0 %v1347
    %v1476 = vpop.f32.mrb[0].mxu0
    %v1477 = vadd.f32 0.0, %v1476
    %v1478 = vpop.f32.mrb[0].mxu0
    %1479 = vmatprep.mubr.f32.mxu0 0.0
    %1480 = vmatmul.mubr.f32.gmra.mrb[0].mxu0 %v1348
    %v1481 = vpop.f32.mrb[0].mxu0
    %v1482 = vadd.f32 0.0, %v1481
    %v1483 = vpop.f32.mrb[0].mxu0
    %1484 = vdwg.mxu0
    %1485 = vmatprep.subr.mxu0 0.0
    %1486 = vmatpush1.msra.mxu0 %v1367
    %1487 = vmatprep.subr.mxu0 0.0
    %1488 = vmatpush1.msra.mxu0 %v1368
    %1489 = vmatprep.subr.mxu0 0.0
    %1490 = vmatpush1.msra.mxu0 %v1369
    %1491 = vmatprep.subr.mxu0 0.0
    %1492 = vmatpush1.msra.mxu0 %v1370
    %1493 = vmatprep.subr.mxu0 0.0
    %1494 = vmatpush1.msra.mxu0 %v1371
    %1495 = vmatprep.subr.mxu0 0.0
    %1496 = vmatpush1.msra.mxu0 %v1372
    %1497 = vmatprep.subr.mxu0 0.0
    %1498 = vmatpush1.msra.mxu0 %v1373
    %1499 = vmatprep.subr.mxu0 0.0
    %1500 = vmatpush1.msra.mxu0 %v1374
    %1501 = vmatprep.subr.mxu0 0.0
    %1502 = vmatpush1.msra.mxu0 %v1375
    %1503 = vmatprep.subr.mxu0 0.0
    %1504 = vmatpush1.msra.mxu0 %v1376
    %1505 = vmatprep.subr.mxu0 0.0
    %1506 = vmatpush1.msra.mxu0 %v1377
    %1507 = vmatprep.subr.mxu0 0.0
    %1508 = vmatpush1.msra.mxu0 %v1378
    %1509 = vmatprep.subr.mxu0 0.0
    %1510 = vmatpush1.msra.mxu0 %v1379
    %1511 = vmatprep.subr.mxu0 0.0
    %1512 = vmatpush1.msra.mxu0 %v1380
    %1513 = vmatprep.subr.mxu0 0.0
    %1514 = vmatpush1.msra.mxu0 %v1381
    %1515 = vmatprep.subr.mxu0 0.0
    %1516 = vmatpush1.msra.mxu0 %v1382
    %1517 = vmatprep.subr.mxu0 0.0
    %1518 = vmatpush1.msra.mxu0 0.0
    %1519 = vmatprep.subr.mxu0 0.0
    %1520 = vmatpush1.msra.mxu0 0.0
    %1521 = vmatprep.subr.mxu0 0.0
    %1522 = vmatpush1.msra.mxu0 0.0
    %1523 = vmatprep.subr.mxu0 0.0
    %1524 = vmatpush1.msra.mxu0 0.0
    %1525 = vmatprep.subr.mxu0 0.0
    %1526 = vmatpush1.msra.mxu0 0.0
    %1527 = vmatprep.subr.mxu0 0.0
    %1528 = vmatpush1.msra.mxu0 0.0
    %1529 = vmatprep.subr.mxu0 0.0
    %1530 = vmatpush1.msra.mxu0 0.0
    %1531 = vmatprep.subr.mxu0 0.0
    %1532 = vmatpush1.msra.mxu0 0.0
    %1533 = vmatprep.subr.mxu0 0.0
    %1534 = vmatpush1.msra.mxu0 0.0
    %1535 = vmatprep.subr.mxu0 0.0
    %1536 = vmatpush1.msra.mxu0 0.0
    %1537 = vmatprep.subr.mxu0 0.0
    %1538 = vmatpush1.msra.mxu0 0.0
    %1539 = vmatprep.subr.mxu0 0.0
    %1540 = vmatpush1.msra.mxu0 0.0
    %1541 = vmatprep.subr.mxu0 0.0
    %1542 = vmatpush1.msra.mxu0 0.0
    %1543 = vmatprep.subr.mxu0 0.0
    %1544 = vmatpush1.msra.mxu0 0.0
    %1545 = vmatprep.subr.mxu0 0.0
    %1546 = vmatpush1.msra.mxu0 0.0
    %1547 = vmatprep.subr.mxu0 0.0
    %1548 = vmatpush1.msra.mxu0 0.0
    %1549 = vmatprep.mubr.f32.mxu0 0.0
    %1550 = vmatmul.mubr.f32.gmra.mrb[0].mxu0 %v1364
    %v1551 = vpop.f32.mrb[0].mxu0
    %v1552 = vadd.f32 %v1467, %v1551
    %v1553 = vpop.f32.mrb[0].mxu0
    %1554 = vmatprep.mubr.f32.mxu0 0.0
    %1555 = vmatmul.mubr.f32.gmra.mrb[0].mxu0 %v1356
    %v1556 = vpop.f32.mrb[0].mxu0
    %v1557 = vadd.f32 %v1472, %v1556
    %v1558 = vpop.f32.mrb[0].mxu0
    %1559 = vmatprep.mubr.f32.mxu0 0.0
    %1560 = vmatmul.mubr.f32.gmra.mrb[0].mxu0 %v1365
    %v1561 = vpop.f32.mrb[0].mxu0
    %v1562 = vadd.f32 %v1477, %v1561
    %v1563 = vpop.f32.mrb[0].mxu0
    %1564 = vmatprep.mubr.f32.mxu0 0.0
    %1565 = vmatmul.mubr.f32.gmra.mrb[0].mxu0 %v1359
    %v1566 = vpop.f32.mrb[0].mxu0
    %v1567 = vadd.f32 %v1482, %v1566
    %v1568 = vpop.f32.mrb[0].mxu0
    %1569 = vdwg.mxu0
    %v1570 = vrot.slane %v1345, 1
    %v1571 = vrot.slane %v1346, 1
    %v1572 = vsel %vm459, %v1570, %v1571
    %v1573 = vrot.slane %v1347, 1
    %v1574 = vrot.slane %v1348, 1
    %v1575 = vsel %vm459, %v1573, %v1574
    %v1580 = vsel %vm459, %v1571, 0.0
    %v1581 = vsel %vm459, %v1574, 0.0
    %s1582 = scalar_lea.vmem [#allocation8], 1024
    %v1583 = vld [vmem:[%s1582] sm:$0xff]
    %v1584 = vld [vmem:[%s1582 + $0x8] sm:$0xff]
    %v1585 = vld [vmem:[%s1582 + $0x10] sm:$0xff]
    %v1586 = vld [vmem:[%s1582 + $0x18] sm:$0xff]
    %v1587 = vld [vmem:[%s1582 + $0x20] sm:$0xff]
    %v1588 = vld [vmem:[%s1582 + $0x28] sm:$0xff]
    %v1589 = vld [vmem:[%s1582 + $0x30] sm:$0xff]
    %v1590 = vld [vmem:[%s1582 + $0x38] sm:$0xff]
    %v1591 = vld [vmem:[%s1582 + $0x40] sm:$0xff]
    %v1592 = vld [vmem:[%s1582 + $0x48] sm:$0xff]
    %v1593 = vld [vmem:[%s1582 + $0x50] sm:$0xff]
    %v1594 = vld [vmem:[%s1582 + $0x58] sm:$0xff]
    %v1595 = vld [vmem:[%s1582 + $0x60] sm:$0xff]
    %v1596 = vld [vmem:[%s1582 + $0x68] sm:$0xff]
    %v1597 = vld [vmem:[%s1582 + $0x70] sm:$0xff]
    %v1598 = vld [vmem:[%s1582 + $0x78] sm:$0xff]
    %1599 = vmatprep.subr.mxu0 0.0
    %1600 = vmatpush1.msra.mxu0 %v1583
    %1601 = vmatprep.subr.mxu0 0.0
    %1602 = vmatpush1.msra.mxu0 %v1584
    %1603 = vmatprep.subr.mxu0 0.0
    %1604 = vmatpush1.msra.mxu0 %v1585
    %1605 = vmatprep.subr.mxu0 0.0
    %1606 = vmatpush1.msra.mxu0 %v1586
    %1607 = vmatprep.subr.mxu0 0.0
    %1608 = vmatpush1.msra.mxu0 %v1587
    %1609 = vmatprep.subr.mxu0 0.0
    %1610 = vmatpush1.msra.mxu0 %v1588
    %1611 = vmatprep.subr.mxu0 0.0
    %1612 = vmatpush1.msra.mxu0 %v1589
    %1613 = vmatprep.subr.mxu0 0.0
    %1614 = vmatpush1.msra.mxu0 %v1590
    %1615 = vmatprep.subr.mxu0 0.0
    %1616 = vmatpush1.msra.mxu0 %v1591
    %1617 = vmatprep.subr.mxu0 0.0
    %1618 = vmatpush1.msra.mxu0 %v1592
    %1619 = vmatprep.subr.mxu0 0.0
    %1620 = vmatpush1.msra.mxu0 %v1593
    %1621 = vmatprep.subr.mxu0 0.0
    %1622 = vmatpush1.msra.mxu0 %v1594
    %1623 = vmatprep.subr.mxu0 0.0
    %1624 = vmatpush1.msra.mxu0 %v1595
    %1625 = vmatprep.subr.mxu0 0.0
    %1626 = vmatpush1.msra.mxu0 %v1596
    %1627 = vmatprep.subr.mxu0 0.0
    %1628 = vmatpush1.msra.mxu0 %v1597
    %1629 = vmatprep.subr.mxu0 0.0
    %1630 = vmatpush1.msra.mxu0 %v1598
    %1631 = vmatprep.subr.mxu0 0.0
    %1632 = vmatpush1.msra.mxu0 0.0
    %1633 = vmatprep.subr.mxu0 0.0
    %1634 = vmatpush1.msra.mxu0 0.0
    %1635 = vmatprep.subr.mxu0 0.0
    %1636 = vmatpush1.msra.mxu0 0.0
    %1637 = vmatprep.subr.mxu0 0.0
    %1638 = vmatpush1.msra.mxu0 0.0
    %1639 = vmatprep.subr.mxu0 0.0
    %1640 = vmatpush1.msra.mxu0 0.0
    %1641 = vmatprep.subr.mxu0 0.0
    %1642 = vmatpush1.msra.mxu0 0.0
    %1643 = vmatprep.subr.mxu0 0.0
    %1644 = vmatpush1.msra.mxu0 0.0
    %1645 = vmatprep.subr.mxu0 0.0
    %1646 = vmatpush1.msra.mxu0 0.0
    %1647 = vmatprep.subr.mxu0 0.0
    %1648 = vmatpush1.msra.mxu0 0.0
    %1649 = vmatprep.subr.mxu0 0.0
    %1650 = vmatpush1.msra.mxu0 0.0
    %1651 = vmatprep.subr.mxu0 0.0
    %1652 = vmatpush1.msra.mxu0 0.0
    %1653 = vmatprep.subr.mxu0 0.0
    %1654 = vmatpush1.msra.mxu0 0.0
    %1655 = vmatprep.subr.mxu0 0.0
    %1656 = vmatpush1.msra.mxu0 0.0
    %1657 = vmatprep.subr.mxu0 0.0
    %1658 = vmatpush1.msra.mxu0 0.0
    %1659 = vmatprep.subr.mxu0 0.0
    %1660 = vmatpush1.msra.mxu0 0.0
    %1661 = vmatprep.subr.mxu0 0.0
    %1662 = vmatpush1.msra.mxu0 0.0
    %1663 = vmatprep.mubr.f32.mxu0 0.0
    %1664 = vmatmul.mubr.f32.gmra.mrb[0].mxu0 %v1572
    %v1665 = vpop.f32.mrb[0].mxu0
    %v1666 = vadd.f32 0.0, %v1665
    %v1667 = vpop.f32.mrb[0].mxu0
    %1668 = vmatprep.mubr.f32.mxu0 0.0
    %1669 = vmatmul.mubr.f32.gmra.mrb[0].mxu0 %v1580
    %v1670 = vpop.f32.mrb[0].mxu0
    %v1671 = vadd.f32 0.0, %v1670
    %v1672 = vpop.f32.mrb[0].mxu0
    %1673 = vmatprep.mubr.f32.mxu0 0.0
    %1674 = vmatmul.mubr.f32.gmra.mrb[0].mxu0 %v1575
    %v1675 = vpop.f32.mrb[0].mxu0
    %v1676 = vadd.f32 0.0, %v1675
    %v1677 = vpop.f32.mrb[0].mxu0
    %1678 = vmatprep.mubr.f32.mxu0 0.0
    %1679 = vmatmul.mubr.f32.gmra.mrb[0].mxu0 %v1581
    %v1680 = vpop.f32.mrb[0].mxu0
    %v1681 = vadd.f32 0.0, %v1680
    %v1682 = vpop.f32.mrb[0].mxu0
    %1683 = vdwg.mxu0
    %v1684 = vadd.f32 %v1552, %v1666
    %v1685 = vadd.f32 %v1557, %v1671
    %v1686 = vadd.f32 %v1562, %v1676
    %v1687 = vadd.f32 %v1567, %v1681
    %v1688 = vlaneseq
    %v1689 = vshrl.u32 %v1688, 7
    %v1690 = vsub.s32 0, %v1689
    %v1691 = vrot.slane %v1349, %v1690
    %v1692 = vadd.f32 %v1684, %v1691
    %v1693 = vadd.f32 %v1685, %v1691
    %v1694 = vadd.f32 %v1686, %v1691
    %v1695 = vadd.f32 %v1687, %v1691
    %v1696 = vld [vmem:[#allocation11 + $0x3] sm:$0x1]
    %v1697 = vlaneseq
    %v1698 = vshrl.u32 %v1697, 7
    %v1699 = vsub.s32 0, %v1698
    %v1700 = vrot.slane %v1696, %v1699
    %v1701 = vmul.f32 %v1692, %v1700
    %v1702 = vmul.f32 %v1693, %v1700
    %v1703 = vmul.f32 %v1694, %v1700
    %v1704 = vmul.f32 %v1695, %v1700
    %v1705 = vld [vmem:[#allocation13 + $0x3] sm:$0x1]
    %v1706 = vlaneseq
    %v1707 = vshrl.u32 %v1706, 7
    %v1708 = vsub.s32 0, %v1707
    %v1709 = vrot.slane %v1705, %v1708
    %v1710 = vadd.f32 %v1701, %v1709
    %v1711 = vadd.f32 %v1702, %v1709
    %v1712 = vadd.f32 %v1703, %v1709
    %v1713 = vadd.f32 %v1704, %v1709
    %v1714 = vmax.f32 %v1710, 0.0
    %v1715 = vmax.f32 %v1711, 0.0
    %v1716 = vmax.f32 %v1712, 0.0
    %v1717 = vmax.f32 %v1713, 0.0
    %v1718 = vld [vmem:[#allocation10 + $0x3] sm:$0x1]
    %v1723 = vrot.slane %v1714, 7
    %v1724 = vrot.slane %v1715, 7
    %v1725 = vsel %vm246, %v1723, %v1724
    %v1726 = vrot.slane %v1716, 7
    %v1727 = vrot.slane %v1717, 7
    %v1728 = vsel %vm246, %v1726, %v1727
    %v1733 = vsel %vm246, 0.0, %v1723
    %v1734 = vsel %vm246, 0.0, %v1726
    %s1735 = scalar_lea.vmem [#allocation8], 1152
    %v1736 = vld [vmem:[%s1735] sm:$0xff]
    %v1737 = vld [vmem:[%s1735 + $0x8] sm:$0xff]
    %v1738 = vld [vmem:[%s1735 + $0x10] sm:$0xff]
    %v1739 = vld [vmem:[%s1735 + $0x18] sm:$0xff]
    %v1740 = vld [vmem:[%s1735 + $0x20] sm:$0xff]
    %v1741 = vld [vmem:[%s1735 + $0x28] sm:$0xff]
    %v1742 = vld [vmem:[%s1735 + $0x30] sm:$0xff]
    %v1743 = vld [vmem:[%s1735 + $0x38] sm:$0xff]
    %v1744 = vld [vmem:[%s1735 + $0x40] sm:$0xff]
    %v1745 = vld [vmem:[%s1735 + $0x48] sm:$0xff]
    %v1746 = vld [vmem:[%s1735 + $0x50] sm:$0xff]
    %v1747 = vld [vmem:[%s1735 + $0x58] sm:$0xff]
    %v1748 = vld [vmem:[%s1735 + $0x60] sm:$0xff]
    %v1749 = vld [vmem:[%s1735 + $0x68] sm:$0xff]
    %v1750 = vld [vmem:[%s1735 + $0x70] sm:$0xff]
    %v1751 = vld [vmem:[%s1735 + $0x78] sm:$0xff]
    %s1752 = scalar_lea.vmem [#allocation8], 1280
    %v1753 = vld [vmem:[%s1752] sm:$0xff]
    %v1754 = vld [vmem:[%s1752 + $0x8] sm:$0xff]
    %v1755 = vld [vmem:[%s1752 + $0x10] sm:$0xff]
    %v1756 = vld [vmem:[%s1752 + $0x18] sm:$0xff]
    %v1757 = vld [vmem:[%s1752 + $0x20] sm:$0xff]
    %v1758 = vld [vmem:[%s1752 + $0x28] sm:$0xff]
    %v1759 = vld [vmem:[%s1752 + $0x30] sm:$0xff]
    %v1760 = vld [vmem:[%s1752 + $0x38] sm:$0xff]
    %v1761 = vld [vmem:[%s1752 + $0x40] sm:$0xff]
    %v1762 = vld [vmem:[%s1752 + $0x48] sm:$0xff]
    %v1763 = vld [vmem:[%s1752 + $0x50] sm:$0xff]
    %v1764 = vld [vmem:[%s1752 + $0x58] sm:$0xff]
    %v1765 = vld [vmem:[%s1752 + $0x60] sm:$0xff]
    %v1766 = vld [vmem:[%s1752 + $0x68] sm:$0xff]
    %v1767 = vld [vmem:[%s1752 + $0x70] sm:$0xff]
    %v1768 = vld [vmem:[%s1752 + $0x78] sm:$0xff]
    %1769 = vmatprep.subr.mxu0 0.0
    %1770 = vmatpush1.msra.mxu0 %v1753
    %1771 = vmatprep.subr.mxu0 0.0
    %1772 = vmatpush1.msra.mxu0 %v1754
    %1773 = vmatprep.subr.mxu0 0.0
    %1774 = vmatpush1.msra.mxu0 %v1755
    %1775 = vmatprep.subr.mxu0 0.0
    %1776 = vmatpush1.msra.mxu0 %v1756
    %1777 = vmatprep.subr.mxu0 0.0
    %1778 = vmatpush1.msra.mxu0 %v1757
    %1779 = vmatprep.subr.mxu0 0.0
    %1780 = vmatpush1.msra.mxu0 %v1758
    %1781 = vmatprep.subr.mxu0 0.0
    %1782 = vmatpush1.msra.mxu0 %v1759
    %1783 = vmatprep.subr.mxu0 0.0
    %1784 = vmatpush1.msra.mxu0 %v1760
    %1785 = vmatprep.subr.mxu0 0.0
    %1786 = vmatpush1.msra.mxu0 %v1761
    %1787 = vmatprep.subr.mxu0 0.0
    %1788 = vmatpush1.msra.mxu0 %v1762
    %1789 = vmatprep.subr.mxu0 0.0
    %1790 = vmatpush1.msra.mxu0 %v1763
    %1791 = vmatprep.subr.mxu0 0.0
    %1792 = vmatpush1.msra.mxu0 %v1764
    %1793 = vmatprep.subr.mxu0 0.0
    %1794 = vmatpush1.msra.mxu0 %v1765
    %1795 = vmatprep.subr.mxu0 0.0
    %1796 = vmatpush1.msra.mxu0 %v1766
    %1797 = vmatprep.subr.mxu0 0.0
    %1798 = vmatpush1.msra.mxu0 %v1767
    %1799 = vmatprep.subr.mxu0 0.0
    %1800 = vmatpush1.msra.mxu0 %v1768
    %1801 = vmatprep.subr.mxu0 0.0
    %1802 = vmatpush1.msra.mxu0 0.0
    %1803 = vmatprep.subr.mxu0 0.0
    %1804 = vmatpush1.msra.mxu0 0.0
    %1805 = vmatprep.subr.mxu0 0.0
    %1806 = vmatpush1.msra.mxu0 0.0
    %1807 = vmatprep.subr.mxu0 0.0
    %1808 = vmatpush1.msra.mxu0 0.0
    %1809 = vmatprep.subr.mxu0 0.0
    %1810 = vmatpush1.msra.mxu0 0.0
    %1811 = vmatprep.subr.mxu0 0.0
    %1812 = vmatpush1.msra.mxu0 0.0
    %1813 = vmatprep.subr.mxu0 0.0
    %1814 = vmatpush1.msra.mxu0 0.0
    %1815 = vmatprep.subr.mxu0 0.0
    %1816 = vmatpush1.msra.mxu0 0.0
    %1817 = vmatprep.subr.mxu0 0.0
    %1818 = vmatpush1.msra.mxu0 0.0
    %1819 = vmatprep.subr.mxu0 0.0
    %1820 = vmatpush1.msra.mxu0 0.0
    %1821 = vmatprep.subr.mxu0 0.0
    %1822 = vmatpush1.msra.mxu0 0.0
    %1823 = vmatprep.subr.mxu0 0.0
    %1824 = vmatpush1.msra.mxu0 0.0
    %1825 = vmatprep.subr.mxu0 0.0
    %1826 = vmatpush1.msra.mxu0 0.0
    %1827 = vmatprep.subr.mxu0 0.0
    %1828 = vmatpush1.msra.mxu0 0.0
    %1829 = vmatprep.subr.mxu0 0.0
    %1830 = vmatpush1.msra.mxu0 0.0
    %1831 = vmatprep.subr.mxu0 0.0
    %1832 = vmatpush1.msra.mxu0 0.0
    %1833 = vmatprep.mubr.f32.mxu0 0.0
    %1834 = vmatmul.mubr.f32.gmra.mrb[0].mxu0 %v1714
    %v1835 = vpop.f32.mrb[0].mxu0
    %v1836 = vadd.f32 0.0, %v1835
    %v1837 = vpop.f32.mrb[0].mxu0
    %1838 = vmatprep.mubr.f32.mxu0 0.0
    %1839 = vmatmul.mubr.f32.gmra.mrb[0].mxu0 %v1715
    %v1840 = vpop.f32.mrb[0].mxu0
    %v1841 = vadd.f32 0.0, %v1840
    %v1842 = vpop.f32.mrb[0].mxu0
    %1843 = vmatprep.mubr.f32.mxu0 0.0
    %1844 = vmatmul.mubr.f32.gmra.mrb[0].mxu0 %v1716
    %v1845 = vpop.f32.mrb[0].mxu0
    %v1846 = vadd.f32 0.0, %v1845
    %v1847 = vpop.f32.mrb[0].mxu0
    %1848 = vmatprep.mubr.f32.mxu0 0.0
    %1849 = vmatmul.mubr.f32.gmra.mrb[0].mxu0 %v1717
    %v1850 = vpop.f32.mrb[0].mxu0
    %v1851 = vadd.f32 0.0, %v1850
    %v1852 = vpop.f32.mrb[0].mxu0
    %1853 = vdwg.mxu0
    %1854 = vmatprep.subr.mxu0 0.0
    %1855 = vmatpush1.msra.mxu0 %v1736
    %1856 = vmatprep.subr.mxu0 0.0
    %1857 = vmatpush1.msra.mxu0 %v1737
    %1858 = vmatprep.subr.mxu0 0.0
    %1859 = vmatpush1.msra.mxu0 %v1738
    %1860 = vmatprep.subr.mxu0 0.0
    %1861 = vmatpush1.msra.mxu0 %v1739
    %1862 = vmatprep.subr.mxu0 0.0
    %1863 = vmatpush1.msra.mxu0 %v1740
    %1864 = vmatprep.subr.mxu0 0.0
    %1865 = vmatpush1.msra.mxu0 %v1741
    %1866 = vmatprep.subr.mxu0 0.0
    %1867 = vmatpush1.msra.mxu0 %v1742
    %1868 = vmatprep.subr.mxu0 0.0
    %1869 = vmatpush1.msra.mxu0 %v1743
    %1870 = vmatprep.subr.mxu0 0.0
    %1871 = vmatpush1.msra.mxu0 %v1744
    %1872 = vmatprep.subr.mxu0 0.0
    %1873 = vmatpush1.msra.mxu0 %v1745
    %1874 = vmatprep.subr.mxu0 0.0
    %1875 = vmatpush1.msra.mxu0 %v1746
    %1876 = vmatprep.subr.mxu0 0.0
    %1877 = vmatpush1.msra.mxu0 %v1747
    %1878 = vmatprep.subr.mxu0 0.0
    %1879 = vmatpush1.msra.mxu0 %v1748
    %1880 = vmatprep.subr.mxu0 0.0
    %1881 = vmatpush1.msra.mxu0 %v1749
    %1882 = vmatprep.subr.mxu0 0.0
    %1883 = vmatpush1.msra.mxu0 %v1750
    %1884 = vmatprep.subr.mxu0 0.0
    %1885 = vmatpush1.msra.mxu0 %v1751
    %1886 = vmatprep.subr.mxu0 0.0
    %1887 = vmatpush1.msra.mxu0 0.0
    %1888 = vmatprep.subr.mxu0 0.0
    %1889 = vmatpush1.msra.mxu0 0.0
    %1890 = vmatprep.subr.mxu0 0.0
    %1891 = vmatpush1.msra.mxu0 0.0
    %1892 = vmatprep.subr.mxu0 0.0
    %1893 = vmatpush1.msra.mxu0 0.0
    %1894 = vmatprep.subr.mxu0 0.0
    %1895 = vmatpush1.msra.mxu0 0.0
    %1896 = vmatprep.subr.mxu0 0.0
    %1897 = vmatpush1.msra.mxu0 0.0
    %1898 = vmatprep.subr.mxu0 0.0
    %1899 = vmatpush1.msra.mxu0 0.0
    %1900 = vmatprep.subr.mxu0 0.0
    %1901 = vmatpush1.msra.mxu0 0.0
    %1902 = vmatprep.subr.mxu0 0.0
    %1903 = vmatpush1.msra.mxu0 0.0
    %1904 = vmatprep.subr.mxu0 0.0
    %1905 = vmatpush1.msra.mxu0 0.0
    %1906 = vmatprep.subr.mxu0 0.0
    %1907 = vmatpush1.msra.mxu0 0.0
    %1908 = vmatprep.subr.mxu0 0.0
    %1909 = vmatpush1.msra.mxu0 0.0
    %1910 = vmatprep.subr.mxu0 0.0
    %1911 = vmatpush1.msra.mxu0 0.0
    %1912 = vmatprep.subr.mxu0 0.0
    %1913 = vmatpush1.msra.mxu0 0.0
    %1914 = vmatprep.subr.mxu0 0.0
    %1915 = vmatpush1.msra.mxu0 0.0
    %1916 = vmatprep.subr.mxu0 0.0
    %1917 = vmatpush1.msra.mxu0 0.0
    %1918 = vmatprep.mubr.f32.mxu0 0.0
    %1919 = vmatmul.mubr.f32.gmra.mrb[0].mxu0 %v1733
    %v1920 = vpop.f32.mrb[0].mxu0
    %v1921 = vadd.f32 %v1836, %v1920
    %v1922 = vpop.f32.mrb[0].mxu0
    %1923 = vmatprep.mubr.f32.mxu0 0.0
    %1924 = vmatmul.mubr.f32.gmra.mrb[0].mxu0 %v1725
    %v1925 = vpop.f32.mrb[0].mxu0
    %v1926 = vadd.f32 %v1841, %v1925
    %v1927 = vpop.f32.mrb[0].mxu0
    %1928 = vmatprep.mubr.f32.mxu0 0.0
    %1929 = vmatmul.mubr.f32.gmra.mrb[0].mxu0 %v1734
    %v1930 = vpop.f32.mrb[0].mxu0
    %v1931 = vadd.f32 %v1846, %v1930
    %v1932 = vpop.f32.mrb[0].mxu0
    %1933 = vmatprep.mubr.f32.mxu0 0.0
    %1934 = vmatmul.mubr.f32.gmra.mrb[0].mxu0 %v1728
    %v1935 = vpop.f32.mrb[0].mxu0
    %v1936 = vadd.f32 %v1851, %v1935
    %v1937 = vpop.f32.mrb[0].mxu0
    %1938 = vdwg.mxu0
    %v1939 = vrot.slane %v1714, 1
    %v1940 = vrot.slane %v1715, 1
    %v1941 = vsel %vm459, %v1939, %v1940
    %v1942 = vrot.slane %v1716, 1
    %v1943 = vrot.slane %v1717, 1
    %v1944 = vsel %vm459, %v1942, %v1943
    %v1949 = vsel %vm459, %v1940, 0.0
    %v1950 = vsel %vm459, %v1943, 0.0
    %s1951 = scalar_lea.vmem [#allocation8], 1408
    %v1952 = vld [vmem:[%s1951] sm:$0xff]
    %v1953 = vld [vmem:[%s1951 + $0x8] sm:$0xff]
    %v1954 = vld [vmem:[%s1951 + $0x10] sm:$0xff]
    %v1955 = vld [vmem:[%s1951 + $0x18] sm:$0xff]
    %v1956 = vld [vmem:[%s1951 + $0x20] sm:$0xff]
    %v1957 = vld [vmem:[%s1951 + $0x28] sm:$0xff]
    %v1958 = vld [vmem:[%s1951 + $0x30] sm:$0xff]
    %v1959 = vld [vmem:[%s1951 + $0x38] sm:$0xff]
    %v1960 = vld [vmem:[%s1951 + $0x40] sm:$0xff]
    %v1961 = vld [vmem:[%s1951 + $0x48] sm:$0xff]
    %v1962 = vld [vmem:[%s1951 + $0x50] sm:$0xff]
    %v1963 = vld [vmem:[%s1951 + $0x58] sm:$0xff]
    %v1964 = vld [vmem:[%s1951 + $0x60] sm:$0xff]
    %v1965 = vld [vmem:[%s1951 + $0x68] sm:$0xff]
    %v1966 = vld [vmem:[%s1951 + $0x70] sm:$0xff]
    %v1967 = vld [vmem:[%s1951 + $0x78] sm:$0xff]
    %1968 = vmatprep.subr.mxu0 0.0
    %1969 = vmatpush1.msra.mxu0 %v1952
    %1970 = vmatprep.subr.mxu0 0.0
    %1971 = vmatpush1.msra.mxu0 %v1953
    %1972 = vmatprep.subr.mxu0 0.0
    %1973 = vmatpush1.msra.mxu0 %v1954
    %1974 = vmatprep.subr.mxu0 0.0
    %1975 = vmatpush1.msra.mxu0 %v1955
    %1976 = vmatprep.subr.mxu0 0.0
    %1977 = vmatpush1.msra.mxu0 %v1956
    %1978 = vmatprep.subr.mxu0 0.0
    %1979 = vmatpush1.msra.mxu0 %v1957
    %1980 = vmatprep.subr.mxu0 0.0
    %1981 = vmatpush1.msra.mxu0 %v1958
    %1982 = vmatprep.subr.mxu0 0.0
    %1983 = vmatpush1.msra.mxu0 %v1959
    %1984 = vmatprep.subr.mxu0 0.0
    %1985 = vmatpush1.msra.mxu0 %v1960
    %1986 = vmatprep.subr.mxu0 0.0
    %1987 = vmatpush1.msra.mxu0 %v1961
    %1988 = vmatprep.subr.mxu0 0.0
    %1989 = vmatpush1.msra.mxu0 %v1962
    %1990 = vmatprep.subr.mxu0 0.0
    %1991 = vmatpush1.msra.mxu0 %v1963
    %1992 = vmatprep.subr.mxu0 0.0
    %1993 = vmatpush1.msra.mxu0 %v1964
    %1994 = vmatprep.subr.mxu0 0.0
    %1995 = vmatpush1.msra.mxu0 %v1965
    %1996 = vmatprep.subr.mxu0 0.0
    %1997 = vmatpush1.msra.mxu0 %v1966
    %1998 = vmatprep.subr.mxu0 0.0
    %1999 = vmatpush1.msra.mxu0 %v1967
    %2000 = vmatprep.subr.mxu0 0.0
    %2001 = vmatpush1.msra.mxu0 0.0
    %2002 = vmatprep.subr.mxu0 0.0
    %2003 = vmatpush1.msra.mxu0 0.0
    %2004 = vmatprep.subr.mxu0 0.0
    %2005 = vmatpush1.msra.mxu0 0.0
    %2006 = vmatprep.subr.mxu0 0.0
    %2007 = vmatpush1.msra.mxu0 0.0
    %2008 = vmatprep.subr.mxu0 0.0
    %2009 = vmatpush1.msra.mxu0 0.0
    %2010 = vmatprep.subr.mxu0 0.0
    %2011 = vmatpush1.msra.mxu0 0.0
    %2012 = vmatprep.subr.mxu0 0.0
    %2013 = vmatpush1.msra.mxu0 0.0
    %2014 = vmatprep.subr.mxu0 0.0
    %2015 = vmatpush1.msra.mxu0 0.0
    %2016 = vmatprep.subr.mxu0 0.0
    %2017 = vmatpush1.msra.mxu0 0.0
    %2018 = vmatprep.subr.mxu0 0.0
    %2019 = vmatpush1.msra.mxu0 0.0
    %2020 = vmatprep.subr.mxu0 0.0
    %2021 = vmatpush1.msra.mxu0 0.0
    %2022 = vmatprep.subr.mxu0 0.0
    %2023 = vmatpush1.msra.mxu0 0.0
    %2024 = vmatprep.subr.mxu0 0.0
    %2025 = vmatpush1.msra.mxu0 0.0
    %2026 = vmatprep.subr.mxu0 0.0
    %2027 = vmatpush1.msra.mxu0 0.0
    %2028 = vmatprep.subr.mxu0 0.0
    %2029 = vmatpush1.msra.mxu0 0.0
    %2030 = vmatprep.subr.mxu0 0.0
    %2031 = vmatpush1.msra.mxu0 0.0
    %2032 = vmatprep.mubr.f32.mxu0 0.0
    %2033 = vmatmul.mubr.f32.gmra.mrb[0].mxu0 %v1941
    %v2034 = vpop.f32.mrb[0].mxu0
    %v2035 = vadd.f32 0.0, %v2034
    %v2036 = vpop.f32.mrb[0].mxu0
    %2037 = vmatprep.mubr.f32.mxu0 0.0
    %2038 = vmatmul.mubr.f32.gmra.mrb[0].mxu0 %v1949
    %v2039 = vpop.f32.mrb[0].mxu0
    %v2040 = vadd.f32 0.0, %v2039
    %v2041 = vpop.f32.mrb[0].mxu0
    %2042 = vmatprep.mubr.f32.mxu0 0.0
    %2043 = vmatmul.mubr.f32.gmra.mrb[0].mxu0 %v1944
    %v2044 = vpop.f32.mrb[0].mxu0
    %v2045 = vadd.f32 0.0, %v2044
    %v2046 = vpop.f32.mrb[0].mxu0
    %2047 = vmatprep.mubr.f32.mxu0 0.0
    %2048 = vmatmul.mubr.f32.gmra.mrb[0].mxu0 %v1950
    %v2049 = vpop.f32.mrb[0].mxu0
    %v2050 = vadd.f32 0.0, %v2049
    %v2051 = vpop.f32.mrb[0].mxu0
    %2052 = vdwg.mxu0
    %v2053 = vadd.f32 %v1921, %v2035
    %v2054 = vadd.f32 %v1926, %v2040
    %v2055 = vadd.f32 %v1931, %v2045
    %v2056 = vadd.f32 %v1936, %v2050
    %v2057 = vlaneseq
    %v2058 = vshrl.u32 %v2057, 7
    %v2059 = vsub.s32 0, %v2058
    %v2060 = vrot.slane %v1718, %v2059
    %v2061 = vadd.f32 %v2053, %v2060
    %v2062 = vadd.f32 %v2054, %v2060
    %v2063 = vadd.f32 %v2055, %v2060
    %v2064 = vadd.f32 %v2056, %v2060
    %v2065 = vadd.f32 %v2061, %v1323
    %v2066 = vadd.f32 %v2062, %v1324
    %v2067 = vadd.f32 %v2063, %v1325
    %v2068 = vadd.f32 %v2064, %v1326
    %v2069 = vld [vmem:[#allocation16] sm:$0x1]
    %v2070 = vlaneseq
    %v2071 = vshrl.u32 %v2070, 7
    %v2072 = vsub.s32 0, %v2071
    %v2073 = vrot.slane %v2069, %v2072
    %v2074 = vmul.f32 %v582, %v2073
    %v2075 = vmul.f32 %v583, %v2073
    %v2076 = vmul.f32 %v584, %v2073
    %v2077 = vmul.f32 %v585, %v2073
    %v2078 = vld [vmem:[#allocation17] sm:$0x1]
    %v2079 = vlaneseq
    %v2080 = vshrl.u32 %v2079, 7
    %v2081 = vsub.s32 0, %v2080
    %v2082 = vrot.slane %v2078, %v2081
    %v2083 = vadd.f32 %v2074, %v2082
    %v2084 = vadd.f32 %v2075, %v2082
    %v2085 = vadd.f32 %v2076, %v2082
    %v2086 = vadd.f32 %v2077, %v2082
    %v2087 = vmax.f32 %v2083, 0.0
    %v2088 = vmax.f32 %v2084, 0.0
    %v2089 = vmax.f32 %v2085, 0.0
    %v2090 = vmax.f32 %v2086, 0.0
    %v2091 = vld [vmem:[#allocation14] sm:$0xff]
    %v2092 = vld [vmem:[#allocation14 + $0x8] sm:$0xff]
    %v2093 = vld [vmem:[#allocation14 + $0x10] sm:$0xff]
    %v2094 = vld [vmem:[#allocation14 + $0x18] sm:$0xff]
    %v2095 = vld [vmem:[#allocation14 + $0x20] sm:$0xff]
    %v2096 = vld [vmem:[#allocation14 + $0x28] sm:$0xff]
    %v2097 = vld [vmem:[#allocation14 + $0x30] sm:$0xff]
    %v2098 = vld [vmem:[#allocation14 + $0x38] sm:$0xff]
    %v2099 = vld [vmem:[#allocation14 + $0x40] sm:$0xff]
    %v2100 = vld [vmem:[#allocation14 + $0x48] sm:$0xff]
    %v2101 = vld [vmem:[#allocation14 + $0x50] sm:$0xff]
    %v2102 = vld [vmem:[#allocation14 + $0x58] sm:$0xff]
    %v2103 = vld [vmem:[#allocation14 + $0x60] sm:$0xff]
    %v2104 = vld [vmem:[#allocation14 + $0x68] sm:$0xff]
    %v2105 = vld [vmem:[#allocation14 + $0x70] sm:$0xff]
    %v2106 = vld [vmem:[#allocation14 + $0x78] sm:$0xff]
    %v2107 = vld [vmem:[#allocation16 + $0x1] sm:$0x1]
    %v2108 = vlaneseq
    %v2109 = vshrl.u32 %v2108, 7
    %v2110 = vsub.s32 0, %v2109
    %v2111 = vrot.slane %v2107, %v2110
    %v2112 = vmul.f32 %v1323, %v2111
    %v2113 = vmul.f32 %v1324, %v2111
    %v2114 = vmul.f32 %v1325, %v2111
    %v2115 = vmul.f32 %v1326, %v2111
    %v2116 = vld [vmem:[#allocation17 + $0x1] sm:$0x1]
    %v2117 = vlaneseq
    %v2118 = vshrl.u32 %v2117, 7
    %v2119 = vsub.s32 0, %v2118
    %v2120 = vrot.slane %v2116, %v2119
    %v2121 = vadd.f32 %v2112, %v2120
    %v2122 = vadd.f32 %v2113, %v2120
    %v2123 = vadd.f32 %v2114, %v2120
    %v2124 = vadd.f32 %v2115, %v2120
    %v2125 = vmax.f32 %v2121, 0.0
    %v2126 = vmax.f32 %v2122, 0.0
    %v2127 = vmax.f32 %v2123, 0.0
    %v2128 = vmax.f32 %v2124, 0.0
    %s2129 = scalar_lea.vmem [#allocation14], 128
    %v2130 = vld [vmem:[%s2129] sm:$0xff]
    %v2131 = vld [vmem:[%s2129 + $0x8] sm:$0xff]
    %v2132 = vld [vmem:[%s2129 + $0x10] sm:$0xff]
    %v2133 = vld [vmem:[%s2129 + $0x18] sm:$0xff]
    %v2134 = vld [vmem:[%s2129 + $0x20] sm:$0xff]
    %v2135 = vld [vmem:[%s2129 + $0x28] sm:$0xff]
    %v2136 = vld [vmem:[%s2129 + $0x30] sm:$0xff]
    %v2137 = vld [vmem:[%s2129 + $0x38] sm:$0xff]
    %v2138 = vld [vmem:[%s2129 + $0x40] sm:$0xff]
    %v2139 = vld [vmem:[%s2129 + $0x48] sm:$0xff]
    %v2140 = vld [vmem:[%s2129 + $0x50] sm:$0xff]
    %v2141 = vld [vmem:[%s2129 + $0x58] sm:$0xff]
    %v2142 = vld [vmem:[%s2129 + $0x60] sm:$0xff]
    %v2143 = vld [vmem:[%s2129 + $0x68] sm:$0xff]
    %v2144 = vld [vmem:[%s2129 + $0x70] sm:$0xff]
    %v2145 = vld [vmem:[%s2129 + $0x78] sm:$0xff]
    %2146 = vmatprep.subr.mxu0 0.0
    %2147 = vmatpush1.msra.mxu0 %v2130
    %2148 = vmatprep.subr.mxu0 0.0
    %2149 = vmatpush1.msra.mxu0 %v2131
    %2150 = vmatprep.subr.mxu0 0.0
    %2151 = vmatpush1.msra.mxu0 %v2132
    %2152 = vmatprep.subr.mxu0 0.0
    %2153 = vmatpush1.msra.mxu0 %v2133
    %2154 = vmatprep.subr.mxu0 0.0
    %2155 = vmatpush1.msra.mxu0 %v2134
    %2156 = vmatprep.subr.mxu0 0.0
    %2157 = vmatpush1.msra.mxu0 %v2135
    %2158 = vmatprep.subr.mxu0 0.0
    %2159 = vmatpush1.msra.mxu0 %v2136
    %2160 = vmatprep.subr.mxu0 0.0
    %2161 = vmatpush1.msra.mxu0 %v2137
    %2162 = vmatprep.subr.mxu0 0.0
    %2163 = vmatpush1.msra.mxu0 %v2138
    %2164 = vmatprep.subr.mxu0 0.0
    %2165 = vmatpush1.msra.mxu0 %v2139
    %2166 = vmatprep.subr.mxu0 0.0
    %2167 = vmatpush1.msra.mxu0 %v2140
    %2168 = vmatprep.subr.mxu0 0.0
    %2169 = vmatpush1.msra.mxu0 %v2141
    %2170 = vmatprep.subr.mxu0 0.0
    %2171 = vmatpush1.msra.mxu0 %v2142
    %2172 = vmatprep.subr.mxu0 0.0
    %2173 = vmatpush1.msra.mxu0 %v2143
    %2174 = vmatprep.subr.mxu0 0.0
    %2175 = vmatpush1.msra.mxu0 %v2144
    %2176 = vmatprep.subr.mxu0 0.0
    %2177 = vmatpush1.msra.mxu0 %v2145
    %2178 = vmatprep.subr.mxu0 0.0
    %2179 = vmatpush1.msra.mxu0 0.0
    %2180 = vmatprep.subr.mxu0 0.0
    %2181 = vmatpush1.msra.mxu0 0.0
    %2182 = vmatprep.subr.mxu0 0.0
    %2183 = vmatpush1.msra.mxu0 0.0
    %2184 = vmatprep.subr.mxu0 0.0
    %2185 = vmatpush1.msra.mxu0 0.0
    %2186 = vmatprep.subr.mxu0 0.0
    %2187 = vmatpush1.msra.mxu0 0.0
    %2188 = vmatprep.subr.mxu0 0.0
    %2189 = vmatpush1.msra.mxu0 0.0
    %2190 = vmatprep.subr.mxu0 0.0
    %2191 = vmatpush1.msra.mxu0 0.0
    %2192 = vmatprep.subr.mxu0 0.0
    %2193 = vmatpush1.msra.mxu0 0.0
    %2194 = vmatprep.subr.mxu0 0.0
    %2195 = vmatpush1.msra.mxu0 0.0
    %2196 = vmatprep.subr.mxu0 0.0
    %2197 = vmatpush1.msra.mxu0 0.0
    %2198 = vmatprep.subr.mxu0 0.0
    %2199 = vmatpush1.msra.mxu0 0.0
    %2200 = vmatprep.subr.mxu0 0.0
    %2201 = vmatpush1.msra.mxu0 0.0
    %2202 = vmatprep.subr.mxu0 0.0
    %2203 = vmatpush1.msra.mxu0 0.0
    %2204 = vmatprep.subr.mxu0 0.0
    %2205 = vmatpush1.msra.mxu0 0.0
    %2206 = vmatprep.subr.mxu0 0.0
    %2207 = vmatpush1.msra.mxu0 0.0
    %2208 = vmatprep.subr.mxu0 0.0
    %2209 = vmatpush1.msra.mxu0 0.0
    %2210 = vmatprep.mubr.f32.mxu0 0.0
    %2211 = vmatmul.mubr.f32.gmra.mrb[0].mxu0 %v2125
    %v2212 = vpop.f32.mrb[0].mxu0
    %v2213 = vadd.f32 0.0, %v2212
    %v2214 = vpop.f32.mrb[0].mxu0
    %2215 = vmatprep.mubr.f32.mxu0 0.0
    %2216 = vmatmul.mubr.f32.gmra.mrb[0].mxu0 %v2126
    %v2217 = vpop.f32.mrb[0].mxu0
    %v2218 = vadd.f32 0.0, %v2217
    %v2219 = vpop.f32.mrb[0].mxu0
    %2220 = vmatprep.mubr.f32.mxu0 0.0
    %2221 = vmatmul.mubr.f32.gmra.mrb[0].mxu0 %v2127
    %v2222 = vpop.f32.mrb[0].mxu0
    %v2223 = vadd.f32 0.0, %v2222
    %v2224 = vpop.f32.mrb[0].mxu0
    %2225 = vmatprep.mubr.f32.mxu0 0.0
    %2226 = vmatmul.mubr.f32.gmra.mrb[0].mxu0 %v2128
    %v2227 = vpop.f32.mrb[0].mxu0
    %v2228 = vadd.f32 0.0, %v2227
    %v2229 = vpop.f32.mrb[0].mxu0
    %2230 = vdwg.mxu0
    %2231 = vmatprep.subr.mxu0 0.0
    %2232 = vmatpush1.msra.mxu0 %v2091
    %2233 = vmatprep.subr.mxu0 0.0
    %2234 = vmatpush1.msra.mxu0 %v2092
    %2235 = vmatprep.subr.mxu0 0.0
    %2236 = vmatpush1.msra.mxu0 %v2093
    %2237 = vmatprep.subr.mxu0 0.0
    %2238 = vmatpush1.msra.mxu0 %v2094
    %2239 = vmatprep.subr.mxu0 0.0
    %2240 = vmatpush1.msra.mxu0 %v2095
    %2241 = vmatprep.subr.mxu0 0.0
    %2242 = vmatpush1.msra.mxu0 %v2096
    %2243 = vmatprep.subr.mxu0 0.0
    %2244 = vmatpush1.msra.mxu0 %v2097
    %2245 = vmatprep.subr.mxu0 0.0
    %2246 = vmatpush1.msra.mxu0 %v2098
    %2247 = vmatprep.subr.mxu0 0.0
    %2248 = vmatpush1.msra.mxu0 %v2099
    %2249 = vmatprep.subr.mxu0 0.0
    %2250 = vmatpush1.msra.mxu0 %v2100
    %2251 = vmatprep.subr.mxu0 0.0
    %2252 = vmatpush1.msra.mxu0 %v2101
    %2253 = vmatprep.subr.mxu0 0.0
    %2254 = vmatpush1.msra.mxu0 %v2102
    %2255 = vmatprep.subr.mxu0 0.0
    %2256 = vmatpush1.msra.mxu0 %v2103
    %2257 = vmatprep.subr.mxu0 0.0
    %2258 = vmatpush1.msra.mxu0 %v2104
    %2259 = vmatprep.subr.mxu0 0.0
    %2260 = vmatpush1.msra.mxu0 %v2105
    %2261 = vmatprep.subr.mxu0 0.0
    %2262 = vmatpush1.msra.mxu0 %v2106
    %2263 = vmatprep.subr.mxu0 0.0
    %2264 = vmatpush1.msra.mxu0 0.0
    %2265 = vmatprep.subr.mxu0 0.0
    %2266 = vmatpush1.msra.mxu0 0.0
    %2267 = vmatprep.subr.mxu0 0.0
    %2268 = vmatpush1.msra.mxu0 0.0
    %2269 = vmatprep.subr.mxu0 0.0
    %2270 = vmatpush1.msra.mxu0 0.0
    %2271 = vmatprep.subr.mxu0 0.0
    %2272 = vmatpush1.msra.mxu0 0.0
    %2273 = vmatprep.subr.mxu0 0.0
    %2274 = vmatpush1.msra.mxu0 0.0
    %2275 = vmatprep.subr.mxu0 0.0
    %2276 = vmatpush1.msra.mxu0 0.0
    %2277 = vmatprep.subr.mxu0 0.0
    %2278 = vmatpush1.msra.mxu0 0.0
    %2279 = vmatprep.subr.mxu0 0.0
    %2280 = vmatpush1.msra.mxu0 0.0
    %2281 = vmatprep.subr.mxu0 0.0
    %2282 = vmatpush1.msra.mxu0 0.0
    %2283 = vmatprep.subr.mxu0 0.0
    %2284 = vmatpush1.msra.mxu0 0.0
    %2285 = vmatprep.subr.mxu0 0.0
    %2286 = vmatpush1.msra.mxu0 0.0
    %2287 = vmatprep.subr.mxu0 0.0
    %2288 = vmatpush1.msra.mxu0 0.0
    %2289 = vmatprep.subr.mxu0 0.0
    %2290 = vmatpush1.msra.mxu0 0.0
    %2291 = vmatprep.subr.mxu0 0.0
    %2292 = vmatpush1.msra.mxu0 0.0
    %2293 = vmatprep.subr.mxu0 0.0
    %2294 = vmatpush1.msra.mxu0 0.0
    %2295 = vmatprep.mubr.f32.mxu0 0.0
    %2296 = vmatmul.mubr.f32.gmra.mrb[0].mxu0 %v2087
    %v2297 = vpop.f32.mrb[0].mxu0
    %v2298 = vadd.f32 %v2213, %v2297
    %v2299 = vpop.f32.mrb[0].mxu0
    %2300 = vmatprep.mubr.f32.mxu0 0.0
    %2301 = vmatmul.mubr.f32.gmra.mrb[0].mxu0 %v2088
    %v2302 = vpop.f32.mrb[0].mxu0
    %v2303 = vadd.f32 %v2218, %v2302
    %v2304 = vpop.f32.mrb[0].mxu0
    %2305 = vmatprep.mubr.f32.mxu0 0.0
    %2306 = vmatmul.mubr.f32.gmra.mrb[0].mxu0 %v2089
    %v2307 = vpop.f32.mrb[0].mxu0
    %v2308 = vadd.f32 %v2223, %v2307
    %v2309 = vpop.f32.mrb[0].mxu0
    %2310 = vmatprep.mubr.f32.mxu0 0.0
    %2311 = vmatmul.mubr.f32.gmra.mrb[0].mxu0 %v2090
    %v2312 = vpop.f32.mrb[0].mxu0
    %v2313 = vadd.f32 %v2228, %v2312
    %v2314 = vpop.f32.mrb[0].mxu0
    %2315 = vdwg.mxu0
    %v2316 = vld [vmem:[#allocation16 + $0x2] sm:$0x1]
    %v2317 = vlaneseq
    %v2318 = vshrl.u32 %v2317, 7
    %v2319 = vsub.s32 0, %v2318
    %v2320 = vrot.slane %v2316, %v2319
    %v2321 = vmul.f32 %v2065, %v2320
    %v2322 = vmul.f32 %v2066, %v2320
    %v2323 = vmul.f32 %v2067, %v2320
    %v2324 = vmul.f32 %v2068, %v2320
    %v2325 = vld [vmem:[#allocation17 + $0x2] sm:$0x1]
    %v2326 = vlaneseq
    %v2327 = vshrl.u32 %v2326, 7
    %v2328 = vsub.s32 0, %v2327
    %v2329 = vrot.slane %v2325, %v2328
    %v2330 = vadd.f32 %v2321, %v2329
    %v2331 = vadd.f32 %v2322, %v2329
    %v2332 = vadd.f32 %v2323, %v2329
    %v2333 = vadd.f32 %v2324, %v2329
    %v2334 = vmax.f32 %v2330, 0.0
    %v2335 = vmax.f32 %v2331, 0.0
    %v2336 = vmax.f32 %v2332, 0.0
    %v2337 = vmax.f32 %v2333, 0.0
    %s2338 = scalar_lea.vmem [#allocation14], 256
    %v2339 = vld [vmem:[%s2338] sm:$0xff]
    %v2340 = vld [vmem:[%s2338 + $0x8] sm:$0xff]
    %v2341 = vld [vmem:[%s2338 + $0x10] sm:$0xff]
    %v2342 = vld [vmem:[%s2338 + $0x18] sm:$0xff]
    %v2343 = vld [vmem:[%s2338 + $0x20] sm:$0xff]
    %v2344 = vld [vmem:[%s2338 + $0x28] sm:$0xff]
    %v2345 = vld [vmem:[%s2338 + $0x30] sm:$0xff]
    %v2346 = vld [vmem:[%s2338 + $0x38] sm:$0xff]
    %v2347 = vld [vmem:[%s2338 + $0x40] sm:$0xff]
    %v2348 = vld [vmem:[%s2338 + $0x48] sm:$0xff]
    %v2349 = vld [vmem:[%s2338 + $0x50] sm:$0xff]
    %v2350 = vld [vmem:[%s2338 + $0x58] sm:$0xff]
    %v2351 = vld [vmem:[%s2338 + $0x60] sm:$0xff]
    %v2352 = vld [vmem:[%s2338 + $0x68] sm:$0xff]
    %v2353 = vld [vmem:[%s2338 + $0x70] sm:$0xff]
    %v2354 = vld [vmem:[%s2338 + $0x78] sm:$0xff]
    %2355 = vmatprep.subr.mxu0 0.0
    %2356 = vmatpush1.msra.mxu0 %v2339
    %2357 = vmatprep.subr.mxu0 0.0
    %2358 = vmatpush1.msra.mxu0 %v2340
    %2359 = vmatprep.subr.mxu0 0.0
    %2360 = vmatpush1.msra.mxu0 %v2341
    %2361 = vmatprep.subr.mxu0 0.0
    %2362 = vmatpush1.msra.mxu0 %v2342
    %2363 = vmatprep.subr.mxu0 0.0
    %2364 = vmatpush1.msra.mxu0 %v2343
    %2365 = vmatprep.subr.mxu0 0.0
    %2366 = vmatpush1.msra.mxu0 %v2344
    %2367 = vmatprep.subr.mxu0 0.0
    %2368 = vmatpush1.msra.mxu0 %v2345
    %2369 = vmatprep.subr.mxu0 0.0
    %2370 = vmatpush1.msra.mxu0 %v2346
    %2371 = vmatprep.subr.mxu0 0.0
    %2372 = vmatpush1.msra.mxu0 %v2347
    %2373 = vmatprep.subr.mxu0 0.0
    %2374 = vmatpush1.msra.mxu0 %v2348
    %2375 = vmatprep.subr.mxu0 0.0
    %2376 = vmatpush1.msra.mxu0 %v2349
    %2377 = vmatprep.subr.mxu0 0.0
    %2378 = vmatpush1.msra.mxu0 %v2350
    %2379 = vmatprep.subr.mxu0 0.0
    %2380 = vmatpush1.msra.mxu0 %v2351
    %2381 = vmatprep.subr.mxu0 0.0
    %2382 = vmatpush1.msra.mxu0 %v2352
    %2383 = vmatprep.subr.mxu0 0.0
    %2384 = vmatpush1.msra.mxu0 %v2353
    %2385 = vmatprep.subr.mxu0 0.0
    %2386 = vmatpush1.msra.mxu0 %v2354
    %2387 = vmatprep.subr.mxu0 0.0
    %2388 = vmatpush1.msra.mxu0 0.0
    %2389 = vmatprep.subr.mxu0 0.0
    %2390 = vmatpush1.msra.mxu0 0.0
    %2391 = vmatprep.subr.mxu0 0.0
    %2392 = vmatpush1.msra.mxu0 0.0
    %2393 = vmatprep.subr.mxu0 0.0
    %2394 = vmatpush1.msra.mxu0 0.0
    %2395 = vmatprep.subr.mxu0 0.0
    %2396 = vmatpush1.msra.mxu0 0.0
    %2397 = vmatprep.subr.mxu0 0.0
    %2398 = vmatpush1.msra.mxu0 0.0
    %2399 = vmatprep.subr.mxu0 0.0
    %2400 = vmatpush1.msra.mxu0 0.0
    %2401 = vmatprep.subr.mxu0 0.0
    %2402 = vmatpush1.msra.mxu0 0.0
    %2403 = vmatprep.subr.mxu0 0.0
    %2404 = vmatpush1.msra.mxu0 0.0
    %2405 = vmatprep.subr.mxu0 0.0
    %2406 = vmatpush1.msra.mxu0 0.0
    %2407 = vmatprep.subr.mxu0 0.0
    %2408 = vmatpush1.msra.mxu0 0.0
    %2409 = vmatprep.subr.mxu0 0.0
    %2410 = vmatpush1.msra.mxu0 0.0
    %2411 = vmatprep.subr.mxu0 0.0
    %2412 = vmatpush1.msra.mxu0 0.0
    %2413 = vmatprep.subr.mxu0 0.0
    %2414 = vmatpush1.msra.mxu0 0.0
    %2415 = vmatprep.subr.mxu0 0.0
    %2416 = vmatpush1.msra.mxu0 0.0
    %2417 = vmatprep.subr.mxu0 0.0
    %2418 = vmatpush1.msra.mxu0 0.0
    %2419 = vmatprep.mubr.f32.mxu0 0.0
    %2420 = vmatmul.mubr.f32.gmra.mrb[0].mxu0 %v2334
    %v2421 = vpop.f32.mrb[0].mxu0
    %v2422 = vadd.f32 0.0, %v2421
    %v2423 = vpop.f32.mrb[0].mxu0
    %2424 = vmatprep.mubr.f32.mxu0 0.0
    %2425 = vmatmul.mubr.f32.gmra.mrb[0].mxu0 %v2335
    %v2426 = vpop.f32.mrb[0].mxu0
    %v2427 = vadd.f32 0.0, %v2426
    %v2428 = vpop.f32.mrb[0].mxu0
    %2429 = vmatprep.mubr.f32.mxu0 0.0
    %2430 = vmatmul.mubr.f32.gmra.mrb[0].mxu0 %v2336
    %v2431 = vpop.f32.mrb[0].mxu0
    %v2432 = vadd.f32 0.0, %v2431
    %v2433 = vpop.f32.mrb[0].mxu0
    %2434 = vmatprep.mubr.f32.mxu0 0.0
    %2435 = vmatmul.mubr.f32.gmra.mrb[0].mxu0 %v2337
    %v2436 = vpop.f32.mrb[0].mxu0
    %v2437 = vadd.f32 0.0, %v2436
    %v2438 = vpop.f32.mrb[0].mxu0
    %2439 = vdwg.mxu0
    %v2440 = vadd.f32 %v2298, %v2422
    %v2441 = vadd.f32 %v2303, %v2427
    %v2442 = vadd.f32 %v2308, %v2432
    %v2443 = vadd.f32 %v2313, %v2437
    %v2444 = vld [vmem:[#allocation23] sm:$0x1]
    %v2445 = vlaneseq
    %v2446 = vshrl.u32 %v2445, 7
    %v2447 = vsub.s32 0, %v2446
    %v2448 = vrot.slane %v2444, %v2447
    %v2449 = vadd.f32 %v2440, %v2448
    %v2450 = vadd.f32 %v2441, %v2448
    %v2451 = vadd.f32 %v2442, %v2448
    %v2452 = vadd.f32 %v2443, %v2448
    %v2453 = vld [vmem:[#allocation11 + $0x4] sm:$0x1]
    %v2454 = vlaneseq
    %v2455 = vshrl.u32 %v2454, 7
    %v2456 = vsub.s32 0, %v2455
    %v2457 = vrot.slane %v2453, %v2456
    %v2458 = vmul.f32 %v2449, %v2457
    %v2459 = vmul.f32 %v2450, %v2457
    %v2460 = vmul.f32 %v2451, %v2457
    %v2461 = vmul.f32 %v2452, %v2457
    %v2462 = vld [vmem:[#allocation13 + $0x4] sm:$0x1]
    %v2463 = vlaneseq
    %v2464 = vshrl.u32 %v2463, 7
    %v2465 = vsub.s32 0, %v2464
    %v2466 = vrot.slane %v2462, %v2465
    %v2467 = vadd.f32 %v2458, %v2466
    %v2468 = vadd.f32 %v2459, %v2466
    %v2469 = vadd.f32 %v2460, %v2466
    %v2470 = vadd.f32 %v2461, %v2466
    %v2471 = vmax.f32 %v2467, 0.0
    %v2472 = vmax.f32 %v2468, 0.0
    %v2473 = vmax.f32 %v2469, 0.0
    %v2474 = vmax.f32 %v2470, 0.0
    %v2475 = vld [vmem:[#allocation10 + $0x4] sm:$0x1]
    %v2480 = vrot.slane %v2471, 7
    %v2481 = vrot.slane %v2472, 7
    %v2482 = vsel %vm246, %v2480, %v2481
    %v2483 = vrot.slane %v2473, 7
    %v2484 = vrot.slane %v2474, 7
    %v2485 = vsel %vm246, %v2483, %v2484
    %v2490 = vsel %vm246, 0.0, %v2480
    %v2491 = vsel %vm246, 0.0, %v2483
    %s2492 = scalar_lea.vmem [#allocation8], 1536
    %v2493 = vld [vmem:[%s2492] sm:$0xff]
    %v2494 = vld [vmem:[%s2492 + $0x8] sm:$0xff]
    %v2495 = vld [vmem:[%s2492 + $0x10] sm:$0xff]
    %v2496 = vld [vmem:[%s2492 + $0x18] sm:$0xff]
    %v2497 = vld [vmem:[%s2492 + $0x20] sm:$0xff]
    %v2498 = vld [vmem:[%s2492 + $0x28] sm:$0xff]
    %v2499 = vld [vmem:[%s2492 + $0x30] sm:$0xff]
    %v2500 = vld [vmem:[%s2492 + $0x38] sm:$0xff]
    %v2501 = vld [vmem:[%s2492 + $0x40] sm:$0xff]
    %v2502 = vld [vmem:[%s2492 + $0x48] sm:$0xff]
    %v2503 = vld [vmem:[%s2492 + $0x50] sm:$0xff]
    %v2504 = vld [vmem:[%s2492 + $0x58] sm:$0xff]
    %v2505 = vld [vmem:[%s2492 + $0x60] sm:$0xff]
    %v2506 = vld [vmem:[%s2492 + $0x68] sm:$0xff]
    %v2507 = vld [vmem:[%s2492 + $0x70] sm:$0xff]
    %v2508 = vld [vmem:[%s2492 + $0x78] sm:$0xff]
    %s2509 = scalar_lea.vmem [#allocation8], 1664
    %v2510 = vld [vmem:[%s2509] sm:$0xff]
    %v2511 = vld [vmem:[%s2509 + $0x8] sm:$0xff]
    %v2512 = vld [vmem:[%s2509 + $0x10] sm:$0xff]
    %v2513 = vld [vmem:[%s2509 + $0x18] sm:$0xff]
    %v2514 = vld [vmem:[%s2509 + $0x20] sm:$0xff]
    %v2515 = vld [vmem:[%s2509 + $0x28] sm:$0xff]
    %v2516 = vld [vmem:[%s2509 + $0x30] sm:$0xff]
    %v2517 = vld [vmem:[%s2509 + $0x38] sm:$0xff]
    %v2518 = vld [vmem:[%s2509 + $0x40] sm:$0xff]
    %v2519 = vld [vmem:[%s2509 + $0x48] sm:$0xff]
    %v2520 = vld [vmem:[%s2509 + $0x50] sm:$0xff]
    %v2521 = vld [vmem:[%s2509 + $0x58] sm:$0xff]
    %v2522 = vld [vmem:[%s2509 + $0x60] sm:$0xff]
    %v2523 = vld [vmem:[%s2509 + $0x68] sm:$0xff]
    %v2524 = vld [vmem:[%s2509 + $0x70] sm:$0xff]
    %v2525 = vld [vmem:[%s2509 + $0x78] sm:$0xff]
    %2526 = vmatprep.subr.mxu0 0.0
    %2527 = vmatpush1.msra.mxu0 %v2510
    %2528 = vmatprep.subr.mxu0 0.0
    %2529 = vmatpush1.msra.mxu0 %v2511
    %2530 = vmatprep.subr.mxu0 0.0
    %2531 = vmatpush1.msra.mxu0 %v2512
    %2532 = vmatprep.subr.mxu0 0.0
    %2533 = vmatpush1.msra.mxu0 %v2513
    %2534 = vmatprep.subr.mxu0 0.0
    %2535 = vmatpush1.msra.mxu0 %v2514
    %2536 = vmatprep.subr.mxu0 0.0
    %2537 = vmatpush1.msra.mxu0 %v2515
    %2538 = vmatprep.subr.mxu0 0.0
    %2539 = vmatpush1.msra.mxu0 %v2516
    %2540 = vmatprep.subr.mxu0 0.0
    %2541 = vmatpush1.msra.mxu0 %v2517
    %2542 = vmatprep.subr.mxu0 0.0
    %2543 = vmatpush1.msra.mxu0 %v2518
    %2544 = vmatprep.subr.mxu0 0.0
    %2545 = vmatpush1.msra.mxu0 %v2519
    %2546 = vmatprep.subr.mxu0 0.0
    %2547 = vmatpush1.msra.mxu0 %v2520
    %2548 = vmatprep.subr.mxu0 0.0
    %2549 = vmatpush1.msra.mxu0 %v2521
    %2550 = vmatprep.subr.mxu0 0.0
    %2551 = vmatpush1.msra.mxu0 %v2522
    %2552 = vmatprep.subr.mxu0 0.0
    %2553 = vmatpush1.msra.mxu0 %v2523
    %2554 = vmatprep.subr.mxu0 0.0
    %2555 = vmatpush1.msra.mxu0 %v2524
    %2556 = vmatprep.subr.mxu0 0.0
    %2557 = vmatpush1.msra.mxu0 %v2525
    %2558 = vmatprep.subr.mxu0 0.0
    %2559 = vmatpush1.msra.mxu0 0.0
    %2560 = vmatprep.subr.mxu0 0.0
    %2561 = vmatpush1.msra.mxu0 0.0
    %2562 = vmatprep.subr.mxu0 0.0
    %2563 = vmatpush1.msra.mxu0 0.0
    %2564 = vmatprep.subr.mxu0 0.0
    %2565 = vmatpush1.msra.mxu0 0.0
    %2566 = vmatprep.subr.mxu0 0.0
    %2567 = vmatpush1.msra.mxu0 0.0
    %2568 = vmatprep.subr.mxu0 0.0
    %2569 = vmatpush1.msra.mxu0 0.0
    %2570 = vmatprep.subr.mxu0 0.0
    %2571 = vmatpush1.msra.mxu0 0.0
    %2572 = vmatprep.subr.mxu0 0.0
    %2573 = vmatpush1.msra.mxu0 0.0
    %2574 = vmatprep.subr.mxu0 0.0
    %2575 = vmatpush1.msra.mxu0 0.0
    %2576 = vmatprep.subr.mxu0 0.0
    %2577 = vmatpush1.msra.mxu0 0.0
    %2578 = vmatprep.subr.mxu0 0.0
    %2579 = vmatpush1.msra.mxu0 0.0
    %2580 = vmatprep.subr.mxu0 0.0
    %2581 = vmatpush1.msra.mxu0 0.0
    %2582 = vmatprep.subr.mxu0 0.0
    %2583 = vmatpush1.msra.mxu0 0.0
    %2584 = vmatprep.subr.mxu0 0.0
    %2585 = vmatpush1.msra.mxu0 0.0
    %2586 = vmatprep.subr.mxu0 0.0
    %2587 = vmatpush1.msra.mxu0 0.0
    %2588 = vmatprep.subr.mxu0 0.0
    %2589 = vmatpush1.msra.mxu0 0.0
    %2590 = vmatprep.mubr.f32.mxu0 0.0
    %2591 = vmatmul.mubr.f32.gmra.mrb[0].mxu0 %v2471
    %v2592 = vpop.f32.mrb[0].mxu0
    %v2593 = vadd.f32 0.0, %v2592
    %v2594 = vpop.f32.mrb[0].mxu0
    %2595 = vmatprep.mubr.f32.mxu0 0.0
    %2596 = vmatmul.mubr.f32.gmra.mrb[0].mxu0 %v2472
    %v2597 = vpop.f32.mrb[0].mxu0
    %v2598 = vadd.f32 0.0, %v2597
    %v2599 = vpop.f32.mrb[0].mxu0
    %2600 = vmatprep.mubr.f32.mxu0 0.0
    %2601 = vmatmul.mubr.f32.gmra.mrb[0].mxu0 %v2473
    %v2602 = vpop.f32.mrb[0].mxu0
    %v2603 = vadd.f32 0.0, %v2602
    %v2604 = vpop.f32.mrb[0].mxu0
    %2605 = vmatprep.mubr.f32.mxu0 0.0
    %2606 = vmatmul.mubr.f32.gmra.mrb[0].mxu0 %v2474
    %v2607 = vpop.f32.mrb[0].mxu0
    %v2608 = vadd.f32 0.0, %v2607
    %v2609 = vpop.f32.mrb[0].mxu0
    %2610 = vdwg.mxu0
    %2611 = vmatprep.subr.mxu0 0.0
    %2612 = vmatpush1.msra.mxu0 %v2493
    %2613 = vmatprep.subr.mxu0 0.0
    %2614 = vmatpush1.msra.mxu0 %v2494
    %2615 = vmatprep.subr.mxu0 0.0
    %2616 = vmatpush1.msra.mxu0 %v2495
    %2617 = vmatprep.subr.mxu0 0.0
    %2618 = vmatpush1.msra.mxu0 %v2496
    %2619 = vmatprep.subr.mxu0 0.0
    %2620 = vmatpush1.msra.mxu0 %v2497
    %2621 = vmatprep.subr.mxu0 0.0
    %2622 = vmatpush1.msra.mxu0 %v2498
    %2623 = vmatprep.subr.mxu0 0.0
    %2624 = vmatpush1.msra.mxu0 %v2499
    %2625 = vmatprep.subr.mxu0 0.0
    %2626 = vmatpush1.msra.mxu0 %v2500
    %2627 = vmatprep.subr.mxu0 0.0
    %2628 = vmatpush1.msra.mxu0 %v2501
    %2629 = vmatprep.subr.mxu0 0.0
    %2630 = vmatpush1.msra.mxu0 %v2502
    %2631 = vmatprep.subr.mxu0 0.0
    %2632 = vmatpush1.msra.mxu0 %v2503
    %2633 = vmatprep.subr.mxu0 0.0
    %2634 = vmatpush1.msra.mxu0 %v2504
    %2635 = vmatprep.subr.mxu0 0.0
    %2636 = vmatpush1.msra.mxu0 %v2505
    %2637 = vmatprep.subr.mxu0 0.0
    %2638 = vmatpush1.msra.mxu0 %v2506
    %2639 = vmatprep.subr.mxu0 0.0
    %2640 = vmatpush1.msra.mxu0 %v2507
    %2641 = vmatprep.subr.mxu0 0.0
    %2642 = vmatpush1.msra.mxu0 %v2508
    %2643 = vmatprep.subr.mxu0 0.0
    %2644 = vmatpush1.msra.mxu0 0.0
    %2645 = vmatprep.subr.mxu0 0.0
    %2646 = vmatpush1.msra.mxu0 0.0
    %2647 = vmatprep.subr.mxu0 0.0
    %2648 = vmatpush1.msra.mxu0 0.0
    %2649 = vmatprep.subr.mxu0 0.0
    %2650 = vmatpush1.msra.mxu0 0.0
    %2651 = vmatprep.subr.mxu0 0.0
    %2652 = vmatpush1.msra.mxu0 0.0
    %2653 = vmatprep.subr.mxu0 0.0
    %2654 = vmatpush1.msra.mxu0 0.0
    %2655 = vmatprep.subr.mxu0 0.0
    %2656 = vmatpush1.msra.mxu0 0.0
    %2657 = vmatprep.subr.mxu0 0.0
    %2658 = vmatpush1.msra.mxu0 0.0
    %2659 = vmatprep.subr.mxu0 0.0
    %2660 = vmatpush1.msra.mxu0 0.0
    %2661 = vmatprep.subr.mxu0 0.0
    %2662 = vmatpush1.msra.mxu0 0.0
    %2663 = vmatprep.subr.mxu0 0.0
    %2664 = vmatpush1.msra.mxu0 0.0
    %2665 = vmatprep.subr.mxu0 0.0
    %2666 = vmatpush1.msra.mxu0 0.0
    %2667 = vmatprep.subr.mxu0 0.0
    %2668 = vmatpush1.msra.mxu0 0.0
    %2669 = vmatprep.subr.mxu0 0.0
    %2670 = vmatpush1.msra.mxu0 0.0
    %2671 = vmatprep.subr.mxu0 0.0
    %2672 = vmatpush1.msra.mxu0 0.0
    %2673 = vmatprep.subr.mxu0 0.0
    %2674 = vmatpush1.msra.mxu0 0.0
    %2675 = vmatprep.mubr.f32.mxu0 0.0
    %2676 = vmatmul.mubr.f32.gmra.mrb[0].mxu0 %v2490
    %v2677 = vpop.f32.mrb[0].mxu0
    %v2678 = vadd.f32 %v2593, %v2677
    %v2679 = vpop.f32.mrb[0].mxu0
    %2680 = vmatprep.mubr.f32.mxu0 0.0
    %2681 = vmatmul.mubr.f32.gmra.mrb[0].mxu0 %v2482
    %v2682 = vpop.f32.mrb[0].mxu0
    %v2683 = vadd.f32 %v2598, %v2682
    %v2684 = vpop.f32.mrb[0].mxu0
    %2685 = vmatprep.mubr.f32.mxu0 0.0
    %2686 = vmatmul.mubr.f32.gmra.mrb[0].mxu0 %v2491
    %v2687 = vpop.f32.mrb[0].mxu0
    %v2688 = vadd.f32 %v2603, %v2687
    %v2689 = vpop.f32.mrb[0].mxu0
    %2690 = vmatprep.mubr.f32.mxu0 0.0
    %2691 = vmatmul.mubr.f32.gmra.mrb[0].mxu0 %v2485
    %v2692 = vpop.f32.mrb[0].mxu0
    %v2693 = vadd.f32 %v2608, %v2692
    %v2694 = vpop.f32.mrb[0].mxu0
    %2695 = vdwg.mxu0
    %v2696 = vrot.slane %v2471, 1
    %v2697 = vrot.slane %v2472, 1
    %v2698 = vsel %vm459, %v2696, %v2697
    %v2699 = vrot.slane %v2473, 1
    %v2700 = vrot.slane %v2474, 1
    %v2701 = vsel %vm459, %v2699, %v2700
    %v2706 = vsel %vm459, %v2697, 0.0
    %v2707 = vsel %vm459, %v2700, 0.0
    %s2708 = scalar_lea.vmem [#allocation8], 1792
    %v2709 = vld [vmem:[%s2708] sm:$0xff]
    %v2710 = vld [vmem:[%s2708 + $0x8] sm:$0xff]
    %v2711 = vld [vmem:[%s2708 + $0x10] sm:$0xff]
    %v2712 = vld [vmem:[%s2708 + $0x18] sm:$0xff]
    %v2713 = vld [vmem:[%s2708 + $0x20] sm:$0xff]
    %v2714 = vld [vmem:[%s2708 + $0x28] sm:$0xff]
    %v2715 = vld [vmem:[%s2708 + $0x30] sm:$0xff]
    %v2716 = vld [vmem:[%s2708 + $0x38] sm:$0xff]
    %v2717 = vld [vmem:[%s2708 + $0x40] sm:$0xff]
    %v2718 = vld [vmem:[%s2708 + $0x48] sm:$0xff]
    %v2719 = vld [vmem:[%s2708 + $0x50] sm:$0xff]
    %v2720 = vld [vmem:[%s2708 + $0x58] sm:$0xff]
    %v2721 = vld [vmem:[%s2708 + $0x60] sm:$0xff]
    %v2722 = vld [vmem:[%s2708 + $0x68] sm:$0xff]
    %v2723 = vld [vmem:[%s2708 + $0x70] sm:$0xff]
    %v2724 = vld [vmem:[%s2708 + $0x78] sm:$0xff]
    %2725 = vmatprep.subr.mxu0 0.0
    %2726 = vmatpush1.msra.mxu0 %v2709
    %2727 = vmatprep.subr.mxu0 0.0
    %2728 = vmatpush1.msra.mxu0 %v2710
    %2729 = vmatprep.subr.mxu0 0.0
    %2730 = vmatpush1.msra.mxu0 %v2711
    %2731 = vmatprep.subr.mxu0 0.0
    %2732 = vmatpush1.msra.mxu0 %v2712
    %2733 = vmatprep.subr.mxu0 0.0
    %2734 = vmatpush1.msra.mxu0 %v2713
    %2735 = vmatprep.subr.mxu0 0.0
    %2736 = vmatpush1.msra.mxu0 %v2714
    %2737 = vmatprep.subr.mxu0 0.0
    %2738 = vmatpush1.msra.mxu0 %v2715
    %2739 = vmatprep.subr.mxu0 0.0
    %2740 = vmatpush1.msra.mxu0 %v2716
    %2741 = vmatprep.subr.mxu0 0.0
    %2742 = vmatpush1.msra.mxu0 %v2717
    %2743 = vmatprep.subr.mxu0 0.0
    %2744 = vmatpush1.msra.mxu0 %v2718
    %2745 = vmatprep.subr.mxu0 0.0
    %2746 = vmatpush1.msra.mxu0 %v2719
    %2747 = vmatprep.subr.mxu0 0.0
    %2748 = vmatpush1.msra.mxu0 %v2720
    %2749 = vmatprep.subr.mxu0 0.0
    %2750 = vmatpush1.msra.mxu0 %v2721
    %2751 = vmatprep.subr.mxu0 0.0
    %2752 = vmatpush1.msra.mxu0 %v2722
    %2753 = vmatprep.subr.mxu0 0.0
    %2754 = vmatpush1.msra.mxu0 %v2723
    %2755 = vmatprep.subr.mxu0 0.0
    %2756 = vmatpush1.msra.mxu0 %v2724
    %2757 = vmatprep.subr.mxu0 0.0
    %2758 = vmatpush1.msra.mxu0 0.0
    %2759 = vmatprep.subr.mxu0 0.0
    %2760 = vmatpush1.msra.mxu0 0.0
    %2761 = vmatprep.subr.mxu0 0.0
    %2762 = vmatpush1.msra.mxu0 0.0
    %2763 = vmatprep.subr.mxu0 0.0
    %2764 = vmatpush1.msra.mxu0 0.0
    %2765 = vmatprep.subr.mxu0 0.0
    %2766 = vmatpush1.msra.mxu0 0.0
    %2767 = vmatprep.subr.mxu0 0.0
    %2768 = vmatpush1.msra.mxu0 0.0
    %2769 = vmatprep.subr.mxu0 0.0
    %2770 = vmatpush1.msra.mxu0 0.0
    %2771 = vmatprep.subr.mxu0 0.0
    %2772 = vmatpush1.msra.mxu0 0.0
    %2773 = vmatprep.subr.mxu0 0.0
    %2774 = vmatpush1.msra.mxu0 0.0
    %2775 = vmatprep.subr.mxu0 0.0
    %2776 = vmatpush1.msra.mxu0 0.0
    %2777 = vmatprep.subr.mxu0 0.0
    %2778 = vmatpush1.msra.mxu0 0.0
    %2779 = vmatprep.subr.mxu0 0.0
    %2780 = vmatpush1.msra.mxu0 0.0
    %2781 = vmatprep.subr.mxu0 0.0
    %2782 = vmatpush1.msra.mxu0 0.0
    %2783 = vmatprep.subr.mxu0 0.0
    %2784 = vmatpush1.msra.mxu0 0.0
    %2785 = vmatprep.subr.mxu0 0.0
    %2786 = vmatpush1.msra.mxu0 0.0
    %2787 = vmatprep.subr.mxu0 0.0
    %2788 = vmatpush1.msra.mxu0 0.0
    %2789 = vmatprep.mubr.f32.mxu0 0.0
    %2790 = vmatmul.mubr.f32.gmra.mrb[0].mxu0 %v2698
    %v2791 = vpop.f32.mrb[0].mxu0
    %v2792 = vadd.f32 0.0, %v2791
    %v2793 = vpop.f32.mrb[0].mxu0
    %2794 = vmatprep.mubr.f32.mxu0 0.0
    %2795 = vmatmul.mubr.f32.gmra.mrb[0].mxu0 %v2706
    %v2796 = vpop.f32.mrb[0].mxu0
    %v2797 = vadd.f32 0.0, %v2796
    %v2798 = vpop.f32.mrb[0].mxu0
    %2799 = vmatprep.mubr.f32.mxu0 0.0
    %2800 = vmatmul.mubr.f32.gmra.mrb[0].mxu0 %v2701
    %v2801 = vpop.f32.mrb[0].mxu0
    %v2802 = vadd.f32 0.0, %v2801
    %v2803 = vpop.f32.mrb[0].mxu0
    %2804 = vmatprep.mubr.f32.mxu0 0.0
    %2805 = vmatmul.mubr.f32.gmra.mrb[0].mxu0 %v2707
    %v2806 = vpop.f32.mrb[0].mxu0
    %v2807 = vadd.f32 0.0, %v2806
    %v2808 = vpop.f32.mrb[0].mxu0
    %2809 = vdwg.mxu0
    %v2810 = vadd.f32 %v2678, %v2792
    %v2811 = vadd.f32 %v2683, %v2797
    %v2812 = vadd.f32 %v2688, %v2802
    %v2813 = vadd.f32 %v2693, %v2807
    %v2814 = vlaneseq
    %v2815 = vshrl.u32 %v2814, 7
    %v2816 = vsub.s32 0, %v2815
    %v2817 = vrot.slane %v2475, %v2816
    %v2818 = vadd.f32 %v2810, %v2817
    %v2819 = vadd.f32 %v2811, %v2817
    %v2820 = vadd.f32 %v2812, %v2817
    %v2821 = vadd.f32 %v2813, %v2817
    %v2822 = vld [vmem:[#allocation11 + $0x5] sm:$0x1]
    %v2823 = vlaneseq
    %v2824 = vshrl.u32 %v2823, 7
    %v2825 = vsub.s32 0, %v2824
    %v2826 = vrot.slane %v2822, %v2825
    %v2827 = vmul.f32 %v2818, %v2826
    %v2828 = vmul.f32 %v2819, %v2826
    %v2829 = vmul.f32 %v2820, %v2826
    %v2830 = vmul.f32 %v2821, %v2826
    %v2831 = vld [vmem:[#allocation13 + $0x5] sm:$0x1]
    %v2832 = vlaneseq
    %v2833 = vshrl.u32 %v2832, 7
    %v2834 = vsub.s32 0, %v2833
    %v2835 = vrot.slane %v2831, %v2834
    %v2836 = vadd.f32 %v2827, %v2835
    %v2837 = vadd.f32 %v2828, %v2835
    %v2838 = vadd.f32 %v2829, %v2835
    %v2839 = vadd.f32 %v2830, %v2835
    %v2840 = vmax.f32 %v2836, 0.0
    %v2841 = vmax.f32 %v2837, 0.0
    %v2842 = vmax.f32 %v2838, 0.0
    %v2843 = vmax.f32 %v2839, 0.0
    %v2844 = vld [vmem:[#allocation10 + $0x5] sm:$0x1]
    %v2849 = vrot.slane %v2840, 7
    %v2850 = vrot.slane %v2841, 7
    %v2851 = vsel %vm246, %v2849, %v2850
    %v2852 = vrot.slane %v2842, 7
    %v2853 = vrot.slane %v2843, 7
    %v2854 = vsel %vm246, %v2852, %v2853
    %v2859 = vsel %vm246, 0.0, %v2849
    %v2860 = vsel %vm246, 0.0, %v2852
    %s2861 = scalar_lea.vmem [#allocation8], 1920
    %v2862 = vld [vmem:[%s2861] sm:$0xff]
    %v2863 = vld [vmem:[%s2861 + $0x8] sm:$0xff]
    %v2864 = vld [vmem:[%s2861 + $0x10] sm:$0xff]
    %v2865 = vld [vmem:[%s2861 + $0x18] sm:$0xff]
    %v2866 = vld [vmem:[%s2861 + $0x20] sm:$0xff]
    %v2867 = vld [vmem:[%s2861 + $0x28] sm:$0xff]
    %v2868 = vld [vmem:[%s2861 + $0x30] sm:$0xff]
    %v2869 = vld [vmem:[%s2861 + $0x38] sm:$0xff]
    %v2870 = vld [vmem:[%s2861 + $0x40] sm:$0xff]
    %v2871 = vld [vmem:[%s2861 + $0x48] sm:$0xff]
    %v2872 = vld [vmem:[%s2861 + $0x50] sm:$0xff]
    %v2873 = vld [vmem:[%s2861 + $0x58] sm:$0xff]
    %v2874 = vld [vmem:[%s2861 + $0x60] sm:$0xff]
    %v2875 = vld [vmem:[%s2861 + $0x68] sm:$0xff]
    %v2876 = vld [vmem:[%s2861 + $0x70] sm:$0xff]
    %v2877 = vld [vmem:[%s2861 + $0x78] sm:$0xff]
    %s2878 = scalar_lea.vmem [#allocation8], 2048
    %v2879 = vld [vmem:[%s2878] sm:$0xff]
    %v2880 = vld [vmem:[%s2878 + $0x8] sm:$0xff]
    %v2881 = vld [vmem:[%s2878 + $0x10] sm:$0xff]
    %v2882 = vld [vmem:[%s2878 + $0x18] sm:$0xff]
    %v2883 = vld [vmem:[%s2878 + $0x20] sm:$0xff]
    %v2884 = vld [vmem:[%s2878 + $0x28] sm:$0xff]
    %v2885 = vld [vmem:[%s2878 + $0x30] sm:$0xff]
    %v2886 = vld [vmem:[%s2878 + $0x38] sm:$0xff]
    %v2887 = vld [vmem:[%s2878 + $0x40] sm:$0xff]
    %v2888 = vld [vmem:[%s2878 + $0x48] sm:$0xff]
    %v2889 = vld [vmem:[%s2878 + $0x50] sm:$0xff]
    %v2890 = vld [vmem:[%s2878 + $0x58] sm:$0xff]
    %v2891 = vld [vmem:[%s2878 + $0x60] sm:$0xff]
    %v2892 = vld [vmem:[%s2878 + $0x68] sm:$0xff]
    %v2893 = vld [vmem:[%s2878 + $0x70] sm:$0xff]
    %v2894 = vld [vmem:[%s2878 + $0x78] sm:$0xff]
    %2895 = vmatprep.subr.mxu0 0.0
    %2896 = vmatpush1.msra.mxu0 %v2879
    %2897 = vmatprep.subr.mxu0 0.0
    %2898 = vmatpush1.msra.mxu0 %v2880
    %2899 = vmatprep.subr.mxu0 0.0
    %2900 = vmatpush1.msra.mxu0 %v2881
    %2901 = vmatprep.subr.mxu0 0.0
    %2902 = vmatpush1.msra.mxu0 %v2882
    %2903 = vmatprep.subr.mxu0 0.0
    %2904 = vmatpush1.msra.mxu0 %v2883
    %2905 = vmatprep.subr.mxu0 0.0
    %2906 = vmatpush1.msra.mxu0 %v2884
    %2907 = vmatprep.subr.mxu0 0.0
    %2908 = vmatpush1.msra.mxu0 %v2885
    %2909 = vmatprep.subr.mxu0 0.0
    %2910 = vmatpush1.msra.mxu0 %v2886
    %2911 = vmatprep.subr.mxu0 0.0
    %2912 = vmatpush1.msra.mxu0 %v2887
    %2913 = vmatprep.subr.mxu0 0.0
    %2914 = vmatpush1.msra.mxu0 %v2888
    %2915 = vmatprep.subr.mxu0 0.0
    %2916 = vmatpush1.msra.mxu0 %v2889
    %2917 = vmatprep.subr.mxu0 0.0
    %2918 = vmatpush1.msra.mxu0 %v2890
    %2919 = vmatprep.subr.mxu0 0.0
    %2920 = vmatpush1.msra.mxu0 %v2891
    %2921 = vmatprep.subr.mxu0 0.0
    %2922 = vmatpush1.msra.mxu0 %v2892
    %2923 = vmatprep.subr.mxu0 0.0
    %2924 = vmatpush1.msra.mxu0 %v2893
    %2925 = vmatprep.subr.mxu0 0.0
    %2926 = vmatpush1.msra.mxu0 %v2894
    %2927 = vmatprep.subr.mxu0 0.0
    %2928 = vmatpush1.msra.mxu0 0.0
    %2929 = vmatprep.subr.mxu0 0.0
    %2930 = vmatpush1.msra.mxu0 0.0
    %2931 = vmatprep.subr.mxu0 0.0
    %2932 = vmatpush1.msra.mxu0 0.0
    %2933 = vmatprep.subr.mxu0 0.0
    %2934 = vmatpush1.msra.mxu0 0.0
    %2935 = vmatprep.subr.mxu0 0.0
    %2936 = vmatpush1.msra.mxu0 0.0
    %2937 = vmatprep.subr.mxu0 0.0
    %2938 = vmatpush1.msra.mxu0 0.0
    %2939 = vmatprep.subr.mxu0 0.0
    %2940 = vmatpush1.msra.mxu0 0.0
    %2941 = vmatprep.subr.mxu0 0.0
    %2942 = vmatpush1.msra.mxu0 0.0
    %2943 = vmatprep.subr.mxu0 0.0
    %2944 = vmatpush1.msra.mxu0 0.0
    %2945 = vmatprep.subr.mxu0 0.0
    %2946 = vmatpush1.msra.mxu0 0.0
    %2947 = vmatprep.subr.mxu0 0.0
    %2948 = vmatpush1.msra.mxu0 0.0
    %2949 = vmatprep.subr.mxu0 0.0
    %2950 = vmatpush1.msra.mxu0 0.0
    %2951 = vmatprep.subr.mxu0 0.0
    %2952 = vmatpush1.msra.mxu0 0.0
    %2953 = vmatprep.subr.mxu0 0.0
    %2954 = vmatpush1.msra.mxu0 0.0
    %2955 = vmatprep.subr.mxu0 0.0
    %2956 = vmatpush1.msra.mxu0 0.0
    %2957 = vmatprep.subr.mxu0 0.0
    %2958 = vmatpush1.msra.mxu0 0.0
    %2959 = vmatprep.mubr.f32.mxu0 0.0
    %2960 = vmatmul.mubr.f32.gmra.mrb[0].mxu0 %v2840
    %v2961 = vpop.f32.mrb[0].mxu0
    %v2962 = vadd.f32 0.0, %v2961
    %v2963 = vpop.f32.mrb[0].mxu0
    %2964 = vmatprep.mubr.f32.mxu0 0.0
    %2965 = vmatmul.mubr.f32.gmra.mrb[0].mxu0 %v2841
    %v2966 = vpop.f32.mrb[0].mxu0
    %v2967 = vadd.f32 0.0, %v2966
    %v2968 = vpop.f32.mrb[0].mxu0
    %2969 = vmatprep.mubr.f32.mxu0 0.0
    %2970 = vmatmul.mubr.f32.gmra.mrb[0].mxu0 %v2842
    %v2971 = vpop.f32.mrb[0].mxu0
    %v2972 = vadd.f32 0.0, %v2971
    %v2973 = vpop.f32.mrb[0].mxu0
    %2974 = vmatprep.mubr.f32.mxu0 0.0
    %2975 = vmatmul.mubr.f32.gmra.mrb[0].mxu0 %v2843
    %v2976 = vpop.f32.mrb[0].mxu0
    %v2977 = vadd.f32 0.0, %v2976
    %v2978 = vpop.f32.mrb[0].mxu0
    %2979 = vdwg.mxu0
    %2980 = vmatprep.subr.mxu0 0.0
    %2981 = vmatpush1.msra.mxu0 %v2862
    %2982 = vmatprep.subr.mxu0 0.0
    %2983 = vmatpush1.msra.mxu0 %v2863
    %2984 = vmatprep.subr.mxu0 0.0
    %2985 = vmatpush1.msra.mxu0 %v2864
    %2986 = vmatprep.subr.mxu0 0.0
    %2987 = vmatpush1.msra.mxu0 %v2865
    %2988 = vmatprep.subr.mxu0 0.0
    %2989 = vmatpush1.msra.mxu0 %v2866
    %2990 = vmatprep.subr.mxu0 0.0
    %2991 = vmatpush1.msra.mxu0 %v2867
    %2992 = vmatprep.subr.mxu0 0.0
    %2993 = vmatpush1.msra.mxu0 %v2868
    %2994 = vmatprep.subr.mxu0 0.0
    %2995 = vmatpush1.msra.mxu0 %v2869
    %2996 = vmatprep.subr.mxu0 0.0
    %2997 = vmatpush1.msra.mxu0 %v2870
    %2998 = vmatprep.subr.mxu0 0.0
    %2999 = vmatpush1.msra.mxu0 %v2871
    %3000 = vmatprep.subr.mxu0 0.0
    %3001 = vmatpush1.msra.mxu0 %v2872
    %3002 = vmatprep.subr.mxu0 0.0
    %3003 = vmatpush1.msra.mxu0 %v2873
    %3004 = vmatprep.subr.mxu0 0.0
    %3005 = vmatpush1.msra.mxu0 %v2874
    %3006 = vmatprep.subr.mxu0 0.0
    %3007 = vmatpush1.msra.mxu0 %v2875
    %3008 = vmatprep.subr.mxu0 0.0
    %3009 = vmatpush1.msra.mxu0 %v2876
    %3010 = vmatprep.subr.mxu0 0.0
    %3011 = vmatpush1.msra.mxu0 %v2877
    %3012 = vmatprep.subr.mxu0 0.0
    %3013 = vmatpush1.msra.mxu0 0.0
    %3014 = vmatprep.subr.mxu0 0.0
    %3015 = vmatpush1.msra.mxu0 0.0
    %3016 = vmatprep.subr.mxu0 0.0
    %3017 = vmatpush1.msra.mxu0 0.0
    %3018 = vmatprep.subr.mxu0 0.0
    %3019 = vmatpush1.msra.mxu0 0.0
    %3020 = vmatprep.subr.mxu0 0.0
    %3021 = vmatpush1.msra.mxu0 0.0
    %3022 = vmatprep.subr.mxu0 0.0
    %3023 = vmatpush1.msra.mxu0 0.0
    %3024 = vmatprep.subr.mxu0 0.0
    %3025 = vmatpush1.msra.mxu0 0.0
    %3026 = vmatprep.subr.mxu0 0.0
    %3027 = vmatpush1.msra.mxu0 0.0
    %3028 = vmatprep.subr.mxu0 0.0
    %3029 = vmatpush1.msra.mxu0 0.0
    %3030 = vmatprep.subr.mxu0 0.0
    %3031 = vmatpush1.msra.mxu0 0.0
    %3032 = vmatprep.subr.mxu0 0.0
    %3033 = vmatpush1.msra.mxu0 0.0
    %3034 = vmatprep.subr.mxu0 0.0
    %3035 = vmatpush1.msra.mxu0 0.0
    %3036 = vmatprep.subr.mxu0 0.0
    %3037 = vmatpush1.msra.mxu0 0.0
    %3038 = vmatprep.subr.mxu0 0.0
    %3039 = vmatpush1.msra.mxu0 0.0
    %3040 = vmatprep.subr.mxu0 0.0
    %3041 = vmatpush1.msra.mxu0 0.0
    %3042 = vmatprep.subr.mxu0 0.0
    %3043 = vmatpush1.msra.mxu0 0.0
    %3044 = vmatprep.mubr.f32.mxu0 0.0
    %3045 = vmatmul.mubr.f32.gmra.mrb[0].mxu0 %v2859
    %v3046 = vpop.f32.mrb[0].mxu0
    %v3047 = vadd.f32 %v2962, %v3046
    %v3048 = vpop.f32.mrb[0].mxu0
    %3049 = vmatprep.mubr.f32.mxu0 0.0
    %3050 = vmatmul.mubr.f32.gmra.mrb[0].mxu0 %v2851
    %v3051 = vpop.f32.mrb[0].mxu0
    %v3052 = vadd.f32 %v2967, %v3051
    %v3053 = vpop.f32.mrb[0].mxu0
    %3054 = vmatprep.mubr.f32.mxu0 0.0
    %3055 = vmatmul.mubr.f32.gmra.mrb[0].mxu0 %v2860
    %v3056 = vpop.f32.mrb[0].mxu0
    %v3057 = vadd.f32 %v2972, %v3056
    %v3058 = vpop.f32.mrb[0].mxu0
    %3059 = vmatprep.mubr.f32.mxu0 0.0
    %3060 = vmatmul.mubr.f32.gmra.mrb[0].mxu0 %v2854
    %v3061 = vpop.f32.mrb[0].mxu0
    %v3062 = vadd.f32 %v2977, %v3061
    %v3063 = vpop.f32.mrb[0].mxu0
    %3064 = vdwg.mxu0
    %v3065 = vrot.slane %v2840, 1
    %v3066 = vrot.slane %v2841, 1
    %v3067 = vsel %vm459, %v3065, %v3066
    %v3068 = vrot.slane %v2842, 1
    %v3069 = vrot.slane %v2843, 1
    %v3070 = vsel %vm459, %v3068, %v3069
    %v3075 = vsel %vm459, %v3066, 0.0
    %v3076 = vsel %vm459, %v3069, 0.0
    %s3077 = scalar_lea.vmem [#allocation8], 2176
    %v3078 = vld [vmem:[%s3077] sm:$0xff]
    %v3079 = vld [vmem:[%s3077 + $0x8] sm:$0xff]
    %v3080 = vld [vmem:[%s3077 + $0x10] sm:$0xff]
    %v3081 = vld [vmem:[%s3077 + $0x18] sm:$0xff]
    %v3082 = vld [vmem:[%s3077 + $0x20] sm:$0xff]
    %v3083 = vld [vmem:[%s3077 + $0x28] sm:$0xff]
    %v3084 = vld [vmem:[%s3077 + $0x30] sm:$0xff]
    %v3085 = vld [vmem:[%s3077 + $0x38] sm:$0xff]
    %v3086 = vld [vmem:[%s3077 + $0x40] sm:$0xff]
    %v3087 = vld [vmem:[%s3077 + $0x48] sm:$0xff]
    %v3088 = vld [vmem:[%s3077 + $0x50] sm:$0xff]
    %v3089 = vld [vmem:[%s3077 + $0x58] sm:$0xff]
    %v3090 = vld [vmem:[%s3077 + $0x60] sm:$0xff]
    %v3091 = vld [vmem:[%s3077 + $0x68] sm:$0xff]
    %v3092 = vld [vmem:[%s3077 + $0x70] sm:$0xff]
    %v3093 = vld [vmem:[%s3077 + $0x78] sm:$0xff]
    %3094 = vmatprep.subr.mxu0 0.0
    %3095 = vmatpush1.msra.mxu0 %v3078
    %3096 = vmatprep.subr.mxu0 0.0
    %3097 = vmatpush1.msra.mxu0 %v3079
    %3098 = vmatprep.subr.mxu0 0.0
    %3099 = vmatpush1.msra.mxu0 %v3080
    %3100 = vmatprep.subr.mxu0 0.0
    %3101 = vmatpush1.msra.mxu0 %v3081
    %3102 = vmatprep.subr.mxu0 0.0
    %3103 = vmatpush1.msra.mxu0 %v3082
    %3104 = vmatprep.subr.mxu0 0.0
    %3105 = vmatpush1.msra.mxu0 %v3083
    %3106 = vmatprep.subr.mxu0 0.0
    %3107 = vmatpush1.msra.mxu0 %v3084
    %3108 = vmatprep.subr.mxu0 0.0
    %3109 = vmatpush1.msra.mxu0 %v3085
    %3110 = vmatprep.subr.mxu0 0.0
    %3111 = vmatpush1.msra.mxu0 %v3086
    %3112 = vmatprep.subr.mxu0 0.0
    %3113 = vmatpush1.msra.mxu0 %v3087
    %3114 = vmatprep.subr.mxu0 0.0
    %3115 = vmatpush1.msra.mxu0 %v3088
    %3116 = vmatprep.subr.mxu0 0.0
    %3117 = vmatpush1.msra.mxu0 %v3089
    %3118 = vmatprep.subr.mxu0 0.0
    %3119 = vmatpush1.msra.mxu0 %v3090
    %3120 = vmatprep.subr.mxu0 0.0
    %3121 = vmatpush1.msra.mxu0 %v3091
    %3122 = vmatprep.subr.mxu0 0.0
    %3123 = vmatpush1.msra.mxu0 %v3092
    %3124 = vmatprep.subr.mxu0 0.0
    %3125 = vmatpush1.msra.mxu0 %v3093
    %3126 = vmatprep.subr.mxu0 0.0
    %3127 = vmatpush1.msra.mxu0 0.0
    %3128 = vmatprep.subr.mxu0 0.0
    %3129 = vmatpush1.msra.mxu0 0.0
    %3130 = vmatprep.subr.mxu0 0.0
    %3131 = vmatpush1.msra.mxu0 0.0
    %3132 = vmatprep.subr.mxu0 0.0
    %3133 = vmatpush1.msra.mxu0 0.0
    %3134 = vmatprep.subr.mxu0 0.0
    %3135 = vmatpush1.msra.mxu0 0.0
    %3136 = vmatprep.subr.mxu0 0.0
    %3137 = vmatpush1.msra.mxu0 0.0
    %3138 = vmatprep.subr.mxu0 0.0
    %3139 = vmatpush1.msra.mxu0 0.0
    %3140 = vmatprep.subr.mxu0 0.0
    %3141 = vmatpush1.msra.mxu0 0.0
    %3142 = vmatprep.subr.mxu0 0.0
    %3143 = vmatpush1.msra.mxu0 0.0
    %3144 = vmatprep.subr.mxu0 0.0
    %3145 = vmatpush1.msra.mxu0 0.0
    %3146 = vmatprep.subr.mxu0 0.0
    %3147 = vmatpush1.msra.mxu0 0.0
    %3148 = vmatprep.subr.mxu0 0.0
    %3149 = vmatpush1.msra.mxu0 0.0
    %3150 = vmatprep.subr.mxu0 0.0
    %3151 = vmatpush1.msra.mxu0 0.0
    %3152 = vmatprep.subr.mxu0 0.0
    %3153 = vmatpush1.msra.mxu0 0.0
    %3154 = vmatprep.subr.mxu0 0.0
    %3155 = vmatpush1.msra.mxu0 0.0
    %3156 = vmatprep.subr.mxu0 0.0
    %3157 = vmatpush1.msra.mxu0 0.0
    %3158 = vmatprep.mubr.f32.mxu0 0.0
    %3159 = vmatmul.mubr.f32.gmra.mrb[0].mxu0 %v3067
    %v3160 = vpop.f32.mrb[0].mxu0
    %v3161 = vadd.f32 0.0, %v3160
    %v3162 = vpop.f32.mrb[0].mxu0
    %3163 = vmatprep.mubr.f32.mxu0 0.0
    %3164 = vmatmul.mubr.f32.gmra.mrb[0].mxu0 %v3075
    %v3165 = vpop.f32.mrb[0].mxu0
    %v3166 = vadd.f32 0.0, %v3165
    %v3167 = vpop.f32.mrb[0].mxu0
    %3168 = vmatprep.mubr.f32.mxu0 0.0
    %3169 = vmatmul.mubr.f32.gmra.mrb[0].mxu0 %v3070
    %v3170 = vpop.f32.mrb[0].mxu0
    %v3171 = vadd.f32 0.0, %v3170
    %v3172 = vpop.f32.mrb[0].mxu0
    %3173 = vmatprep.mubr.f32.mxu0 0.0
    %3174 = vmatmul.mubr.f32.gmra.mrb[0].mxu0 %v3076
    %v3175 = vpop.f32.mrb[0].mxu0
    %v3176 = vadd.f32 0.0, %v3175
    %v3177 = vpop.f32.mrb[0].mxu0
    %3178 = vdwg.mxu0
    %v3179 = vadd.f32 %v3047, %v3161
    %v3180 = vadd.f32 %v3052, %v3166
    %v3181 = vadd.f32 %v3057, %v3171
    %v3182 = vadd.f32 %v3062, %v3176
    %v3183 = vlaneseq
    %v3184 = vshrl.u32 %v3183, 7
    %v3185 = vsub.s32 0, %v3184
    %v3186 = vrot.slane %v2844, %v3185
    %v3187 = vadd.f32 %v3179, %v3186
    %v3188 = vadd.f32 %v3180, %v3186
    %v3189 = vadd.f32 %v3181, %v3186
    %v3190 = vadd.f32 %v3182, %v3186
    %v3191 = vadd.f32 %v3187, %v2449
    %v3192 = vadd.f32 %v3188, %v2450
    %v3193 = vadd.f32 %v3189, %v2451
    %v3194 = vadd.f32 %v3190, %v2452
    %v3195 = vld [vmem:[#allocation11 + $0x6] sm:$0x1]
    %v3196 = vlaneseq
    %v3197 = vshrl.u32 %v3196, 7
    %v3198 = vsub.s32 0, %v3197
    %v3199 = vrot.slane %v3195, %v3198
    %v3200 = vmul.f32 %v3191, %v3199
    %v3201 = vmul.f32 %v3192, %v3199
    %v3202 = vmul.f32 %v3193, %v3199
    %v3203 = vmul.f32 %v3194, %v3199
    %v3204 = vld [vmem:[#allocation13 + $0x6] sm:$0x1]
    %v3205 = vlaneseq
    %v3206 = vshrl.u32 %v3205, 7
    %v3207 = vsub.s32 0, %v3206
    %v3208 = vrot.slane %v3204, %v3207
    %v3209 = vadd.f32 %v3200, %v3208
    %v3210 = vadd.f32 %v3201, %v3208
    %v3211 = vadd.f32 %v3202, %v3208
    %v3212 = vadd.f32 %v3203, %v3208
    %v3213 = vmax.f32 %v3209, 0.0
    %v3214 = vmax.f32 %v3210, 0.0
    %v3215 = vmax.f32 %v3211, 0.0
    %v3216 = vmax.f32 %v3212, 0.0
    %v3217 = vld [vmem:[#allocation10 + $0x6] sm:$0x1]
    %v3222 = vrot.slane %v3213, 7
    %v3223 = vrot.slane %v3214, 7
    %v3224 = vsel %vm246, %v3222, %v3223
    %v3225 = vrot.slane %v3215, 7
    %v3226 = vrot.slane %v3216, 7
    %v3227 = vsel %vm246, %v3225, %v3226
    %v3232 = vsel %vm246, 0.0, %v3222
    %v3233 = vsel %vm246, 0.0, %v3225
    %s3234 = scalar_lea.vmem [#allocation8], 2304
    %v3235 = vld [vmem:[%s3234] sm:$0xff]
    %v3236 = vld [vmem:[%s3234 + $0x8] sm:$0xff]
    %v3237 = vld [vmem:[%s3234 + $0x10] sm:$0xff]
    %v3238 = vld [vmem:[%s3234 + $0x18] sm:$0xff]
    %v3239 = vld [vmem:[%s3234 + $0x20] sm:$0xff]
    %v3240 = vld [vmem:[%s3234 + $0x28] sm:$0xff]
    %v3241 = vld [vmem:[%s3234 + $0x30] sm:$0xff]
    %v3242 = vld [vmem:[%s3234 + $0x38] sm:$0xff]
    %v3243 = vld [vmem:[%s3234 + $0x40] sm:$0xff]
    %v3244 = vld [vmem:[%s3234 + $0x48] sm:$0xff]
    %v3245 = vld [vmem:[%s3234 + $0x50] sm:$0xff]
    %v3246 = vld [vmem:[%s3234 + $0x58] sm:$0xff]
    %v3247 = vld [vmem:[%s3234 + $0x60] sm:$0xff]
    %v3248 = vld [vmem:[%s3234 + $0x68] sm:$0xff]
    %v3249 = vld [vmem:[%s3234 + $0x70] sm:$0xff]
    %v3250 = vld [vmem:[%s3234 + $0x78] sm:$0xff]
    %s3251 = scalar_lea.vmem [#allocation8], 2432
    %v3252 = vld [vmem:[%s3251] sm:$0xff]
    %v3253 = vld [vmem:[%s3251 + $0x8] sm:$0xff]
    %v3254 = vld [vmem:[%s3251 + $0x10] sm:$0xff]
    %v3255 = vld [vmem:[%s3251 + $0x18] sm:$0xff]
    %v3256 = vld [vmem:[%s3251 + $0x20] sm:$0xff]
    %v3257 = vld [vmem:[%s3251 + $0x28] sm:$0xff]
    %v3258 = vld [vmem:[%s3251 + $0x30] sm:$0xff]
    %v3259 = vld [vmem:[%s3251 + $0x38] sm:$0xff]
    %v3260 = vld [vmem:[%s3251 + $0x40] sm:$0xff]
    %v3261 = vld [vmem:[%s3251 + $0x48] sm:$0xff]
    %v3262 = vld [vmem:[%s3251 + $0x50] sm:$0xff]
    %v3263 = vld [vmem:[%s3251 + $0x58] sm:$0xff]
    %v3264 = vld [vmem:[%s3251 + $0x60] sm:$0xff]
    %v3265 = vld [vmem:[%s3251 + $0x68] sm:$0xff]
    %v3266 = vld [vmem:[%s3251 + $0x70] sm:$0xff]
    %v3267 = vld [vmem:[%s3251 + $0x78] sm:$0xff]
    %3268 = vmatprep.subr.mxu0 0.0
    %3269 = vmatpush1.msra.mxu0 %v3252
    %3270 = vmatprep.subr.mxu0 0.0
    %3271 = vmatpush1.msra.mxu0 %v3253
    %3272 = vmatprep.subr.mxu0 0.0
    %3273 = vmatpush1.msra.mxu0 %v3254
    %3274 = vmatprep.subr.mxu0 0.0
    %3275 = vmatpush1.msra.mxu0 %v3255
    %3276 = vmatprep.subr.mxu0 0.0
    %3277 = vmatpush1.msra.mxu0 %v3256
    %3278 = vmatprep.subr.mxu0 0.0
    %3279 = vmatpush1.msra.mxu0 %v3257
    %3280 = vmatprep.subr.mxu0 0.0
    %3281 = vmatpush1.msra.mxu0 %v3258
    %3282 = vmatprep.subr.mxu0 0.0
    %3283 = vmatpush1.msra.mxu0 %v3259
    %3284 = vmatprep.subr.mxu0 0.0
    %3285 = vmatpush1.msra.mxu0 %v3260
    %3286 = vmatprep.subr.mxu0 0.0
    %3287 = vmatpush1.msra.mxu0 %v3261
    %3288 = vmatprep.subr.mxu0 0.0
    %3289 = vmatpush1.msra.mxu0 %v3262
    %3290 = vmatprep.subr.mxu0 0.0
    %3291 = vmatpush1.msra.mxu0 %v3263
    %3292 = vmatprep.subr.mxu0 0.0
    %3293 = vmatpush1.msra.mxu0 %v3264
    %3294 = vmatprep.subr.mxu0 0.0
    %3295 = vmatpush1.msra.mxu0 %v3265
    %3296 = vmatprep.subr.mxu0 0.0
    %3297 = vmatpush1.msra.mxu0 %v3266
    %3298 = vmatprep.subr.mxu0 0.0
    %3299 = vmatpush1.msra.mxu0 %v3267
    %3300 = vmatprep.subr.mxu0 0.0
    %3301 = vmatpush1.msra.mxu0 0.0
    %3302 = vmatprep.subr.mxu0 0.0
    %3303 = vmatpush1.msra.mxu0 0.0
    %3304 = vmatprep.subr.mxu0 0.0
    %3305 = vmatpush1.msra.mxu0 0.0
    %3306 = vmatprep.subr.mxu0 0.0
    %3307 = vmatpush1.msra.mxu0 0.0
    %3308 = vmatprep.subr.mxu0 0.0
    %3309 = vmatpush1.msra.mxu0 0.0
    %3310 = vmatprep.subr.mxu0 0.0
    %3311 = vmatpush1.msra.mxu0 0.0
    %3312 = vmatprep.subr.mxu0 0.0
    %3313 = vmatpush1.msra.mxu0 0.0
    %3314 = vmatprep.subr.mxu0 0.0
    %3315 = vmatpush1.msra.mxu0 0.0
    %3316 = vmatprep.subr.mxu0 0.0
    %3317 = vmatpush1.msra.mxu0 0.0
    %3318 = vmatprep.subr.mxu0 0.0
    %3319 = vmatpush1.msra.mxu0 0.0
    %3320 = vmatprep.subr.mxu0 0.0
    %3321 = vmatpush1.msra.mxu0 0.0
    %3322 = vmatprep.subr.mxu0 0.0
    %3323 = vmatpush1.msra.mxu0 0.0
    %3324 = vmatprep.subr.mxu0 0.0
    %3325 = vmatpush1.msra.mxu0 0.0
    %3326 = vmatprep.subr.mxu0 0.0
    %3327 = vmatpush1.msra.mxu0 0.0
    %3328 = vmatprep.subr.mxu0 0.0
    %3329 = vmatpush1.msra.mxu0 0.0
    %3330 = vmatprep.subr.mxu0 0.0
    %3331 = vmatpush1.msra.mxu0 0.0
    %3332 = vmatprep.mubr.f32.mxu0 0.0
    %3333 = vmatmul.mubr.f32.gmra.mrb[0].mxu0 %v3213
    %v3334 = vpop.f32.mrb[0].mxu0
    %v3335 = vadd.f32 0.0, %v3334
    %v3336 = vpop.f32.mrb[0].mxu0
    %3337 = vmatprep.mubr.f32.mxu0 0.0
    %3338 = vmatmul.mubr.f32.gmra.mrb[0].mxu0 %v3214
    %v3339 = vpop.f32.mrb[0].mxu0
    %v3340 = vadd.f32 0.0, %v3339
    %v3341 = vpop.f32.mrb[0].mxu0
    %3342 = vmatprep.mubr.f32.mxu0 0.0
    %3343 = vmatmul.mubr.f32.gmra.mrb[0].mxu0 %v3215
    %v3344 = vpop.f32.mrb[0].mxu0
    %v3345 = vadd.f32 0.0, %v3344
    %v3346 = vpop.f32.mrb[0].mxu0
    %3347 = vmatprep.mubr.f32.mxu0 0.0
    %3348 = vmatmul.mubr.f32.gmra.mrb[0].mxu0 %v3216
    %v3349 = vpop.f32.mrb[0].mxu0
    %v3350 = vadd.f32 0.0, %v3349
    %v3351 = vpop.f32.mrb[0].mxu0
    %3352 = vdwg.mxu0
    %3353 = vmatprep.subr.mxu0 0.0
    %3354 = vmatpush1.msra.mxu0 %v3235
    %3355 = vmatprep.subr.mxu0 0.0
    %3356 = vmatpush1.msra.mxu0 %v3236
    %3357 = vmatprep.subr.mxu0 0.0
    %3358 = vmatpush1.msra.mxu0 %v3237
    %3359 = vmatprep.subr.mxu0 0.0
    %3360 = vmatpush1.msra.mxu0 %v3238
    %3361 = vmatprep.subr.mxu0 0.0
    %3362 = vmatpush1.msra.mxu0 %v3239
    %3363 = vmatprep.subr.mxu0 0.0
    %3364 = vmatpush1.msra.mxu0 %v3240
    %3365 = vmatprep.subr.mxu0 0.0
    %3366 = vmatpush1.msra.mxu0 %v3241
    %3367 = vmatprep.subr.mxu0 0.0
    %3368 = vmatpush1.msra.mxu0 %v3242
    %3369 = vmatprep.subr.mxu0 0.0
    %3370 = vmatpush1.msra.mxu0 %v3243
    %3371 = vmatprep.subr.mxu0 0.0
    %3372 = vmatpush1.msra.mxu0 %v3244
    %3373 = vmatprep.subr.mxu0 0.0
    %3374 = vmatpush1.msra.mxu0 %v3245
    %3375 = vmatprep.subr.mxu0 0.0
    %3376 = vmatpush1.msra.mxu0 %v3246
    %3377 = vmatprep.subr.mxu0 0.0
    %3378 = vmatpush1.msra.mxu0 %v3247
    %3379 = vmatprep.subr.mxu0 0.0
    %3380 = vmatpush1.msra.mxu0 %v3248
    %3381 = vmatprep.subr.mxu0 0.0
    %3382 = vmatpush1.msra.mxu0 %v3249
    %3383 = vmatprep.subr.mxu0 0.0
    %3384 = vmatpush1.msra.mxu0 %v3250
    %3385 = vmatprep.subr.mxu0 0.0
    %3386 = vmatpush1.msra.mxu0 0.0
    %3387 = vmatprep.subr.mxu0 0.0
    %3388 = vmatpush1.msra.mxu0 0.0
    %3389 = vmatprep.subr.mxu0 0.0
    %3390 = vmatpush1.msra.mxu0 0.0
    %3391 = vmatprep.subr.mxu0 0.0
    %3392 = vmatpush1.msra.mxu0 0.0
    %3393 = vmatprep.subr.mxu0 0.0
    %3394 = vmatpush1.msra.mxu0 0.0
    %3395 = vmatprep.subr.mxu0 0.0
    %3396 = vmatpush1.msra.mxu0 0.0
    %3397 = vmatprep.subr.mxu0 0.0
    %3398 = vmatpush1.msra.mxu0 0.0
    %3399 = vmatprep.subr.mxu0 0.0
    %3400 = vmatpush1.msra.mxu0 0.0
    %3401 = vmatprep.subr.mxu0 0.0
    %3402 = vmatpush1.msra.mxu0 0.0
    %3403 = vmatprep.subr.mxu0 0.0
    %3404 = vmatpush1.msra.mxu0 0.0
    %3405 = vmatprep.subr.mxu0 0.0
    %3406 = vmatpush1.msra.mxu0 0.0
    %3407 = vmatprep.subr.mxu0 0.0
    %3408 = vmatpush1.msra.mxu0 0.0
    %3409 = vmatprep.subr.mxu0 0.0
    %3410 = vmatpush1.msra.mxu0 0.0
    %3411 = vmatprep.subr.mxu0 0.0
    %3412 = vmatpush1.msra.mxu0 0.0
    %3413 = vmatprep.subr.mxu0 0.0
    %3414 = vmatpush1.msra.mxu0 0.0
    %3415 = vmatprep.subr.mxu0 0.0
    %3416 = vmatpush1.msra.mxu0 0.0
    %3417 = vmatprep.mubr.f32.mxu0 0.0
    %3418 = vmatmul.mubr.f32.gmra.mrb[0].mxu0 %v3232
    %v3419 = vpop.f32.mrb[0].mxu0
    %v3420 = vadd.f32 %v3335, %v3419
    %v3421 = vpop.f32.mrb[0].mxu0
    %3422 = vmatprep.mubr.f32.mxu0 0.0
    %3423 = vmatmul.mubr.f32.gmra.mrb[0].mxu0 %v3224
    %v3424 = vpop.f32.mrb[0].mxu0
    %v3425 = vadd.f32 %v3340, %v3424
    %v3426 = vpop.f32.mrb[0].mxu0
    %3427 = vmatprep.mubr.f32.mxu0 0.0
    %3428 = vmatmul.mubr.f32.gmra.mrb[0].mxu0 %v3233
    %v3429 = vpop.f32.mrb[0].mxu0
    %v3430 = vadd.f32 %v3345, %v3429
    %v3431 = vpop.f32.mrb[0].mxu0
    %3432 = vmatprep.mubr.f32.mxu0 0.0
    %3433 = vmatmul.mubr.f32.gmra.mrb[0].mxu0 %v3227
    %v3434 = vpop.f32.mrb[0].mxu0
    %v3435 = vadd.f32 %v3350, %v3434
    %v3436 = vpop.f32.mrb[0].mxu0
    %3437 = vdwg.mxu0
    %v3438 = vrot.slane %v3213, 1
    %v3439 = vrot.slane %v3214, 1
    %v3440 = vsel %vm459, %v3438, %v3439
    %v3441 = vrot.slane %v3215, 1
    %v3442 = vrot.slane %v3216, 1
    %v3443 = vsel %vm459, %v3441, %v3442
    %v3448 = vsel %vm459, %v3439, 0.0
    %v3449 = vsel %vm459, %v3442, 0.0
    %s3450 = scalar_lea.vmem [#allocation8], 2560
    %v3451 = vld [vmem:[%s3450] sm:$0xff]
    %v3452 = vld [vmem:[%s3450 + $0x8] sm:$0xff]
    %v3453 = vld [vmem:[%s3450 + $0x10] sm:$0xff]
    %v3454 = vld [vmem:[%s3450 + $0x18] sm:$0xff]
    %v3455 = vld [vmem:[%s3450 + $0x20] sm:$0xff]
    %v3456 = vld [vmem:[%s3450 + $0x28] sm:$0xff]
    %v3457 = vld [vmem:[%s3450 + $0x30] sm:$0xff]
    %v3458 = vld [vmem:[%s3450 + $0x38] sm:$0xff]
    %v3459 = vld [vmem:[%s3450 + $0x40] sm:$0xff]
    %v3460 = vld [vmem:[%s3450 + $0x48] sm:$0xff]
    %v3461 = vld [vmem:[%s3450 + $0x50] sm:$0xff]
    %v3462 = vld [vmem:[%s3450 + $0x58] sm:$0xff]
    %v3463 = vld [vmem:[%s3450 + $0x60] sm:$0xff]
    %v3464 = vld [vmem:[%s3450 + $0x68] sm:$0xff]
    %v3465 = vld [vmem:[%s3450 + $0x70] sm:$0xff]
    %v3466 = vld [vmem:[%s3450 + $0x78] sm:$0xff]
    %3467 = vmatprep.subr.mxu0 0.0
    %3468 = vmatpush1.msra.mxu0 %v3451
    %3469 = vmatprep.subr.mxu0 0.0
    %3470 = vmatpush1.msra.mxu0 %v3452
    %3471 = vmatprep.subr.mxu0 0.0
    %3472 = vmatpush1.msra.mxu0 %v3453
    %3473 = vmatprep.subr.mxu0 0.0
    %3474 = vmatpush1.msra.mxu0 %v3454
    %3475 = vmatprep.subr.mxu0 0.0
    %3476 = vmatpush1.msra.mxu0 %v3455
    %3477 = vmatprep.subr.mxu0 0.0
    %3478 = vmatpush1.msra.mxu0 %v3456
    %3479 = vmatprep.subr.mxu0 0.0
    %3480 = vmatpush1.msra.mxu0 %v3457
    %3481 = vmatprep.subr.mxu0 0.0
    %3482 = vmatpush1.msra.mxu0 %v3458
    %3483 = vmatprep.subr.mxu0 0.0
    %3484 = vmatpush1.msra.mxu0 %v3459
    %3485 = vmatprep.subr.mxu0 0.0
    %3486 = vmatpush1.msra.mxu0 %v3460
    %3487 = vmatprep.subr.mxu0 0.0
    %3488 = vmatpush1.msra.mxu0 %v3461
    %3489 = vmatprep.subr.mxu0 0.0
    %3490 = vmatpush1.msra.mxu0 %v3462
    %3491 = vmatprep.subr.mxu0 0.0
    %3492 = vmatpush1.msra.mxu0 %v3463
    %3493 = vmatprep.subr.mxu0 0.0
    %3494 = vmatpush1.msra.mxu0 %v3464
    %3495 = vmatprep.subr.mxu0 0.0
    %3496 = vmatpush1.msra.mxu0 %v3465
    %3497 = vmatprep.subr.mxu0 0.0
    %3498 = vmatpush1.msra.mxu0 %v3466
    %3499 = vmatprep.subr.mxu0 0.0
    %3500 = vmatpush1.msra.mxu0 0.0
    %3501 = vmatprep.subr.mxu0 0.0
    %3502 = vmatpush1.msra.mxu0 0.0
    %3503 = vmatprep.subr.mxu0 0.0
    %3504 = vmatpush1.msra.mxu0 0.0
    %3505 = vmatprep.subr.mxu0 0.0
    %3506 = vmatpush1.msra.mxu0 0.0
    %3507 = vmatprep.subr.mxu0 0.0
    %3508 = vmatpush1.msra.mxu0 0.0
    %3509 = vmatprep.subr.mxu0 0.0
    %3510 = vmatpush1.msra.mxu0 0.0
    %3511 = vmatprep.subr.mxu0 0.0
    %3512 = vmatpush1.msra.mxu0 0.0
    %3513 = vmatprep.subr.mxu0 0.0
    %3514 = vmatpush1.msra.mxu0 0.0
    %3515 = vmatprep.subr.mxu0 0.0
    %3516 = vmatpush1.msra.mxu0 0.0
    %3517 = vmatprep.subr.mxu0 0.0
    %3518 = vmatpush1.msra.mxu0 0.0
    %3519 = vmatprep.subr.mxu0 0.0
    %3520 = vmatpush1.msra.mxu0 0.0
    %3521 = vmatprep.subr.mxu0 0.0
    %3522 = vmatpush1.msra.mxu0 0.0
    %3523 = vmatprep.subr.mxu0 0.0
    %3524 = vmatpush1.msra.mxu0 0.0
    %3525 = vmatprep.subr.mxu0 0.0
    %3526 = vmatpush1.msra.mxu0 0.0
    %3527 = vmatprep.subr.mxu0 0.0
    %3528 = vmatpush1.msra.mxu0 0.0
    %3529 = vmatprep.subr.mxu0 0.0
    %3530 = vmatpush1.msra.mxu0 0.0
    %3531 = vmatprep.mubr.f32.mxu0 0.0
    %3532 = vmatmul.mubr.f32.gmra.mrb[0].mxu0 %v3440
    %v3533 = vpop.f32.mrb[0].mxu0
    %v3534 = vadd.f32 0.0, %v3533
    %v3535 = vpop.f32.mrb[0].mxu0
    %3536 = vmatprep.mubr.f32.mxu0 0.0
    %3537 = vmatmul.mubr.f32.gmra.mrb[0].mxu0 %v3448
    %v3538 = vpop.f32.mrb[0].mxu0
    %v3539 = vadd.f32 0.0, %v3538
    %v3540 = vpop.f32.mrb[0].mxu0
    %3541 = vmatprep.mubr.f32.mxu0 0.0
    %3542 = vmatmul.mubr.f32.gmra.mrb[0].mxu0 %v3443
    %v3543 = vpop.f32.mrb[0].mxu0
    %v3544 = vadd.f32 0.0, %v3543
    %v3545 = vpop.f32.mrb[0].mxu0
    %3546 = vmatprep.mubr.f32.mxu0 0.0
    %3547 = vmatmul.mubr.f32.gmra.mrb[0].mxu0 %v3449
    %v3548 = vpop.f32.mrb[0].mxu0
    %v3549 = vadd.f32 0.0, %v3548
    %v3550 = vpop.f32.mrb[0].mxu0
    %3551 = vdwg.mxu0
    %v3552 = vadd.f32 %v3420, %v3534
    %v3553 = vadd.f32 %v3425, %v3539
    %v3554 = vadd.f32 %v3430, %v3544
    %v3555 = vadd.f32 %v3435, %v3549
    %v3556 = vlaneseq
    %v3557 = vshrl.u32 %v3556, 7
    %v3558 = vsub.s32 0, %v3557
    %v3559 = vrot.slane %v3217, %v3558
    %v3560 = vadd.f32 %v3552, %v3559
    %v3561 = vadd.f32 %v3553, %v3559
    %v3562 = vadd.f32 %v3554, %v3559
    %v3563 = vadd.f32 %v3555, %v3559
    %v3564 = vld [vmem:[#allocation11 + $0x7] sm:$0x1]
    %v3565 = vlaneseq
    %v3566 = vshrl.u32 %v3565, 7
    %v3567 = vsub.s32 0, %v3566
    %v3568 = vrot.slane %v3564, %v3567
    %v3569 = vmul.f32 %v3560, %v3568
    %v3570 = vmul.f32 %v3561, %v3568
    %v3571 = vmul.f32 %v3562, %v3568
    %v3572 = vmul.f32 %v3563, %v3568
    %v3573 = vld [vmem:[#allocation13 + $0x7] sm:$0x1]
    %v3574 = vlaneseq
    %v3575 = vshrl.u32 %v3574, 7
    %v3576 = vsub.s32 0, %v3575
    %v3577 = vrot.slane %v3573, %v3576
    %v3578 = vadd.f32 %v3569, %v3577
    %v3579 = vadd.f32 %v3570, %v3577
    %v3580 = vadd.f32 %v3571, %v3577
    %v3581 = vadd.f32 %v3572, %v3577
    %v3582 = vmax.f32 %v3578, 0.0
    %v3583 = vmax.f32 %v3579, 0.0
    %v3584 = vmax.f32 %v3580, 0.0
    %v3585 = vmax.f32 %v3581, 0.0
    %v3586 = vld [vmem:[#allocation10 + $0x7] sm:$0x1]
    %v3591 = vrot.slane %v3582, 7
    %v3592 = vrot.slane %v3583, 7
    %v3593 = vsel %vm246, %v3591, %v3592
    %v3594 = vrot.slane %v3584, 7
    %v3595 = vrot.slane %v3585, 7
    %v3596 = vsel %vm246, %v3594, %v3595
    %v3601 = vsel %vm246, 0.0, %v3591
    %v3602 = vsel %vm246, 0.0, %v3594
    %s3603 = scalar_lea.vmem [#allocation8], 2688
    %v3604 = vld [vmem:[%s3603] sm:$0xff]
    %v3605 = vld [vmem:[%s3603 + $0x8] sm:$0xff]
    %v3606 = vld [vmem:[%s3603 + $0x10] sm:$0xff]
    %v3607 = vld [vmem:[%s3603 + $0x18] sm:$0xff]
    %v3608 = vld [vmem:[%s3603 + $0x20] sm:$0xff]
    %v3609 = vld [vmem:[%s3603 + $0x28] sm:$0xff]
    %v3610 = vld [vmem:[%s3603 + $0x30] sm:$0xff]
    %v3611 = vld [vmem:[%s3603 + $0x38] sm:$0xff]
    %v3612 = vld [vmem:[%s3603 + $0x40] sm:$0xff]
    %v3613 = vld [vmem:[%s3603 + $0x48] sm:$0xff]
    %v3614 = vld [vmem:[%s3603 + $0x50] sm:$0xff]
    %v3615 = vld [vmem:[%s3603 + $0x58] sm:$0xff]
    %v3616 = vld [vmem:[%s3603 + $0x60] sm:$0xff]
    %v3617 = vld [vmem:[%s3603 + $0x68] sm:$0xff]
    %v3618 = vld [vmem:[%s3603 + $0x70] sm:$0xff]
    %v3619 = vld [vmem:[%s3603 + $0x78] sm:$0xff]
    %s3620 = scalar_lea.vmem [#allocation8], 2816
    %v3621 = vld [vmem:[%s3620] sm:$0xff]
    %v3622 = vld [vmem:[%s3620 + $0x8] sm:$0xff]
    %v3623 = vld [vmem:[%s3620 + $0x10] sm:$0xff]
    %v3624 = vld [vmem:[%s3620 + $0x18] sm:$0xff]
    %v3625 = vld [vmem:[%s3620 + $0x20] sm:$0xff]
    %v3626 = vld [vmem:[%s3620 + $0x28] sm:$0xff]
    %v3627 = vld [vmem:[%s3620 + $0x30] sm:$0xff]
    %v3628 = vld [vmem:[%s3620 + $0x38] sm:$0xff]
    %v3629 = vld [vmem:[%s3620 + $0x40] sm:$0xff]
    %v3630 = vld [vmem:[%s3620 + $0x48] sm:$0xff]
    %v3631 = vld [vmem:[%s3620 + $0x50] sm:$0xff]
    %v3632 = vld [vmem:[%s3620 + $0x58] sm:$0xff]
    %v3633 = vld [vmem:[%s3620 + $0x60] sm:$0xff]
    %v3634 = vld [vmem:[%s3620 + $0x68] sm:$0xff]
    %v3635 = vld [vmem:[%s3620 + $0x70] sm:$0xff]
    %v3636 = vld [vmem:[%s3620 + $0x78] sm:$0xff]
    %3637 = vmatprep.subr.mxu0 0.0
    %3638 = vmatpush1.msra.mxu0 %v3621
    %3639 = vmatprep.subr.mxu0 0.0
    %3640 = vmatpush1.msra.mxu0 %v3622
    %3641 = vmatprep.subr.mxu0 0.0
    %3642 = vmatpush1.msra.mxu0 %v3623
    %3643 = vmatprep.subr.mxu0 0.0
    %3644 = vmatpush1.msra.mxu0 %v3624
    %3645 = vmatprep.subr.mxu0 0.0
    %3646 = vmatpush1.msra.mxu0 %v3625
    %3647 = vmatprep.subr.mxu0 0.0
    %3648 = vmatpush1.msra.mxu0 %v3626
    %3649 = vmatprep.subr.mxu0 0.0
    %3650 = vmatpush1.msra.mxu0 %v3627
    %3651 = vmatprep.subr.mxu0 0.0
    %3652 = vmatpush1.msra.mxu0 %v3628
    %3653 = vmatprep.subr.mxu0 0.0
    %3654 = vmatpush1.msra.mxu0 %v3629
    %3655 = vmatprep.subr.mxu0 0.0
    %3656 = vmatpush1.msra.mxu0 %v3630
    %3657 = vmatprep.subr.mxu0 0.0
    %3658 = vmatpush1.msra.mxu0 %v3631
    %3659 = vmatprep.subr.mxu0 0.0
    %3660 = vmatpush1.msra.mxu0 %v3632
    %3661 = vmatprep.subr.mxu0 0.0
    %3662 = vmatpush1.msra.mxu0 %v3633
    %3663 = vmatprep.subr.mxu0 0.0
    %3664 = vmatpush1.msra.mxu0 %v3634
    %3665 = vmatprep.subr.mxu0 0.0
    %3666 = vmatpush1.msra.mxu0 %v3635
    %3667 = vmatprep.subr.mxu0 0.0
    %3668 = vmatpush1.msra.mxu0 %v3636
    %3669 = vmatprep.subr.mxu0 0.0
    %3670 = vmatpush1.msra.mxu0 0.0
    %3671 = vmatprep.subr.mxu0 0.0
    %3672 = vmatpush1.msra.mxu0 0.0
    %3673 = vmatprep.subr.mxu0 0.0
    %3674 = vmatpush1.msra.mxu0 0.0
    %3675 = vmatprep.subr.mxu0 0.0
    %3676 = vmatpush1.msra.mxu0 0.0
    %3677 = vmatprep.subr.mxu0 0.0
    %3678 = vmatpush1.msra.mxu0 0.0
    %3679 = vmatprep.subr.mxu0 0.0
    %3680 = vmatpush1.msra.mxu0 0.0
    %3681 = vmatprep.subr.mxu0 0.0
    %3682 = vmatpush1.msra.mxu0 0.0
    %3683 = vmatprep.subr.mxu0 0.0
    %3684 = vmatpush1.msra.mxu0 0.0
    %3685 = vmatprep.subr.mxu0 0.0
    %3686 = vmatpush1.msra.mxu0 0.0
    %3687 = vmatprep.subr.mxu0 0.0
    %3688 = vmatpush1.msra.mxu0 0.0
    %3689 = vmatprep.subr.mxu0 0.0
    %3690 = vmatpush1.msra.mxu0 0.0
    %3691 = vmatprep.subr.mxu0 0.0
    %3692 = vmatpush1.msra.mxu0 0.0
    %3693 = vmatprep.subr.mxu0 0.0
    %3694 = vmatpush1.msra.mxu0 0.0
    %3695 = vmatprep.subr.mxu0 0.0
    %3696 = vmatpush1.msra.mxu0 0.0
    %3697 = vmatprep.subr.mxu0 0.0
    %3698 = vmatpush1.msra.mxu0 0.0
    %3699 = vmatprep.subr.mxu0 0.0
    %3700 = vmatpush1.msra.mxu0 0.0
    %3701 = vmatprep.mubr.f32.mxu0 0.0
    %3702 = vmatmul.mubr.f32.gmra.mrb[0].mxu0 %v3582
    %v3703 = vpop.f32.mrb[0].mxu0
    %v3704 = vadd.f32 0.0, %v3703
    %v3705 = vpop.f32.mrb[0].mxu0
    %3706 = vmatprep.mubr.f32.mxu0 0.0
    %3707 = vmatmul.mubr.f32.gmra.mrb[0].mxu0 %v3583
    %v3708 = vpop.f32.mrb[0].mxu0
    %v3709 = vadd.f32 0.0, %v3708
    %v3710 = vpop.f32.mrb[0].mxu0
    %3711 = vmatprep.mubr.f32.mxu0 0.0
    %3712 = vmatmul.mubr.f32.gmra.mrb[0].mxu0 %v3584
    %v3713 = vpop.f32.mrb[0].mxu0
    %v3714 = vadd.f32 0.0, %v3713
    %v3715 = vpop.f32.mrb[0].mxu0
    %3716 = vmatprep.mubr.f32.mxu0 0.0
    %3717 = vmatmul.mubr.f32.gmra.mrb[0].mxu0 %v3585
    %v3718 = vpop.f32.mrb[0].mxu0
    %v3719 = vadd.f32 0.0, %v3718
    %v3720 = vpop.f32.mrb[0].mxu0
    %3721 = vdwg.mxu0
    %3722 = vmatprep.subr.mxu0 0.0
    %3723 = vmatpush1.msra.mxu0 %v3604
    %3724 = vmatprep.subr.mxu0 0.0
    %3725 = vmatpush1.msra.mxu0 %v3605
    %3726 = vmatprep.subr.mxu0 0.0
    %3727 = vmatpush1.msra.mxu0 %v3606
    %3728 = vmatprep.subr.mxu0 0.0
    %3729 = vmatpush1.msra.mxu0 %v3607
    %3730 = vmatprep.subr.mxu0 0.0
    %3731 = vmatpush1.msra.mxu0 %v3608
    %3732 = vmatprep.subr.mxu0 0.0
    %3733 = vmatpush1.msra.mxu0 %v3609
    %3734 = vmatprep.subr.mxu0 0.0
    %3735 = vmatpush1.msra.mxu0 %v3610
    %3736 = vmatprep.subr.mxu0 0.0
    %3737 = vmatpush1.msra.mxu0 %v3611
    %3738 = vmatprep.subr.mxu0 0.0
    %3739 = vmatpush1.msra.mxu0 %v3612
    %3740 = vmatprep.subr.mxu0 0.0
    %3741 = vmatpush1.msra.mxu0 %v3613
    %3742 = vmatprep.subr.mxu0 0.0
    %3743 = vmatpush1.msra.mxu0 %v3614
    %3744 = vmatprep.subr.mxu0 0.0
    %3745 = vmatpush1.msra.mxu0 %v3615
    %3746 = vmatprep.subr.mxu0 0.0
    %3747 = vmatpush1.msra.mxu0 %v3616
    %3748 = vmatprep.subr.mxu0 0.0
    %3749 = vmatpush1.msra.mxu0 %v3617
    %3750 = vmatprep.subr.mxu0 0.0
    %3751 = vmatpush1.msra.mxu0 %v3618
    %3752 = vmatprep.subr.mxu0 0.0
    %3753 = vmatpush1.msra.mxu0 %v3619
    %3754 = vmatprep.subr.mxu0 0.0
    %3755 = vmatpush1.msra.mxu0 0.0
    %3756 = vmatprep.subr.mxu0 0.0
    %3757 = vmatpush1.msra.mxu0 0.0
    %3758 = vmatprep.subr.mxu0 0.0
    %3759 = vmatpush1.msra.mxu0 0.0
    %3760 = vmatprep.subr.mxu0 0.0
    %3761 = vmatpush1.msra.mxu0 0.0
    %3762 = vmatprep.subr.mxu0 0.0
    %3763 = vmatpush1.msra.mxu0 0.0
    %3764 = vmatprep.subr.mxu0 0.0
    %3765 = vmatpush1.msra.mxu0 0.0
    %3766 = vmatprep.subr.mxu0 0.0
    %3767 = vmatpush1.msra.mxu0 0.0
    %3768 = vmatprep.subr.mxu0 0.0
    %3769 = vmatpush1.msra.mxu0 0.0
    %3770 = vmatprep.subr.mxu0 0.0
    %3771 = vmatpush1.msra.mxu0 0.0
    %3772 = vmatprep.subr.mxu0 0.0
    %3773 = vmatpush1.msra.mxu0 0.0
    %3774 = vmatprep.subr.mxu0 0.0
    %3775 = vmatpush1.msra.mxu0 0.0
    %3776 = vmatprep.subr.mxu0 0.0
    %3777 = vmatpush1.msra.mxu0 0.0
    %3778 = vmatprep.subr.mxu0 0.0
    %3779 = vmatpush1.msra.mxu0 0.0
    %3780 = vmatprep.subr.mxu0 0.0
    %3781 = vmatpush1.msra.mxu0 0.0
    %3782 = vmatprep.subr.mxu0 0.0
    %3783 = vmatpush1.msra.mxu0 0.0
    %3784 = vmatprep.subr.mxu0 0.0
    %3785 = vmatpush1.msra.mxu0 0.0
    %3786 = vmatprep.mubr.f32.mxu0 0.0
    %3787 = vmatmul.mubr.f32.gmra.mrb[0].mxu0 %v3601
    %v3788 = vpop.f32.mrb[0].mxu0
    %v3789 = vadd.f32 %v3704, %v3788
    %v3790 = vpop.f32.mrb[0].mxu0
    %3791 = vmatprep.mubr.f32.mxu0 0.0
    %3792 = vmatmul.mubr.f32.gmra.mrb[0].mxu0 %v3593
    %v3793 = vpop.f32.mrb[0].mxu0
    %v3794 = vadd.f32 %v3709, %v3793
    %v3795 = vpop.f32.mrb[0].mxu0
    %3796 = vmatprep.mubr.f32.mxu0 0.0
    %3797 = vmatmul.mubr.f32.gmra.mrb[0].mxu0 %v3602
    %v3798 = vpop.f32.mrb[0].mxu0
    %v3799 = vadd.f32 %v3714, %v3798
    %v3800 = vpop.f32.mrb[0].mxu0
    %3801 = vmatprep.mubr.f32.mxu0 0.0
    %3802 = vmatmul.mubr.f32.gmra.mrb[0].mxu0 %v3596
    %v3803 = vpop.f32.mrb[0].mxu0
    %v3804 = vadd.f32 %v3719, %v3803
    %v3805 = vpop.f32.mrb[0].mxu0
    %3806 = vdwg.mxu0
    %v3807 = vrot.slane %v3582, 1
    %v3808 = vrot.slane %v3583, 1
    %v3809 = vsel %vm459, %v3807, %v3808
    %v3810 = vrot.slane %v3584, 1
    %v3811 = vrot.slane %v3585, 1
    %v3812 = vsel %vm459, %v3810, %v3811
    %v3817 = vsel %vm459, %v3808, 0.0
    %v3818 = vsel %vm459, %v3811, 0.0
    %s3819 = scalar_lea.vmem [#allocation8], 2944
    %v3820 = vld [vmem:[%s3819] sm:$0xff]
    %v3821 = vld [vmem:[%s3819 + $0x8] sm:$0xff]
    %v3822 = vld [vmem:[%s3819 + $0x10] sm:$0xff]
    %v3823 = vld [vmem:[%s3819 + $0x18] sm:$0xff]
    %v3824 = vld [vmem:[%s3819 + $0x20] sm:$0xff]
    %v3825 = vld [vmem:[%s3819 + $0x28] sm:$0xff]
    %v3826 = vld [vmem:[%s3819 + $0x30] sm:$0xff]
    %v3827 = vld [vmem:[%s3819 + $0x38] sm:$0xff]
    %v3828 = vld [vmem:[%s3819 + $0x40] sm:$0xff]
    %v3829 = vld [vmem:[%s3819 + $0x48] sm:$0xff]
    %v3830 = vld [vmem:[%s3819 + $0x50] sm:$0xff]
    %v3831 = vld [vmem:[%s3819 + $0x58] sm:$0xff]
    %v3832 = vld [vmem:[%s3819 + $0x60] sm:$0xff]
    %v3833 = vld [vmem:[%s3819 + $0x68] sm:$0xff]
    %v3834 = vld [vmem:[%s3819 + $0x70] sm:$0xff]
    %v3835 = vld [vmem:[%s3819 + $0x78] sm:$0xff]
    %3836 = vmatprep.subr.mxu0 0.0
    %3837 = vmatpush1.msra.mxu0 %v3820
    %3838 = vmatprep.subr.mxu0 0.0
    %3839 = vmatpush1.msra.mxu0 %v3821
    %3840 = vmatprep.subr.mxu0 0.0
    %3841 = vmatpush1.msra.mxu0 %v3822
    %3842 = vmatprep.subr.mxu0 0.0
    %3843 = vmatpush1.msra.mxu0 %v3823
    %3844 = vmatprep.subr.mxu0 0.0
    %3845 = vmatpush1.msra.mxu0 %v3824
    %3846 = vmatprep.subr.mxu0 0.0
    %3847 = vmatpush1.msra.mxu0 %v3825
    %3848 = vmatprep.subr.mxu0 0.0
    %3849 = vmatpush1.msra.mxu0 %v3826
    %3850 = vmatprep.subr.mxu0 0.0
    %3851 = vmatpush1.msra.mxu0 %v3827
    %3852 = vmatprep.subr.mxu0 0.0
    %3853 = vmatpush1.msra.mxu0 %v3828
    %3854 = vmatprep.subr.mxu0 0.0
    %3855 = vmatpush1.msra.mxu0 %v3829
    %3856 = vmatprep.subr.mxu0 0.0
    %3857 = vmatpush1.msra.mxu0 %v3830
    %3858 = vmatprep.subr.mxu0 0.0
    %3859 = vmatpush1.msra.mxu0 %v3831
    %3860 = vmatprep.subr.mxu0 0.0
    %3861 = vmatpush1.msra.mxu0 %v3832
    %3862 = vmatprep.subr.mxu0 0.0
    %3863 = vmatpush1.msra.mxu0 %v3833
    %3864 = vmatprep.subr.mxu0 0.0
    %3865 = vmatpush1.msra.mxu0 %v3834
    %3866 = vmatprep.subr.mxu0 0.0
    %3867 = vmatpush1.msra.mxu0 %v3835
    %3868 = vmatprep.subr.mxu0 0.0
    %3869 = vmatpush1.msra.mxu0 0.0
    %3870 = vmatprep.subr.mxu0 0.0
    %3871 = vmatpush1.msra.mxu0 0.0
    %3872 = vmatprep.subr.mxu0 0.0
    %3873 = vmatpush1.msra.mxu0 0.0
    %3874 = vmatprep.subr.mxu0 0.0
    %3875 = vmatpush1.msra.mxu0 0.0
    %3876 = vmatprep.subr.mxu0 0.0
    %3877 = vmatpush1.msra.mxu0 0.0
    %3878 = vmatprep.subr.mxu0 0.0
    %3879 = vmatpush1.msra.mxu0 0.0
    %3880 = vmatprep.subr.mxu0 0.0
    %3881 = vmatpush1.msra.mxu0 0.0
    %3882 = vmatprep.subr.mxu0 0.0
    %3883 = vmatpush1.msra.mxu0 0.0
    %3884 = vmatprep.subr.mxu0 0.0
    %3885 = vmatpush1.msra.mxu0 0.0
    %3886 = vmatprep.subr.mxu0 0.0
    %3887 = vmatpush1.msra.mxu0 0.0
    %3888 = vmatprep.subr.mxu0 0.0
    %3889 = vmatpush1.msra.mxu0 0.0
    %3890 = vmatprep.subr.mxu0 0.0
    %3891 = vmatpush1.msra.mxu0 0.0
    %3892 = vmatprep.subr.mxu0 0.0
    %3893 = vmatpush1.msra.mxu0 0.0
    %3894 = vmatprep.subr.mxu0 0.0
    %3895 = vmatpush1.msra.mxu0 0.0
    %3896 = vmatprep.subr.mxu0 0.0
    %3897 = vmatpush1.msra.mxu0 0.0
    %3898 = vmatprep.subr.mxu0 0.0
    %3899 = vmatpush1.msra.mxu0 0.0
    %3900 = vmatprep.mubr.f32.mxu0 0.0
    %3901 = vmatmul.mubr.f32.gmra.mrb[0].mxu0 %v3809
    %v3902 = vpop.f32.mrb[0].mxu0
    %v3903 = vadd.f32 0.0, %v3902
    %v3904 = vpop.f32.mrb[0].mxu0
    %3905 = vmatprep.mubr.f32.mxu0 0.0
    %3906 = vmatmul.mubr.f32.gmra.mrb[0].mxu0 %v3817
    %v3907 = vpop.f32.mrb[0].mxu0
    %v3908 = vadd.f32 0.0, %v3907
    %v3909 = vpop.f32.mrb[0].mxu0
    %3910 = vmatprep.mubr.f32.mxu0 0.0
    %3911 = vmatmul.mubr.f32.gmra.mrb[0].mxu0 %v3812
    %v3912 = vpop.f32.mrb[0].mxu0
    %v3913 = vadd.f32 0.0, %v3912
    %v3914 = vpop.f32.mrb[0].mxu0
    %3915 = vmatprep.mubr.f32.mxu0 0.0
    %3916 = vmatmul.mubr.f32.gmra.mrb[0].mxu0 %v3818
    %v3917 = vpop.f32.mrb[0].mxu0
    %v3918 = vadd.f32 0.0, %v3917
    %v3919 = vpop.f32.mrb[0].mxu0
    %3920 = vdwg.mxu0
    %v3921 = vadd.f32 %v3789, %v3903
    %v3922 = vadd.f32 %v3794, %v3908
    %v3923 = vadd.f32 %v3799, %v3913
    %v3924 = vadd.f32 %v3804, %v3918
    %v3925 = vlaneseq
    %v3926 = vshrl.u32 %v3925, 7
    %v3927 = vsub.s32 0, %v3926
    %v3928 = vrot.slane %v3586, %v3927
    %v3929 = vadd.f32 %v3921, %v3928
    %v3930 = vadd.f32 %v3922, %v3928
    %v3931 = vadd.f32 %v3923, %v3928
    %v3932 = vadd.f32 %v3924, %v3928
    %v3933 = vadd.f32 %v3929, %v3191
    %v3934 = vadd.f32 %v3930, %v3192
    %v3935 = vadd.f32 %v3931, %v3193
    %v3936 = vadd.f32 %v3932, %v3194
    %v3937 = vld [vmem:[#allocation20] sm:$0x1]
    %v3938 = vlaneseq
    %v3939 = vshrl.u32 %v3938, 7
    %v3940 = vsub.s32 0, %v3939
    %v3941 = vrot.slane %v3937, %v3940
    %v3942 = vmul.f32 %v582, %v3941
    %v3943 = vmul.f32 %v583, %v3941
    %v3944 = vmul.f32 %v584, %v3941
    %v3945 = vmul.f32 %v585, %v3941
    %v3946 = vld [vmem:[#allocation22] sm:$0x1]
    %v3947 = vlaneseq
    %v3948 = vshrl.u32 %v3947, 7
    %v3949 = vsub.s32 0, %v3948
    %v3950 = vrot.slane %v3946, %v3949
    %v3951 = vadd.f32 %v3942, %v3950
    %v3952 = vadd.f32 %v3943, %v3950
    %v3953 = vadd.f32 %v3944, %v3950
    %v3954 = vadd.f32 %v3945, %v3950
    %v3955 = vmax.f32 %v3951, 0.0
    %v3956 = vmax.f32 %v3952, 0.0
    %v3957 = vmax.f32 %v3953, 0.0
    %v3958 = vmax.f32 %v3954, 0.0
    %v3959 = vld [vmem:[#allocation19] sm:$0xff]
    %v3960 = vld [vmem:[#allocation19 + $0x8] sm:$0xff]
    %v3961 = vld [vmem:[#allocation19 + $0x10] sm:$0xff]
    %v3962 = vld [vmem:[#allocation19 + $0x18] sm:$0xff]
    %v3963 = vld [vmem:[#allocation19 + $0x20] sm:$0xff]
    %v3964 = vld [vmem:[#allocation19 + $0x28] sm:$0xff]
    %v3965 = vld [vmem:[#allocation19 + $0x30] sm:$0xff]
    %v3966 = vld [vmem:[#allocation19 + $0x38] sm:$0xff]
    %v3967 = vld [vmem:[#allocation19 + $0x40] sm:$0xff]
    %v3968 = vld [vmem:[#allocation19 + $0x48] sm:$0xff]
    %v3969 = vld [vmem:[#allocation19 + $0x50] sm:$0xff]
    %v3970 = vld [vmem:[#allocation19 + $0x58] sm:$0xff]
    %v3971 = vld [vmem:[#allocation19 + $0x60] sm:$0xff]
    %v3972 = vld [vmem:[#allocation19 + $0x68] sm:$0xff]
    %v3973 = vld [vmem:[#allocation19 + $0x70] sm:$0xff]
    %v3974 = vld [vmem:[#allocation19 + $0x78] sm:$0xff]
    %v3975 = vld [vmem:[#allocation20 + $0x1] sm:$0x1]
    %v3976 = vlaneseq
    %v3977 = vshrl.u32 %v3976, 7
    %v3978 = vsub.s32 0, %v3977
    %v3979 = vrot.slane %v3975, %v3978
    %v3980 = vmul.f32 %v2449, %v3979
    %v3981 = vmul.f32 %v2450, %v3979
    %v3982 = vmul.f32 %v2451, %v3979
    %v3983 = vmul.f32 %v2452, %v3979
    %v3984 = vld [vmem:[#allocation22 + $0x1] sm:$0x1]
    %v3985 = vlaneseq
    %v3986 = vshrl.u32 %v3985, 7
    %v3987 = vsub.s32 0, %v3986
    %v3988 = vrot.slane %v3984, %v3987
    %v3989 = vadd.f32 %v3980, %v3988
    %v3990 = vadd.f32 %v3981, %v3988
    %v3991 = vadd.f32 %v3982, %v3988
    %v3992 = vadd.f32 %v3983, %v3988
    %v3993 = vmax.f32 %v3989, 0.0
    %v3994 = vmax.f32 %v3990, 0.0
    %v3995 = vmax.f32 %v3991, 0.0
    %v3996 = vmax.f32 %v3992, 0.0
    %s3997 = scalar_lea.vmem [#allocation19], 128
    %v3998 = vld [vmem:[%s3997] sm:$0xff]
    %v3999 = vld [vmem:[%s3997 + $0x8] sm:$0xff]
    %v4000 = vld [vmem:[%s3997 + $0x10] sm:$0xff]
    %v4001 = vld [vmem:[%s3997 + $0x18] sm:$0xff]
    %v4002 = vld [vmem:[%s3997 + $0x20] sm:$0xff]
    %v4003 = vld [vmem:[%s3997 + $0x28] sm:$0xff]
    %v4004 = vld [vmem:[%s3997 + $0x30] sm:$0xff]
    %v4005 = vld [vmem:[%s3997 + $0x38] sm:$0xff]
    %v4006 = vld [vmem:[%s3997 + $0x40] sm:$0xff]
    %v4007 = vld [vmem:[%s3997 + $0x48] sm:$0xff]
    %v4008 = vld [vmem:[%s3997 + $0x50] sm:$0xff]
    %v4009 = vld [vmem:[%s3997 + $0x58] sm:$0xff]
    %v4010 = vld [vmem:[%s3997 + $0x60] sm:$0xff]
    %v4011 = vld [vmem:[%s3997 + $0x68] sm:$0xff]
    %v4012 = vld [vmem:[%s3997 + $0x70] sm:$0xff]
    %v4013 = vld [vmem:[%s3997 + $0x78] sm:$0xff]
    %4014 = vmatprep.subr.mxu0 0.0
    %4015 = vmatpush1.msra.mxu0 %v3998
    %4016 = vmatprep.subr.mxu0 0.0
    %4017 = vmatpush1.msra.mxu0 %v3999
    %4018 = vmatprep.subr.mxu0 0.0
    %4019 = vmatpush1.msra.mxu0 %v4000
    %4020 = vmatprep.subr.mxu0 0.0
    %4021 = vmatpush1.msra.mxu0 %v4001
    %4022 = vmatprep.subr.mxu0 0.0
    %4023 = vmatpush1.msra.mxu0 %v4002
    %4024 = vmatprep.subr.mxu0 0.0
    %4025 = vmatpush1.msra.mxu0 %v4003
    %4026 = vmatprep.subr.mxu0 0.0
    %4027 = vmatpush1.msra.mxu0 %v4004
    %4028 = vmatprep.subr.mxu0 0.0
    %4029 = vmatpush1.msra.mxu0 %v4005
    %4030 = vmatprep.subr.mxu0 0.0
    %4031 = vmatpush1.msra.mxu0 %v4006
    %4032 = vmatprep.subr.mxu0 0.0
    %4033 = vmatpush1.msra.mxu0 %v4007
    %4034 = vmatprep.subr.mxu0 0.0
    %4035 = vmatpush1.msra.mxu0 %v4008
    %4036 = vmatprep.subr.mxu0 0.0
    %4037 = vmatpush1.msra.mxu0 %v4009
    %4038 = vmatprep.subr.mxu0 0.0
    %4039 = vmatpush1.msra.mxu0 %v4010
    %4040 = vmatprep.subr.mxu0 0.0
    %4041 = vmatpush1.msra.mxu0 %v4011
    %4042 = vmatprep.subr.mxu0 0.0
    %4043 = vmatpush1.msra.mxu0 %v4012
    %4044 = vmatprep.subr.mxu0 0.0
    %4045 = vmatpush1.msra.mxu0 %v4013
    %4046 = vmatprep.subr.mxu0 0.0
    %4047 = vmatpush1.msra.mxu0 0.0
    %4048 = vmatprep.subr.mxu0 0.0
    %4049 = vmatpush1.msra.mxu0 0.0
    %4050 = vmatprep.subr.mxu0 0.0
    %4051 = vmatpush1.msra.mxu0 0.0
    %4052 = vmatprep.subr.mxu0 0.0
    %4053 = vmatpush1.msra.mxu0 0.0
    %4054 = vmatprep.subr.mxu0 0.0
    %4055 = vmatpush1.msra.mxu0 0.0
    %4056 = vmatprep.subr.mxu0 0.0
    %4057 = vmatpush1.msra.mxu0 0.0
    %4058 = vmatprep.subr.mxu0 0.0
    %4059 = vmatpush1.msra.mxu0 0.0
    %4060 = vmatprep.subr.mxu0 0.0
    %4061 = vmatpush1.msra.mxu0 0.0
    %4062 = vmatprep.subr.mxu0 0.0
    %4063 = vmatpush1.msra.mxu0 0.0
    %4064 = vmatprep.subr.mxu0 0.0
    %4065 = vmatpush1.msra.mxu0 0.0
    %4066 = vmatprep.subr.mxu0 0.0
    %4067 = vmatpush1.msra.mxu0 0.0
    %4068 = vmatprep.subr.mxu0 0.0
    %4069 = vmatpush1.msra.mxu0 0.0
    %4070 = vmatprep.subr.mxu0 0.0
    %4071 = vmatpush1.msra.mxu0 0.0
    %4072 = vmatprep.subr.mxu0 0.0
    %4073 = vmatpush1.msra.mxu0 0.0
    %4074 = vmatprep.subr.mxu0 0.0
    %4075 = vmatpush1.msra.mxu0 0.0
    %4076 = vmatprep.subr.mxu0 0.0
    %4077 = vmatpush1.msra.mxu0 0.0
    %4078 = vmatprep.mubr.f32.mxu0 0.0
    %4079 = vmatmul.mubr.f32.gmra.mrb[0].mxu0 %v3993
    %v4080 = vpop.f32.mrb[0].mxu0
    %v4081 = vadd.f32 0.0, %v4080
    %v4082 = vpop.f32.mrb[0].mxu0
    %4083 = vmatprep.mubr.f32.mxu0 0.0
    %4084 = vmatmul.mubr.f32.gmra.mrb[0].mxu0 %v3994
    %v4085 = vpop.f32.mrb[0].mxu0
    %v4086 = vadd.f32 0.0, %v4085
    %v4087 = vpop.f32.mrb[0].mxu0
    %4088 = vmatprep.mubr.f32.mxu0 0.0
    %4089 = vmatmul.mubr.f32.gmra.mrb[0].mxu0 %v3995
    %v4090 = vpop.f32.mrb[0].mxu0
    %v4091 = vadd.f32 0.0, %v4090
    %v4092 = vpop.f32.mrb[0].mxu0
    %4093 = vmatprep.mubr.f32.mxu0 0.0
    %4094 = vmatmul.mubr.f32.gmra.mrb[0].mxu0 %v3996
    %v4095 = vpop.f32.mrb[0].mxu0
    %v4096 = vadd.f32 0.0, %v4095
    %v4097 = vpop.f32.mrb[0].mxu0
    %4098 = vdwg.mxu0
    %4099 = vmatprep.subr.mxu0 0.0
    %4100 = vmatpush1.msra.mxu0 %v3959
    %4101 = vmatprep.subr.mxu0 0.0
    %4102 = vmatpush1.msra.mxu0 %v3960
    %4103 = vmatprep.subr.mxu0 0.0
    %4104 = vmatpush1.msra.mxu0 %v3961
    %4105 = vmatprep.subr.mxu0 0.0
    %4106 = vmatpush1.msra.mxu0 %v3962
    %4107 = vmatprep.subr.mxu0 0.0
    %4108 = vmatpush1.msra.mxu0 %v3963
    %4109 = vmatprep.subr.mxu0 0.0
    %4110 = vmatpush1.msra.mxu0 %v3964
    %4111 = vmatprep.subr.mxu0 0.0
    %4112 = vmatpush1.msra.mxu0 %v3965
    %4113 = vmatprep.subr.mxu0 0.0
    %4114 = vmatpush1.msra.mxu0 %v3966
    %4115 = vmatprep.subr.mxu0 0.0
    %4116 = vmatpush1.msra.mxu0 %v3967
    %4117 = vmatprep.subr.mxu0 0.0
    %4118 = vmatpush1.msra.mxu0 %v3968
    %4119 = vmatprep.subr.mxu0 0.0
    %4120 = vmatpush1.msra.mxu0 %v3969
    %4121 = vmatprep.subr.mxu0 0.0
    %4122 = vmatpush1.msra.mxu0 %v3970
    %4123 = vmatprep.subr.mxu0 0.0
    %4124 = vmatpush1.msra.mxu0 %v3971
    %4125 = vmatprep.subr.mxu0 0.0
    %4126 = vmatpush1.msra.mxu0 %v3972
    %4127 = vmatprep.subr.mxu0 0.0
    %4128 = vmatpush1.msra.mxu0 %v3973
    %4129 = vmatprep.subr.mxu0 0.0
    %4130 = vmatpush1.msra.mxu0 %v3974
    %4131 = vmatprep.subr.mxu0 0.0
    %4132 = vmatpush1.msra.mxu0 0.0
    %4133 = vmatprep.subr.mxu0 0.0
    %4134 = vmatpush1.msra.mxu0 0.0
    %4135 = vmatprep.subr.mxu0 0.0
    %4136 = vmatpush1.msra.mxu0 0.0
    %4137 = vmatprep.subr.mxu0 0.0
    %4138 = vmatpush1.msra.mxu0 0.0
    %4139 = vmatprep.subr.mxu0 0.0
    %4140 = vmatpush1.msra.mxu0 0.0
    %4141 = vmatprep.subr.mxu0 0.0
    %4142 = vmatpush1.msra.mxu0 0.0
    %4143 = vmatprep.subr.mxu0 0.0
    %4144 = vmatpush1.msra.mxu0 0.0
    %4145 = vmatprep.subr.mxu0 0.0
    %4146 = vmatpush1.msra.mxu0 0.0
    %4147 = vmatprep.subr.mxu0 0.0
    %4148 = vmatpush1.msra.mxu0 0.0
    %4149 = vmatprep.subr.mxu0 0.0
    %4150 = vmatpush1.msra.mxu0 0.0
    %4151 = vmatprep.subr.mxu0 0.0
    %4152 = vmatpush1.msra.mxu0 0.0
    %4153 = vmatprep.subr.mxu0 0.0
    %4154 = vmatpush1.msra.mxu0 0.0
    %4155 = vmatprep.subr.mxu0 0.0
    %4156 = vmatpush1.msra.mxu0 0.0
    %4157 = vmatprep.subr.mxu0 0.0
    %4158 = vmatpush1.msra.mxu0 0.0
    %4159 = vmatprep.subr.mxu0 0.0
    %4160 = vmatpush1.msra.mxu0 0.0
    %4161 = vmatprep.subr.mxu0 0.0
    %4162 = vmatpush1.msra.mxu0 0.0
    %4163 = vmatprep.mubr.f32.mxu0 0.0
    %4164 = vmatmul.mubr.f32.gmra.mrb[0].mxu0 %v3955
    %v4165 = vpop.f32.mrb[0].mxu0
    %v4166 = vadd.f32 %v4081, %v4165
    %v4167 = vpop.f32.mrb[0].mxu0
    %4168 = vmatprep.mubr.f32.mxu0 0.0
    %4169 = vmatmul.mubr.f32.gmra.mrb[0].mxu0 %v3956
    %v4170 = vpop.f32.mrb[0].mxu0
    %v4171 = vadd.f32 %v4086, %v4170
    %v4172 = vpop.f32.mrb[0].mxu0
    %4173 = vmatprep.mubr.f32.mxu0 0.0
    %4174 = vmatmul.mubr.f32.gmra.mrb[0].mxu0 %v3957
    %v4175 = vpop.f32.mrb[0].mxu0
    %v4176 = vadd.f32 %v4091, %v4175
    %v4177 = vpop.f32.mrb[0].mxu0
    %4178 = vmatprep.mubr.f32.mxu0 0.0
    %4179 = vmatmul.mubr.f32.gmra.mrb[0].mxu0 %v3958
    %v4180 = vpop.f32.mrb[0].mxu0
    %v4181 = vadd.f32 %v4096, %v4180
    %v4182 = vpop.f32.mrb[0].mxu0
    %4183 = vdwg.mxu0
    %v4184 = vld [vmem:[#allocation20 + $0x2] sm:$0x1]
    %v4185 = vlaneseq
    %v4186 = vshrl.u32 %v4185, 7
    %v4187 = vsub.s32 0, %v4186
    %v4188 = vrot.slane %v4184, %v4187
    %v4189 = vmul.f32 %v3191, %v4188
    %v4190 = vmul.f32 %v3192, %v4188
    %v4191 = vmul.f32 %v3193, %v4188
    %v4192 = vmul.f32 %v3194, %v4188
    %v4193 = vld [vmem:[#allocation22 + $0x2] sm:$0x1]
    %v4194 = vlaneseq
    %v4195 = vshrl.u32 %v4194, 7
    %v4196 = vsub.s32 0, %v4195
    %v4197 = vrot.slane %v4193, %v4196
    %v4198 = vadd.f32 %v4189, %v4197
    %v4199 = vadd.f32 %v4190, %v4197
    %v4200 = vadd.f32 %v4191, %v4197
    %v4201 = vadd.f32 %v4192, %v4197
    %v4202 = vmax.f32 %v4198, 0.0
    %v4203 = vmax.f32 %v4199, 0.0
    %v4204 = vmax.f32 %v4200, 0.0
    %v4205 = vmax.f32 %v4201, 0.0
    %s4206 = scalar_lea.vmem [#allocation19], 256
    %v4207 = vld [vmem:[%s4206] sm:$0xff]
    %v4208 = vld [vmem:[%s4206 + $0x8] sm:$0xff]
    %v4209 = vld [vmem:[%s4206 + $0x10] sm:$0xff]
    %v4210 = vld [vmem:[%s4206 + $0x18] sm:$0xff]
    %v4211 = vld [vmem:[%s4206 + $0x20] sm:$0xff]
    %v4212 = vld [vmem:[%s4206 + $0x28] sm:$0xff]
    %v4213 = vld [vmem:[%s4206 + $0x30] sm:$0xff]
    %v4214 = vld [vmem:[%s4206 + $0x38] sm:$0xff]
    %v4215 = vld [vmem:[%s4206 + $0x40] sm:$0xff]
    %v4216 = vld [vmem:[%s4206 + $0x48] sm:$0xff]
    %v4217 = vld [vmem:[%s4206 + $0x50] sm:$0xff]
    %v4218 = vld [vmem:[%s4206 + $0x58] sm:$0xff]
    %v4219 = vld [vmem:[%s4206 + $0x60] sm:$0xff]
    %v4220 = vld [vmem:[%s4206 + $0x68] sm:$0xff]
    %v4221 = vld [vmem:[%s4206 + $0x70] sm:$0xff]
    %v4222 = vld [vmem:[%s4206 + $0x78] sm:$0xff]
    %4223 = vmatprep.subr.mxu0 0.0
    %4224 = vmatpush1.msra.mxu0 %v4207
    %4225 = vmatprep.subr.mxu0 0.0
    %4226 = vmatpush1.msra.mxu0 %v4208
    %4227 = vmatprep.subr.mxu0 0.0
    %4228 = vmatpush1.msra.mxu0 %v4209
    %4229 = vmatprep.subr.mxu0 0.0
    %4230 = vmatpush1.msra.mxu0 %v4210
    %4231 = vmatprep.subr.mxu0 0.0
    %4232 = vmatpush1.msra.mxu0 %v4211
    %4233 = vmatprep.subr.mxu0 0.0
    %4234 = vmatpush1.msra.mxu0 %v4212
    %4235 = vmatprep.subr.mxu0 0.0
    %4236 = vmatpush1.msra.mxu0 %v4213
    %4237 = vmatprep.subr.mxu0 0.0
    %4238 = vmatpush1.msra.mxu0 %v4214
    %4239 = vmatprep.subr.mxu0 0.0
    %4240 = vmatpush1.msra.mxu0 %v4215
    %4241 = vmatprep.subr.mxu0 0.0
    %4242 = vmatpush1.msra.mxu0 %v4216
    %4243 = vmatprep.subr.mxu0 0.0
    %4244 = vmatpush1.msra.mxu0 %v4217
    %4245 = vmatprep.subr.mxu0 0.0
    %4246 = vmatpush1.msra.mxu0 %v4218
    %4247 = vmatprep.subr.mxu0 0.0
    %4248 = vmatpush1.msra.mxu0 %v4219
    %4249 = vmatprep.subr.mxu0 0.0
    %4250 = vmatpush1.msra.mxu0 %v4220
    %4251 = vmatprep.subr.mxu0 0.0
    %4252 = vmatpush1.msra.mxu0 %v4221
    %4253 = vmatprep.subr.mxu0 0.0
    %4254 = vmatpush1.msra.mxu0 %v4222
    %4255 = vmatprep.subr.mxu0 0.0
    %4256 = vmatpush1.msra.mxu0 0.0
    %4257 = vmatprep.subr.mxu0 0.0
    %4258 = vmatpush1.msra.mxu0 0.0
    %4259 = vmatprep.subr.mxu0 0.0
    %4260 = vmatpush1.msra.mxu0 0.0
    %4261 = vmatprep.subr.mxu0 0.0
    %4262 = vmatpush1.msra.mxu0 0.0
    %4263 = vmatprep.subr.mxu0 0.0
    %4264 = vmatpush1.msra.mxu0 0.0
    %4265 = vmatprep.subr.mxu0 0.0
    %4266 = vmatpush1.msra.mxu0 0.0
    %4267 = vmatprep.subr.mxu0 0.0
    %4268 = vmatpush1.msra.mxu0 0.0
    %4269 = vmatprep.subr.mxu0 0.0
    %4270 = vmatpush1.msra.mxu0 0.0
    %4271 = vmatprep.subr.mxu0 0.0
    %4272 = vmatpush1.msra.mxu0 0.0
    %4273 = vmatprep.subr.mxu0 0.0
    %4274 = vmatpush1.msra.mxu0 0.0
    %4275 = vmatprep.subr.mxu0 0.0
    %4276 = vmatpush1.msra.mxu0 0.0
    %4277 = vmatprep.subr.mxu0 0.0
    %4278 = vmatpush1.msra.mxu0 0.0
    %4279 = vmatprep.subr.mxu0 0.0
    %4280 = vmatpush1.msra.mxu0 0.0
    %4281 = vmatprep.subr.mxu0 0.0
    %4282 = vmatpush1.msra.mxu0 0.0
    %4283 = vmatprep.subr.mxu0 0.0
    %4284 = vmatpush1.msra.mxu0 0.0
    %4285 = vmatprep.subr.mxu0 0.0
    %4286 = vmatpush1.msra.mxu0 0.0
    %4287 = vmatprep.mubr.f32.mxu0 0.0
    %4288 = vmatmul.mubr.f32.gmra.mrb[0].mxu0 %v4202
    %v4289 = vpop.f32.mrb[0].mxu0
    %v4290 = vadd.f32 0.0, %v4289
    %v4291 = vpop.f32.mrb[0].mxu0
    %4292 = vmatprep.mubr.f32.mxu0 0.0
    %4293 = vmatmul.mubr.f32.gmra.mrb[0].mxu0 %v4203
    %v4294 = vpop.f32.mrb[0].mxu0
    %v4295 = vadd.f32 0.0, %v4294
    %v4296 = vpop.f32.mrb[0].mxu0
    %4297 = vmatprep.mubr.f32.mxu0 0.0
    %4298 = vmatmul.mubr.f32.gmra.mrb[0].mxu0 %v4204
    %v4299 = vpop.f32.mrb[0].mxu0
    %v4300 = vadd.f32 0.0, %v4299
    %v4301 = vpop.f32.mrb[0].mxu0
    %4302 = vmatprep.mubr.f32.mxu0 0.0
    %4303 = vmatmul.mubr.f32.gmra.mrb[0].mxu0 %v4205
    %v4304 = vpop.f32.mrb[0].mxu0
    %v4305 = vadd.f32 0.0, %v4304
    %v4306 = vpop.f32.mrb[0].mxu0
    %4307 = vdwg.mxu0
    %v4308 = vadd.f32 %v4166, %v4290
    %v4309 = vadd.f32 %v4171, %v4295
    %v4310 = vadd.f32 %v4176, %v4300
    %v4311 = vadd.f32 %v4181, %v4305
    %v4312 = vld [vmem:[#allocation20 + $0x3] sm:$0x1]
    %v4313 = vlaneseq
    %v4314 = vshrl.u32 %v4313, 7
    %v4315 = vsub.s32 0, %v4314
    %v4316 = vrot.slane %v4312, %v4315
    %v4317 = vmul.f32 %v3933, %v4316
    %v4318 = vmul.f32 %v3934, %v4316
    %v4319 = vmul.f32 %v3935, %v4316
    %v4320 = vmul.f32 %v3936, %v4316
    %v4321 = vld [vmem:[#allocation22 + $0x3] sm:$0x1]
    %v4322 = vlaneseq
    %v4323 = vshrl.u32 %v4322, 7
    %v4324 = vsub.s32 0, %v4323
    %v4325 = vrot.slane %v4321, %v4324
    %v4326 = vadd.f32 %v4317, %v4325
    %v4327 = vadd.f32 %v4318, %v4325
    %v4328 = vadd.f32 %v4319, %v4325
    %v4329 = vadd.f32 %v4320, %v4325
    %v4330 = vmax.f32 %v4326, 0.0
    %v4331 = vmax.f32 %v4327, 0.0
    %v4332 = vmax.f32 %v4328, 0.0
    %v4333 = vmax.f32 %v4329, 0.0
    %s4334 = scalar_lea.vmem [#allocation19], 384
    %v4335 = vld [vmem:[%s4334] sm:$0xff]
    %v4336 = vld [vmem:[%s4334 + $0x8] sm:$0xff]
    %v4337 = vld [vmem:[%s4334 + $0x10] sm:$0xff]
    %v4338 = vld [vmem:[%s4334 + $0x18] sm:$0xff]
    %v4339 = vld [vmem:[%s4334 + $0x20] sm:$0xff]
    %v4340 = vld [vmem:[%s4334 + $0x28] sm:$0xff]
    %v4341 = vld [vmem:[%s4334 + $0x30] sm:$0xff]
    %v4342 = vld [vmem:[%s4334 + $0x38] sm:$0xff]
    %v4343 = vld [vmem:[%s4334 + $0x40] sm:$0xff]
    %v4344 = vld [vmem:[%s4334 + $0x48] sm:$0xff]
    %v4345 = vld [vmem:[%s4334 + $0x50] sm:$0xff]
    %v4346 = vld [vmem:[%s4334 + $0x58] sm:$0xff]
    %v4347 = vld [vmem:[%s4334 + $0x60] sm:$0xff]
    %v4348 = vld [vmem:[%s4334 + $0x68] sm:$0xff]
    %v4349 = vld [vmem:[%s4334 + $0x70] sm:$0xff]
    %v4350 = vld [vmem:[%s4334 + $0x78] sm:$0xff]
    %4351 = vmatprep.subr.mxu0 0.0
    %4352 = vmatpush1.msra.mxu0 %v4335
    %4353 = vmatprep.subr.mxu0 0.0
    %4354 = vmatpush1.msra.mxu0 %v4336
    %4355 = vmatprep.subr.mxu0 0.0
    %4356 = vmatpush1.msra.mxu0 %v4337
    %4357 = vmatprep.subr.mxu0 0.0
    %4358 = vmatpush1.msra.mxu0 %v4338
    %4359 = vmatprep.subr.mxu0 0.0
    %4360 = vmatpush1.msra.mxu0 %v4339
    %4361 = vmatprep.subr.mxu0 0.0
    %4362 = vmatpush1.msra.mxu0 %v4340
    %4363 = vmatprep.subr.mxu0 0.0
    %4364 = vmatpush1.msra.mxu0 %v4341
    %4365 = vmatprep.subr.mxu0 0.0
    %4366 = vmatpush1.msra.mxu0 %v4342
    %4367 = vmatprep.subr.mxu0 0.0
    %4368 = vmatpush1.msra.mxu0 %v4343
    %4369 = vmatprep.subr.mxu0 0.0
    %4370 = vmatpush1.msra.mxu0 %v4344
    %4371 = vmatprep.subr.mxu0 0.0
    %4372 = vmatpush1.msra.mxu0 %v4345
    %4373 = vmatprep.subr.mxu0 0.0
    %4374 = vmatpush1.msra.mxu0 %v4346
    %4375 = vmatprep.subr.mxu0 0.0
    %4376 = vmatpush1.msra.mxu0 %v4347
    %4377 = vmatprep.subr.mxu0 0.0
    %4378 = vmatpush1.msra.mxu0 %v4348
    %4379 = vmatprep.subr.mxu0 0.0
    %4380 = vmatpush1.msra.mxu0 %v4349
    %4381 = vmatprep.subr.mxu0 0.0
    %4382 = vmatpush1.msra.mxu0 %v4350
    %4383 = vmatprep.subr.mxu0 0.0
    %4384 = vmatpush1.msra.mxu0 0.0
    %4385 = vmatprep.subr.mxu0 0.0
    %4386 = vmatpush1.msra.mxu0 0.0
    %4387 = vmatprep.subr.mxu0 0.0
    %4388 = vmatpush1.msra.mxu0 0.0
    %4389 = vmatprep.subr.mxu0 0.0
    %4390 = vmatpush1.msra.mxu0 0.0
    %4391 = vmatprep.subr.mxu0 0.0
    %4392 = vmatpush1.msra.mxu0 0.0
    %4393 = vmatprep.subr.mxu0 0.0
    %4394 = vmatpush1.msra.mxu0 0.0
    %4395 = vmatprep.subr.mxu0 0.0
    %4396 = vmatpush1.msra.mxu0 0.0
    %4397 = vmatprep.subr.mxu0 0.0
    %4398 = vmatpush1.msra.mxu0 0.0
    %4399 = vmatprep.subr.mxu0 0.0
    %4400 = vmatpush1.msra.mxu0 0.0
    %4401 = vmatprep.subr.mxu0 0.0
    %4402 = vmatpush1.msra.mxu0 0.0
    %4403 = vmatprep.subr.mxu0 0.0
    %4404 = vmatpush1.msra.mxu0 0.0
    %4405 = vmatprep.subr.mxu0 0.0
    %4406 = vmatpush1.msra.mxu0 0.0
    %4407 = vmatprep.subr.mxu0 0.0
    %4408 = vmatpush1.msra.mxu0 0.0
    %4409 = vmatprep.subr.mxu0 0.0
    %4410 = vmatpush1.msra.mxu0 0.0
    %4411 = vmatprep.subr.mxu0 0.0
    %4412 = vmatpush1.msra.mxu0 0.0
    %4413 = vmatprep.subr.mxu0 0.0
    %4414 = vmatpush1.msra.mxu0 0.0
    %4415 = vmatprep.mubr.f32.mxu0 0.0
    %4416 = vmatmul.mubr.f32.gmra.mrb[0].mxu0 %v4330
    %v4417 = vpop.f32.mrb[0].mxu0
    %v4418 = vadd.f32 0.0, %v4417
    %v4419 = vpop.f32.mrb[0].mxu0
    %4420 = vmatprep.mubr.f32.mxu0 0.0
    %4421 = vmatmul.mubr.f32.gmra.mrb[0].mxu0 %v4331
    %v4422 = vpop.f32.mrb[0].mxu0
    %v4423 = vadd.f32 0.0, %v4422
    %v4424 = vpop.f32.mrb[0].mxu0
    %4425 = vmatprep.mubr.f32.mxu0 0.0
    %4426 = vmatmul.mubr.f32.gmra.mrb[0].mxu0 %v4332
    %v4427 = vpop.f32.mrb[0].mxu0
    %v4428 = vadd.f32 0.0, %v4427
    %v4429 = vpop.f32.mrb[0].mxu0
    %4430 = vmatprep.mubr.f32.mxu0 0.0
    %4431 = vmatmul.mubr.f32.gmra.mrb[0].mxu0 %v4333
    %v4432 = vpop.f32.mrb[0].mxu0
    %v4433 = vadd.f32 0.0, %v4432
    %v4434 = vpop.f32.mrb[0].mxu0
    %4435 = vdwg.mxu0
    %v4436 = vadd.f32 %v4308, %v4418
    %v4437 = vadd.f32 %v4309, %v4423
    %v4438 = vadd.f32 %v4310, %v4428
    %v4439 = vadd.f32 %v4311, %v4433
    %v4440 = vld [vmem:[#allocation23 + $0x1] sm:$0x1]
    %v4441 = vlaneseq
    %v4442 = vshrl.u32 %v4441, 7
    %v4443 = vsub.s32 0, %v4442
    %v4444 = vrot.slane %v4440, %v4443
    %v4445 = vadd.f32 %v4436, %v4444
    %v4446 = vadd.f32 %v4437, %v4444
    %v4447 = vadd.f32 %v4438, %v4444
    %v4448 = vadd.f32 %v4439, %v4444
    %v4449 = vld [vmem:[#allocation25] sm:$0x1]
    %v4454 = vrot.slane %v4445, 7
    %v4455 = vrot.slane %v4446, 7
    %v4456 = vsel %vm246, %v4454, %v4455
    %v4457 = vrot.slane %v4447, 7
    %v4458 = vrot.slane %v4448, 7
    %v4459 = vsel %vm246, %v4457, %v4458
    %v4464 = vsel %vm246, 0.0, %v4454
    %v4465 = vsel %vm246, 0.0, %v4457
    %v4466 = vld [vmem:[%s14] sm:$0xff]
    %v4467 = vld [vmem:[%s14 + $0x8] sm:$0xff]
    %v4468 = vld [vmem:[%s14 + $0x10] sm:$0xff]
    %v4469 = vld [vmem:[%s14 + $0x18] sm:$0xff]
    %v4470 = vld [vmem:[%s14 + $0x20] sm:$0xff]
    %v4471 = vld [vmem:[%s14 + $0x28] sm:$0xff]
    %v4472 = vld [vmem:[%s14 + $0x30] sm:$0xff]
    %v4473 = vld [vmem:[%s14 + $0x38] sm:$0xff]
    %v4474 = vld [vmem:[%s14 + $0x40] sm:$0xff]
    %v4475 = vld [vmem:[%s14 + $0x48] sm:$0xff]
    %v4476 = vld [vmem:[%s14 + $0x50] sm:$0xff]
    %v4477 = vld [vmem:[%s14 + $0x58] sm:$0xff]
    %v4478 = vld [vmem:[%s14 + $0x60] sm:$0xff]
    %v4479 = vld [vmem:[%s14 + $0x68] sm:$0xff]
    %v4480 = vld [vmem:[%s14 + $0x70] sm:$0xff]
    %v4481 = vld [vmem:[%s14 + $0x78] sm:$0xff]
    %s4482 = scalar_lea.vmem %s14, 128
    %v4483 = vld [vmem:[%s4482] sm:$0xff]
    %v4484 = vld [vmem:[%s4482 + $0x8] sm:$0xff]
    %v4485 = vld [vmem:[%s4482 + $0x10] sm:$0xff]
    %v4486 = vld [vmem:[%s4482 + $0x18] sm:$0xff]
    %v4487 = vld [vmem:[%s4482 + $0x20] sm:$0xff]
    %v4488 = vld [vmem:[%s4482 + $0x28] sm:$0xff]
    %v4489 = vld [vmem:[%s4482 + $0x30] sm:$0xff]
    %v4490 = vld [vmem:[%s4482 + $0x38] sm:$0xff]
    %v4491 = vld [vmem:[%s4482 + $0x40] sm:$0xff]
    %v4492 = vld [vmem:[%s4482 + $0x48] sm:$0xff]
    %v4493 = vld [vmem:[%s4482 + $0x50] sm:$0xff]
    %v4494 = vld [vmem:[%s4482 + $0x58] sm:$0xff]
    %v4495 = vld [vmem:[%s4482 + $0x60] sm:$0xff]
    %v4496 = vld [vmem:[%s4482 + $0x68] sm:$0xff]
    %v4497 = vld [vmem:[%s4482 + $0x70] sm:$0xff]
    %v4498 = vld [vmem:[%s4482 + $0x78] sm:$0xff]
    %4499 = vmatprep.subr.mxu0 0.0
    %4500 = vmatpush1.msra.mxu0 %v4483
    %4501 = vmatprep.subr.mxu0 0.0
    %4502 = vmatpush1.msra.mxu0 %v4484
    %4503 = vmatprep.subr.mxu0 0.0
    %4504 = vmatpush1.msra.mxu0 %v4485
    %4505 = vmatprep.subr.mxu0 0.0
    %4506 = vmatpush1.msra.mxu0 %v4486
    %4507 = vmatprep.subr.mxu0 0.0
    %4508 = vmatpush1.msra.mxu0 %v4487
    %4509 = vmatprep.subr.mxu0 0.0
    %4510 = vmatpush1.msra.mxu0 %v4488
    %4511 = vmatprep.subr.mxu0 0.0
    %4512 = vmatpush1.msra.mxu0 %v4489
    %4513 = vmatprep.subr.mxu0 0.0
    %4514 = vmatpush1.msra.mxu0 %v4490
    %4515 = vmatprep.subr.mxu0 0.0
    %4516 = vmatpush1.msra.mxu0 %v4491
    %4517 = vmatprep.subr.mxu0 0.0
    %4518 = vmatpush1.msra.mxu0 %v4492
    %4519 = vmatprep.subr.mxu0 0.0
    %4520 = vmatpush1.msra.mxu0 %v4493
    %4521 = vmatprep.subr.mxu0 0.0
    %4522 = vmatpush1.msra.mxu0 %v4494
    %4523 = vmatprep.subr.mxu0 0.0
    %4524 = vmatpush1.msra.mxu0 %v4495
    %4525 = vmatprep.subr.mxu0 0.0
    %4526 = vmatpush1.msra.mxu0 %v4496
    %4527 = vmatprep.subr.mxu0 0.0
    %4528 = vmatpush1.msra.mxu0 %v4497
    %4529 = vmatprep.subr.mxu0 0.0
    %4530 = vmatpush1.msra.mxu0 %v4498
    %4531 = vmatprep.subr.mxu0 0.0
    %4532 = vmatpush1.msra.mxu0 0.0
    %4533 = vmatprep.subr.mxu0 0.0
    %4534 = vmatpush1.msra.mxu0 0.0
    %4535 = vmatprep.subr.mxu0 0.0
    %4536 = vmatpush1.msra.mxu0 0.0
    %4537 = vmatprep.subr.mxu0 0.0
    %4538 = vmatpush1.msra.mxu0 0.0
    %4539 = vmatprep.subr.mxu0 0.0
    %4540 = vmatpush1.msra.mxu0 0.0
    %4541 = vmatprep.subr.mxu0 0.0
    %4542 = vmatpush1.msra.mxu0 0.0
    %4543 = vmatprep.subr.mxu0 0.0
    %4544 = vmatpush1.msra.mxu0 0.0
    %4545 = vmatprep.subr.mxu0 0.0
    %4546 = vmatpush1.msra.mxu0 0.0
    %4547 = vmatprep.subr.mxu0 0.0
    %4548 = vmatpush1.msra.mxu0 0.0
    %4549 = vmatprep.subr.mxu0 0.0
    %4550 = vmatpush1.msra.mxu0 0.0
    %4551 = vmatprep.subr.mxu0 0.0
    %4552 = vmatpush1.msra.mxu0 0.0
    %4553 = vmatprep.subr.mxu0 0.0
    %4554 = vmatpush1.msra.mxu0 0.0
    %4555 = vmatprep.subr.mxu0 0.0
    %4556 = vmatpush1.msra.mxu0 0.0
    %4557 = vmatprep.subr.mxu0 0.0
    %4558 = vmatpush1.msra.mxu0 0.0
    %4559 = vmatprep.subr.mxu0 0.0
    %4560 = vmatpush1.msra.mxu0 0.0
    %4561 = vmatprep.subr.mxu0 0.0
    %4562 = vmatpush1.msra.mxu0 0.0
    %4563 = vmatprep.mubr.f32.mxu0 0.0
    %4564 = vmatmul.mubr.f32.gmra.mrb[0].mxu0 %v4445
    %v4565 = vpop.f32.mrb[0].mxu0
    %v4566 = vadd.f32 0.0, %v4565
    %v4567 = vpop.f32.mrb[0].mxu0
    %4568 = vmatprep.mubr.f32.mxu0 0.0
    %4569 = vmatmul.mubr.f32.gmra.mrb[0].mxu0 %v4446
    %v4570 = vpop.f32.mrb[0].mxu0
    %v4571 = vadd.f32 0.0, %v4570
    %v4572 = vpop.f32.mrb[0].mxu0
    %4573 = vmatprep.mubr.f32.mxu0 0.0
    %4574 = vmatmul.mubr.f32.gmra.mrb[0].mxu0 %v4447
    %v4575 = vpop.f32.mrb[0].mxu0
    %v4576 = vadd.f32 0.0, %v4575
    %v4577 = vpop.f32.mrb[0].mxu0
    %4578 = vmatprep.mubr.f32.mxu0 0.0
    %4579 = vmatmul.mubr.f32.gmra.mrb[0].mxu0 %v4448
    %v4580 = vpop.f32.mrb[0].mxu0
    %v4581 = vadd.f32 0.0, %v4580
    %v4582 = vpop.f32.mrb[0].mxu0
    %4583 = vdwg.mxu0
    %4584 = vmatprep.subr.mxu0 0.0
    %4585 = vmatpush1.msra.mxu0 %v4466
    %4586 = vmatprep.subr.mxu0 0.0
    %4587 = vmatpush1.msra.mxu0 %v4467
    %4588 = vmatprep.subr.mxu0 0.0
    %4589 = vmatpush1.msra.mxu0 %v4468
    %4590 = vmatprep.subr.mxu0 0.0
    %4591 = vmatpush1.msra.mxu0 %v4469
    %4592 = vmatprep.subr.mxu0 0.0
    %4593 = vmatpush1.msra.mxu0 %v4470
    %4594 = vmatprep.subr.mxu0 0.0
    %4595 = vmatpush1.msra.mxu0 %v4471
    %4596 = vmatprep.subr.mxu0 0.0
    %4597 = vmatpush1.msra.mxu0 %v4472
    %4598 = vmatprep.subr.mxu0 0.0
    %4599 = vmatpush1.msra.mxu0 %v4473
    %4600 = vmatprep.subr.mxu0 0.0
    %4601 = vmatpush1.msra.mxu0 %v4474
    %4602 = vmatprep.subr.mxu0 0.0
    %4603 = vmatpush1.msra.mxu0 %v4475
    %4604 = vmatprep.subr.mxu0 0.0
    %4605 = vmatpush1.msra.mxu0 %v4476
    %4606 = vmatprep.subr.mxu0 0.0
    %4607 = vmatpush1.msra.mxu0 %v4477
    %4608 = vmatprep.subr.mxu0 0.0
    %4609 = vmatpush1.msra.mxu0 %v4478
    %4610 = vmatprep.subr.mxu0 0.0
    %4611 = vmatpush1.msra.mxu0 %v4479
    %4612 = vmatprep.subr.mxu0 0.0
    %4613 = vmatpush1.msra.mxu0 %v4480
    %4614 = vmatprep.subr.mxu0 0.0
    %4615 = vmatpush1.msra.mxu0 %v4481
    %4616 = vmatprep.subr.mxu0 0.0
    %4617 = vmatpush1.msra.mxu0 0.0
    %4618 = vmatprep.subr.mxu0 0.0
    %4619 = vmatpush1.msra.mxu0 0.0
    %4620 = vmatprep.subr.mxu0 0.0
    %4621 = vmatpush1.msra.mxu0 0.0
    %4622 = vmatprep.subr.mxu0 0.0
    %4623 = vmatpush1.msra.mxu0 0.0
    %4624 = vmatprep.subr.mxu0 0.0
    %4625 = vmatpush1.msra.mxu0 0.0
    %4626 = vmatprep.subr.mxu0 0.0
    %4627 = vmatpush1.msra.mxu0 0.0
    %4628 = vmatprep.subr.mxu0 0.0
    %4629 = vmatpush1.msra.mxu0 0.0
    %4630 = vmatprep.subr.mxu0 0.0
    %4631 = vmatpush1.msra.mxu0 0.0
    %4632 = vmatprep.subr.mxu0 0.0
    %4633 = vmatpush1.msra.mxu0 0.0
    %4634 = vmatprep.subr.mxu0 0.0
    %4635 = vmatpush1.msra.mxu0 0.0
    %4636 = vmatprep.subr.mxu0 0.0
    %4637 = vmatpush1.msra.mxu0 0.0
    %4638 = vmatprep.subr.mxu0 0.0
    %4639 = vmatpush1.msra.mxu0 0.0
    %4640 = vmatprep.subr.mxu0 0.0
    %4641 = vmatpush1.msra.mxu0 0.0
    %4642 = vmatprep.subr.mxu0 0.0
    %4643 = vmatpush1.msra.mxu0 0.0
    %4644 = vmatprep.subr.mxu0 0.0
    %4645 = vmatpush1.msra.mxu0 0.0
    %4646 = vmatprep.subr.mxu0 0.0
    %4647 = vmatpush1.msra.mxu0 0.0
    %4648 = vmatprep.mubr.f32.mxu0 0.0
    %4649 = vmatmul.mubr.f32.gmra.mrb[0].mxu0 %v4464
    %v4650 = vpop.f32.mrb[0].mxu0
    %v4651 = vadd.f32 %v4566, %v4650
    %v4652 = vpop.f32.mrb[0].mxu0
    %4653 = vmatprep.mubr.f32.mxu0 0.0
    %4654 = vmatmul.mubr.f32.gmra.mrb[0].mxu0 %v4456
    %v4655 = vpop.f32.mrb[0].mxu0
    %v4656 = vadd.f32 %v4571, %v4655
    %v4657 = vpop.f32.mrb[0].mxu0
    %4658 = vmatprep.mubr.f32.mxu0 0.0
    %4659 = vmatmul.mubr.f32.gmra.mrb[0].mxu0 %v4465
    %v4660 = vpop.f32.mrb[0].mxu0
    %v4661 = vadd.f32 %v4576, %v4660
    %v4662 = vpop.f32.mrb[0].mxu0
    %4663 = vmatprep.mubr.f32.mxu0 0.0
    %4664 = vmatmul.mubr.f32.gmra.mrb[0].mxu0 %v4459
    %v4665 = vpop.f32.mrb[0].mxu0
    %v4666 = vadd.f32 %v4581, %v4665
    %v4667 = vpop.f32.mrb[0].mxu0
    %4668 = vdwg.mxu0
    %v4669 = vrot.slane %v4445, 1
    %v4670 = vrot.slane %v4446, 1
    %v4671 = vsel %vm459, %v4669, %v4670
    %v4672 = vrot.slane %v4447, 1
    %v4673 = vrot.slane %v4448, 1
    %v4674 = vsel %vm459, %v4672, %v4673
    %v4679 = vsel %vm459, %v4670, 0.0
    %v4680 = vsel %vm459, %v4673, 0.0
    %s4681 = scalar_lea.vmem %s14, 256
    %v4682 = vld [vmem:[%s4681] sm:$0xff]
    %v4683 = vld [vmem:[%s4681 + $0x8] sm:$0xff]
    %v4684 = vld [vmem:[%s4681 + $0x10] sm:$0xff]
    %v4685 = vld [vmem:[%s4681 + $0x18] sm:$0xff]
    %v4686 = vld [vmem:[%s4681 + $0x20] sm:$0xff]
    %v4687 = vld [vmem:[%s4681 + $0x28] sm:$0xff]
    %v4688 = vld [vmem:[%s4681 + $0x30] sm:$0xff]
    %v4689 = vld [vmem:[%s4681 + $0x38] sm:$0xff]
    %v4690 = vld [vmem:[%s4681 + $0x40] sm:$0xff]
    %v4691 = vld [vmem:[%s4681 + $0x48] sm:$0xff]
    %v4692 = vld [vmem:[%s4681 + $0x50] sm:$0xff]
    %v4693 = vld [vmem:[%s4681 + $0x58] sm:$0xff]
    %v4694 = vld [vmem:[%s4681 + $0x60] sm:$0xff]
    %v4695 = vld [vmem:[%s4681 + $0x68] sm:$0xff]
    %v4696 = vld [vmem:[%s4681 + $0x70] sm:$0xff]
    %v4697 = vld [vmem:[%s4681 + $0x78] sm:$0xff]
    %4698 = vmatprep.subr.mxu0 0.0
    %4699 = vmatpush1.msra.mxu0 %v4682
    %4700 = vmatprep.subr.mxu0 0.0
    %4701 = vmatpush1.msra.mxu0 %v4683
    %4702 = vmatprep.subr.mxu0 0.0
    %4703 = vmatpush1.msra.mxu0 %v4684
    %4704 = vmatprep.subr.mxu0 0.0
    %4705 = vmatpush1.msra.mxu0 %v4685
    %4706 = vmatprep.subr.mxu0 0.0
    %4707 = vmatpush1.msra.mxu0 %v4686
    %4708 = vmatprep.subr.mxu0 0.0
    %4709 = vmatpush1.msra.mxu0 %v4687
    %4710 = vmatprep.subr.mxu0 0.0
    %4711 = vmatpush1.msra.mxu0 %v4688
    %4712 = vmatprep.subr.mxu0 0.0
    %4713 = vmatpush1.msra.mxu0 %v4689
    %4714 = vmatprep.subr.mxu0 0.0
    %4715 = vmatpush1.msra.mxu0 %v4690
    %4716 = vmatprep.subr.mxu0 0.0
    %4717 = vmatpush1.msra.mxu0 %v4691
    %4718 = vmatprep.subr.mxu0 0.0
    %4719 = vmatpush1.msra.mxu0 %v4692
    %4720 = vmatprep.subr.mxu0 0.0
    %4721 = vmatpush1.msra.mxu0 %v4693
    %4722 = vmatprep.subr.mxu0 0.0
    %4723 = vmatpush1.msra.mxu0 %v4694
    %4724 = vmatprep.subr.mxu0 0.0
    %4725 = vmatpush1.msra.mxu0 %v4695
    %4726 = vmatprep.subr.mxu0 0.0
    %4727 = vmatpush1.msra.mxu0 %v4696
    %4728 = vmatprep.subr.mxu0 0.0
    %4729 = vmatpush1.msra.mxu0 %v4697
    %4730 = vmatprep.subr.mxu0 0.0
    %4731 = vmatpush1.msra.mxu0 0.0
    %4732 = vmatprep.subr.mxu0 0.0
    %4733 = vmatpush1.msra.mxu0 0.0
    %4734 = vmatprep.subr.mxu0 0.0
    %4735 = vmatpush1.msra.mxu0 0.0
    %4736 = vmatprep.subr.mxu0 0.0
    %4737 = vmatpush1.msra.mxu0 0.0
    %4738 = vmatprep.subr.mxu0 0.0
    %4739 = vmatpush1.msra.mxu0 0.0
    %4740 = vmatprep.subr.mxu0 0.0
    %4741 = vmatpush1.msra.mxu0 0.0
    %4742 = vmatprep.subr.mxu0 0.0
    %4743 = vmatpush1.msra.mxu0 0.0
    %4744 = vmatprep.subr.mxu0 0.0
    %4745 = vmatpush1.msra.mxu0 0.0
    %4746 = vmatprep.subr.mxu0 0.0
    %4747 = vmatpush1.msra.mxu0 0.0
    %4748 = vmatprep.subr.mxu0 0.0
    %4749 = vmatpush1.msra.mxu0 0.0
    %4750 = vmatprep.subr.mxu0 0.0
    %4751 = vmatpush1.msra.mxu0 0.0
    %4752 = vmatprep.subr.mxu0 0.0
    %4753 = vmatpush1.msra.mxu0 0.0
    %4754 = vmatprep.subr.mxu0 0.0
    %4755 = vmatpush1.msra.mxu0 0.0
    %4756 = vmatprep.subr.mxu0 0.0
    %4757 = vmatpush1.msra.mxu0 0.0
    %4758 = vmatprep.subr.mxu0 0.0
    %4759 = vmatpush1.msra.mxu0 0.0
    %4760 = vmatprep.subr.mxu0 0.0
    %4761 = vmatpush1.msra.mxu0 0.0
    %4762 = vmatprep.mubr.f32.mxu0 0.0
    %4763 = vmatmul.mubr.f32.gmra.mrb[0].mxu0 %v4671
    %v4764 = vpop.f32.mrb[0].mxu0
    %v4765 = vadd.f32 0.0, %v4764
    %v4766 = vpop.f32.mrb[0].mxu0
    %4767 = vmatprep.mubr.f32.mxu0 0.0
    %4768 = vmatmul.mubr.f32.gmra.mrb[0].mxu0 %v4679
    %v4769 = vpop.f32.mrb[0].mxu0
    %v4770 = vadd.f32 0.0, %v4769
    %v4771 = vpop.f32.mrb[0].mxu0
    %4772 = vmatprep.mubr.f32.mxu0 0.0
    %4773 = vmatmul.mubr.f32.gmra.mrb[0].mxu0 %v4674
    %v4774 = vpop.f32.mrb[0].mxu0
    %v4775 = vadd.f32 0.0, %v4774
    %v4776 = vpop.f32.mrb[0].mxu0
    %4777 = vmatprep.mubr.f32.mxu0 0.0
    %4778 = vmatmul.mubr.f32.gmra.mrb[0].mxu0 %v4680
    %v4779 = vpop.f32.mrb[0].mxu0
    %v4780 = vadd.f32 0.0, %v4779
    %v4781 = vpop.f32.mrb[0].mxu0
    %4782 = vdwg.mxu0
    %v4783 = vadd.f32 %v4651, %v4765
    %v4784 = vadd.f32 %v4656, %v4770
    %v4785 = vadd.f32 %v4661, %v4775
    %v4786 = vadd.f32 %v4666, %v4780
    %v4788 = vlaneseq
    %v4789 = vshrl.u32 %v4788, 7
    %v4790 = vsub.s32 0, %v4789
    %v4791 = vrot.slane %v4449, %v4790
    %v4793 = vadd.f32 %v4783, %v4791
    %v4794 = vadd.f32 %v4784, %v4791
    %v4795 = vadd.f32 %v4785, %v4791
    %v4796 = vadd.f32 %v4786, %v4791
    %v4797 = vadd.f32 %v4793, %v237
    %v4798 = vadd.f32 %v4794, %v238
    %v4799 = vadd.f32 %v4795, %v239
    %v4800 = vadd.f32 %v4796, %v240
    %4801 = vst.msk [vmem:[#allocation26] sm:$0xff] %vm270, %v4797
    %4802 = vst.msk [vmem:[#allocation26 + $0x8] sm:$0xff] %vm270, %v4798
    %4803 = vst.msk [vmem:[#allocation26 + $0x10] sm:$0xff] %vm270, %v4799
    %4804 = vst.msk [vmem:[#allocation26 + $0x18] sm:$0xff] %vm270, %v4800
    // Predicated region
    $region126: #{tpu_custom_call.1} parent=1 // pred_check
      _
    $region127: #{tpu_custom_call.1} parent=1 // pred_check_branch
      %4806 = sbr.rel (0) target = $region129
    $region128: #{tpu_custom_call.1} parent=1 // pred_region
      %s4808 = ssub.s32 512, 512
      %4809 = vsyncadd [#allocation4], %s4808
      %s4810 = sshll.u32 [#allocation26], 4
      %s4811 = int_to_ptr.vmem [resolvable:$true] %s4810
      %4816 = dma.vmem_to_hbm [thread:$0]  %s4811, 512, %s16, [#allocation4], 128, 128, 8
    $region129: #{tpu_custom_call.1} parent=1 // pred_fallthru
      _
    // Predicated region
    $region130: #{tpu_custom_call.1} parent=1 // pred_check
      _
    $region131: #{tpu_custom_call.1} parent=1 // pred_check_branch
      %4818 = sbr.rel (0) target = $region133
    $region132: #{tpu_custom_call.1} parent=1 // pred_region
      %4819 = dma.done [#allocation4], 512
    $region133: #{tpu_custom_call.1} parent=1 // pred_fallthru
      _
    %4820 = vsyncpa [#allocation3], 1
    %4821 = vsyncpa [#allocation6], 1
    %4822 = vsyncpa [#allocation9], 1
    %4823 = vsyncpa [#allocation12], 1
    %4824 = vsyncpa [#allocation15], 1
    %4825 = vsyncpa [#allocation18], 1
    %4826 = vsyncpa [#allocation21], 1
    %4827 = vsyncpa [#allocation24], 1
    %4828 = vsyncpa [#allocation4], 1

</llo_original>
